<compile_context>
chip_gen: v7x
topology: tpu7x:2x2x1
jax: 0.10.0
libtpu: 0.0.40
codegen_flags: <defaults>
</compile_context>

<pallas_src>
import jax
import jax.numpy as jnp
from jax.experimental import pallas as pl
from jax.experimental.pallas import tpu as pltpu


# ----------------------------------------------------------------------------
# Fused SEBasicBlock kernel
# ----------------------------------------------------------------------------
def _make_fused_se_block_kernel(B, H, W, Cin, Cout, eps, has_downsample):
    KH = KW = 3
    NPIX = B * H * W
    inv_n = 1.0 / NPIX

    def bn_affine(acc, gamma, beta):
        # Training-mode BatchNorm over (N, H, W): single-pass stats
        # (sum / sum-of-squares, biased variance), folded into one FMA.
        mean = jnp.sum(acc, axis=0, keepdims=True) * inv_n            # (1, C)
        var = jnp.sum(acc * acc, axis=0, keepdims=True) * inv_n - mean * mean
        scale = gamma * jax.lax.rsqrt(var + eps)
        shift = beta - mean * scale
        return acc * scale + shift

    def im2col(pad_ref, C):
        # 9 shifted taps concatenated along the contraction axis -> (NPIX, 9*C).
        taps = [
            pad_ref[:, kh:kh + H, kw:kw + W, :].reshape(NPIX, C)
            for kh in range(KH) for kw in range(KW)
        ]
        return jnp.concatenate(taps, axis=1)

    def kernel(*refs):
        if has_downsample:
            (x_ref, w1_ref, w2_ref, wds_ref,
             g1_ref, b1_ref, g2_ref, b2_ref, gds_ref, bds_ref,
             wfc1_ref, wfc2_ref,
             o_ref, xpad_ref, midpad_ref) = refs
        else:
            (x_ref, w1_ref, w2_ref,
             g1_ref, b1_ref, g2_ref, b2_ref,
             wfc1_ref, wfc2_ref,
             o_ref, xpad_ref, midpad_ref) = refs

        # ---- in-kernel zero padding of the input (no XLA pad / extra HBM pass) ----
        xpad_ref[...] = jnp.zeros(xpad_ref.shape, xpad_ref.dtype)
        xpad_ref[:, 1:1 + H, 1:1 + W, :] = x_ref[...]

        # ---- residual path ----
        if has_downsample:
            # 1x1 conv == plain channel matmul on the unpadded input, + BN.
            x2d = x_ref[...].reshape(NPIX, Cin).astype(jnp.bfloat16)
            acc_ds = jnp.dot(x2d, wds_ref[...], preferred_element_type=jnp.float32)
            residual = bn_affine(acc_ds, gds_ref[...], bds_ref[...])  # (NPIX, Cout)
        else:
            residual = x_ref[...].reshape(NPIX, Cout)                 # identity (Cin == Cout)

        # ---- conv1 (3x3 "same") as one im2col matmul + bn1 + relu ----
        p1 = im2col(xpad_ref, Cin).astype(jnp.bfloat16)               # (NPIX, 9*Cin)
        acc1 = jnp.dot(p1, w1_ref[...], preferred_element_type=jnp.float32)
        mid = jnp.maximum(bn_affine(acc1, g1_ref[...], b1_ref[...]), 0.0)

        # ---- stage-2 padded activation stays in VMEM scratch ----
        midpad_ref[...] = jnp.zeros(midpad_ref.shape, midpad_ref.dtype)
        midpad_ref[:, 1:1 + H, 1:1 + W, :] = mid.reshape(B, H, W, Cout)

        # ---- conv2 (3x3 "same") + bn2 ----
        p2 = im2col(midpad_ref, Cout).astype(jnp.bfloat16)            # (NPIX, 9*Cout)
        acc2 = jnp.dot(p2, w2_ref[...], preferred_element_type=jnp.float32)
        y2 = bn_affine(acc2, g2_ref[...], b2_ref[...])                # (NPIX, Cout)

        # ---- SE: global avg pool -> fc1 -> relu -> fc2 -> sigmoid ----
        y2b = y2.reshape(B, H * W, Cout)
        pooled = jnp.mean(y2b, axis=1)                                # (B, Cout)
        hidden = jnp.maximum(
            jnp.dot(pooled, wfc1_ref[...], preferred_element_type=jnp.float32), 0.0)
        gate = jax.nn.sigmoid(
            jnp.dot(hidden, wfc2_ref[...], preferred_element_type=jnp.float32))

        # ---- channel scaling + residual add + final relu ----
        out = y2b * gate[:, None, :] + residual.reshape(B, H * W, Cout)
        o_ref[...] = jnp.maximum(out, 0.0)

    return kernel


# ----------------------------------------------------------------------------
# Wrapper: layout plumbing + single pallas_call
# ----------------------------------------------------------------------------
def _oihw_to_im2col(w_oihw):
    """(Cout, Cin, KH, KW) -> (KH*KW*Cin, Cout), row order matches the tap concat."""
    cout, cin, kh, kw = w_oihw.shape
    return jnp.transpose(w_oihw, (2, 3, 1, 0)).reshape(kh * kw * cin, cout)


@jax.jit
def se_basic_block_forward(x_nchw, params):
    eps = 1e-5
    x = jnp.transpose(x_nchw, (0, 2, 3, 1)).astype(jnp.float32)       # NCHW -> NHWC
    B, H, W, Cin = x.shape
    Cout = params["w_conv1"].shape[0]
    has_downsample = "w_ds" in params

    # conv weights laid out for the im2col dots, cast once to bf16 (f32 accumulate).
    w1 = _oihw_to_im2col(params["w_conv1"]).astype(jnp.bfloat16)      # (9*Cin,  Cout)
    w2 = _oihw_to_im2col(params["w_conv2"]).astype(jnp.bfloat16)      # (9*Cout, Cout)
    g1 = params["g1"].reshape(1, Cout).astype(jnp.float32)
    b1 = params["b1"].reshape(1, Cout).astype(jnp.float32)
    g2 = params["g2"].reshape(1, Cout).astype(jnp.float32)
    b2 = params["b2"].reshape(1, Cout).astype(jnp.float32)
    wfc1 = params["w_fc1"].astype(jnp.float32)                        # (Cout, Cout//r)
    wfc2 = params["w_fc2"].astype(jnp.float32)                        # (Cout//r, Cout)

    args = [x, w1, w2]
    if has_downsample:
        wds = jnp.transpose(params["w_ds"][:, :, 0, 0], (1, 0)).astype(jnp.bfloat16)
        gds = params["g_ds"].reshape(1, Cout).astype(jnp.float32)
        bds = params["b_ds"].reshape(1, Cout).astype(jnp.float32)
        args += [wds, g1, b1, g2, b2, gds, bds]
    else:
        args += [g1, b1, g2, b2]
    args += [wfc1, wfc2]

    kernel = _make_fused_se_block_kernel(B, H, W, Cin, Cout, eps, has_downsample)
    vmem = pl.BlockSpec(memory_space=pltpu.MemorySpace.VMEM)

    out = pl.pallas_call(
        kernel,
        out_shape=jax.ShapeDtypeStruct((B, H * W, Cout), jnp.float32),
        in_specs=[vmem] * len(args),
        out_specs=vmem,
        scratch_shapes=[
            pltpu.VMEM((B, H + 2, W + 2, Cin), jnp.float32),          # padded input
            pltpu.VMEM((B, H + 2, W + 2, Cout), jnp.float32),         # padded conv1 out
        ],
        compiler_params=pltpu.CompilerParams(
            vmem_limit_bytes=32 * 1024 * 1024,
        ),
    )(*args)

    out = out.reshape(B, H, W, Cout)
    return jnp.transpose(out, (0, 3, 1, 2))                           # NHWC -> NCHW


# ----------------------------------------------------------------------------
# Pure-JAX (XLA, f32) reference for a sanity check
# ----------------------------------------------------------------------------
def _reference_forward(x_nchw, params, eps=1e-5):
    def conv(x, w, pad):
        return jax.lax.conv_general_dilated(
            x, w, (1, 1), [(pad, pad), (pad, pad)],
            dimension_numbers=("NCHW", "OIHW", "NCHW"))

    def bn(x, g, b):
        mean = jnp.mean(x, axis=(0, 2, 3), keepdims=True)
        var = jnp.mean((x - mean) ** 2, axis=(0, 2, 3), keepdims=True)
        return (x - mean) * (g.reshape(1, -1, 1, 1) * jax.lax.rsqrt(var + eps)) \
            + b.reshape(1, -1, 1, 1)

    if "w_ds" in params:
        residual = bn(conv(x_nchw, params["w_ds"], 0), params["g_ds"], params["b_ds"])
    else:
        residual = x_nchw
    out = jax.nn.relu(bn(conv(x_nchw, params["w_conv1"], 1), params["g1"], params["b1"]))
    out = bn(conv(out, params["w_conv2"], 1), params["g2"], params["b2"])
    pooled = jnp.mean(out, axis=(2, 3))                               # (B, C)
    h = jax.nn.relu(pooled @ params["w_fc1"])
    s = jax.nn.sigmoid(h @ params["w_fc2"])                           # (B, C)
    return jax.nn.relu(out * s[:, :, None, None] + residual)


# ----------------------------------------------------------------------------
# Deterministic parameter init + example run
# ----------------------------------------------------------------------------
def init_params(key, inplanes, planes, reduction):
    hidden = planes // reduction
    ks = jax.random.split(key, 6)
    return {
        # conv weights in PyTorch OIHW layout
        "w_conv1": 0.1 * jax.random.normal(ks[0], (planes, inplanes, 3, 3), jnp.float32),
        "w_conv2": 0.1 * jax.random.normal(ks[1], (planes, planes, 3, 3), jnp.float32),
        "w_ds":    0.1 * jax.random.normal(ks[2], (planes, inplanes, 1, 1), jnp.float32),
        # BatchNorm affine params (PyTorch default init: gamma=1, beta=0)
        "g1": jnp.ones((planes,), jnp.float32),   "b1": jnp.zeros((planes,), jnp.float32),
        "g2": jnp.ones((planes,), jnp.float32),   "b2": jnp.zeros((planes,), jnp.float32),
        "g_ds": jnp.ones((planes,), jnp.float32), "b_ds": jnp.zeros((planes,), jnp.float32),
        # SE FC weights, stored pre-transposed for x @ W: (in, out)
        "w_fc1": 0.1 * jax.random.normal(ks[3], (planes, hidden), jnp.float32),
        "w_fc2": 0.1 * jax.random.normal(ks[4], (hidden, planes), jnp.float32),
    }


if __name__ == "__main__":
    B, inplanes, planes, H, W = 2, 16, 32, 16, 16
    reduction = 16  # hidden = planes // reduction = 2

    key = jax.random.PRNGKey(0)
    k_x, k_p = jax.random.split(key)
    x = jax.random.normal(k_x, (B, inplanes, H, W), jnp.float32)      # NCHW, like PyTorch
    params = init_params(k_p, inplanes, planes, reduction)

    out = se_basic_block_forward(x, params)
    out = jax.block_until_ready(out)

    assert out.shape == (B, planes, H, W), out.shape
    assert bool(jnp.all(out >= 0.0))                                  # final ReLU

    # Sanity check against f32 XLA reference (bf16 MXU inputs + single-pass BN
    # stats introduce only small numerical differences).
    ref = _reference_forward(x, params)
    max_err = float(jnp.max(jnp.abs(out - ref)))
    assert max_err < 0.25, max_err

    print("KERNEL_OK")
</pallas_src>

<mosaic_0001>
module attributes {stable_mosaic.version = 11 : i64} {
  func.func @kernel(%arg0: memref<2x16x16x16xf32, #tpu.memory_space<vmem>>, %arg1: memref<144x32xbf16, #tpu.memory_space<vmem>>, %arg2: memref<288x32xbf16, #tpu.memory_space<vmem>>, %arg3: memref<16x32xbf16, #tpu.memory_space<vmem>>, %arg4: memref<1x32xf32, #tpu.memory_space<vmem>>, %arg5: memref<1x32xf32, #tpu.memory_space<vmem>>, %arg6: memref<1x32xf32, #tpu.memory_space<vmem>>, %arg7: memref<1x32xf32, #tpu.memory_space<vmem>>, %arg8: memref<1x32xf32, #tpu.memory_space<vmem>>, %arg9: memref<1x32xf32, #tpu.memory_space<vmem>>, %arg10: memref<32x2xf32, #tpu.memory_space<vmem>>, %arg11: memref<2x32xf32, #tpu.memory_space<vmem>>, %arg12: memref<2x256x32xf32, #tpu.memory_space<vmem>>, %arg13: memref<2x18x18x16xf32, #tpu.memory_space<vmem>>, %arg14: memref<2x18x18x32xf32, #tpu.memory_space<vmem>>) attributes {dimension_semantics = [], scalar_prefetch = 0 : i64, scratch_operands = 2 : i64, tpu.core_type = #tpu.core_type<tc>} {
    %cst = arith.constant 0.000000e+00 : f32
    %0 = vector.broadcast %cst : f32 to vector<2x18x18x16xf32>
    %c0 = arith.constant 0 : index
    %c0_0 = arith.constant 0 : index
    %c0_1 = arith.constant 0 : index
    %c0_2 = arith.constant 0 : index
    %1 = vector.load %arg13[%c0, %c0_0, %c0_1, %c0_2] : memref<2x18x18x16xf32, #tpu.memory_space<vmem>>, vector<2x18x18x16xf32>
    tpu.vector_store %arg13[%c0, %c0_0, %c0_1, %c0_2], %0 {strides = array<i32>} : memref<2x18x18x16xf32, #tpu.memory_space<vmem>>, vector<2x18x18x16xf32>,
    %c0_3 = arith.constant 0 : index
    %c0_4 = arith.constant 0 : index
    %c0_5 = arith.constant 0 : index
    %c0_6 = arith.constant 0 : index
    %2 = vector.load %arg0[%c0_3, %c0_4, %c0_5, %c0_6] : memref<2x16x16x16xf32, #tpu.memory_space<vmem>>, vector<2x16x16x16xf32>
    %c0_7 = arith.constant 0 : index
    %c1 = arith.constant 1 : index
    %c1_8 = arith.constant 1 : index
    %c0_9 = arith.constant 0 : index
    %3 = vector.load %arg13[%c0_7, %c1, %c1_8, %c0_9] : memref<2x18x18x16xf32, #tpu.memory_space<vmem>>, vector<2x16x16x16xf32>
    tpu.vector_store %arg13[%c0_7, %c1, %c1_8, %c0_9], %2 {strides = array<i32>} : memref<2x18x18x16xf32, #tpu.memory_space<vmem>>, vector<2x16x16x16xf32>,
    %c0_10 = arith.constant 0 : index
    %c0_11 = arith.constant 0 : index
    %c0_12 = arith.constant 0 : index
    %c0_13 = arith.constant 0 : index
    %4 = vector.load %arg0[%c0_10, %c0_11, %c0_12, %c0_13] : memref<2x16x16x16xf32, #tpu.memory_space<vmem>>, vector<2x16x16x16xf32>
    %5 = vector.shape_cast %4 : vector<2x16x16x16xf32> to vector<512x16xf32>
    %6 = arith.truncf %5 : vector<512x16xf32> to vector<512x16xbf16>
    %c0_14 = arith.constant 0 : index
    %c0_15 = arith.constant 0 : index
    %7 = vector.load %arg3[%c0_14, %c0_15] : memref<16x32xbf16, #tpu.memory_space<vmem>>, vector<16x32xbf16>
    %cst_16 = arith.constant dense<0.000000e+00> : vector<512x32xf32>
    %8 = tpu.matmul %6, %7, %cst_16 {dimension_numbers = #tpu.dot_dimension_numbers<[1], [0], [0], [1], [0, 0, 1, 1], [], []>} : vector<512x16xbf16>, vector<16x32xbf16>, vector<512x32xf32> -> vector<512x32xf32>
    %c0_17 = arith.constant 0 : index
    %c0_18 = arith.constant 0 : index
    %9 = vector.load %arg8[%c0_17, %c0_18] : memref<1x32xf32, #tpu.memory_space<vmem>>, vector<1x32xf32>
    %c0_19 = arith.constant 0 : index
    %c0_20 = arith.constant 0 : index
    %10 = vector.load %arg9[%c0_19, %c0_20] : memref<1x32xf32, #tpu.memory_space<vmem>>, vector<1x32xf32>
    %cst_21 = arith.constant dense<0.000000e+00> : vector<32xf32>
    %11 = vector.multi_reduction <add>, %8, %cst_21 [0] : vector<512x32xf32> to vector<32xf32>
    %12 = vector.shape_cast %11 : vector<32xf32> to vector<1x32xf32>
    %cst_22 = arith.constant 0.001953125 : f32
    %13 = vector.broadcast %cst_22 : f32 to vector<1x32xf32>
    %14 = arith.mulf %12, %13 : vector<1x32xf32>
    %15 = arith.mulf %8, %8 : vector<512x32xf32>
    %cst_23 = arith.constant dense<0.000000e+00> : vector<32xf32>
    %16 = vector.multi_reduction <add>, %15, %cst_23 [0] : vector<512x32xf32> to vector<32xf32>
    %17 = vector.shape_cast %16 : vector<32xf32> to vector<1x32xf32>
    %cst_24 = arith.constant 0.001953125 : f32
    %18 = vector.broadcast %cst_24 : f32 to vector<1x32xf32>
    %19 = arith.mulf %17, %18 : vector<1x32xf32>
    %20 = arith.mulf %14, %14 : vector<1x32xf32>
    %21 = arith.subf %19, %20 : vector<1x32xf32>
    %cst_25 = arith.constant 9.99999974E-6 : f32
    %22 = vector.broadcast %cst_25 : f32 to vector<1x32xf32>
    %23 = arith.addf %21, %22 : vector<1x32xf32>
    %24 = math.rsqrt %23 : vector<1x32xf32>
    %25 = arith.mulf %9, %24 : vector<1x32xf32>
    %26 = arith.mulf %14, %25 : vector<1x32xf32>
    %27 = arith.subf %10, %26 : vector<1x32xf32>
    %28 = vector.broadcast %25 : vector<1x32xf32> to vector<512x32xf32>
    %29 = arith.mulf %8, %28 : vector<512x32xf32>
    %30 = vector.broadcast %27 : vector<1x32xf32> to vector<512x32xf32>
    %31 = arith.addf %29, %30 : vector<512x32xf32>
    %c0_26 = arith.constant 0 : index
    %c0_27 = arith.constant 0 : index
    %c0_28 = arith.constant 0 : index
    %c0_29 = arith.constant 0 : index
    %32 = vector.load %arg13[%c0_26, %c0_27, %c0_28, %c0_29] : memref<2x18x18x16xf32, #tpu.memory_space<vmem>>, vector<2x16x16x16xf32>
    %33 = vector.shape_cast %32 : vector<2x16x16x16xf32> to vector<512x16xf32>
    %c0_30 = arith.constant 0 : index
    %c0_31 = arith.constant 0 : index
    %c1_32 = arith.constant 1 : index
    %c0_33 = arith.constant 0 : index
    %34 = vector.load %arg13[%c0_30, %c0_31, %c1_32, %c0_33] : memref<2x18x18x16xf32, #tpu.memory_space<vmem>>, vector<2x16x16x16xf32>
    %35 = vector.shape_cast %34 : vector<2x16x16x16xf32> to vector<512x16xf32>
    %c0_34 = arith.constant 0 : index
    %c0_35 = arith.constant 0 : index
    %c2 = arith.constant 2 : index
    %c0_36 = arith.constant 0 : index
    %36 = vector.load %arg13[%c0_34, %c0_35, %c2, %c0_36] : memref<2x18x18x16xf32, #tpu.memory_space<vmem>>, vector<2x16x16x16xf32>
    %37 = vector.shape_cast %36 : vector<2x16x16x16xf32> to vector<512x16xf32>
    %c0_37 = arith.constant 0 : index
    %c1_38 = arith.constant 1 : index
    %c0_39 = arith.constant 0 : index
    %c0_40 = arith.constant 0 : index
    %38 = vector.load %arg13[%c0_37, %c1_38, %c0_39, %c0_40] : memref<2x18x18x16xf32, #tpu.memory_space<vmem>>, vector<2x16x16x16xf32>
    %39 = vector.shape_cast %38 : vector<2x16x16x16xf32> to vector<512x16xf32>
    %c0_41 = arith.constant 0 : index
    %c1_42 = arith.constant 1 : index
    %c1_43 = arith.constant 1 : index
    %c0_44 = arith.constant 0 : index
    %40 = vector.load %arg13[%c0_41, %c1_42, %c1_43, %c0_44] : memref<2x18x18x16xf32, #tpu.memory_space<vmem>>, vector<2x16x16x16xf32>
    %41 = vector.shape_cast %40 : vector<2x16x16x16xf32> to vector<512x16xf32>
    %c0_45 = arith.constant 0 : index
    %c1_46 = arith.constant 1 : index
    %c2_47 = arith.constant 2 : index
    %c0_48 = arith.constant 0 : index
    %42 = vector.load %arg13[%c0_45, %c1_46, %c2_47, %c0_48] : memref<2x18x18x16xf32, #tpu.memory_space<vmem>>, vector<2x16x16x16xf32>
    %43 = vector.shape_cast %42 : vector<2x16x16x16xf32> to vector<512x16xf32>
    %c0_49 = arith.constant 0 : index
    %c2_50 = arith.constant 2 : index
    %c0_51 = arith.constant 0 : index
    %c0_52 = arith.constant 0 : index
    %44 = vector.load %arg13[%c0_49, %c2_50, %c0_51, %c0_52] : memref<2x18x18x16xf32, #tpu.memory_space<vmem>>, vector<2x16x16x16xf32>
    %45 = vector.shape_cast %44 : vector<2x16x16x16xf32> to vector<512x16xf32>
    %c0_53 = arith.constant 0 : index
    %c2_54 = arith.constant 2 : index
    %c1_55 = arith.constant 1 : index
    %c0_56 = arith.constant 0 : index
    %46 = vector.load %arg13[%c0_53, %c2_54, %c1_55, %c0_56] : memref<2x18x18x16xf32, #tpu.memory_space<vmem>>, vector<2x16x16x16xf32>
    %47 = vector.shape_cast %46 : vector<2x16x16x16xf32> to vector<512x16xf32>
    %c0_57 = arith.constant 0 : index
    %c2_58 = arith.constant 2 : index
    %c2_59 = arith.constant 2 : index
    %c0_60 = arith.constant 0 : index
    %48 = vector.load %arg13[%c0_57, %c2_58, %c2_59, %c0_60] : memref<2x18x18x16xf32, #tpu.memory_space<vmem>>, vector<2x16x16x16xf32>
    %49 = vector.shape_cast %48 : vector<2x16x16x16xf32> to vector<512x16xf32>
    %50 = tpu.concatenate %33, %35, %37, %39, %41, %43, %45, %47, %49 in 1 : vector<512x16xf32>, vector<512x16xf32>, vector<512x16xf32>, vector<512x16xf32>, vector<512x16xf32>, vector<512x16xf32>, vector<512x16xf32>, vector<512x16xf32>, vector<512x16xf32> -> vector<512x144xf32>
    %51 = arith.truncf %50 : vector<512x144xf32> to vector<512x144xbf16>
    %c0_61 = arith.constant 0 : index
    %c0_62 = arith.constant 0 : index
    %52 = vector.load %arg1[%c0_61, %c0_62] : memref<144x32xbf16, #tpu.memory_space<vmem>>, vector<144x32xbf16>
    %cst_63 = arith.constant dense<0.000000e+00> : vector<512x32xf32>
    %53 = tpu.matmul %51, %52, %cst_63 {dimension_numbers = #tpu.dot_dimension_numbers<[1], [0], [0], [1], [0, 0, 1, 1], [], []>} : vector<512x144xbf16>, vector<144x32xbf16>, vector<512x32xf32> -> vector<512x32xf32>
    %c0_64 = arith.constant 0 : index
    %c0_65 = arith.constant 0 : index
    %54 = vector.load %arg4[%c0_64, %c0_65] : memref<1x32xf32, #tpu.memory_space<vmem>>, vector<1x32xf32>
    %c0_66 = arith.constant 0 : index
    %c0_67 = arith.constant 0 : index
    %55 = vector.load %arg5[%c0_66, %c0_67] : memref<1x32xf32, #tpu.memory_space<vmem>>, vector<1x32xf32>
    %cst_68 = arith.constant dense<0.000000e+00> : vector<32xf32>
    %56 = vector.multi_reduction <add>, %53, %cst_68 [0] : vector<512x32xf32> to vector<32xf32>
    %57 = vector.shape_cast %56 : vector<32xf32> to vector<1x32xf32>
    %cst_69 = arith.constant 0.001953125 : f32
    %58 = vector.broadcast %cst_69 : f32 to vector<1x32xf32>
    %59 = arith.mulf %57, %58 : vector<1x32xf32>
    %60 = arith.mulf %53, %53 : vector<512x32xf32>
    %cst_70 = arith.constant dense<0.000000e+00> : vector<32xf32>
    %61 = vector.multi_reduction <add>, %60, %cst_70 [0] : vector<512x32xf32> to vector<32xf32>
    %62 = vector.shape_cast %61 : vector<32xf32> to vector<1x32xf32>
    %cst_71 = arith.constant 0.001953125 : f32
    %63 = vector.broadcast %cst_71 : f32 to vector<1x32xf32>
    %64 = arith.mulf %62, %63 : vector<1x32xf32>
    %65 = arith.mulf %59, %59 : vector<1x32xf32>
    %66 = arith.subf %64, %65 : vector<1x32xf32>
    %cst_72 = arith.constant 9.99999974E-6 : f32
    %67 = vector.broadcast %cst_72 : f32 to vector<1x32xf32>
    %68 = arith.addf %66, %67 : vector<1x32xf32>
    %69 = math.rsqrt %68 : vector<1x32xf32>
    %70 = arith.mulf %54, %69 : vector<1x32xf32>
    %71 = arith.mulf %59, %70 : vector<1x32xf32>
    %72 = arith.subf %55, %71 : vector<1x32xf32>
    %73 = vector.broadcast %70 : vector<1x32xf32> to vector<512x32xf32>
    %74 = arith.mulf %53, %73 : vector<512x32xf32>
    %75 = vector.broadcast %72 : vector<1x32xf32> to vector<512x32xf32>
    %76 = arith.addf %74, %75 : vector<512x32xf32>
    %cst_73 = arith.constant 0.000000e+00 : f32
    %77 = vector.broadcast %cst_73 : f32 to vector<512x32xf32>
    %78 = arith.maximumf %76, %77 : vector<512x32xf32>
    %cst_74 = arith.constant 0.000000e+00 : f32
    %79 = vector.broadcast %cst_74 : f32 to vector<2x18x18x32xf32>
    %c0_75 = arith.constant 0 : index
    %c0_76 = arith.constant 0 : index
    %c0_77 = arith.constant 0 : index
    %c0_78 = arith.constant 0 : index
    %80 = vector.load %arg14[%c0_75, %c0_76, %c0_77, %c0_78] : memref<2x18x18x32xf32, #tpu.memory_space<vmem>>, vector<2x18x18x32xf32>
    tpu.vector_store %arg14[%c0_75, %c0_76, %c0_77, %c0_78], %79 {strides = array<i32>} : memref<2x18x18x32xf32, #tpu.memory_space<vmem>>, vector<2x18x18x32xf32>,
    %81 = vector.shape_cast %78 : vector<512x32xf32> to vector<2x16x16x32xf32>
    %c0_79 = arith.constant 0 : index
    %c1_80 = arith.constant 1 : index
    %c1_81 = arith.constant 1 : index
    %c0_82 = arith.constant 0 : index
    %82 = vector.load %arg14[%c0_79, %c1_80, %c1_81, %c0_82] : memref<2x18x18x32xf32, #tpu.memory_space<vmem>>, vector<2x16x16x32xf32>
    tpu.vector_store %arg14[%c0_79, %c1_80, %c1_81, %c0_82], %81 {strides = array<i32>} : memref<2x18x18x32xf32, #tpu.memory_space<vmem>>, vector<2x16x16x32xf32>,
    %c0_83 = arith.constant 0 : index
    %c0_84 = arith.constant 0 : index
    %c0_85 = arith.constant 0 : index
    %c0_86 = arith.constant 0 : index
    %83 = vector.load %arg14[%c0_83, %c0_84, %c0_85, %c0_86] : memref<2x18x18x32xf32, #tpu.memory_space<vmem>>, vector<2x16x16x32xf32>
    %84 = vector.shape_cast %83 : vector<2x16x16x32xf32> to vector<512x32xf32>
    %c0_87 = arith.constant 0 : index
    %c0_88 = arith.constant 0 : index
    %c1_89 = arith.constant 1 : index
    %c0_90 = arith.constant 0 : index
    %85 = vector.load %arg14[%c0_87, %c0_88, %c1_89, %c0_90] : memref<2x18x18x32xf32, #tpu.memory_space<vmem>>, vector<2x16x16x32xf32>
    %86 = vector.shape_cast %85 : vector<2x16x16x32xf32> to vector<512x32xf32>
    %c0_91 = arith.constant 0 : index
    %c0_92 = arith.constant 0 : index
    %c2_93 = arith.constant 2 : index
    %c0_94 = arith.constant 0 : index
    %87 = vector.load %arg14[%c0_91, %c0_92, %c2_93, %c0_94] : memref<2x18x18x32xf32, #tpu.memory_space<vmem>>, vector<2x16x16x32xf32>
    %88 = vector.shape_cast %87 : vector<2x16x16x32xf32> to vector<512x32xf32>
    %c0_95 = arith.constant 0 : index
    %c1_96 = arith.constant 1 : index
    %c0_97 = arith.constant 0 : index
    %c0_98 = arith.constant 0 : index
    %89 = vector.load %arg14[%c0_95, %c1_96, %c0_97, %c0_98] : memref<2x18x18x32xf32, #tpu.memory_space<vmem>>, vector<2x16x16x32xf32>
    %90 = vector.shape_cast %89 : vector<2x16x16x32xf32> to vector<512x32xf32>
    %c0_99 = arith.constant 0 : index
    %c1_100 = arith.constant 1 : index
    %c1_101 = arith.constant 1 : index
    %c0_102 = arith.constant 0 : index
    %91 = vector.load %arg14[%c0_99, %c1_100, %c1_101, %c0_102] : memref<2x18x18x32xf32, #tpu.memory_space<vmem>>, vector<2x16x16x32xf32>
    %92 = vector.shape_cast %91 : vector<2x16x16x32xf32> to vector<512x32xf32>
    %c0_103 = arith.constant 0 : index
    %c1_104 = arith.constant 1 : index
    %c2_105 = arith.constant 2 : index
    %c0_106 = arith.constant 0 : index
    %93 = vector.load %arg14[%c0_103, %c1_104, %c2_105, %c0_106] : memref<2x18x18x32xf32, #tpu.memory_space<vmem>>, vector<2x16x16x32xf32>
    %94 = vector.shape_cast %93 : vector<2x16x16x32xf32> to vector<512x32xf32>
    %c0_107 = arith.constant 0 : index
    %c2_108 = arith.constant 2 : index
    %c0_109 = arith.constant 0 : index
    %c0_110 = arith.constant 0 : index
    %95 = vector.load %arg14[%c0_107, %c2_108, %c0_109, %c0_110] : memref<2x18x18x32xf32, #tpu.memory_space<vmem>>, vector<2x16x16x32xf32>
    %96 = vector.shape_cast %95 : vector<2x16x16x32xf32> to vector<512x32xf32>
    %c0_111 = arith.constant 0 : index
    %c2_112 = arith.constant 2 : index
    %c1_113 = arith.constant 1 : index
    %c0_114 = arith.constant 0 : index
    %97 = vector.load %arg14[%c0_111, %c2_112, %c1_113, %c0_114] : memref<2x18x18x32xf32, #tpu.memory_space<vmem>>, vector<2x16x16x32xf32>
    %98 = vector.shape_cast %97 : vector<2x16x16x32xf32> to vector<512x32xf32>
    %c0_115 = arith.constant 0 : index
    %c2_116 = arith.constant 2 : index
    %c2_117 = arith.constant 2 : index
    %c0_118 = arith.constant 0 : index
    %99 = vector.load %arg14[%c0_115, %c2_116, %c2_117, %c0_118] : memref<2x18x18x32xf32, #tpu.memory_space<vmem>>, vector<2x16x16x32xf32>
    %100 = vector.shape_cast %99 : vector<2x16x16x32xf32> to vector<512x32xf32>
    %101 = tpu.concatenate %84, %86, %88, %90, %92, %94, %96, %98, %100 in 1 : vector<512x32xf32>, vector<512x32xf32>, vector<512x32xf32>, vector<512x32xf32>, vector<512x32xf32>, vector<512x32xf32>, vector<512x32xf32>, vector<512x32xf32>, vector<512x32xf32> -> vector<512x288xf32>
    %102 = arith.truncf %101 : vector<512x288xf32> to vector<512x288xbf16>
    %c0_119 = arith.constant 0 : index
    %c0_120 = arith.constant 0 : index
    %103 = vector.load %arg2[%c0_119, %c0_120] : memref<288x32xbf16, #tpu.memory_space<vmem>>, vector<288x32xbf16>
    %cst_121 = arith.constant dense<0.000000e+00> : vector<512x32xf32>
    %104 = tpu.matmul %102, %103, %cst_121 {dimension_numbers = #tpu.dot_dimension_numbers<[1], [0], [0], [1], [0, 0, 1, 1], [], []>} : vector<512x288xbf16>, vector<288x32xbf16>, vector<512x32xf32> -> vector<512x32xf32>
    %c0_122 = arith.constant 0 : index
    %c0_123 = arith.constant 0 : index
    %105 = vector.load %arg6[%c0_122, %c0_123] : memref<1x32xf32, #tpu.memory_space<vmem>>, vector<1x32xf32>
    %c0_124 = arith.constant 0 : index
    %c0_125 = arith.constant 0 : index
    %106 = vector.load %arg7[%c0_124, %c0_125] : memref<1x32xf32, #tpu.memory_space<vmem>>, vector<1x32xf32>
    %cst_126 = arith.constant dense<0.000000e+00> : vector<32xf32>
    %107 = vector.multi_reduction <add>, %104, %cst_126 [0] : vector<512x32xf32> to vector<32xf32>
    %108 = vector.shape_cast %107 : vector<32xf32> to vector<1x32xf32>
    %cst_127 = arith.constant 0.001953125 : f32
    %109 = vector.broadcast %cst_127 : f32 to vector<1x32xf32>
    %110 = arith.mulf %108, %109 : vector<1x32xf32>
    %111 = arith.mulf %104, %104 : vector<512x32xf32>
    %cst_128 = arith.constant dense<0.000000e+00> : vector<32xf32>
    %112 = vector.multi_reduction <add>, %111, %cst_128 [0] : vector<512x32xf32> to vector<32xf32>
    %113 = vector.shape_cast %112 : vector<32xf32> to vector<1x32xf32>
    %cst_129 = arith.constant 0.001953125 : f32
    %114 = vector.broadcast %cst_129 : f32 to vector<1x32xf32>
    %115 = arith.mulf %113, %114 : vector<1x32xf32>
    %116 = arith.mulf %110, %110 : vector<1x32xf32>
    %117 = arith.subf %115, %116 : vector<1x32xf32>
    %cst_130 = arith.constant 9.99999974E-6 : f32
    %118 = vector.broadcast %cst_130 : f32 to vector<1x32xf32>
    %119 = arith.addf %117, %118 : vector<1x32xf32>
    %120 = math.rsqrt %119 : vector<1x32xf32>
    %121 = arith.mulf %105, %120 : vector<1x32xf32>
    %122 = arith.mulf %110, %121 : vector<1x32xf32>
    %123 = arith.subf %106, %122 : vector<1x32xf32>
    %124 = vector.broadcast %121 : vector<1x32xf32> to vector<512x32xf32>
    %125 = arith.mulf %104, %124 : vector<512x32xf32>
    %126 = vector.broadcast %123 : vector<1x32xf32> to vector<512x32xf32>
    %127 = arith.addf %125, %126 : vector<512x32xf32>
    %128 = vector.shape_cast %127 : vector<512x32xf32> to vector<2x256x32xf32>
    %cst_131 = arith.constant dense<0.000000e+00> : vector<2x32xf32>
    %129 = vector.multi_reduction <add>, %128, %cst_131 [1] : vector<2x256x32xf32> to vector<2x32xf32>
    %cst_132 = arith.constant 2.560000e+02 : f32
    %130 = vector.broadcast %cst_132 : f32 to vector<2x32xf32>
    %131 = arith.divf %129, %130 : vector<2x32xf32>
    %c0_133 = arith.constant 0 : index
    %c0_134 = arith.constant 0 : index
    %132 = vector.load %arg10[%c0_133, %c0_134] : memref<32x2xf32, #tpu.memory_space<vmem>>, vector<32x2xf32>
    %cst_135 = arith.constant dense<0.000000e+00> : vector<2x2xf32>
    %133 = tpu.matmul %131, %132, %cst_135 {dimension_numbers = #tpu.dot_dimension_numbers<[1], [0], [0], [1], [0, 0, 1, 1], [], []>} : vector<2x32xf32>, vector<32x2xf32>, vector<2x2xf32> -> vector<2x2xf32>
    %cst_136 = arith.constant 0.000000e+00 : f32
    %134 = vector.broadcast %cst_136 : f32 to vector<2x2xf32>
    %135 = arith.maximumf %133, %134 : vector<2x2xf32>
    %c0_137 = arith.constant 0 : index
    %c0_138 = arith.constant 0 : index
    %136 = vector.load %arg11[%c0_137, %c0_138] : memref<2x32xf32, #tpu.memory_space<vmem>>, vector<2x32xf32>
    %cst_139 = arith.constant dense<0.000000e+00> : vector<2x32xf32>
    %137 = tpu.matmul %135, %136, %cst_139 {dimension_numbers = #tpu.dot_dimension_numbers<[1], [0], [0], [1], [0, 0, 1, 1], [], []>} : vector<2x2xf32>, vector<2x32xf32>, vector<2x32xf32> -> vector<2x32xf32>
    %138 = arith.negf %137 : vector<2x32xf32>
    %139 = math.exp %138 : vector<2x32xf32>
    %cst_140 = arith.constant 1.000000e+00 : f32
    %140 = vector.broadcast %cst_140 : f32 to vector<2x32xf32>
    %141 = arith.addf %140, %139 : vector<2x32xf32>
    %142 = arith.divf %140, %141 : vector<2x32xf32>
    %143 = vector.shape_cast %142 : vector<2x32xf32> to vector<2x1x32xf32>
    %144 = vector.broadcast %143 : vector<2x1x32xf32> to vector<2x256x32xf32>
    %145 = arith.mulf %128, %144 : vector<2x256x32xf32>
    %146 = vector.shape_cast %31 : vector<512x32xf32> to vector<2x256x32xf32>
    %147 = arith.addf %145, %146 : vector<2x256x32xf32>
    %cst_141 = arith.constant 0.000000e+00 : f32
    %148 = vector.broadcast %cst_141 : f32 to vector<2x256x32xf32>
    %149 = arith.maximumf %147, %148 : vector<2x256x32xf32>
    %c0_142 = arith.constant 0 : index
    %c0_143 = arith.constant 0 : index
    %c0_144 = arith.constant 0 : index
    %150 = vector.load %arg12[%c0_142, %c0_143, %c0_144] : memref<2x256x32xf32, #tpu.memory_space<vmem>>, vector<2x256x32xf32>
    tpu.vector_store %arg12[%c0_142, %c0_143, %c0_144], %149 {strides = array<i32>} : memref<2x256x32xf32, #tpu.memory_space<vmem>>, vector<2x256x32xf32>,
    return
  }
}

</mosaic_0001>

<llo_original>
// kernel: se_basic_block_forward.1
$region0: #{se_basic_block_forward.1}
  #allocation0 [shape = 'u32[]', space=smem, size = 0x4, offset = 0x4, fixed_abs, tag = 'smem constant byte address 0x4 - core index']
  #allocation1 [shape = 'u32[144,128]{1,0:T(1,128)}', space=vmem, size = 0x12000, scoped, tag = 'internal scratch']
  #allocation2 [shape = 'f32[2,18,18,16]{3,2,1,0:T(8,128)}', space=vmem, size = 0x6c000, scoped, tag = 'scratch operand']
  #allocation3 [shape = 'f32[2,18,18,32]{3,2,1,0:T(8,128)}', space=vmem, size = 0x6c000, scoped, tag = 'scratch operand']
  %s0 = inlined_call_operand.vmem [shape: f32[2,16,16,16], index: 0, kind: input, shape index: {}]
  %s1 = inlined_call_operand.vmem [shape: bf16[144,32], index: 1, kind: input, shape index: {}]
  %s2 = inlined_call_operand.vmem [shape: bf16[288,32], index: 2, kind: input, shape index: {}]
  %s3 = inlined_call_operand.vmem [shape: bf16[16,32], index: 3, kind: input, shape index: {}]
  %s4 = inlined_call_operand.vmem [shape: f32[1,32], index: 4, kind: input, shape index: {}]
  %s5 = inlined_call_operand.vmem [shape: f32[1,32], index: 5, kind: input, shape index: {}]
  %s6 = inlined_call_operand.vmem [shape: f32[1,32], index: 6, kind: input, shape index: {}]
  %s7 = inlined_call_operand.vmem [shape: f32[1,32], index: 7, kind: input, shape index: {}]
  %s8 = inlined_call_operand.vmem [shape: f32[1,32], index: 8, kind: input, shape index: {}]
  %s9 = inlined_call_operand.vmem [shape: f32[1,32], index: 9, kind: input, shape index: {}]
  %s10 = inlined_call_operand.vmem [shape: f32[32,2], index: 10, kind: input, shape index: {}]
  %s11 = inlined_call_operand.vmem [shape: f32[2,32], index: 11, kind: input, shape index: {}]
  %s12 = inlined_call_operand.hbm [shape: f32[2,256,32], index: 12, kind: output, shape index: {}]
  %s13 = sld [smem:[#allocation0]]
  $region58: #{se_basic_block_forward.1} parent=0
    _
  %s15 = ssub.s32 1, %s13
  %s16 = scalar_select 0, %s15, %s13
  $region1: #{se_basic_block_forward.1} parent=0
    #allocation4 [shape = 'u8[262144]{0}', space=vmem, size = 0x40000, scoped, tag = 'output window, operand 0, single buffered']
    #allocation5 [shape = 's32[1]{0}', space=sflag, size = 0x4, scoped, tag = 'scoped memory for se_basic_block_forward.1']
    %17 = vsyncpa [#allocation5], 0
    // Predicated region
    $region2: #{se_basic_block_forward.1} parent=1 // pred_check
      _
    $region3: #{se_basic_block_forward.1} parent=1 // pred_check_branch
      %19 = sbr.rel (0) target = $region5
    $region4: #{se_basic_block_forward.1} parent=1 // pred_region
      _
    $region5: #{se_basic_block_forward.1} parent=1 // pred_fallthru
      _
    // Predicated region
    $region6: #{se_basic_block_forward.1} parent=1 // pred_check
      _
    $region7: #{se_basic_block_forward.1} parent=1 // pred_check_branch
      %21 = sbr.rel (0) target = $region9
    $region8: #{se_basic_block_forward.1} parent=1 // pred_region
      _
    $region9: #{se_basic_block_forward.1} parent=1 // pred_fallthru
      _
    // Predicated region
    $region10: #{se_basic_block_forward.1} parent=1 // pred_check
      _
    $region11: #{se_basic_block_forward.1} parent=1 // pred_check_branch
      %23 = sbr.rel (0) target = $region13
    $region12: #{se_basic_block_forward.1} parent=1 // pred_region
      _
    $region13: #{se_basic_block_forward.1} parent=1 // pred_fallthru
      _
    // Predicated region
    $region14: #{se_basic_block_forward.1} parent=1 // pred_check
      _
    $region15: #{se_basic_block_forward.1} parent=1 // pred_check_branch
      %25 = sbr.rel (0) target = $region17
    $region16: #{se_basic_block_forward.1} parent=1 // pred_region
      _
    $region17: #{se_basic_block_forward.1} parent=1 // pred_fallthru
      _
    // Predicated region
    $region18: #{se_basic_block_forward.1} parent=1 // pred_check
      _
    $region19: #{se_basic_block_forward.1} parent=1 // pred_check_branch
      %27 = sbr.rel (0) target = $region21
    $region20: #{se_basic_block_forward.1} parent=1 // pred_region
      _
    $region21: #{se_basic_block_forward.1} parent=1 // pred_fallthru
      _
    // Predicated region
    $region22: #{se_basic_block_forward.1} parent=1 // pred_check
      _
    $region23: #{se_basic_block_forward.1} parent=1 // pred_check_branch
      %29 = sbr.rel (0) target = $region25
    $region24: #{se_basic_block_forward.1} parent=1 // pred_region
      _
    $region25: #{se_basic_block_forward.1} parent=1 // pred_fallthru
      _
    // Predicated region
    $region26: #{se_basic_block_forward.1} parent=1 // pred_check
      _
    $region27: #{se_basic_block_forward.1} parent=1 // pred_check_branch
      %31 = sbr.rel (0) target = $region29
    $region28: #{se_basic_block_forward.1} parent=1 // pred_region
      _
    $region29: #{se_basic_block_forward.1} parent=1 // pred_fallthru
      _
    // Predicated region
    $region30: #{se_basic_block_forward.1} parent=1 // pred_check
      _
    $region31: #{se_basic_block_forward.1} parent=1 // pred_check_branch
      %33 = sbr.rel (0) target = $region33
    $region32: #{se_basic_block_forward.1} parent=1 // pred_region
      _
    $region33: #{se_basic_block_forward.1} parent=1 // pred_fallthru
      _
    // Predicated region
    $region34: #{se_basic_block_forward.1} parent=1 // pred_check
      _
    $region35: #{se_basic_block_forward.1} parent=1 // pred_check_branch
      %35 = sbr.rel (0) target = $region37
    $region36: #{se_basic_block_forward.1} parent=1 // pred_region
      _
    $region37: #{se_basic_block_forward.1} parent=1 // pred_fallthru
      _
    // Predicated region
    $region38: #{se_basic_block_forward.1} parent=1 // pred_check
      _
    $region39: #{se_basic_block_forward.1} parent=1 // pred_check_branch
      %37 = sbr.rel (0) target = $region41
    $region40: #{se_basic_block_forward.1} parent=1 // pred_region
      _
    $region41: #{se_basic_block_forward.1} parent=1 // pred_fallthru
      _
    // Predicated region
    $region42: #{se_basic_block_forward.1} parent=1 // pred_check
      _
    $region43: #{se_basic_block_forward.1} parent=1 // pred_check_branch
      %39 = sbr.rel (0) target = $region45
    $region44: #{se_basic_block_forward.1} parent=1 // pred_region
      _
    $region45: #{se_basic_block_forward.1} parent=1 // pred_fallthru
      _
    // Predicated region
    $region46: #{se_basic_block_forward.1} parent=1 // pred_check
      _
    $region47: #{se_basic_block_forward.1} parent=1 // pred_check_branch
      %41 = sbr.rel (0) target = $region49
    $region48: #{se_basic_block_forward.1} parent=1 // pred_region
      _
    $region49: #{se_basic_block_forward.1} parent=1 // pred_fallthru
      _
    %vm43 = vcmask 130048
    %44 = vst.msk [vmem:[#allocation2] sm:$0xff] %vm43, 0.0
    %45 = vst.msk [vmem:[#allocation2 + $0x8] sm:$0xff] %vm43, 0.0
    %vm46 = vcmask 123904
    %47 = vst.msk [vmem:[#allocation2 + $0x10] sm:$0x3] %vm46, 0.0
    %48 = vst.msk [vmem:[#allocation2 + $0x18] sm:$0xff] %vm43, 0.0
    %49 = vst.msk [vmem:[#allocation2 + $0x20] sm:$0xff] %vm43, 0.0
    %50 = vst.msk [vmem:[#allocation2 + $0x28] sm:$0x3] %vm46, 0.0
    %51 = vst.msk [vmem:[#allocation2 + $0x30] sm:$0xff] %vm43, 0.0
    %52 = vst.msk [vmem:[#allocation2 + $0x38] sm:$0xff] %vm43, 0.0
    %53 = vst.msk [vmem:[#allocation2 + $0x40] sm:$0x3] %vm46, 0.0
    %54 = vst.msk [vmem:[#allocation2 + $0x48] sm:$0xff] %vm43, 0.0
    %55 = vst.msk [vmem:[#allocation2 + $0x50] sm:$0xff] %vm43, 0.0
    %56 = vst.msk [vmem:[#allocation2 + $0x58] sm:$0x3] %vm46, 0.0
    %57 = vst.msk [vmem:[#allocation2 + $0x60] sm:$0xff] %vm43, 0.0
    %58 = vst.msk [vmem:[#allocation2 + $0x68] sm:$0xff] %vm43, 0.0
    %59 = vst.msk [vmem:[#allocation2 + $0x70] sm:$0x3] %vm46, 0.0
    %60 = vst.msk [vmem:[#allocation2 + $0x78] sm:$0xff] %vm43, 0.0
    %61 = vst.msk [vmem:[#allocation2 + $0x80] sm:$0xff] %vm43, 0.0
    %62 = vst.msk [vmem:[#allocation2 + $0x88] sm:$0x3] %vm46, 0.0
    %63 = vst.msk [vmem:[#allocation2 + $0x90] sm:$0xff] %vm43, 0.0
    %64 = vst.msk [vmem:[#allocation2 + $0x98] sm:$0xff] %vm43, 0.0
    %65 = vst.msk [vmem:[#allocation2 + $0xa0] sm:$0x3] %vm46, 0.0
    %66 = vst.msk [vmem:[#allocation2 + $0xa8] sm:$0xff] %vm43, 0.0
    %67 = vst.msk [vmem:[#allocation2 + $0xb0] sm:$0xff] %vm43, 0.0
    %68 = vst.msk [vmem:[#allocation2 + $0xb8] sm:$0x3] %vm46, 0.0
    %69 = vst.msk [vmem:[#allocation2 + $0xc0] sm:$0xff] %vm43, 0.0
    %70 = vst.msk [vmem:[#allocation2 + $0xc8] sm:$0xff] %vm43, 0.0
    %71 = vst.msk [vmem:[#allocation2 + $0xd0] sm:$0x3] %vm46, 0.0
    %72 = vst.msk [vmem:[#allocation2 + $0xd8] sm:$0xff] %vm43, 0.0
    %73 = vst.msk [vmem:[#allocation2 + $0xe0] sm:$0xff] %vm43, 0.0
    %74 = vst.msk [vmem:[#allocation2 + $0xe8] sm:$0x3] %vm46, 0.0
    %75 = vst.msk [vmem:[#allocation2 + $0xf0] sm:$0xff] %vm43, 0.0
    %76 = vst.msk [vmem:[#allocation2 + $0xf8] sm:$0xff] %vm43, 0.0
    %77 = vst.msk [vmem:[#allocation2 + $0x100] sm:$0x3] %vm46, 0.0
    %78 = vst.msk [vmem:[#allocation2 + $0x108] sm:$0xff] %vm43, 0.0
    %79 = vst.msk [vmem:[#allocation2 + $0x110] sm:$0xff] %vm43, 0.0
    %80 = vst.msk [vmem:[#allocation2 + $0x118] sm:$0x3] %vm46, 0.0
    %81 = vst.msk [vmem:[#allocation2 + $0x120] sm:$0xff] %vm43, 0.0
    %82 = vst.msk [vmem:[#allocation2 + $0x128] sm:$0xff] %vm43, 0.0
    %83 = vst.msk [vmem:[#allocation2 + $0x130] sm:$0x3] %vm46, 0.0
    %84 = vst.msk [vmem:[#allocation2 + $0x138] sm:$0xff] %vm43, 0.0
    %85 = vst.msk [vmem:[#allocation2 + $0x140] sm:$0xff] %vm43, 0.0
    %86 = vst.msk [vmem:[#allocation2 + $0x148] sm:$0x3] %vm46, 0.0
    %87 = vst.msk [vmem:[#allocation2 + $0x150] sm:$0xff] %vm43, 0.0
    %88 = vst.msk [vmem:[#allocation2 + $0x158] sm:$0xff] %vm43, 0.0
    %89 = vst.msk [vmem:[#allocation2 + $0x160] sm:$0x3] %vm46, 0.0
    %90 = vst.msk [vmem:[#allocation2 + $0x168] sm:$0xff] %vm43, 0.0
    %91 = vst.msk [vmem:[#allocation2 + $0x170] sm:$0xff] %vm43, 0.0
    %92 = vst.msk [vmem:[#allocation2 + $0x178] sm:$0x3] %vm46, 0.0
    %93 = vst.msk [vmem:[#allocation2 + $0x180] sm:$0xff] %vm43, 0.0
    %94 = vst.msk [vmem:[#allocation2 + $0x188] sm:$0xff] %vm43, 0.0
    %95 = vst.msk [vmem:[#allocation2 + $0x190] sm:$0x3] %vm46, 0.0
    %96 = vst.msk [vmem:[#allocation2 + $0x198] sm:$0xff] %vm43, 0.0
    %97 = vst.msk [vmem:[#allocation2 + $0x1a0] sm:$0xff] %vm43, 0.0
    %98 = vst.msk [vmem:[#allocation2 + $0x1a8] sm:$0x3] %vm46, 0.0
    %99 = vst.msk [vmem:[#allocation2 + $0x1b0] sm:$0xff] %vm43, 0.0
    %100 = vst.msk [vmem:[#allocation2 + $0x1b8] sm:$0xff] %vm43, 0.0
    %101 = vst.msk [vmem:[#allocation2 + $0x1c0] sm:$0x3] %vm46, 0.0
    %102 = vst.msk [vmem:[#allocation2 + $0x1c8] sm:$0xff] %vm43, 0.0
    %103 = vst.msk [vmem:[#allocation2 + $0x1d0] sm:$0xff] %vm43, 0.0
    %104 = vst.msk [vmem:[#allocation2 + $0x1d8] sm:$0x3] %vm46, 0.0
    %105 = vst.msk [vmem:[#allocation2 + $0x1e0] sm:$0xff] %vm43, 0.0
    %106 = vst.msk [vmem:[#allocation2 + $0x1e8] sm:$0xff] %vm43, 0.0
    %107 = vst.msk [vmem:[#allocation2 + $0x1f0] sm:$0x3] %vm46, 0.0
    %108 = vst.msk [vmem:[#allocation2 + $0x1f8] sm:$0xff] %vm43, 0.0
    %109 = vst.msk [vmem:[#allocation2 + $0x200] sm:$0xff] %vm43, 0.0
    %110 = vst.msk [vmem:[#allocation2 + $0x208] sm:$0x3] %vm46, 0.0
    %111 = vst.msk [vmem:[#allocation2 + $0x210] sm:$0xff] %vm43, 0.0
    %112 = vst.msk [vmem:[#allocation2 + $0x218] sm:$0xff] %vm43, 0.0
    %113 = vst.msk [vmem:[#allocation2 + $0x220] sm:$0x3] %vm46, 0.0
    %114 = vst.msk [vmem:[#allocation2 + $0x228] sm:$0xff] %vm43, 0.0
    %115 = vst.msk [vmem:[#allocation2 + $0x230] sm:$0xff] %vm43, 0.0
    %116 = vst.msk [vmem:[#allocation2 + $0x238] sm:$0x3] %vm46, 0.0
    %117 = vst.msk [vmem:[#allocation2 + $0x240] sm:$0xff] %vm43, 0.0
    %118 = vst.msk [vmem:[#allocation2 + $0x248] sm:$0xff] %vm43, 0.0
    %119 = vst.msk [vmem:[#allocation2 + $0x250] sm:$0x3] %vm46, 0.0
    %120 = vst.msk [vmem:[#allocation2 + $0x258] sm:$0xff] %vm43, 0.0
    %121 = vst.msk [vmem:[#allocation2 + $0x260] sm:$0xff] %vm43, 0.0
    %122 = vst.msk [vmem:[#allocation2 + $0x268] sm:$0x3] %vm46, 0.0
    %123 = vst.msk [vmem:[#allocation2 + $0x270] sm:$0xff] %vm43, 0.0
    %124 = vst.msk [vmem:[#allocation2 + $0x278] sm:$0xff] %vm43, 0.0
    %125 = vst.msk [vmem:[#allocation2 + $0x280] sm:$0x3] %vm46, 0.0
    %126 = vst.msk [vmem:[#allocation2 + $0x288] sm:$0xff] %vm43, 0.0
    %127 = vst.msk [vmem:[#allocation2 + $0x290] sm:$0xff] %vm43, 0.0
    %128 = vst.msk [vmem:[#allocation2 + $0x298] sm:$0x3] %vm46, 0.0
    %129 = vst.msk [vmem:[#allocation2 + $0x2a0] sm:$0xff] %vm43, 0.0
    %130 = vst.msk [vmem:[#allocation2 + $0x2a8] sm:$0xff] %vm43, 0.0
    %131 = vst.msk [vmem:[#allocation2 + $0x2b0] sm:$0x3] %vm46, 0.0
    %132 = vst.msk [vmem:[#allocation2 + $0x2b8] sm:$0xff] %vm43, 0.0
    %133 = vst.msk [vmem:[#allocation2 + $0x2c0] sm:$0xff] %vm43, 0.0
    %134 = vst.msk [vmem:[#allocation2 + $0x2c8] sm:$0x3] %vm46, 0.0
    %135 = vst.msk [vmem:[#allocation2 + $0x2d0] sm:$0xff] %vm43, 0.0
    %136 = vst.msk [vmem:[#allocation2 + $0x2d8] sm:$0xff] %vm43, 0.0
    %137 = vst.msk [vmem:[#allocation2 + $0x2e0] sm:$0x3] %vm46, 0.0
    %138 = vst.msk [vmem:[#allocation2 + $0x2e8] sm:$0xff] %vm43, 0.0
    %139 = vst.msk [vmem:[#allocation2 + $0x2f0] sm:$0xff] %vm43, 0.0
    %140 = vst.msk [vmem:[#allocation2 + $0x2f8] sm:$0x3] %vm46, 0.0
    %141 = vst.msk [vmem:[#allocation2 + $0x300] sm:$0xff] %vm43, 0.0
    %142 = vst.msk [vmem:[#allocation2 + $0x308] sm:$0xff] %vm43, 0.0
    %143 = vst.msk [vmem:[#allocation2 + $0x310] sm:$0x3] %vm46, 0.0
    %144 = vst.msk [vmem:[#allocation2 + $0x318] sm:$0xff] %vm43, 0.0
    %145 = vst.msk [vmem:[#allocation2 + $0x320] sm:$0xff] %vm43, 0.0
    %146 = vst.msk [vmem:[#allocation2 + $0x328] sm:$0x3] %vm46, 0.0
    %147 = vst.msk [vmem:[#allocation2 + $0x330] sm:$0xff] %vm43, 0.0
    %148 = vst.msk [vmem:[#allocation2 + $0x338] sm:$0xff] %vm43, 0.0
    %149 = vst.msk [vmem:[#allocation2 + $0x340] sm:$0x3] %vm46, 0.0
    %150 = vst.msk [vmem:[#allocation2 + $0x348] sm:$0xff] %vm43, 0.0
    %151 = vst.msk [vmem:[#allocation2 + $0x350] sm:$0xff] %vm43, 0.0
    %152 = vst.msk [vmem:[#allocation2 + $0x358] sm:$0x3] %vm46, 0.0
    %v153 = vld [vmem:[%s0] sm:$0xff]
    %v154 = vld [vmem:[%s0 + $0x8] sm:$0xff]
    %v155 = vld [vmem:[%s0 + $0x10] sm:$0xff]
    %v156 = vld [vmem:[%s0 + $0x18] sm:$0xff]
    %v157 = vld [vmem:[%s0 + $0x20] sm:$0xff]
    %v158 = vld [vmem:[%s0 + $0x28] sm:$0xff]
    %v159 = vld [vmem:[%s0 + $0x30] sm:$0xff]
    %v160 = vld [vmem:[%s0 + $0x38] sm:$0xff]
    %v161 = vld [vmem:[%s0 + $0x40] sm:$0xff]
    %v162 = vld [vmem:[%s0 + $0x48] sm:$0xff]
    %v163 = vld [vmem:[%s0 + $0x50] sm:$0xff]
    %v164 = vld [vmem:[%s0 + $0x58] sm:$0xff]
    %v165 = vld [vmem:[%s0 + $0x60] sm:$0xff]
    %v166 = vld [vmem:[%s0 + $0x68] sm:$0xff]
    %v167 = vld [vmem:[%s0 + $0x70] sm:$0xff]
    %v168 = vld [vmem:[%s0 + $0x78] sm:$0xff]
    %v169 = vld [vmem:[%s0 + $0x80] sm:$0xff]
    %v170 = vld [vmem:[%s0 + $0x88] sm:$0xff]
    %v171 = vld [vmem:[%s0 + $0x90] sm:$0xff]
    %v172 = vld [vmem:[%s0 + $0x98] sm:$0xff]
    %v173 = vld [vmem:[%s0 + $0xa0] sm:$0xff]
    %v174 = vld [vmem:[%s0 + $0xa8] sm:$0xff]
    %v175 = vld [vmem:[%s0 + $0xb0] sm:$0xff]
    %v176 = vld [vmem:[%s0 + $0xb8] sm:$0xff]
    %v177 = vld [vmem:[%s0 + $0xc0] sm:$0xff]
    %v178 = vld [vmem:[%s0 + $0xc8] sm:$0xff]
    %v179 = vld [vmem:[%s0 + $0xd0] sm:$0xff]
    %v180 = vld [vmem:[%s0 + $0xd8] sm:$0xff]
    %v181 = vld [vmem:[%s0 + $0xe0] sm:$0xff]
    %v182 = vld [vmem:[%s0 + $0xe8] sm:$0xff]
    %v183 = vld [vmem:[%s0 + $0xf0] sm:$0xff]
    %v184 = vld [vmem:[%s0 + $0xf8] sm:$0xff]
    %v185 = vld [vmem:[%s0 + $0x100] sm:$0xff]
    %v186 = vld [vmem:[%s0 + $0x108] sm:$0xff]
    %v187 = vld [vmem:[%s0 + $0x110] sm:$0xff]
    %v188 = vld [vmem:[%s0 + $0x118] sm:$0xff]
    %v189 = vld [vmem:[%s0 + $0x120] sm:$0xff]
    %v190 = vld [vmem:[%s0 + $0x128] sm:$0xff]
    %v191 = vld [vmem:[%s0 + $0x130] sm:$0xff]
    %v192 = vld [vmem:[%s0 + $0x138] sm:$0xff]
    %v193 = vld [vmem:[%s0 + $0x140] sm:$0xff]
    %v194 = vld [vmem:[%s0 + $0x148] sm:$0xff]
    %v195 = vld [vmem:[%s0 + $0x150] sm:$0xff]
    %v196 = vld [vmem:[%s0 + $0x158] sm:$0xff]
    %v197 = vld [vmem:[%s0 + $0x160] sm:$0xff]
    %v198 = vld [vmem:[%s0 + $0x168] sm:$0xff]
    %v199 = vld [vmem:[%s0 + $0x170] sm:$0xff]
    %v200 = vld [vmem:[%s0 + $0x178] sm:$0xff]
    %v201 = vld [vmem:[%s0 + $0x180] sm:$0xff]
    %v202 = vld [vmem:[%s0 + $0x188] sm:$0xff]
    %v203 = vld [vmem:[%s0 + $0x190] sm:$0xff]
    %v204 = vld [vmem:[%s0 + $0x198] sm:$0xff]
    %v205 = vld [vmem:[%s0 + $0x1a0] sm:$0xff]
    %v206 = vld [vmem:[%s0 + $0x1a8] sm:$0xff]
    %v207 = vld [vmem:[%s0 + $0x1b0] sm:$0xff]
    %v208 = vld [vmem:[%s0 + $0x1b8] sm:$0xff]
    %v209 = vld [vmem:[%s0 + $0x1c0] sm:$0xff]
    %v210 = vld [vmem:[%s0 + $0x1c8] sm:$0xff]
    %v211 = vld [vmem:[%s0 + $0x1d0] sm:$0xff]
    %v212 = vld [vmem:[%s0 + $0x1d8] sm:$0xff]
    %v213 = vld [vmem:[%s0 + $0x1e0] sm:$0xff]
    %v214 = vld [vmem:[%s0 + $0x1e8] sm:$0xff]
    %v215 = vld [vmem:[%s0 + $0x1f0] sm:$0xff]
    %v216 = vld [vmem:[%s0 + $0x1f8] sm:$0xff]
    %s217 = scalar_lea.vmem [#allocation2], 24
    %218 = vst.msk [vmem:[%s217 + $0x1] sm:$0xff] %vm43, %v153
    %219 = vst.msk [vmem:[%s217 + $0x9] sm:$0xff] %vm43, %v154
    %220 = vst.msk [vmem:[%s217 + $0x19] sm:$0xff] %vm43, %v155
    %221 = vst.msk [vmem:[%s217 + $0x21] sm:$0xff] %vm43, %v156
    %222 = vst.msk [vmem:[%s217 + $0x31] sm:$0xff] %vm43, %v157
    %223 = vst.msk [vmem:[%s217 + $0x39] sm:$0xff] %vm43, %v158
    %224 = vst.msk [vmem:[%s217 + $0x49] sm:$0xff] %vm43, %v159
    %225 = vst.msk [vmem:[%s217 + $0x51] sm:$0xff] %vm43, %v160
    %226 = vst.msk [vmem:[%s217 + $0x61] sm:$0xff] %vm43, %v161
    %227 = vst.msk [vmem:[%s217 + $0x69] sm:$0xff] %vm43, %v162
    %228 = vst.msk [vmem:[%s217 + $0x79] sm:$0xff] %vm43, %v163
    %229 = vst.msk [vmem:[%s217 + $0x81] sm:$0xff] %vm43, %v164
    %230 = vst.msk [vmem:[%s217 + $0x91] sm:$0xff] %vm43, %v165
    %231 = vst.msk [vmem:[%s217 + $0x99] sm:$0xff] %vm43, %v166
    %232 = vst.msk [vmem:[%s217 + $0xa9] sm:$0xff] %vm43, %v167
    %233 = vst.msk [vmem:[%s217 + $0xb1] sm:$0xff] %vm43, %v168
    %234 = vst.msk [vmem:[%s217 + $0xc1] sm:$0xff] %vm43, %v169
    %235 = vst.msk [vmem:[%s217 + $0xc9] sm:$0xff] %vm43, %v170
    %236 = vst.msk [vmem:[%s217 + $0xd9] sm:$0xff] %vm43, %v171
    %237 = vst.msk [vmem:[%s217 + $0xe1] sm:$0xff] %vm43, %v172
    %238 = vst.msk [vmem:[%s217 + $0xf1] sm:$0xff] %vm43, %v173
    %239 = vst.msk [vmem:[%s217 + $0xf9] sm:$0xff] %vm43, %v174
    %240 = vst.msk [vmem:[%s217 + $0x109] sm:$0xff] %vm43, %v175
    %241 = vst.msk [vmem:[%s217 + $0x111] sm:$0xff] %vm43, %v176
    %242 = vst.msk [vmem:[%s217 + $0x121] sm:$0xff] %vm43, %v177
    %243 = vst.msk [vmem:[%s217 + $0x129] sm:$0xff] %vm43, %v178
    %244 = vst.msk [vmem:[%s217 + $0x139] sm:$0xff] %vm43, %v179
    %245 = vst.msk [vmem:[%s217 + $0x141] sm:$0xff] %vm43, %v180
    %246 = vst.msk [vmem:[%s217 + $0x151] sm:$0xff] %vm43, %v181
    %247 = vst.msk [vmem:[%s217 + $0x159] sm:$0xff] %vm43, %v182
    %248 = vst.msk [vmem:[%s217 + $0x169] sm:$0xff] %vm43, %v183
    %249 = vst.msk [vmem:[%s217 + $0x171] sm:$0xff] %vm43, %v184
    %250 = vst.msk [vmem:[%s217 + $0x1b1] sm:$0xff] %vm43, %v185
    %251 = vst.msk [vmem:[%s217 + $0x1b9] sm:$0xff] %vm43, %v186
    %252 = vst.msk [vmem:[%s217 + $0x1c9] sm:$0xff] %vm43, %v187
    %253 = vst.msk [vmem:[%s217 + $0x1d1] sm:$0xff] %vm43, %v188
    %254 = vst.msk [vmem:[%s217 + $0x1e1] sm:$0xff] %vm43, %v189
    %255 = vst.msk [vmem:[%s217 + $0x1e9] sm:$0xff] %vm43, %v190
    %256 = vst.msk [vmem:[%s217 + $0x1f9] sm:$0xff] %vm43, %v191
    %257 = vst.msk [vmem:[%s217 + $0x201] sm:$0xff] %vm43, %v192
    %258 = vst.msk [vmem:[%s217 + $0x211] sm:$0xff] %vm43, %v193
    %259 = vst.msk [vmem:[%s217 + $0x219] sm:$0xff] %vm43, %v194
    %260 = vst.msk [vmem:[%s217 + $0x229] sm:$0xff] %vm43, %v195
    %261 = vst.msk [vmem:[%s217 + $0x231] sm:$0xff] %vm43, %v196
    %262 = vst.msk [vmem:[%s217 + $0x241] sm:$0xff] %vm43, %v197
    %263 = vst.msk [vmem:[%s217 + $0x249] sm:$0xff] %vm43, %v198
    %264 = vst.msk [vmem:[%s217 + $0x259] sm:$0xff] %vm43, %v199
    %265 = vst.msk [vmem:[%s217 + $0x261] sm:$0xff] %vm43, %v200
    %266 = vst.msk [vmem:[%s217 + $0x271] sm:$0xff] %vm43, %v201
    %267 = vst.msk [vmem:[%s217 + $0x279] sm:$0xff] %vm43, %v202
    %268 = vst.msk [vmem:[%s217 + $0x289] sm:$0xff] %vm43, %v203
    %269 = vst.msk [vmem:[%s217 + $0x291] sm:$0xff] %vm43, %v204
    %270 = vst.msk [vmem:[%s217 + $0x2a1] sm:$0xff] %vm43, %v205
    %271 = vst.msk [vmem:[%s217 + $0x2a9] sm:$0xff] %vm43, %v206
    %272 = vst.msk [vmem:[%s217 + $0x2b9] sm:$0xff] %vm43, %v207
    %273 = vst.msk [vmem:[%s217 + $0x2c1] sm:$0xff] %vm43, %v208
    %274 = vst.msk [vmem:[%s217 + $0x2d1] sm:$0xff] %vm43, %v209
    %275 = vst.msk [vmem:[%s217 + $0x2d9] sm:$0xff] %vm43, %v210
    %276 = vst.msk [vmem:[%s217 + $0x2e9] sm:$0xff] %vm43, %v211
    %277 = vst.msk [vmem:[%s217 + $0x2f1] sm:$0xff] %vm43, %v212
    %278 = vst.msk [vmem:[%s217 + $0x301] sm:$0xff] %vm43, %v213
    %279 = vst.msk [vmem:[%s217 + $0x309] sm:$0xff] %vm43, %v214
    %280 = vst.msk [vmem:[%s217 + $0x319] sm:$0xff] %vm43, %v215
    %281 = vst.msk [vmem:[%s217 + $0x321] sm:$0xff] %vm43, %v216
    %v282 = vld [vmem:[%s0] sm:$0xff]
    %v283 = vld [vmem:[%s0 + $0x8] sm:$0xff]
    %v284 = vld [vmem:[%s0 + $0x10] sm:$0xff]
    %v285 = vld [vmem:[%s0 + $0x18] sm:$0xff]
    %v286 = vld [vmem:[%s0 + $0x20] sm:$0xff]
    %v287 = vld [vmem:[%s0 + $0x28] sm:$0xff]
    %v288 = vld [vmem:[%s0 + $0x30] sm:$0xff]
    %v289 = vld [vmem:[%s0 + $0x38] sm:$0xff]
    %v290 = vld [vmem:[%s0 + $0x40] sm:$0xff]
    %v291 = vld [vmem:[%s0 + $0x48] sm:$0xff]
    %v292 = vld [vmem:[%s0 + $0x50] sm:$0xff]
    %v293 = vld [vmem:[%s0 + $0x58] sm:$0xff]
    %v294 = vld [vmem:[%s0 + $0x60] sm:$0xff]
    %v295 = vld [vmem:[%s0 + $0x68] sm:$0xff]
    %v296 = vld [vmem:[%s0 + $0x70] sm:$0xff]
    %v297 = vld [vmem:[%s0 + $0x78] sm:$0xff]
    %v298 = vld [vmem:[%s0 + $0x80] sm:$0xff]
    %v299 = vld [vmem:[%s0 + $0x88] sm:$0xff]
    %v300 = vld [vmem:[%s0 + $0x90] sm:$0xff]
    %v301 = vld [vmem:[%s0 + $0x98] sm:$0xff]
    %v302 = vld [vmem:[%s0 + $0xa0] sm:$0xff]
    %v303 = vld [vmem:[%s0 + $0xa8] sm:$0xff]
    %v304 = vld [vmem:[%s0 + $0xb0] sm:$0xff]
    %v305 = vld [vmem:[%s0 + $0xb8] sm:$0xff]
    %v306 = vld [vmem:[%s0 + $0xc0] sm:$0xff]
    %v307 = vld [vmem:[%s0 + $0xc8] sm:$0xff]
    %v308 = vld [vmem:[%s0 + $0xd0] sm:$0xff]
    %v309 = vld [vmem:[%s0 + $0xd8] sm:$0xff]
    %v310 = vld [vmem:[%s0 + $0xe0] sm:$0xff]
    %v311 = vld [vmem:[%s0 + $0xe8] sm:$0xff]
    %v312 = vld [vmem:[%s0 + $0xf0] sm:$0xff]
    %v313 = vld [vmem:[%s0 + $0xf8] sm:$0xff]
    %v314 = vld [vmem:[%s0 + $0x100] sm:$0xff]
    %v315 = vld [vmem:[%s0 + $0x108] sm:$0xff]
    %v316 = vld [vmem:[%s0 + $0x110] sm:$0xff]
    %v317 = vld [vmem:[%s0 + $0x118] sm:$0xff]
    %v318 = vld [vmem:[%s0 + $0x120] sm:$0xff]
    %v319 = vld [vmem:[%s0 + $0x128] sm:$0xff]
    %v320 = vld [vmem:[%s0 + $0x130] sm:$0xff]
    %v321 = vld [vmem:[%s0 + $0x138] sm:$0xff]
    %v322 = vld [vmem:[%s0 + $0x140] sm:$0xff]
    %v323 = vld [vmem:[%s0 + $0x148] sm:$0xff]
    %v324 = vld [vmem:[%s0 + $0x150] sm:$0xff]
    %v325 = vld [vmem:[%s0 + $0x158] sm:$0xff]
    %v326 = vld [vmem:[%s0 + $0x160] sm:$0xff]
    %v327 = vld [vmem:[%s0 + $0x168] sm:$0xff]
    %v328 = vld [vmem:[%s0 + $0x170] sm:$0xff]
    %v329 = vld [vmem:[%s0 + $0x178] sm:$0xff]
    %v330 = vld [vmem:[%s0 + $0x180] sm:$0xff]
    %v331 = vld [vmem:[%s0 + $0x188] sm:$0xff]
    %v332 = vld [vmem:[%s0 + $0x190] sm:$0xff]
    %v333 = vld [vmem:[%s0 + $0x198] sm:$0xff]
    %v334 = vld [vmem:[%s0 + $0x1a0] sm:$0xff]
    %v335 = vld [vmem:[%s0 + $0x1a8] sm:$0xff]
    %v336 = vld [vmem:[%s0 + $0x1b0] sm:$0xff]
    %v337 = vld [vmem:[%s0 + $0x1b8] sm:$0xff]
    %v338 = vld [vmem:[%s0 + $0x1c0] sm:$0xff]
    %v339 = vld [vmem:[%s0 + $0x1c8] sm:$0xff]
    %v340 = vld [vmem:[%s0 + $0x1d0] sm:$0xff]
    %v341 = vld [vmem:[%s0 + $0x1d8] sm:$0xff]
    %v342 = vld [vmem:[%s0 + $0x1e0] sm:$0xff]
    %v343 = vld [vmem:[%s0 + $0x1e8] sm:$0xff]
    %v344 = vld [vmem:[%s0 + $0x1f0] sm:$0xff]
    %v345 = vld [vmem:[%s0 + $0x1f8] sm:$0xff]
    %v346 = vpack.c.bf16 %v283, %v282
    %v347 = vpack.c.bf16 %v285, %v284
    %v348 = vpack.c.bf16 %v287, %v286
    %v349 = vpack.c.bf16 %v289, %v288
    %v350 = vpack.c.bf16 %v291, %v290
    %v351 = vpack.c.bf16 %v293, %v292
    %v352 = vpack.c.bf16 %v295, %v294
    %v353 = vpack.c.bf16 %v297, %v296
    %v354 = vpack.c.bf16 %v299, %v298
    %v355 = vpack.c.bf16 %v301, %v300
    %v356 = vpack.c.bf16 %v303, %v302
    %v357 = vpack.c.bf16 %v305, %v304
    %v358 = vpack.c.bf16 %v307, %v306
    %v359 = vpack.c.bf16 %v309, %v308
    %v360 = vpack.c.bf16 %v311, %v310
    %v361 = vpack.c.bf16 %v313, %v312
    %v362 = vpack.c.bf16 %v315, %v314
    %v363 = vpack.c.bf16 %v317, %v316
    %v364 = vpack.c.bf16 %v319, %v318
    %v365 = vpack.c.bf16 %v321, %v320
    %v366 = vpack.c.bf16 %v323, %v322
    %v367 = vpack.c.bf16 %v325, %v324
    %v368 = vpack.c.bf16 %v327, %v326
    %v369 = vpack.c.bf16 %v329, %v328
    %v370 = vpack.c.bf16 %v331, %v330
    %v371 = vpack.c.bf16 %v333, %v332
    %v372 = vpack.c.bf16 %v335, %v334
    %v373 = vpack.c.bf16 %v337, %v336
    %v374 = vpack.c.bf16 %v339, %v338
    %v375 = vpack.c.bf16 %v341, %v340
    %v376 = vpack.c.bf16 %v343, %v342
    %v377 = vpack.c.bf16 %v345, %v344
    %v378 = vld [vmem:[%s3] sm:$0xf]
    %v379 = vld [vmem:[%s3 + $0x4] sm:$0xf]
    %v382 = vunpack.c.l.b16 %v378
    %v383 = vunpack.c.l.b16 %v379
    %v384 = vpack.c.b16 %v383, %v382
    %v387 = vsel %vm43, %v346, 0
    %v390 = vsel %vm43, %v347, 0
    %v393 = vsel %vm43, %v348, 0
    %v396 = vsel %vm43, %v349, 0
    %v399 = vsel %vm43, %v350, 0
    %v402 = vsel %vm43, %v351, 0
    %v405 = vsel %vm43, %v352, 0
    %v408 = vsel %vm43, %v353, 0
    %v411 = vsel %vm43, %v354, 0
    %v414 = vsel %vm43, %v355, 0
    %v417 = vsel %vm43, %v356, 0
    %v420 = vsel %vm43, %v357, 0
    %v423 = vsel %vm43, %v358, 0
    %v426 = vsel %vm43, %v359, 0
    %v429 = vsel %vm43, %v360, 0
    %v432 = vsel %vm43, %v361, 0
    %v435 = vsel %vm43, %v362, 0
    %v438 = vsel %vm43, %v363, 0
    %v441 = vsel %vm43, %v364, 0
    %v444 = vsel %vm43, %v365, 0
    %v447 = vsel %vm43, %v366, 0
    %v450 = vsel %vm43, %v367, 0
    %v453 = vsel %vm43, %v368, 0
    %v456 = vsel %vm43, %v369, 0
    %v459 = vsel %vm43, %v370, 0
    %v462 = vsel %vm43, %v371, 0
    %v465 = vsel %vm43, %v372, 0
    %v468 = vsel %vm43, %v373, 0
    %v471 = vsel %vm43, %v374, 0
    %v474 = vsel %vm43, %v375, 0
    %v477 = vsel %vm43, %v376, 0
    %v480 = vsel %vm43, %v377, 0
    %482 = vmatprep.subr.bf16.mxu0 0
    %483 = vmatpush1.bf16.msra.mxu0 %v384
    %484 = vmatprep.subr.bf16.mxu0 0
    %485 = vmatpush1.bf16.msra.mxu0 0
    %486 = vmatprep.subr.bf16.mxu0 0
    %487 = vmatpush1.bf16.msra.mxu0 0
    %488 = vmatprep.subr.bf16.mxu0 0
    %489 = vmatpush1.bf16.msra.mxu0 0
    %490 = vmatprep.subr.bf16.mxu0 0
    %491 = vmatpush1.bf16.msra.mxu0 0
    %492 = vmatprep.subr.bf16.mxu0 0
    %493 = vmatpush1.bf16.msra.mxu0 0
    %494 = vmatprep.subr.bf16.mxu0 0
    %495 = vmatpush1.bf16.msra.mxu0 0
    %496 = vmatprep.subr.bf16.mxu0 0
    %497 = vmatpush1.bf16.msra.mxu0 0
    %498 = vmatprep.subr.bf16.mxu0 0
    %499 = vmatpush1.bf16.msra.mxu0 0
    %500 = vmatprep.subr.bf16.mxu0 0
    %501 = vmatpush1.bf16.msra.mxu0 0
    %502 = vmatprep.subr.bf16.mxu0 0
    %503 = vmatpush1.bf16.msra.mxu0 0
    %504 = vmatprep.subr.bf16.mxu0 0
    %505 = vmatpush1.bf16.msra.mxu0 0
    %506 = vmatprep.subr.bf16.mxu0 0
    %507 = vmatpush1.bf16.msra.mxu0 0
    %508 = vmatprep.subr.bf16.mxu0 0
    %509 = vmatpush1.bf16.msra.mxu0 0
    %510 = vmatprep.subr.bf16.mxu0 0
    %511 = vmatpush1.bf16.msra.mxu0 0
    %512 = vmatprep.subr.bf16.mxu0 0
    %513 = vmatpush1.bf16.msra.mxu0 0
    %514 = vmatprep.mubr.bf16.mxu0 0
    %515 = vmatmul.mubr.bf16.gmra.mrb[0].mxu0 %v387
    %v516 = vpop.f32.mrb[0].mxu0
    %v517 = vadd.f32 0.0, %v516
    %v518 = vpop.f32.mrb[0].mxu0
    %v519 = vpop.f32.mrb[0].mxu0
    %v520 = vadd.f32 0.0, %v519
    %v521 = vpop.f32.mrb[0].mxu0
    %522 = vmatprep.mubr.bf16.mxu0 0
    %523 = vmatmul.mubr.bf16.gmra.mrb[0].mxu0 %v390
    %v524 = vpop.f32.mrb[0].mxu0
    %v525 = vadd.f32 0.0, %v524
    %v526 = vpop.f32.mrb[0].mxu0
    %v527 = vpop.f32.mrb[0].mxu0
    %v528 = vadd.f32 0.0, %v527
    %v529 = vpop.f32.mrb[0].mxu0
    %530 = vmatprep.mubr.bf16.mxu0 0
    %531 = vmatmul.mubr.bf16.gmra.mrb[0].mxu0 %v393
    %v532 = vpop.f32.mrb[0].mxu0
    %v533 = vadd.f32 0.0, %v532
    %v534 = vpop.f32.mrb[0].mxu0
    %v535 = vpop.f32.mrb[0].mxu0
    %v536 = vadd.f32 0.0, %v535
    %v537 = vpop.f32.mrb[0].mxu0
    %538 = vmatprep.mubr.bf16.mxu0 0
    %539 = vmatmul.mubr.bf16.gmra.mrb[0].mxu0 %v396
    %v540 = vpop.f32.mrb[0].mxu0
    %v541 = vadd.f32 0.0, %v540
    %v542 = vpop.f32.mrb[0].mxu0
    %v543 = vpop.f32.mrb[0].mxu0
    %v544 = vadd.f32 0.0, %v543
    %v545 = vpop.f32.mrb[0].mxu0
    %546 = vmatprep.mubr.bf16.mxu0 0
    %547 = vmatmul.mubr.bf16.gmra.mrb[0].mxu0 %v399
    %v548 = vpop.f32.mrb[0].mxu0
    %v549 = vadd.f32 0.0, %v548
    %v550 = vpop.f32.mrb[0].mxu0
    %v551 = vpop.f32.mrb[0].mxu0
    %v552 = vadd.f32 0.0, %v551
    %v553 = vpop.f32.mrb[0].mxu0
    %554 = vmatprep.mubr.bf16.mxu0 0
    %555 = vmatmul.mubr.bf16.gmra.mrb[0].mxu0 %v402
    %v556 = vpop.f32.mrb[0].mxu0
    %v557 = vadd.f32 0.0, %v556
    %v558 = vpop.f32.mrb[0].mxu0
    %v559 = vpop.f32.mrb[0].mxu0
    %v560 = vadd.f32 0.0, %v559
    %v561 = vpop.f32.mrb[0].mxu0
    %562 = vmatprep.mubr.bf16.mxu0 0
    %563 = vmatmul.mubr.bf16.gmra.mrb[0].mxu0 %v405
    %v564 = vpop.f32.mrb[0].mxu0
    %v565 = vadd.f32 0.0, %v564
    %v566 = vpop.f32.mrb[0].mxu0
    %v567 = vpop.f32.mrb[0].mxu0
    %v568 = vadd.f32 0.0, %v567
    %v569 = vpop.f32.mrb[0].mxu0
    %570 = vmatprep.mubr.bf16.mxu0 0
    %571 = vmatmul.mubr.bf16.gmra.mrb[0].mxu0 %v408
    %v572 = vpop.f32.mrb[0].mxu0
    %v573 = vadd.f32 0.0, %v572
    %v574 = vpop.f32.mrb[0].mxu0
    %v575 = vpop.f32.mrb[0].mxu0
    %v576 = vadd.f32 0.0, %v575
    %v577 = vpop.f32.mrb[0].mxu0
    %578 = vmatprep.mubr.bf16.mxu0 0
    %579 = vmatmul.mubr.bf16.gmra.mrb[0].mxu0 %v411
    %v580 = vpop.f32.mrb[0].mxu0
    %v581 = vadd.f32 0.0, %v580
    %v582 = vpop.f32.mrb[0].mxu0
    %v583 = vpop.f32.mrb[0].mxu0
    %v584 = vadd.f32 0.0, %v583
    %v585 = vpop.f32.mrb[0].mxu0
    %586 = vmatprep.mubr.bf16.mxu0 0
    %587 = vmatmul.mubr.bf16.gmra.mrb[0].mxu0 %v414
    %v588 = vpop.f32.mrb[0].mxu0
    %v589 = vadd.f32 0.0, %v588
    %v590 = vpop.f32.mrb[0].mxu0
    %v591 = vpop.f32.mrb[0].mxu0
    %v592 = vadd.f32 0.0, %v591
    %v593 = vpop.f32.mrb[0].mxu0
    %594 = vmatprep.mubr.bf16.mxu0 0
    %595 = vmatmul.mubr.bf16.gmra.mrb[0].mxu0 %v417
    %v596 = vpop.f32.mrb[0].mxu0
    %v597 = vadd.f32 0.0, %v596
    %v598 = vpop.f32.mrb[0].mxu0
    %v599 = vpop.f32.mrb[0].mxu0
    %v600 = vadd.f32 0.0, %v599
    %v601 = vpop.f32.mrb[0].mxu0
    %602 = vmatprep.mubr.bf16.mxu0 0
    %603 = vmatmul.mubr.bf16.gmra.mrb[0].mxu0 %v420
    %v604 = vpop.f32.mrb[0].mxu0
    %v605 = vadd.f32 0.0, %v604
    %v606 = vpop.f32.mrb[0].mxu0
    %v607 = vpop.f32.mrb[0].mxu0
    %v608 = vadd.f32 0.0, %v607
    %v609 = vpop.f32.mrb[0].mxu0
    %610 = vmatprep.mubr.bf16.mxu0 0
    %611 = vmatmul.mubr.bf16.gmra.mrb[0].mxu0 %v423
    %v612 = vpop.f32.mrb[0].mxu0
    %v613 = vadd.f32 0.0, %v612
    %v614 = vpop.f32.mrb[0].mxu0
    %v615 = vpop.f32.mrb[0].mxu0
    %v616 = vadd.f32 0.0, %v615
    %v617 = vpop.f32.mrb[0].mxu0
    %618 = vmatprep.mubr.bf16.mxu0 0
    %619 = vmatmul.mubr.bf16.gmra.mrb[0].mxu0 %v426
    %v620 = vpop.f32.mrb[0].mxu0
    %v621 = vadd.f32 0.0, %v620
    %v622 = vpop.f32.mrb[0].mxu0
    %v623 = vpop.f32.mrb[0].mxu0
    %v624 = vadd.f32 0.0, %v623
    %v625 = vpop.f32.mrb[0].mxu0
    %626 = vmatprep.mubr.bf16.mxu0 0
    %627 = vmatmul.mubr.bf16.gmra.mrb[0].mxu0 %v429
    %v628 = vpop.f32.mrb[0].mxu0
    %v629 = vadd.f32 0.0, %v628
    %v630 = vpop.f32.mrb[0].mxu0
    %v631 = vpop.f32.mrb[0].mxu0
    %v632 = vadd.f32 0.0, %v631
    %v633 = vpop.f32.mrb[0].mxu0
    %634 = vmatprep.mubr.bf16.mxu0 0
    %635 = vmatmul.mubr.bf16.gmra.mrb[0].mxu0 %v432
    %v636 = vpop.f32.mrb[0].mxu0
    %v637 = vadd.f32 0.0, %v636
    %v638 = vpop.f32.mrb[0].mxu0
    %v639 = vpop.f32.mrb[0].mxu0
    %v640 = vadd.f32 0.0, %v639
    %v641 = vpop.f32.mrb[0].mxu0
    %642 = vmatprep.mubr.bf16.mxu0 0
    %643 = vmatmul.mubr.bf16.gmra.mrb[0].mxu0 %v435
    %v644 = vpop.f32.mrb[0].mxu0
    %v645 = vadd.f32 0.0, %v644
    %v646 = vpop.f32.mrb[0].mxu0
    %v647 = vpop.f32.mrb[0].mxu0
    %v648 = vadd.f32 0.0, %v647
    %v649 = vpop.f32.mrb[0].mxu0
    %650 = vmatprep.mubr.bf16.mxu0 0
    %651 = vmatmul.mubr.bf16.gmra.mrb[0].mxu0 %v438
    %v652 = vpop.f32.mrb[0].mxu0
    %v653 = vadd.f32 0.0, %v652
    %v654 = vpop.f32.mrb[0].mxu0
    %v655 = vpop.f32.mrb[0].mxu0
    %v656 = vadd.f32 0.0, %v655
    %v657 = vpop.f32.mrb[0].mxu0
    %658 = vmatprep.mubr.bf16.mxu0 0
    %659 = vmatmul.mubr.bf16.gmra.mrb[0].mxu0 %v441
    %v660 = vpop.f32.mrb[0].mxu0
    %v661 = vadd.f32 0.0, %v660
    %v662 = vpop.f32.mrb[0].mxu0
    %v663 = vpop.f32.mrb[0].mxu0
    %v664 = vadd.f32 0.0, %v663
    %v665 = vpop.f32.mrb[0].mxu0
    %666 = vmatprep.mubr.bf16.mxu0 0
    %667 = vmatmul.mubr.bf16.gmra.mrb[0].mxu0 %v444
    %v668 = vpop.f32.mrb[0].mxu0
    %v669 = vadd.f32 0.0, %v668
    %v670 = vpop.f32.mrb[0].mxu0
    %v671 = vpop.f32.mrb[0].mxu0
    %v672 = vadd.f32 0.0, %v671
    %v673 = vpop.f32.mrb[0].mxu0
    %674 = vmatprep.mubr.bf16.mxu0 0
    %675 = vmatmul.mubr.bf16.gmra.mrb[0].mxu0 %v447
    %v676 = vpop.f32.mrb[0].mxu0
    %v677 = vadd.f32 0.0, %v676
    %v678 = vpop.f32.mrb[0].mxu0
    %v679 = vpop.f32.mrb[0].mxu0
    %v680 = vadd.f32 0.0, %v679
    %v681 = vpop.f32.mrb[0].mxu0
    %682 = vmatprep.mubr.bf16.mxu0 0
    %683 = vmatmul.mubr.bf16.gmra.mrb[0].mxu0 %v450
    %v684 = vpop.f32.mrb[0].mxu0
    %v685 = vadd.f32 0.0, %v684
    %v686 = vpop.f32.mrb[0].mxu0
    %v687 = vpop.f32.mrb[0].mxu0
    %v688 = vadd.f32 0.0, %v687
    %v689 = vpop.f32.mrb[0].mxu0
    %690 = vmatprep.mubr.bf16.mxu0 0
    %691 = vmatmul.mubr.bf16.gmra.mrb[0].mxu0 %v453
    %v692 = vpop.f32.mrb[0].mxu0
    %v693 = vadd.f32 0.0, %v692
    %v694 = vpop.f32.mrb[0].mxu0
    %v695 = vpop.f32.mrb[0].mxu0
    %v696 = vadd.f32 0.0, %v695
    %v697 = vpop.f32.mrb[0].mxu0
    %698 = vmatprep.mubr.bf16.mxu0 0
    %699 = vmatmul.mubr.bf16.gmra.mrb[0].mxu0 %v456
    %v700 = vpop.f32.mrb[0].mxu0
    %v701 = vadd.f32 0.0, %v700
    %v702 = vpop.f32.mrb[0].mxu0
    %v703 = vpop.f32.mrb[0].mxu0
    %v704 = vadd.f32 0.0, %v703
    %v705 = vpop.f32.mrb[0].mxu0
    %706 = vmatprep.mubr.bf16.mxu0 0
    %707 = vmatmul.mubr.bf16.gmra.mrb[0].mxu0 %v459
    %v708 = vpop.f32.mrb[0].mxu0
    %v709 = vadd.f32 0.0, %v708
    %v710 = vpop.f32.mrb[0].mxu0
    %v711 = vpop.f32.mrb[0].mxu0
    %v712 = vadd.f32 0.0, %v711
    %v713 = vpop.f32.mrb[0].mxu0
    %714 = vmatprep.mubr.bf16.mxu0 0
    %715 = vmatmul.mubr.bf16.gmra.mrb[0].mxu0 %v462
    %v716 = vpop.f32.mrb[0].mxu0
    %v717 = vadd.f32 0.0, %v716
    %v718 = vpop.f32.mrb[0].mxu0
    %v719 = vpop.f32.mrb[0].mxu0
    %v720 = vadd.f32 0.0, %v719
    %v721 = vpop.f32.mrb[0].mxu0
    %722 = vmatprep.mubr.bf16.mxu0 0
    %723 = vmatmul.mubr.bf16.gmra.mrb[0].mxu0 %v465
    %v724 = vpop.f32.mrb[0].mxu0
    %v725 = vadd.f32 0.0, %v724
    %v726 = vpop.f32.mrb[0].mxu0
    %v727 = vpop.f32.mrb[0].mxu0
    %v728 = vadd.f32 0.0, %v727
    %v729 = vpop.f32.mrb[0].mxu0
    %730 = vmatprep.mubr.bf16.mxu0 0
    %731 = vmatmul.mubr.bf16.gmra.mrb[0].mxu0 %v468
    %v732 = vpop.f32.mrb[0].mxu0
    %v733 = vadd.f32 0.0, %v732
    %v734 = vpop.f32.mrb[0].mxu0
    %v735 = vpop.f32.mrb[0].mxu0
    %v736 = vadd.f32 0.0, %v735
    %v737 = vpop.f32.mrb[0].mxu0
    %738 = vmatprep.mubr.bf16.mxu0 0
    %739 = vmatmul.mubr.bf16.gmra.mrb[0].mxu0 %v471
    %v740 = vpop.f32.mrb[0].mxu0
    %v741 = vadd.f32 0.0, %v740
    %v742 = vpop.f32.mrb[0].mxu0
    %v743 = vpop.f32.mrb[0].mxu0
    %v744 = vadd.f32 0.0, %v743
    %v745 = vpop.f32.mrb[0].mxu0
    %746 = vmatprep.mubr.bf16.mxu0 0
    %747 = vmatmul.mubr.bf16.gmra.mrb[0].mxu0 %v474
    %v748 = vpop.f32.mrb[0].mxu0
    %v749 = vadd.f32 0.0, %v748
    %v750 = vpop.f32.mrb[0].mxu0
    %v751 = vpop.f32.mrb[0].mxu0
    %v752 = vadd.f32 0.0, %v751
    %v753 = vpop.f32.mrb[0].mxu0
    %754 = vmatprep.mubr.bf16.mxu0 0
    %755 = vmatmul.mubr.bf16.gmra.mrb[0].mxu0 %v477
    %v756 = vpop.f32.mrb[0].mxu0
    %v757 = vadd.f32 0.0, %v756
    %v758 = vpop.f32.mrb[0].mxu0
    %v759 = vpop.f32.mrb[0].mxu0
    %v760 = vadd.f32 0.0, %v759
    %v761 = vpop.f32.mrb[0].mxu0
    %762 = vmatprep.mubr.bf16.mxu0 0
    %763 = vmatmul.mubr.bf16.gmra.mrb[0].mxu0 %v480
    %v764 = vpop.f32.mrb[0].mxu0
    %v765 = vadd.f32 0.0, %v764
    %v766 = vpop.f32.mrb[0].mxu0
    %v767 = vpop.f32.mrb[0].mxu0
    %v768 = vadd.f32 0.0, %v767
    %v769 = vpop.f32.mrb[0].mxu0
    %770 = vdwg.mxu0
    %v771 = vld [vmem:[%s8] sm:$0x1]
    %v772 = vld [vmem:[%s9] sm:$0x1]
    %vm773 = vcmask 261120
    %v774 = vsel %vm773, %v517, 0.0
    %v775 = vsel %vm773, %v520, 0.0
    %v776 = vadd.f32 %v774, %v775
    %v777 = vsel %vm773, %v525, 0.0
    %v778 = vadd.f32 %v776, %v777
    %v779 = vsel %vm773, %v528, 0.0
    %v780 = vadd.f32 %v778, %v779
    %v781 = vsel %vm773, %v533, 0.0
    %v782 = vadd.f32 %v780, %v781
    %v783 = vsel %vm773, %v536, 0.0
    %v784 = vadd.f32 %v782, %v783
    %v785 = vsel %vm773, %v541, 0.0
    %v786 = vadd.f32 %v784, %v785
    %v787 = vsel %vm773, %v544, 0.0
    %v788 = vadd.f32 %v786, %v787
    %v789 = vsel %vm773, %v549, 0.0
    %v790 = vadd.f32 %v788, %v789
    %v791 = vsel %vm773, %v552, 0.0
    %v792 = vadd.f32 %v790, %v791
    %v793 = vsel %vm773, %v557, 0.0
    %v794 = vadd.f32 %v792, %v793
    %v795 = vsel %vm773, %v560, 0.0
    %v796 = vadd.f32 %v794, %v795
    %v797 = vsel %vm773, %v565, 0.0
    %v798 = vadd.f32 %v796, %v797
    %v799 = vsel %vm773, %v568, 0.0
    %v800 = vadd.f32 %v798, %v799
    %v801 = vsel %vm773, %v573, 0.0
    %v802 = vadd.f32 %v800, %v801
    %v803 = vsel %vm773, %v576, 0.0
    %v804 = vadd.f32 %v802, %v803
    %v805 = vsel %vm773, %v581, 0.0
    %v806 = vadd.f32 %v804, %v805
    %v807 = vsel %vm773, %v584, 0.0
    %v808 = vadd.f32 %v806, %v807
    %v809 = vsel %vm773, %v589, 0.0
    %v810 = vadd.f32 %v808, %v809
    %v811 = vsel %vm773, %v592, 0.0
    %v812 = vadd.f32 %v810, %v811
    %v813 = vsel %vm773, %v597, 0.0
    %v814 = vadd.f32 %v812, %v813
    %v815 = vsel %vm773, %v600, 0.0
    %v816 = vadd.f32 %v814, %v815
    %v817 = vsel %vm773, %v605, 0.0
    %v818 = vadd.f32 %v816, %v817
    %v819 = vsel %vm773, %v608, 0.0
    %v820 = vadd.f32 %v818, %v819
    %v821 = vsel %vm773, %v613, 0.0
    %v822 = vadd.f32 %v820, %v821
    %v823 = vsel %vm773, %v616, 0.0
    %v824 = vadd.f32 %v822, %v823
    %v825 = vsel %vm773, %v621, 0.0
    %v826 = vadd.f32 %v824, %v825
    %v827 = vsel %vm773, %v624, 0.0
    %v828 = vadd.f32 %v826, %v827
    %v829 = vsel %vm773, %v629, 0.0
    %v830 = vadd.f32 %v828, %v829
    %v831 = vsel %vm773, %v632, 0.0
    %v832 = vadd.f32 %v830, %v831
    %v833 = vsel %vm773, %v637, 0.0
    %v834 = vadd.f32 %v832, %v833
    %v835 = vsel %vm773, %v640, 0.0
    %v836 = vadd.f32 %v834, %v835
    %v837 = vsel %vm773, %v645, 0.0
    %v838 = vadd.f32 %v836, %v837
    %v839 = vsel %vm773, %v648, 0.0
    %v840 = vadd.f32 %v838, %v839
    %v841 = vsel %vm773, %v653, 0.0
    %v842 = vadd.f32 %v840, %v841
    %v843 = vsel %vm773, %v656, 0.0
    %v844 = vadd.f32 %v842, %v843
    %v845 = vsel %vm773, %v661, 0.0
    %v846 = vadd.f32 %v844, %v845
    %v847 = vsel %vm773, %v664, 0.0
    %v848 = vadd.f32 %v846, %v847
    %v849 = vsel %vm773, %v669, 0.0
    %v850 = vadd.f32 %v848, %v849
    %v851 = vsel %vm773, %v672, 0.0
    %v852 = vadd.f32 %v850, %v851
    %v853 = vsel %vm773, %v677, 0.0
    %v854 = vadd.f32 %v852, %v853
    %v855 = vsel %vm773, %v680, 0.0
    %v856 = vadd.f32 %v854, %v855
    %v857 = vsel %vm773, %v685, 0.0
    %v858 = vadd.f32 %v856, %v857
    %v859 = vsel %vm773, %v688, 0.0
    %v860 = vadd.f32 %v858, %v859
    %v861 = vsel %vm773, %v693, 0.0
    %v862 = vadd.f32 %v860, %v861
    %v863 = vsel %vm773, %v696, 0.0
    %v864 = vadd.f32 %v862, %v863
    %v865 = vsel %vm773, %v701, 0.0
    %v866 = vadd.f32 %v864, %v865
    %v867 = vsel %vm773, %v704, 0.0
    %v868 = vadd.f32 %v866, %v867
    %v869 = vsel %vm773, %v709, 0.0
    %v870 = vadd.f32 %v868, %v869
    %v871 = vsel %vm773, %v712, 0.0
    %v872 = vadd.f32 %v870, %v871
    %v873 = vsel %vm773, %v717, 0.0
    %v874 = vadd.f32 %v872, %v873
    %v875 = vsel %vm773, %v720, 0.0
    %v876 = vadd.f32 %v874, %v875
    %v877 = vsel %vm773, %v725, 0.0
    %v878 = vadd.f32 %v876, %v877
    %v879 = vsel %vm773, %v728, 0.0
    %v880 = vadd.f32 %v878, %v879
    %v881 = vsel %vm773, %v733, 0.0
    %v882 = vadd.f32 %v880, %v881
    %v883 = vsel %vm773, %v736, 0.0
    %v884 = vadd.f32 %v882, %v883
    %v885 = vsel %vm773, %v741, 0.0
    %v886 = vadd.f32 %v884, %v885
    %v887 = vsel %vm773, %v744, 0.0
    %v888 = vadd.f32 %v886, %v887
    %v889 = vsel %vm773, %v749, 0.0
    %v890 = vadd.f32 %v888, %v889
    %v891 = vsel %vm773, %v752, 0.0
    %v892 = vadd.f32 %v890, %v891
    %v893 = vsel %vm773, %v757, 0.0
    %v894 = vadd.f32 %v892, %v893
    %v895 = vsel %vm773, %v760, 0.0
    %v896 = vadd.f32 %v894, %v895
    %v897 = vsel %vm773, %v765, 0.0
    %v898 = vadd.f32 %v896, %v897
    %v899 = vsel %vm773, %v768, 0.0
    %v900 = vadd.f32 %v898, %v899
    %v901 = vrot.slane %v900, 4
    %v902 = vadd.f32 %v900, %v901
    %v903 = vrot.slane %v902, 2
    %v904 = vadd.f32 %v902, %v903
    %v905 = vrot.slane %v904, 1
    %v906 = vadd.f32 %v904, %v905
    %v907 = vmul.f32 %v906, 0.001953125
    %v908 = vmul.f32 %v517, %v517
    %v909 = vmul.f32 %v520, %v520
    %v910 = vmul.f32 %v525, %v525
    %v911 = vmul.f32 %v528, %v528
    %v912 = vmul.f32 %v533, %v533
    %v913 = vmul.f32 %v536, %v536
    %v914 = vmul.f32 %v541, %v541
    %v915 = vmul.f32 %v544, %v544
    %v916 = vmul.f32 %v549, %v549
    %v917 = vmul.f32 %v552, %v552
    %v918 = vmul.f32 %v557, %v557
    %v919 = vmul.f32 %v560, %v560
    %v920 = vmul.f32 %v565, %v565
    %v921 = vmul.f32 %v568, %v568
    %v922 = vmul.f32 %v573, %v573
    %v923 = vmul.f32 %v576, %v576
    %v924 = vmul.f32 %v581, %v581
    %v925 = vmul.f32 %v584, %v584
    %v926 = vmul.f32 %v589, %v589
    %v927 = vmul.f32 %v592, %v592
    %v928 = vmul.f32 %v597, %v597
    %v929 = vmul.f32 %v600, %v600
    %v930 = vmul.f32 %v605, %v605
    %v931 = vmul.f32 %v608, %v608
    %v932 = vmul.f32 %v613, %v613
    %v933 = vmul.f32 %v616, %v616
    %v934 = vmul.f32 %v621, %v621
    %v935 = vmul.f32 %v624, %v624
    %v936 = vmul.f32 %v629, %v629
    %v937 = vmul.f32 %v632, %v632
    %v938 = vmul.f32 %v637, %v637
    %v939 = vmul.f32 %v640, %v640
    %v940 = vmul.f32 %v645, %v645
    %v941 = vmul.f32 %v648, %v648
    %v942 = vmul.f32 %v653, %v653
    %v943 = vmul.f32 %v656, %v656
    %v944 = vmul.f32 %v661, %v661
    %v945 = vmul.f32 %v664, %v664
    %v946 = vmul.f32 %v669, %v669
    %v947 = vmul.f32 %v672, %v672
    %v948 = vmul.f32 %v677, %v677
    %v949 = vmul.f32 %v680, %v680
    %v950 = vmul.f32 %v685, %v685
    %v951 = vmul.f32 %v688, %v688
    %v952 = vmul.f32 %v693, %v693
    %v953 = vmul.f32 %v696, %v696
    %v954 = vmul.f32 %v701, %v701
    %v955 = vmul.f32 %v704, %v704
    %v956 = vmul.f32 %v709, %v709
    %v957 = vmul.f32 %v712, %v712
    %v958 = vmul.f32 %v717, %v717
    %v959 = vmul.f32 %v720, %v720
    %v960 = vmul.f32 %v725, %v725
    %v961 = vmul.f32 %v728, %v728
    %v962 = vmul.f32 %v733, %v733
    %v963 = vmul.f32 %v736, %v736
    %v964 = vmul.f32 %v741, %v741
    %v965 = vmul.f32 %v744, %v744
    %v966 = vmul.f32 %v749, %v749
    %v967 = vmul.f32 %v752, %v752
    %v968 = vmul.f32 %v757, %v757
    %v969 = vmul.f32 %v760, %v760
    %v970 = vmul.f32 %v765, %v765
    %v971 = vmul.f32 %v768, %v768
    %v972 = vsel %vm773, %v908, 0.0
    %v973 = vsel %vm773, %v909, 0.0
    %v974 = vadd.f32 %v972, %v973
    %v975 = vsel %vm773, %v910, 0.0
    %v976 = vadd.f32 %v974, %v975
    %v977 = vsel %vm773, %v911, 0.0
    %v978 = vadd.f32 %v976, %v977
    %v979 = vsel %vm773, %v912, 0.0
    %v980 = vadd.f32 %v978, %v979
    %v981 = vsel %vm773, %v913, 0.0
    %v982 = vadd.f32 %v980, %v981
    %v983 = vsel %vm773, %v914, 0.0
    %v984 = vadd.f32 %v982, %v983
    %v985 = vsel %vm773, %v915, 0.0
    %v986 = vadd.f32 %v984, %v985
    %v987 = vsel %vm773, %v916, 0.0
    %v988 = vadd.f32 %v986, %v987
    %v989 = vsel %vm773, %v917, 0.0
    %v990 = vadd.f32 %v988, %v989
    %v991 = vsel %vm773, %v918, 0.0
    %v992 = vadd.f32 %v990, %v991
    %v993 = vsel %vm773, %v919, 0.0
    %v994 = vadd.f32 %v992, %v993
    %v995 = vsel %vm773, %v920, 0.0
    %v996 = vadd.f32 %v994, %v995
    %v997 = vsel %vm773, %v921, 0.0
    %v998 = vadd.f32 %v996, %v997
    %v999 = vsel %vm773, %v922, 0.0
    %v1000 = vadd.f32 %v998, %v999
    %v1001 = vsel %vm773, %v923, 0.0
    %v1002 = vadd.f32 %v1000, %v1001
    %v1003 = vsel %vm773, %v924, 0.0
    %v1004 = vadd.f32 %v1002, %v1003
    %v1005 = vsel %vm773, %v925, 0.0
    %v1006 = vadd.f32 %v1004, %v1005
    %v1007 = vsel %vm773, %v926, 0.0
    %v1008 = vadd.f32 %v1006, %v1007
    %v1009 = vsel %vm773, %v927, 0.0
    %v1010 = vadd.f32 %v1008, %v1009
    %v1011 = vsel %vm773, %v928, 0.0
    %v1012 = vadd.f32 %v1010, %v1011
    %v1013 = vsel %vm773, %v929, 0.0
    %v1014 = vadd.f32 %v1012, %v1013
    %v1015 = vsel %vm773, %v930, 0.0
    %v1016 = vadd.f32 %v1014, %v1015
    %v1017 = vsel %vm773, %v931, 0.0
    %v1018 = vadd.f32 %v1016, %v1017
    %v1019 = vsel %vm773, %v932, 0.0
    %v1020 = vadd.f32 %v1018, %v1019
    %v1021 = vsel %vm773, %v933, 0.0
    %v1022 = vadd.f32 %v1020, %v1021
    %v1023 = vsel %vm773, %v934, 0.0
    %v1024 = vadd.f32 %v1022, %v1023
    %v1025 = vsel %vm773, %v935, 0.0
    %v1026 = vadd.f32 %v1024, %v1025
    %v1027 = vsel %vm773, %v936, 0.0
    %v1028 = vadd.f32 %v1026, %v1027
    %v1029 = vsel %vm773, %v937, 0.0
    %v1030 = vadd.f32 %v1028, %v1029
    %v1031 = vsel %vm773, %v938, 0.0
    %v1032 = vadd.f32 %v1030, %v1031
    %v1033 = vsel %vm773, %v939, 0.0
    %v1034 = vadd.f32 %v1032, %v1033
    %v1035 = vsel %vm773, %v940, 0.0
    %v1036 = vadd.f32 %v1034, %v1035
    %v1037 = vsel %vm773, %v941, 0.0
    %v1038 = vadd.f32 %v1036, %v1037
    %v1039 = vsel %vm773, %v942, 0.0
    %v1040 = vadd.f32 %v1038, %v1039
    %v1041 = vsel %vm773, %v943, 0.0
    %v1042 = vadd.f32 %v1040, %v1041
    %v1043 = vsel %vm773, %v944, 0.0
    %v1044 = vadd.f32 %v1042, %v1043
    %v1045 = vsel %vm773, %v945, 0.0
    %v1046 = vadd.f32 %v1044, %v1045
    %v1047 = vsel %vm773, %v946, 0.0
    %v1048 = vadd.f32 %v1046, %v1047
    %v1049 = vsel %vm773, %v947, 0.0
    %v1050 = vadd.f32 %v1048, %v1049
    %v1051 = vsel %vm773, %v948, 0.0
    %v1052 = vadd.f32 %v1050, %v1051
    %v1053 = vsel %vm773, %v949, 0.0
    %v1054 = vadd.f32 %v1052, %v1053
    %v1055 = vsel %vm773, %v950, 0.0
    %v1056 = vadd.f32 %v1054, %v1055
    %v1057 = vsel %vm773, %v951, 0.0
    %v1058 = vadd.f32 %v1056, %v1057
    %v1059 = vsel %vm773, %v952, 0.0
    %v1060 = vadd.f32 %v1058, %v1059
    %v1061 = vsel %vm773, %v953, 0.0
    %v1062 = vadd.f32 %v1060, %v1061
    %v1063 = vsel %vm773, %v954, 0.0
    %v1064 = vadd.f32 %v1062, %v1063
    %v1065 = vsel %vm773, %v955, 0.0
    %v1066 = vadd.f32 %v1064, %v1065
    %v1067 = vsel %vm773, %v956, 0.0
    %v1068 = vadd.f32 %v1066, %v1067
    %v1069 = vsel %vm773, %v957, 0.0
    %v1070 = vadd.f32 %v1068, %v1069
    %v1071 = vsel %vm773, %v958, 0.0
    %v1072 = vadd.f32 %v1070, %v1071
    %v1073 = vsel %vm773, %v959, 0.0
    %v1074 = vadd.f32 %v1072, %v1073
    %v1075 = vsel %vm773, %v960, 0.0
    %v1076 = vadd.f32 %v1074, %v1075
    %v1077 = vsel %vm773, %v961, 0.0
    %v1078 = vadd.f32 %v1076, %v1077
    %v1079 = vsel %vm773, %v962, 0.0
    %v1080 = vadd.f32 %v1078, %v1079
    %v1081 = vsel %vm773, %v963, 0.0
    %v1082 = vadd.f32 %v1080, %v1081
    %v1083 = vsel %vm773, %v964, 0.0
    %v1084 = vadd.f32 %v1082, %v1083
    %v1085 = vsel %vm773, %v965, 0.0
    %v1086 = vadd.f32 %v1084, %v1085
    %v1087 = vsel %vm773, %v966, 0.0
    %v1088 = vadd.f32 %v1086, %v1087
    %v1089 = vsel %vm773, %v967, 0.0
    %v1090 = vadd.f32 %v1088, %v1089
    %v1091 = vsel %vm773, %v968, 0.0
    %v1092 = vadd.f32 %v1090, %v1091
    %v1093 = vsel %vm773, %v969, 0.0
    %v1094 = vadd.f32 %v1092, %v1093
    %v1095 = vsel %vm773, %v970, 0.0
    %v1096 = vadd.f32 %v1094, %v1095
    %v1097 = vsel %vm773, %v971, 0.0
    %v1098 = vadd.f32 %v1096, %v1097
    %v1099 = vrot.slane %v1098, 4
    %v1100 = vadd.f32 %v1098, %v1099
    %v1101 = vrot.slane %v1100, 2
    %v1102 = vadd.f32 %v1100, %v1101
    %v1103 = vrot.slane %v1102, 1
    %v1104 = vadd.f32 %v1102, %v1103
    %v1105 = vmul.f32 %v1104, 0.001953125
    %v1106 = vmul.f32 %v907, %v907
    %v1107 = vsub.f32 %v1105, %v1106
    %v1108 = vadd.f32 %v1107, 1e-05
    %v1109 = vrsqrt.pop %v1108
    %v1110 = vmul.f32 %v771, %v1109
    %v1111 = vmul.f32 %v907, %v1110
    %v1112 = vsub.f32 %v772, %v1111
    %v1114 = vlaneseq
    %v1115 = vshrl.u32 %v1114, 7
    %v1116 = vsub.s32 0, %v1115
    %v1117 = vrot.slane %v1110, %v1116
    %v1119 = vmul.f32 %v517, %v1117
    %v1120 = vmul.f32 %v520, %v1117
    %v1121 = vmul.f32 %v525, %v1117
    %v1122 = vmul.f32 %v528, %v1117
    %v1123 = vmul.f32 %v533, %v1117
    %v1124 = vmul.f32 %v536, %v1117
    %v1125 = vmul.f32 %v541, %v1117
    %v1126 = vmul.f32 %v544, %v1117
    %v1127 = vmul.f32 %v549, %v1117
    %v1128 = vmul.f32 %v552, %v1117
    %v1129 = vmul.f32 %v557, %v1117
    %v1130 = vmul.f32 %v560, %v1117
    %v1131 = vmul.f32 %v565, %v1117
    %v1132 = vmul.f32 %v568, %v1117
    %v1133 = vmul.f32 %v573, %v1117
    %v1134 = vmul.f32 %v576, %v1117
    %v1135 = vmul.f32 %v581, %v1117
    %v1136 = vmul.f32 %v584, %v1117
    %v1137 = vmul.f32 %v589, %v1117
    %v1138 = vmul.f32 %v592, %v1117
    %v1139 = vmul.f32 %v597, %v1117
    %v1140 = vmul.f32 %v600, %v1117
    %v1141 = vmul.f32 %v605, %v1117
    %v1142 = vmul.f32 %v608, %v1117
    %v1143 = vmul.f32 %v613, %v1117
    %v1144 = vmul.f32 %v616, %v1117
    %v1145 = vmul.f32 %v621, %v1117
    %v1146 = vmul.f32 %v624, %v1117
    %v1147 = vmul.f32 %v629, %v1117
    %v1148 = vmul.f32 %v632, %v1117
    %v1149 = vmul.f32 %v637, %v1117
    %v1150 = vmul.f32 %v640, %v1117
    %v1151 = vmul.f32 %v645, %v1117
    %v1152 = vmul.f32 %v648, %v1117
    %v1153 = vmul.f32 %v653, %v1117
    %v1154 = vmul.f32 %v656, %v1117
    %v1155 = vmul.f32 %v661, %v1117
    %v1156 = vmul.f32 %v664, %v1117
    %v1157 = vmul.f32 %v669, %v1117
    %v1158 = vmul.f32 %v672, %v1117
    %v1159 = vmul.f32 %v677, %v1117
    %v1160 = vmul.f32 %v680, %v1117
    %v1161 = vmul.f32 %v685, %v1117
    %v1162 = vmul.f32 %v688, %v1117
    %v1163 = vmul.f32 %v693, %v1117
    %v1164 = vmul.f32 %v696, %v1117
    %v1165 = vmul.f32 %v701, %v1117
    %v1166 = vmul.f32 %v704, %v1117
    %v1167 = vmul.f32 %v709, %v1117
    %v1168 = vmul.f32 %v712, %v1117
    %v1169 = vmul.f32 %v717, %v1117
    %v1170 = vmul.f32 %v720, %v1117
    %v1171 = vmul.f32 %v725, %v1117
    %v1172 = vmul.f32 %v728, %v1117
    %v1173 = vmul.f32 %v733, %v1117
    %v1174 = vmul.f32 %v736, %v1117
    %v1175 = vmul.f32 %v741, %v1117
    %v1176 = vmul.f32 %v744, %v1117
    %v1177 = vmul.f32 %v749, %v1117
    %v1178 = vmul.f32 %v752, %v1117
    %v1179 = vmul.f32 %v757, %v1117
    %v1180 = vmul.f32 %v760, %v1117
    %v1181 = vmul.f32 %v765, %v1117
    %v1182 = vmul.f32 %v768, %v1117
    %v1184 = vlaneseq
    %v1185 = vshrl.u32 %v1184, 7
    %v1186 = vsub.s32 0, %v1185
    %v1187 = vrot.slane %v1112, %v1186
    %v1189 = vadd.f32 %v1119, %v1187
    %v1190 = vadd.f32 %v1120, %v1187
    %v1191 = vadd.f32 %v1121, %v1187
    %v1192 = vadd.f32 %v1122, %v1187
    %v1193 = vadd.f32 %v1123, %v1187
    %v1194 = vadd.f32 %v1124, %v1187
    %v1195 = vadd.f32 %v1125, %v1187
    %v1196 = vadd.f32 %v1126, %v1187
    %v1197 = vadd.f32 %v1127, %v1187
    %v1198 = vadd.f32 %v1128, %v1187
    %v1199 = vadd.f32 %v1129, %v1187
    %v1200 = vadd.f32 %v1130, %v1187
    %v1201 = vadd.f32 %v1131, %v1187
    %v1202 = vadd.f32 %v1132, %v1187
    %v1203 = vadd.f32 %v1133, %v1187
    %v1204 = vadd.f32 %v1134, %v1187
    %v1205 = vadd.f32 %v1135, %v1187
    %v1206 = vadd.f32 %v1136, %v1187
    %v1207 = vadd.f32 %v1137, %v1187
    %v1208 = vadd.f32 %v1138, %v1187
    %v1209 = vadd.f32 %v1139, %v1187
    %v1210 = vadd.f32 %v1140, %v1187
    %v1211 = vadd.f32 %v1141, %v1187
    %v1212 = vadd.f32 %v1142, %v1187
    %v1213 = vadd.f32 %v1143, %v1187
    %v1214 = vadd.f32 %v1144, %v1187
    %v1215 = vadd.f32 %v1145, %v1187
    %v1216 = vadd.f32 %v1146, %v1187
    %v1217 = vadd.f32 %v1147, %v1187
    %v1218 = vadd.f32 %v1148, %v1187
    %v1219 = vadd.f32 %v1149, %v1187
    %v1220 = vadd.f32 %v1150, %v1187
    %v1221 = vadd.f32 %v1151, %v1187
    %v1222 = vadd.f32 %v1152, %v1187
    %v1223 = vadd.f32 %v1153, %v1187
    %v1224 = vadd.f32 %v1154, %v1187
    %v1225 = vadd.f32 %v1155, %v1187
    %v1226 = vadd.f32 %v1156, %v1187
    %v1227 = vadd.f32 %v1157, %v1187
    %v1228 = vadd.f32 %v1158, %v1187
    %v1229 = vadd.f32 %v1159, %v1187
    %v1230 = vadd.f32 %v1160, %v1187
    %v1231 = vadd.f32 %v1161, %v1187
    %v1232 = vadd.f32 %v1162, %v1187
    %v1233 = vadd.f32 %v1163, %v1187
    %v1234 = vadd.f32 %v1164, %v1187
    %v1235 = vadd.f32 %v1165, %v1187
    %v1236 = vadd.f32 %v1166, %v1187
    %v1237 = vadd.f32 %v1167, %v1187
    %v1238 = vadd.f32 %v1168, %v1187
    %v1239 = vadd.f32 %v1169, %v1187
    %v1240 = vadd.f32 %v1170, %v1187
    %v1241 = vadd.f32 %v1171, %v1187
    %v1242 = vadd.f32 %v1172, %v1187
    %v1243 = vadd.f32 %v1173, %v1187
    %v1244 = vadd.f32 %v1174, %v1187
    %v1245 = vadd.f32 %v1175, %v1187
    %v1246 = vadd.f32 %v1176, %v1187
    %v1247 = vadd.f32 %v1177, %v1187
    %v1248 = vadd.f32 %v1178, %v1187
    %v1249 = vadd.f32 %v1179, %v1187
    %v1250 = vadd.f32 %v1180, %v1187
    %v1251 = vadd.f32 %v1181, %v1187
    %v1252 = vadd.f32 %v1182, %v1187
    %v1253 = vld [vmem:[#allocation2] sm:$0xff]
    %v1254 = vld [vmem:[#allocation2 + $0x8] sm:$0xff]
    %v1255 = vld [vmem:[#allocation2 + $0x18] sm:$0xff]
    %v1256 = vld [vmem:[#allocation2 + $0x20] sm:$0xff]
    %v1257 = vld [vmem:[#allocation2 + $0x30] sm:$0xff]
    %v1258 = vld [vmem:[#allocation2 + $0x38] sm:$0xff]
    %v1259 = vld [vmem:[#allocation2 + $0x48] sm:$0xff]
    %v1260 = vld [vmem:[#allocation2 + $0x50] sm:$0xff]
    %v1261 = vld [vmem:[#allocation2 + $0x60] sm:$0xff]
    %v1262 = vld [vmem:[#allocation2 + $0x68] sm:$0xff]
    %v1263 = vld [vmem:[#allocation2 + $0x78] sm:$0xff]
    %v1264 = vld [vmem:[#allocation2 + $0x80] sm:$0xff]
    %v1265 = vld [vmem:[#allocation2 + $0x90] sm:$0xff]
    %v1266 = vld [vmem:[#allocation2 + $0x98] sm:$0xff]
    %v1267 = vld [vmem:[#allocation2 + $0xa8] sm:$0xff]
    %v1268 = vld [vmem:[#allocation2 + $0xb0] sm:$0xff]
    %v1269 = vld [vmem:[#allocation2 + $0xc0] sm:$0xff]
    %v1270 = vld [vmem:[#allocation2 + $0xc8] sm:$0xff]
    %v1271 = vld [vmem:[#allocation2 + $0xd8] sm:$0xff]
    %v1272 = vld [vmem:[#allocation2 + $0xe0] sm:$0xff]
    %v1273 = vld [vmem:[#allocation2 + $0xf0] sm:$0xff]
    %v1274 = vld [vmem:[#allocation2 + $0xf8] sm:$0xff]
    %v1275 = vld [vmem:[#allocation2 + $0x108] sm:$0xff]
    %v1276 = vld [vmem:[#allocation2 + $0x110] sm:$0xff]
    %v1277 = vld [vmem:[#allocation2 + $0x120] sm:$0xff]
    %v1278 = vld [vmem:[#allocation2 + $0x128] sm:$0xff]
    %v1279 = vld [vmem:[#allocation2 + $0x138] sm:$0xff]
    %v1280 = vld [vmem:[#allocation2 + $0x140] sm:$0xff]
    %v1281 = vld [vmem:[#allocation2 + $0x150] sm:$0xff]
    %v1282 = vld [vmem:[#allocation2 + $0x158] sm:$0xff]
    %v1283 = vld [vmem:[#allocation2 + $0x168] sm:$0xff]
    %v1284 = vld [vmem:[#allocation2 + $0x170] sm:$0xff]
    %v1285 = vld [vmem:[#allocation2 + $0x1b0] sm:$0xff]
    %v1286 = vld [vmem:[#allocation2 + $0x1b8] sm:$0xff]
    %v1287 = vld [vmem:[#allocation2 + $0x1c8] sm:$0xff]
    %v1288 = vld [vmem:[#allocation2 + $0x1d0] sm:$0xff]
    %v1289 = vld [vmem:[#allocation2 + $0x1e0] sm:$0xff]
    %v1290 = vld [vmem:[#allocation2 + $0x1e8] sm:$0xff]
    %v1291 = vld [vmem:[#allocation2 + $0x1f8] sm:$0xff]
    %v1292 = vld [vmem:[#allocation2 + $0x200] sm:$0xff]
    %v1293 = vld [vmem:[#allocation2 + $0x210] sm:$0xff]
    %v1294 = vld [vmem:[#allocation2 + $0x218] sm:$0xff]
    %v1295 = vld [vmem:[#allocation2 + $0x228] sm:$0xff]
    %v1296 = vld [vmem:[#allocation2 + $0x230] sm:$0xff]
    %v1297 = vld [vmem:[#allocation2 + $0x240] sm:$0xff]
    %v1298 = vld [vmem:[#allocation2 + $0x248] sm:$0xff]
    %v1299 = vld [vmem:[#allocation2 + $0x258] sm:$0xff]
    %v1300 = vld [vmem:[#allocation2 + $0x260] sm:$0xff]
    %v1301 = vld [vmem:[#allocation2 + $0x270] sm:$0xff]
    %v1302 = vld [vmem:[#allocation2 + $0x278] sm:$0xff]
    %v1303 = vld [vmem:[#allocation2 + $0x288] sm:$0xff]
    %v1304 = vld [vmem:[#allocation2 + $0x290] sm:$0xff]
    %v1305 = vld [vmem:[#allocation2 + $0x2a0] sm:$0xff]
    %v1306 = vld [vmem:[#allocation2 + $0x2a8] sm:$0xff]
    %v1307 = vld [vmem:[#allocation2 + $0x2b8] sm:$0xff]
    %v1308 = vld [vmem:[#allocation2 + $0x2c0] sm:$0xff]
    %v1309 = vld [vmem:[#allocation2 + $0x2d0] sm:$0xff]
    %v1310 = vld [vmem:[#allocation2 + $0x2d8] sm:$0xff]
    %v1311 = vld [vmem:[#allocation2 + $0x2e8] sm:$0xff]
    %v1312 = vld [vmem:[#allocation2 + $0x2f0] sm:$0xff]
    %v1313 = vld [vmem:[#allocation2 + $0x300] sm:$0xff]
    %v1314 = vld [vmem:[#allocation2 + $0x308] sm:$0xff]
    %v1315 = vld [vmem:[#allocation2 + $0x318] sm:$0xff]
    %v1316 = vld [vmem:[#allocation2 + $0x320] sm:$0xff]
    %v1317 = vld [vmem:[#allocation2 + $0x1] sm:$0xff]
    %v1318 = vld [vmem:[#allocation2 + $0x9] sm:$0xff]
    %v1319 = vld [vmem:[#allocation2 + $0x19] sm:$0xff]
    %v1320 = vld [vmem:[#allocation2 + $0x21] sm:$0xff]
    %v1321 = vld [vmem:[#allocation2 + $0x31] sm:$0xff]
    %v1322 = vld [vmem:[#allocation2 + $0x39] sm:$0xff]
    %v1323 = vld [vmem:[#allocation2 + $0x49] sm:$0xff]
    %v1324 = vld [vmem:[#allocation2 + $0x51] sm:$0xff]
    %v1325 = vld [vmem:[#allocation2 + $0x61] sm:$0xff]
    %v1326 = vld [vmem:[#allocation2 + $0x69] sm:$0xff]
    %v1327 = vld [vmem:[#allocation2 + $0x79] sm:$0xff]
    %v1328 = vld [vmem:[#allocation2 + $0x81] sm:$0xff]
    %v1329 = vld [vmem:[#allocation2 + $0x91] sm:$0xff]
    %v1330 = vld [vmem:[#allocation2 + $0x99] sm:$0xff]
    %v1331 = vld [vmem:[#allocation2 + $0xa9] sm:$0xff]
    %v1332 = vld [vmem:[#allocation2 + $0xb1] sm:$0xff]
    %v1333 = vld [vmem:[#allocation2 + $0xc1] sm:$0xff]
    %v1334 = vld [vmem:[#allocation2 + $0xc9] sm:$0xff]
    %v1335 = vld [vmem:[#allocation2 + $0xd9] sm:$0xff]
    %v1336 = vld [vmem:[#allocation2 + $0xe1] sm:$0xff]
    %v1337 = vld [vmem:[#allocation2 + $0xf1] sm:$0xff]
    %v1338 = vld [vmem:[#allocation2 + $0xf9] sm:$0xff]
    %v1339 = vld [vmem:[#allocation2 + $0x109] sm:$0xff]
    %v1340 = vld [vmem:[#allocation2 + $0x111] sm:$0xff]
    %v1341 = vld [vmem:[#allocation2 + $0x121] sm:$0xff]
    %v1342 = vld [vmem:[#allocation2 + $0x129] sm:$0xff]
    %v1343 = vld [vmem:[#allocation2 + $0x139] sm:$0xff]
    %v1344 = vld [vmem:[#allocation2 + $0x141] sm:$0xff]
    %v1345 = vld [vmem:[#allocation2 + $0x151] sm:$0xff]
    %v1346 = vld [vmem:[#allocation2 + $0x159] sm:$0xff]
    %v1347 = vld [vmem:[#allocation2 + $0x169] sm:$0xff]
    %v1348 = vld [vmem:[#allocation2 + $0x171] sm:$0xff]
    %v1349 = vld [vmem:[#allocation2 + $0x1b1] sm:$0xff]
    %v1350 = vld [vmem:[#allocation2 + $0x1b9] sm:$0xff]
    %v1351 = vld [vmem:[#allocation2 + $0x1c9] sm:$0xff]
    %v1352 = vld [vmem:[#allocation2 + $0x1d1] sm:$0xff]
    %v1353 = vld [vmem:[#allocation2 + $0x1e1] sm:$0xff]
    %v1354 = vld [vmem:[#allocation2 + $0x1e9] sm:$0xff]
    %v1355 = vld [vmem:[#allocation2 + $0x1f9] sm:$0xff]
    %v1356 = vld [vmem:[#allocation2 + $0x201] sm:$0xff]
    %v1357 = vld [vmem:[#allocation2 + $0x211] sm:$0xff]
    %v1358 = vld [vmem:[#allocation2 + $0x219] sm:$0xff]
    %v1359 = vld [vmem:[#allocation2 + $0x229] sm:$0xff]
    %v1360 = vld [vmem:[#allocation2 + $0x231] sm:$0xff]
    %v1361 = vld [vmem:[#allocation2 + $0x241] sm:$0xff]
    %v1362 = vld [vmem:[#allocation2 + $0x249] sm:$0xff]
    %v1363 = vld [vmem:[#allocation2 + $0x259] sm:$0xff]
    %v1364 = vld [vmem:[#allocation2 + $0x261] sm:$0xff]
    %v1365 = vld [vmem:[#allocation2 + $0x271] sm:$0xff]
    %v1366 = vld [vmem:[#allocation2 + $0x279] sm:$0xff]
    %v1367 = vld [vmem:[#allocation2 + $0x289] sm:$0xff]
    %v1368 = vld [vmem:[#allocation2 + $0x291] sm:$0xff]
    %v1369 = vld [vmem:[#allocation2 + $0x2a1] sm:$0xff]
    %v1370 = vld [vmem:[#allocation2 + $0x2a9] sm:$0xff]
    %v1371 = vld [vmem:[#allocation2 + $0x2b9] sm:$0xff]
    %v1372 = vld [vmem:[#allocation2 + $0x2c1] sm:$0xff]
    %v1373 = vld [vmem:[#allocation2 + $0x2d1] sm:$0xff]
    %v1374 = vld [vmem:[#allocation2 + $0x2d9] sm:$0xff]
    %v1375 = vld [vmem:[#allocation2 + $0x2e9] sm:$0xff]
    %v1376 = vld [vmem:[#allocation2 + $0x2f1] sm:$0xff]
    %v1377 = vld [vmem:[#allocation2 + $0x301] sm:$0xff]
    %v1378 = vld [vmem:[#allocation2 + $0x309] sm:$0xff]
    %v1379 = vld [vmem:[#allocation2 + $0x319] sm:$0xff]
    %v1380 = vld [vmem:[#allocation2 + $0x321] sm:$0xff]
    %v1381 = vld [vmem:[#allocation2 + $0x2] sm:$0xff]
    %v1382 = vld [vmem:[#allocation2 + $0xa] sm:$0xff]
    %v1383 = vld [vmem:[#allocation2 + $0x1a] sm:$0xff]
    %v1384 = vld [vmem:[#allocation2 + $0x22] sm:$0xff]
    %v1385 = vld [vmem:[#allocation2 + $0x32] sm:$0xff]
    %v1386 = vld [vmem:[#allocation2 + $0x3a] sm:$0xff]
    %v1387 = vld [vmem:[#allocation2 + $0x4a] sm:$0xff]
    %v1388 = vld [vmem:[#allocation2 + $0x52] sm:$0xff]
    %v1389 = vld [vmem:[#allocation2 + $0x62] sm:$0xff]
    %v1390 = vld [vmem:[#allocation2 + $0x6a] sm:$0xff]
    %v1391 = vld [vmem:[#allocation2 + $0x7a] sm:$0xff]
    %v1392 = vld [vmem:[#allocation2 + $0x82] sm:$0xff]
    %v1393 = vld [vmem:[#allocation2 + $0x92] sm:$0xff]
    %v1394 = vld [vmem:[#allocation2 + $0x9a] sm:$0xff]
    %v1395 = vld [vmem:[#allocation2 + $0xaa] sm:$0xff]
    %v1396 = vld [vmem:[#allocation2 + $0xb2] sm:$0xff]
    %v1397 = vld [vmem:[#allocation2 + $0xc2] sm:$0xff]
    %v1398 = vld [vmem:[#allocation2 + $0xca] sm:$0xff]
    %v1399 = vld [vmem:[#allocation2 + $0xda] sm:$0xff]
    %v1400 = vld [vmem:[#allocation2 + $0xe2] sm:$0xff]
    %v1401 = vld [vmem:[#allocation2 + $0xf2] sm:$0xff]
    %v1402 = vld [vmem:[#allocation2 + $0xfa] sm:$0xff]
    %v1403 = vld [vmem:[#allocation2 + $0x10a] sm:$0xff]
    %v1404 = vld [vmem:[#allocation2 + $0x112] sm:$0xff]
    %v1405 = vld [vmem:[#allocation2 + $0x122] sm:$0xff]
    %v1406 = vld [vmem:[#allocation2 + $0x12a] sm:$0xff]
    %v1407 = vld [vmem:[#allocation2 + $0x13a] sm:$0xff]
    %v1408 = vld [vmem:[#allocation2 + $0x142] sm:$0xff]
    %v1409 = vld [vmem:[#allocation2 + $0x152] sm:$0xff]
    %v1410 = vld [vmem:[#allocation2 + $0x15a] sm:$0xff]
    %v1411 = vld [vmem:[#allocation2 + $0x16a] sm:$0xff]
    %v1412 = vld [vmem:[#allocation2 + $0x172] sm:$0xff]
    %v1413 = vld [vmem:[#allocation2 + $0x1b2] sm:$0xff]
    %v1414 = vld [vmem:[#allocation2 + $0x1ba] sm:$0xff]
    %v1415 = vld [vmem:[#allocation2 + $0x1ca] sm:$0xff]
    %v1416 = vld [vmem:[#allocation2 + $0x1d2] sm:$0xff]
    %v1417 = vld [vmem:[#allocation2 + $0x1e2] sm:$0xff]
    %v1418 = vld [vmem:[#allocation2 + $0x1ea] sm:$0xff]
    %v1419 = vld [vmem:[#allocation2 + $0x1fa] sm:$0xff]
    %v1420 = vld [vmem:[#allocation2 + $0x202] sm:$0xff]
    %v1421 = vld [vmem:[#allocation2 + $0x212] sm:$0xff]
    %v1422 = vld [vmem:[#allocation2 + $0x21a] sm:$0xff]
    %v1423 = vld [vmem:[#allocation2 + $0x22a] sm:$0xff]
    %v1424 = vld [vmem:[#allocation2 + $0x232] sm:$0xff]
    %v1425 = vld [vmem:[#allocation2 + $0x242] sm:$0xff]
    %v1426 = vld [vmem:[#allocation2 + $0x24a] sm:$0xff]
    %v1427 = vld [vmem:[#allocation2 + $0x25a] sm:$0xff]
    %v1428 = vld [vmem:[#allocation2 + $0x262] sm:$0xff]
    %v1429 = vld [vmem:[#allocation2 + $0x272] sm:$0xff]
    %v1430 = vld [vmem:[#allocation2 + $0x27a] sm:$0xff]
    %v1431 = vld [vmem:[#allocation2 + $0x28a] sm:$0xff]
    %v1432 = vld [vmem:[#allocation2 + $0x292] sm:$0xff]
    %v1433 = vld [vmem:[#allocation2 + $0x2a2] sm:$0xff]
    %v1434 = vld [vmem:[#allocation2 + $0x2aa] sm:$0xff]
    %v1435 = vld [vmem:[#allocation2 + $0x2ba] sm:$0xff]
    %v1436 = vld [vmem:[#allocation2 + $0x2c2] sm:$0xff]
    %v1437 = vld [vmem:[#allocation2 + $0x2d2] sm:$0xff]
    %v1438 = vld [vmem:[#allocation2 + $0x2da] sm:$0xff]
    %v1439 = vld [vmem:[#allocation2 + $0x2ea] sm:$0xff]
    %v1440 = vld [vmem:[#allocation2 + $0x2f2] sm:$0xff]
    %v1441 = vld [vmem:[#allocation2 + $0x302] sm:$0xff]
    %v1442 = vld [vmem:[#allocation2 + $0x30a] sm:$0xff]
    %v1443 = vld [vmem:[#allocation2 + $0x31a] sm:$0xff]
    %v1444 = vld [vmem:[#allocation2 + $0x322] sm:$0xff]
    %v1445 = vld [vmem:[%s217] sm:$0xff]
    %v1446 = vld [vmem:[%s217 + $0x8] sm:$0xff]
    %v1447 = vld [vmem:[%s217 + $0x18] sm:$0xff]
    %v1448 = vld [vmem:[%s217 + $0x20] sm:$0xff]
    %v1449 = vld [vmem:[%s217 + $0x30] sm:$0xff]
    %v1450 = vld [vmem:[%s217 + $0x38] sm:$0xff]
    %v1451 = vld [vmem:[%s217 + $0x48] sm:$0xff]
    %v1452 = vld [vmem:[%s217 + $0x50] sm:$0xff]
    %v1453 = vld [vmem:[%s217 + $0x60] sm:$0xff]
    %v1454 = vld [vmem:[%s217 + $0x68] sm:$0xff]
    %v1455 = vld [vmem:[%s217 + $0x78] sm:$0xff]
    %v1456 = vld [vmem:[%s217 + $0x80] sm:$0xff]
    %v1457 = vld [vmem:[%s217 + $0x90] sm:$0xff]
    %v1458 = vld [vmem:[%s217 + $0x98] sm:$0xff]
    %v1459 = vld [vmem:[%s217 + $0xa8] sm:$0xff]
    %v1460 = vld [vmem:[%s217 + $0xb0] sm:$0xff]
    %v1461 = vld [vmem:[%s217 + $0xc0] sm:$0xff]
    %v1462 = vld [vmem:[%s217 + $0xc8] sm:$0xff]
    %v1463 = vld [vmem:[%s217 + $0xd8] sm:$0xff]
    %v1464 = vld [vmem:[%s217 + $0xe0] sm:$0xff]
    %v1465 = vld [vmem:[%s217 + $0xf0] sm:$0xff]
    %v1466 = vld [vmem:[%s217 + $0xf8] sm:$0xff]
    %v1467 = vld [vmem:[%s217 + $0x108] sm:$0xff]
    %v1468 = vld [vmem:[%s217 + $0x110] sm:$0xff]
    %v1469 = vld [vmem:[%s217 + $0x120] sm:$0xff]
    %v1470 = vld [vmem:[%s217 + $0x128] sm:$0xff]
    %v1471 = vld [vmem:[%s217 + $0x138] sm:$0xff]
    %v1472 = vld [vmem:[%s217 + $0x140] sm:$0xff]
    %v1473 = vld [vmem:[%s217 + $0x150] sm:$0xff]
    %v1474 = vld [vmem:[%s217 + $0x158] sm:$0xff]
    %v1475 = vld [vmem:[%s217 + $0x168] sm:$0xff]
    %v1476 = vld [vmem:[%s217 + $0x170] sm:$0xff]
    %v1477 = vld [vmem:[%s217 + $0x1b0] sm:$0xff]
    %v1478 = vld [vmem:[%s217 + $0x1b8] sm:$0xff]
    %v1479 = vld [vmem:[%s217 + $0x1c8] sm:$0xff]
    %v1480 = vld [vmem:[%s217 + $0x1d0] sm:$0xff]
    %v1481 = vld [vmem:[%s217 + $0x1e0] sm:$0xff]
    %v1482 = vld [vmem:[%s217 + $0x1e8] sm:$0xff]
    %v1483 = vld [vmem:[%s217 + $0x1f8] sm:$0xff]
    %v1484 = vld [vmem:[%s217 + $0x200] sm:$0xff]
    %v1485 = vld [vmem:[%s217 + $0x210] sm:$0xff]
    %v1486 = vld [vmem:[%s217 + $0x218] sm:$0xff]
    %v1487 = vld [vmem:[%s217 + $0x228] sm:$0xff]
    %v1488 = vld [vmem:[%s217 + $0x230] sm:$0xff]
    %v1489 = vld [vmem:[%s217 + $0x240] sm:$0xff]
    %v1490 = vld [vmem:[%s217 + $0x248] sm:$0xff]
    %v1491 = vld [vmem:[%s217 + $0x258] sm:$0xff]
    %v1492 = vld [vmem:[%s217 + $0x260] sm:$0xff]
    %v1493 = vld [vmem:[%s217 + $0x270] sm:$0xff]
    %v1494 = vld [vmem:[%s217 + $0x278] sm:$0xff]
    %v1495 = vld [vmem:[%s217 + $0x288] sm:$0xff]
    %v1496 = vld [vmem:[%s217 + $0x290] sm:$0xff]
    %v1497 = vld [vmem:[%s217 + $0x2a0] sm:$0xff]
    %v1498 = vld [vmem:[%s217 + $0x2a8] sm:$0xff]
    %v1499 = vld [vmem:[%s217 + $0x2b8] sm:$0xff]
    %v1500 = vld [vmem:[%s217 + $0x2c0] sm:$0xff]
    %v1501 = vld [vmem:[%s217 + $0x2d0] sm:$0xff]
    %v1502 = vld [vmem:[%s217 + $0x2d8] sm:$0xff]
    %v1503 = vld [vmem:[%s217 + $0x2e8] sm:$0xff]
    %v1504 = vld [vmem:[%s217 + $0x2f0] sm:$0xff]
    %v1505 = vld [vmem:[%s217 + $0x300] sm:$0xff]
    %v1506 = vld [vmem:[%s217 + $0x308] sm:$0xff]
    %v1507 = vld [vmem:[%s217 + $0x318] sm:$0xff]
    %v1508 = vld [vmem:[%s217 + $0x320] sm:$0xff]
    %v1509 = vld [vmem:[%s217 + $0x1] sm:$0xff]
    %v1510 = vld [vmem:[%s217 + $0x9] sm:$0xff]
    %v1511 = vld [vmem:[%s217 + $0x19] sm:$0xff]
    %v1512 = vld [vmem:[%s217 + $0x21] sm:$0xff]
    %v1513 = vld [vmem:[%s217 + $0x31] sm:$0xff]
    %v1514 = vld [vmem:[%s217 + $0x39] sm:$0xff]
    %v1515 = vld [vmem:[%s217 + $0x49] sm:$0xff]
    %v1516 = vld [vmem:[%s217 + $0x51] sm:$0xff]
    %v1517 = vld [vmem:[%s217 + $0x61] sm:$0xff]
    %v1518 = vld [vmem:[%s217 + $0x69] sm:$0xff]
    %v1519 = vld [vmem:[%s217 + $0x79] sm:$0xff]
    %v1520 = vld [vmem:[%s217 + $0x81] sm:$0xff]
    %v1521 = vld [vmem:[%s217 + $0x91] sm:$0xff]
    %v1522 = vld [vmem:[%s217 + $0x99] sm:$0xff]
    %v1523 = vld [vmem:[%s217 + $0xa9] sm:$0xff]
    %v1524 = vld [vmem:[%s217 + $0xb1] sm:$0xff]
    %v1525 = vld [vmem:[%s217 + $0xc1] sm:$0xff]
    %v1526 = vld [vmem:[%s217 + $0xc9] sm:$0xff]
    %v1527 = vld [vmem:[%s217 + $0xd9] sm:$0xff]
    %v1528 = vld [vmem:[%s217 + $0xe1] sm:$0xff]
    %v1529 = vld [vmem:[%s217 + $0xf1] sm:$0xff]
    %v1530 = vld [vmem:[%s217 + $0xf9] sm:$0xff]
    %v1531 = vld [vmem:[%s217 + $0x109] sm:$0xff]
    %v1532 = vld [vmem:[%s217 + $0x111] sm:$0xff]
    %v1533 = vld [vmem:[%s217 + $0x121] sm:$0xff]
    %v1534 = vld [vmem:[%s217 + $0x129] sm:$0xff]
    %v1535 = vld [vmem:[%s217 + $0x139] sm:$0xff]
    %v1536 = vld [vmem:[%s217 + $0x141] sm:$0xff]
    %v1537 = vld [vmem:[%s217 + $0x151] sm:$0xff]
    %v1538 = vld [vmem:[%s217 + $0x159] sm:$0xff]
    %v1539 = vld [vmem:[%s217 + $0x169] sm:$0xff]
    %v1540 = vld [vmem:[%s217 + $0x171] sm:$0xff]
    %v1541 = vld [vmem:[%s217 + $0x1b1] sm:$0xff]
    %v1542 = vld [vmem:[%s217 + $0x1b9] sm:$0xff]
    %v1543 = vld [vmem:[%s217 + $0x1c9] sm:$0xff]
    %v1544 = vld [vmem:[%s217 + $0x1d1] sm:$0xff]
    %v1545 = vld [vmem:[%s217 + $0x1e1] sm:$0xff]
    %v1546 = vld [vmem:[%s217 + $0x1e9] sm:$0xff]
    %v1547 = vld [vmem:[%s217 + $0x1f9] sm:$0xff]
    %v1548 = vld [vmem:[%s217 + $0x201] sm:$0xff]
    %v1549 = vld [vmem:[%s217 + $0x211] sm:$0xff]
    %v1550 = vld [vmem:[%s217 + $0x219] sm:$0xff]
    %v1551 = vld [vmem:[%s217 + $0x229] sm:$0xff]
    %v1552 = vld [vmem:[%s217 + $0x231] sm:$0xff]
    %v1553 = vld [vmem:[%s217 + $0x241] sm:$0xff]
    %v1554 = vld [vmem:[%s217 + $0x249] sm:$0xff]
    %v1555 = vld [vmem:[%s217 + $0x259] sm:$0xff]
    %v1556 = vld [vmem:[%s217 + $0x261] sm:$0xff]
    %v1557 = vld [vmem:[%s217 + $0x271] sm:$0xff]
    %v1558 = vld [vmem:[%s217 + $0x279] sm:$0xff]
    %v1559 = vld [vmem:[%s217 + $0x289] sm:$0xff]
    %v1560 = vld [vmem:[%s217 + $0x291] sm:$0xff]
    %v1561 = vld [vmem:[%s217 + $0x2a1] sm:$0xff]
    %v1562 = vld [vmem:[%s217 + $0x2a9] sm:$0xff]
    %v1563 = vld [vmem:[%s217 + $0x2b9] sm:$0xff]
    %v1564 = vld [vmem:[%s217 + $0x2c1] sm:$0xff]
    %v1565 = vld [vmem:[%s217 + $0x2d1] sm:$0xff]
    %v1566 = vld [vmem:[%s217 + $0x2d9] sm:$0xff]
    %v1567 = vld [vmem:[%s217 + $0x2e9] sm:$0xff]
    %v1568 = vld [vmem:[%s217 + $0x2f1] sm:$0xff]
    %v1569 = vld [vmem:[%s217 + $0x301] sm:$0xff]
    %v1570 = vld [vmem:[%s217 + $0x309] sm:$0xff]
    %v1571 = vld [vmem:[%s217 + $0x319] sm:$0xff]
    %v1572 = vld [vmem:[%s217 + $0x321] sm:$0xff]
    %v1573 = vld [vmem:[%s217 + $0x2] sm:$0xff]
    %v1574 = vld [vmem:[%s217 + $0xa] sm:$0xff]
    %v1575 = vld [vmem:[%s217 + $0x1a] sm:$0xff]
    %v1576 = vld [vmem:[%s217 + $0x22] sm:$0xff]
    %v1577 = vld [vmem:[%s217 + $0x32] sm:$0xff]
    %v1578 = vld [vmem:[%s217 + $0x3a] sm:$0xff]
    %v1579 = vld [vmem:[%s217 + $0x4a] sm:$0xff]
    %v1580 = vld [vmem:[%s217 + $0x52] sm:$0xff]
    %v1581 = vld [vmem:[%s217 + $0x62] sm:$0xff]
    %v1582 = vld [vmem:[%s217 + $0x6a] sm:$0xff]
    %v1583 = vld [vmem:[%s217 + $0x7a] sm:$0xff]
    %v1584 = vld [vmem:[%s217 + $0x82] sm:$0xff]
    %v1585 = vld [vmem:[%s217 + $0x92] sm:$0xff]
    %v1586 = vld [vmem:[%s217 + $0x9a] sm:$0xff]
    %v1587 = vld [vmem:[%s217 + $0xaa] sm:$0xff]
    %v1588 = vld [vmem:[%s217 + $0xb2] sm:$0xff]
    %v1589 = vld [vmem:[%s217 + $0xc2] sm:$0xff]
    %v1590 = vld [vmem:[%s217 + $0xca] sm:$0xff]
    %v1591 = vld [vmem:[%s217 + $0xda] sm:$0xff]
    %v1592 = vld [vmem:[%s217 + $0xe2] sm:$0xff]
    %v1593 = vld [vmem:[%s217 + $0xf2] sm:$0xff]
    %v1594 = vld [vmem:[%s217 + $0xfa] sm:$0xff]
    %v1595 = vld [vmem:[%s217 + $0x10a] sm:$0xff]
    %v1596 = vld [vmem:[%s217 + $0x112] sm:$0xff]
    %v1597 = vld [vmem:[%s217 + $0x122] sm:$0xff]
    %v1598 = vld [vmem:[%s217 + $0x12a] sm:$0xff]
    %v1599 = vld [vmem:[%s217 + $0x13a] sm:$0xff]
    %v1600 = vld [vmem:[%s217 + $0x142] sm:$0xff]
    %v1601 = vld [vmem:[%s217 + $0x152] sm:$0xff]
    %v1602 = vld [vmem:[%s217 + $0x15a] sm:$0xff]
    %v1603 = vld [vmem:[%s217 + $0x16a] sm:$0xff]
    %v1604 = vld [vmem:[%s217 + $0x172] sm:$0xff]
    %v1605 = vld [vmem:[%s217 + $0x1b2] sm:$0xff]
    %v1606 = vld [vmem:[%s217 + $0x1ba] sm:$0xff]
    %v1607 = vld [vmem:[%s217 + $0x1ca] sm:$0xff]
    %v1608 = vld [vmem:[%s217 + $0x1d2] sm:$0xff]
    %v1609 = vld [vmem:[%s217 + $0x1e2] sm:$0xff]
    %v1610 = vld [vmem:[%s217 + $0x1ea] sm:$0xff]
    %v1611 = vld [vmem:[%s217 + $0x1fa] sm:$0xff]
    %v1612 = vld [vmem:[%s217 + $0x202] sm:$0xff]
    %v1613 = vld [vmem:[%s217 + $0x212] sm:$0xff]
    %v1614 = vld [vmem:[%s217 + $0x21a] sm:$0xff]
    %v1615 = vld [vmem:[%s217 + $0x22a] sm:$0xff]
    %v1616 = vld [vmem:[%s217 + $0x232] sm:$0xff]
    %v1617 = vld [vmem:[%s217 + $0x242] sm:$0xff]
    %v1618 = vld [vmem:[%s217 + $0x24a] sm:$0xff]
    %v1619 = vld [vmem:[%s217 + $0x25a] sm:$0xff]
    %v1620 = vld [vmem:[%s217 + $0x262] sm:$0xff]
    %v1621 = vld [vmem:[%s217 + $0x272] sm:$0xff]
    %v1622 = vld [vmem:[%s217 + $0x27a] sm:$0xff]
    %v1623 = vld [vmem:[%s217 + $0x28a] sm:$0xff]
    %v1624 = vld [vmem:[%s217 + $0x292] sm:$0xff]
    %v1625 = vld [vmem:[%s217 + $0x2a2] sm:$0xff]
    %v1626 = vld [vmem:[%s217 + $0x2aa] sm:$0xff]
    %v1627 = vld [vmem:[%s217 + $0x2ba] sm:$0xff]
    %v1628 = vld [vmem:[%s217 + $0x2c2] sm:$0xff]
    %v1629 = vld [vmem:[%s217 + $0x2d2] sm:$0xff]
    %v1630 = vld [vmem:[%s217 + $0x2da] sm:$0xff]
    %v1631 = vld [vmem:[%s217 + $0x2ea] sm:$0xff]
    %v1632 = vld [vmem:[%s217 + $0x2f2] sm:$0xff]
    %v1633 = vld [vmem:[%s217 + $0x302] sm:$0xff]
    %v1634 = vld [vmem:[%s217 + $0x30a] sm:$0xff]
    %v1635 = vld [vmem:[%s217 + $0x31a] sm:$0xff]
    %v1636 = vld [vmem:[%s217 + $0x322] sm:$0xff]
    %s1637 = scalar_lea.vmem [#allocation2], 48
    %v1638 = vld [vmem:[%s1637] sm:$0xff]
    %v1639 = vld [vmem:[%s1637 + $0x8] sm:$0xff]
    %v1640 = vld [vmem:[%s1637 + $0x18] sm:$0xff]
    %v1641 = vld [vmem:[%s1637 + $0x20] sm:$0xff]
    %v1642 = vld [vmem:[%s1637 + $0x30] sm:$0xff]
    %v1643 = vld [vmem:[%s1637 + $0x38] sm:$0xff]
    %v1644 = vld [vmem:[%s1637 + $0x48] sm:$0xff]
    %v1645 = vld [vmem:[%s1637 + $0x50] sm:$0xff]
    %v1646 = vld [vmem:[%s1637 + $0x60] sm:$0xff]
    %v1647 = vld [vmem:[%s1637 + $0x68] sm:$0xff]
    %v1648 = vld [vmem:[%s1637 + $0x78] sm:$0xff]
    %v1649 = vld [vmem:[%s1637 + $0x80] sm:$0xff]
    %v1650 = vld [vmem:[%s1637 + $0x90] sm:$0xff]
    %v1651 = vld [vmem:[%s1637 + $0x98] sm:$0xff]
    %v1652 = vld [vmem:[%s1637 + $0xa8] sm:$0xff]
    %v1653 = vld [vmem:[%s1637 + $0xb0] sm:$0xff]
    %v1654 = vld [vmem:[%s1637 + $0xc0] sm:$0xff]
    %v1655 = vld [vmem:[%s1637 + $0xc8] sm:$0xff]
    %v1656 = vld [vmem:[%s1637 + $0xd8] sm:$0xff]
    %v1657 = vld [vmem:[%s1637 + $0xe0] sm:$0xff]
    %v1658 = vld [vmem:[%s1637 + $0xf0] sm:$0xff]
    %v1659 = vld [vmem:[%s1637 + $0xf8] sm:$0xff]
    %v1660 = vld [vmem:[%s1637 + $0x108] sm:$0xff]
    %v1661 = vld [vmem:[%s1637 + $0x110] sm:$0xff]
    %v1662 = vld [vmem:[%s1637 + $0x120] sm:$0xff]
    %v1663 = vld [vmem:[%s1637 + $0x128] sm:$0xff]
    %v1664 = vld [vmem:[%s1637 + $0x138] sm:$0xff]
    %v1665 = vld [vmem:[%s1637 + $0x140] sm:$0xff]
    %v1666 = vld [vmem:[%s1637 + $0x150] sm:$0xff]
    %v1667 = vld [vmem:[%s1637 + $0x158] sm:$0xff]
    %v1668 = vld [vmem:[%s1637 + $0x168] sm:$0xff]
    %v1669 = vld [vmem:[%s1637 + $0x170] sm:$0xff]
    %v1670 = vld [vmem:[%s1637 + $0x1b0] sm:$0xff]
    %v1671 = vld [vmem:[%s1637 + $0x1b8] sm:$0xff]
    %v1672 = vld [vmem:[%s1637 + $0x1c8] sm:$0xff]
    %v1673 = vld [vmem:[%s1637 + $0x1d0] sm:$0xff]
    %v1674 = vld [vmem:[%s1637 + $0x1e0] sm:$0xff]
    %v1675 = vld [vmem:[%s1637 + $0x1e8] sm:$0xff]
    %v1676 = vld [vmem:[%s1637 + $0x1f8] sm:$0xff]
    %v1677 = vld [vmem:[%s1637 + $0x200] sm:$0xff]
    %v1678 = vld [vmem:[%s1637 + $0x210] sm:$0xff]
    %v1679 = vld [vmem:[%s1637 + $0x218] sm:$0xff]
    %v1680 = vld [vmem:[%s1637 + $0x228] sm:$0xff]
    %v1681 = vld [vmem:[%s1637 + $0x230] sm:$0xff]
    %v1682 = vld [vmem:[%s1637 + $0x240] sm:$0xff]
    %v1683 = vld [vmem:[%s1637 + $0x248] sm:$0xff]
    %v1684 = vld [vmem:[%s1637 + $0x258] sm:$0xff]
    %v1685 = vld [vmem:[%s1637 + $0x260] sm:$0xff]
    %v1686 = vld [vmem:[%s1637 + $0x270] sm:$0xff]
    %v1687 = vld [vmem:[%s1637 + $0x278] sm:$0xff]
    %v1688 = vld [vmem:[%s1637 + $0x288] sm:$0xff]
    %v1689 = vld [vmem:[%s1637 + $0x290] sm:$0xff]
    %v1690 = vld [vmem:[%s1637 + $0x2a0] sm:$0xff]
    %v1691 = vld [vmem:[%s1637 + $0x2a8] sm:$0xff]
    %v1692 = vld [vmem:[%s1637 + $0x2b8] sm:$0xff]
    %v1693 = vld [vmem:[%s1637 + $0x2c0] sm:$0xff]
    %v1694 = vld [vmem:[%s1637 + $0x2d0] sm:$0xff]
    %v1695 = vld [vmem:[%s1637 + $0x2d8] sm:$0xff]
    %v1696 = vld [vmem:[%s1637 + $0x2e8] sm:$0xff]
    %v1697 = vld [vmem:[%s1637 + $0x2f0] sm:$0xff]
    %v1698 = vld [vmem:[%s1637 + $0x300] sm:$0xff]
    %v1699 = vld [vmem:[%s1637 + $0x308] sm:$0xff]
    %v1700 = vld [vmem:[%s1637 + $0x318] sm:$0xff]
    %v1701 = vld [vmem:[%s1637 + $0x320] sm:$0xff]
    %v1702 = vld [vmem:[%s1637 + $0x1] sm:$0xff]
    %v1703 = vld [vmem:[%s1637 + $0x9] sm:$0xff]
    %v1704 = vld [vmem:[%s1637 + $0x19] sm:$0xff]
    %v1705 = vld [vmem:[%s1637 + $0x21] sm:$0xff]
    %v1706 = vld [vmem:[%s1637 + $0x31] sm:$0xff]
    %v1707 = vld [vmem:[%s1637 + $0x39] sm:$0xff]
    %v1708 = vld [vmem:[%s1637 + $0x49] sm:$0xff]
    %v1709 = vld [vmem:[%s1637 + $0x51] sm:$0xff]
    %v1710 = vld [vmem:[%s1637 + $0x61] sm:$0xff]
    %v1711 = vld [vmem:[%s1637 + $0x69] sm:$0xff]
    %v1712 = vld [vmem:[%s1637 + $0x79] sm:$0xff]
    %v1713 = vld [vmem:[%s1637 + $0x81] sm:$0xff]
    %v1714 = vld [vmem:[%s1637 + $0x91] sm:$0xff]
    %v1715 = vld [vmem:[%s1637 + $0x99] sm:$0xff]
    %v1716 = vld [vmem:[%s1637 + $0xa9] sm:$0xff]
    %v1717 = vld [vmem:[%s1637 + $0xb1] sm:$0xff]
    %v1718 = vld [vmem:[%s1637 + $0xc1] sm:$0xff]
    %v1719 = vld [vmem:[%s1637 + $0xc9] sm:$0xff]
    %v1720 = vld [vmem:[%s1637 + $0xd9] sm:$0xff]
    %v1721 = vld [vmem:[%s1637 + $0xe1] sm:$0xff]
    %v1722 = vld [vmem:[%s1637 + $0xf1] sm:$0xff]
    %v1723 = vld [vmem:[%s1637 + $0xf9] sm:$0xff]
    %v1724 = vld [vmem:[%s1637 + $0x109] sm:$0xff]
    %v1725 = vld [vmem:[%s1637 + $0x111] sm:$0xff]
    %v1726 = vld [vmem:[%s1637 + $0x121] sm:$0xff]
    %v1727 = vld [vmem:[%s1637 + $0x129] sm:$0xff]
    %v1728 = vld [vmem:[%s1637 + $0x139] sm:$0xff]
    %v1729 = vld [vmem:[%s1637 + $0x141] sm:$0xff]
    %v1730 = vld [vmem:[%s1637 + $0x151] sm:$0xff]
    %v1731 = vld [vmem:[%s1637 + $0x159] sm:$0xff]
    %v1732 = vld [vmem:[%s1637 + $0x169] sm:$0xff]
    %v1733 = vld [vmem:[%s1637 + $0x171] sm:$0xff]
    %v1734 = vld [vmem:[%s1637 + $0x1b1] sm:$0xff]
    %v1735 = vld [vmem:[%s1637 + $0x1b9] sm:$0xff]
    %v1736 = vld [vmem:[%s1637 + $0x1c9] sm:$0xff]
    %v1737 = vld [vmem:[%s1637 + $0x1d1] sm:$0xff]
    %v1738 = vld [vmem:[%s1637 + $0x1e1] sm:$0xff]
    %v1739 = vld [vmem:[%s1637 + $0x1e9] sm:$0xff]
    %v1740 = vld [vmem:[%s1637 + $0x1f9] sm:$0xff]
    %v1741 = vld [vmem:[%s1637 + $0x201] sm:$0xff]
    %v1742 = vld [vmem:[%s1637 + $0x211] sm:$0xff]
    %v1743 = vld [vmem:[%s1637 + $0x219] sm:$0xff]
    %v1744 = vld [vmem:[%s1637 + $0x229] sm:$0xff]
    %v1745 = vld [vmem:[%s1637 + $0x231] sm:$0xff]
    %v1746 = vld [vmem:[%s1637 + $0x241] sm:$0xff]
    %v1747 = vld [vmem:[%s1637 + $0x249] sm:$0xff]
    %v1748 = vld [vmem:[%s1637 + $0x259] sm:$0xff]
    %v1749 = vld [vmem:[%s1637 + $0x261] sm:$0xff]
    %v1750 = vld [vmem:[%s1637 + $0x271] sm:$0xff]
    %v1751 = vld [vmem:[%s1637 + $0x279] sm:$0xff]
    %v1752 = vld [vmem:[%s1637 + $0x289] sm:$0xff]
    %v1753 = vld [vmem:[%s1637 + $0x291] sm:$0xff]
    %v1754 = vld [vmem:[%s1637 + $0x2a1] sm:$0xff]
    %v1755 = vld [vmem:[%s1637 + $0x2a9] sm:$0xff]
    %v1756 = vld [vmem:[%s1637 + $0x2b9] sm:$0xff]
    %v1757 = vld [vmem:[%s1637 + $0x2c1] sm:$0xff]
    %v1758 = vld [vmem:[%s1637 + $0x2d1] sm:$0xff]
    %v1759 = vld [vmem:[%s1637 + $0x2d9] sm:$0xff]
    %v1760 = vld [vmem:[%s1637 + $0x2e9] sm:$0xff]
    %v1761 = vld [vmem:[%s1637 + $0x2f1] sm:$0xff]
    %v1762 = vld [vmem:[%s1637 + $0x301] sm:$0xff]
    %v1763 = vld [vmem:[%s1637 + $0x309] sm:$0xff]
    %v1764 = vld [vmem:[%s1637 + $0x319] sm:$0xff]
    %v1765 = vld [vmem:[%s1637 + $0x321] sm:$0xff]
    %v1766 = vld [vmem:[%s1637 + $0x2] sm:$0xff]
    %v1767 = vld [vmem:[%s1637 + $0xa] sm:$0xff]
    %v1768 = vld [vmem:[%s1637 + $0x1a] sm:$0xff]
    %v1769 = vld [vmem:[%s1637 + $0x22] sm:$0xff]
    %v1770 = vld [vmem:[%s1637 + $0x32] sm:$0xff]
    %v1771 = vld [vmem:[%s1637 + $0x3a] sm:$0xff]
    %v1772 = vld [vmem:[%s1637 + $0x4a] sm:$0xff]
    %v1773 = vld [vmem:[%s1637 + $0x52] sm:$0xff]
    %v1774 = vld [vmem:[%s1637 + $0x62] sm:$0xff]
    %v1775 = vld [vmem:[%s1637 + $0x6a] sm:$0xff]
    %v1776 = vld [vmem:[%s1637 + $0x7a] sm:$0xff]
    %v1777 = vld [vmem:[%s1637 + $0x82] sm:$0xff]
    %v1778 = vld [vmem:[%s1637 + $0x92] sm:$0xff]
    %v1779 = vld [vmem:[%s1637 + $0x9a] sm:$0xff]
    %v1780 = vld [vmem:[%s1637 + $0xaa] sm:$0xff]
    %v1781 = vld [vmem:[%s1637 + $0xb2] sm:$0xff]
    %v1782 = vld [vmem:[%s1637 + $0xc2] sm:$0xff]
    %v1783 = vld [vmem:[%s1637 + $0xca] sm:$0xff]
    %v1784 = vld [vmem:[%s1637 + $0xda] sm:$0xff]
    %v1785 = vld [vmem:[%s1637 + $0xe2] sm:$0xff]
    %v1786 = vld [vmem:[%s1637 + $0xf2] sm:$0xff]
    %v1787 = vld [vmem:[%s1637 + $0xfa] sm:$0xff]
    %v1788 = vld [vmem:[%s1637 + $0x10a] sm:$0xff]
    %v1789 = vld [vmem:[%s1637 + $0x112] sm:$0xff]
    %v1790 = vld [vmem:[%s1637 + $0x122] sm:$0xff]
    %v1791 = vld [vmem:[%s1637 + $0x12a] sm:$0xff]
    %v1792 = vld [vmem:[%s1637 + $0x13a] sm:$0xff]
    %v1793 = vld [vmem:[%s1637 + $0x142] sm:$0xff]
    %v1794 = vld [vmem:[%s1637 + $0x152] sm:$0xff]
    %v1795 = vld [vmem:[%s1637 + $0x15a] sm:$0xff]
    %v1796 = vld [vmem:[%s1637 + $0x16a] sm:$0xff]
    %v1797 = vld [vmem:[%s1637 + $0x172] sm:$0xff]
    %v1798 = vld [vmem:[%s1637 + $0x1b2] sm:$0xff]
    %v1799 = vld [vmem:[%s1637 + $0x1ba] sm:$0xff]
    %v1800 = vld [vmem:[%s1637 + $0x1ca] sm:$0xff]
    %v1801 = vld [vmem:[%s1637 + $0x1d2] sm:$0xff]
    %v1802 = vld [vmem:[%s1637 + $0x1e2] sm:$0xff]
    %v1803 = vld [vmem:[%s1637 + $0x1ea] sm:$0xff]
    %v1804 = vld [vmem:[%s1637 + $0x1fa] sm:$0xff]
    %v1805 = vld [vmem:[%s1637 + $0x202] sm:$0xff]
    %v1806 = vld [vmem:[%s1637 + $0x212] sm:$0xff]
    %v1807 = vld [vmem:[%s1637 + $0x21a] sm:$0xff]
    %v1808 = vld [vmem:[%s1637 + $0x22a] sm:$0xff]
    %v1809 = vld [vmem:[%s1637 + $0x232] sm:$0xff]
    %v1810 = vld [vmem:[%s1637 + $0x242] sm:$0xff]
    %v1811 = vld [vmem:[%s1637 + $0x24a] sm:$0xff]
    %v1812 = vld [vmem:[%s1637 + $0x25a] sm:$0xff]
    %v1813 = vld [vmem:[%s1637 + $0x262] sm:$0xff]
    %v1814 = vld [vmem:[%s1637 + $0x272] sm:$0xff]
    %v1815 = vld [vmem:[%s1637 + $0x27a] sm:$0xff]
    %v1816 = vld [vmem:[%s1637 + $0x28a] sm:$0xff]
    %v1817 = vld [vmem:[%s1637 + $0x292] sm:$0xff]
    %v1818 = vld [vmem:[%s1637 + $0x2a2] sm:$0xff]
    %v1819 = vld [vmem:[%s1637 + $0x2aa] sm:$0xff]
    %v1820 = vld [vmem:[%s1637 + $0x2ba] sm:$0xff]
    %v1821 = vld [vmem:[%s1637 + $0x2c2] sm:$0xff]
    %v1822 = vld [vmem:[%s1637 + $0x2d2] sm:$0xff]
    %v1823 = vld [vmem:[%s1637 + $0x2da] sm:$0xff]
    %v1824 = vld [vmem:[%s1637 + $0x2ea] sm:$0xff]
    %v1825 = vld [vmem:[%s1637 + $0x2f2] sm:$0xff]
    %v1826 = vld [vmem:[%s1637 + $0x302] sm:$0xff]
    %v1827 = vld [vmem:[%s1637 + $0x30a] sm:$0xff]
    %v1828 = vld [vmem:[%s1637 + $0x31a] sm:$0xff]
    %v1829 = vld [vmem:[%s1637 + $0x322] sm:$0xff]
    %1894 = vrot.lane.b32.xlu0 %v1317, 16
    %v1895 = vpop.permute.xlu0 %1894
    %1896 = vrot.lane.b32.xlu0 %v1318, 16
    %v1897 = vpop.permute.xlu0 %1896
    %1898 = vrot.lane.b32.xlu0 %v1319, 16
    %v1899 = vpop.permute.xlu0 %1898
    %1900 = vrot.lane.b32.xlu0 %v1320, 16
    %v1901 = vpop.permute.xlu0 %1900
    %1902 = vrot.lane.b32.xlu0 %v1321, 16
    %v1903 = vpop.permute.xlu0 %1902
    %1904 = vrot.lane.b32.xlu0 %v1322, 16
    %v1905 = vpop.permute.xlu0 %1904
    %1906 = vrot.lane.b32.xlu0 %v1323, 16
    %v1907 = vpop.permute.xlu0 %1906
    %1908 = vrot.lane.b32.xlu0 %v1324, 16
    %v1909 = vpop.permute.xlu0 %1908
    %1910 = vrot.lane.b32.xlu0 %v1325, 16
    %v1911 = vpop.permute.xlu0 %1910
    %1912 = vrot.lane.b32.xlu0 %v1326, 16
    %v1913 = vpop.permute.xlu0 %1912
    %1914 = vrot.lane.b32.xlu0 %v1327, 16
    %v1915 = vpop.permute.xlu0 %1914
    %1916 = vrot.lane.b32.xlu0 %v1328, 16
    %v1917 = vpop.permute.xlu0 %1916
    %1918 = vrot.lane.b32.xlu0 %v1329, 16
    %v1919 = vpop.permute.xlu0 %1918
    %1920 = vrot.lane.b32.xlu0 %v1330, 16
    %v1921 = vpop.permute.xlu0 %1920
    %1922 = vrot.lane.b32.xlu0 %v1331, 16
    %v1923 = vpop.permute.xlu0 %1922
    %1924 = vrot.lane.b32.xlu0 %v1332, 16
    %v1925 = vpop.permute.xlu0 %1924
    %1926 = vrot.lane.b32.xlu0 %v1333, 16
    %v1927 = vpop.permute.xlu0 %1926
    %1928 = vrot.lane.b32.xlu0 %v1334, 16
    %v1929 = vpop.permute.xlu0 %1928
    %1930 = vrot.lane.b32.xlu0 %v1335, 16
    %v1931 = vpop.permute.xlu0 %1930
    %1932 = vrot.lane.b32.xlu0 %v1336, 16
    %v1933 = vpop.permute.xlu0 %1932
    %1934 = vrot.lane.b32.xlu0 %v1337, 16
    %v1935 = vpop.permute.xlu0 %1934
    %1936 = vrot.lane.b32.xlu0 %v1338, 16
    %v1937 = vpop.permute.xlu0 %1936
    %1938 = vrot.lane.b32.xlu0 %v1339, 16
    %v1939 = vpop.permute.xlu0 %1938
    %1940 = vrot.lane.b32.xlu0 %v1340, 16
    %v1941 = vpop.permute.xlu0 %1940
    %1942 = vrot.lane.b32.xlu0 %v1341, 16
    %v1943 = vpop.permute.xlu0 %1942
    %1944 = vrot.lane.b32.xlu0 %v1342, 16
    %v1945 = vpop.permute.xlu0 %1944
    %1946 = vrot.lane.b32.xlu0 %v1343, 16
    %v1947 = vpop.permute.xlu0 %1946
    %1948 = vrot.lane.b32.xlu0 %v1344, 16
    %v1949 = vpop.permute.xlu0 %1948
    %1950 = vrot.lane.b32.xlu0 %v1345, 16
    %v1951 = vpop.permute.xlu0 %1950
    %1952 = vrot.lane.b32.xlu0 %v1346, 16
    %v1953 = vpop.permute.xlu0 %1952
    %1954 = vrot.lane.b32.xlu0 %v1347, 16
    %v1955 = vpop.permute.xlu0 %1954
    %1956 = vrot.lane.b32.xlu0 %v1348, 16
    %v1957 = vpop.permute.xlu0 %1956
    %1958 = vrot.lane.b32.xlu0 %v1349, 16
    %v1959 = vpop.permute.xlu0 %1958
    %1960 = vrot.lane.b32.xlu0 %v1350, 16
    %v1961 = vpop.permute.xlu0 %1960
    %1962 = vrot.lane.b32.xlu0 %v1351, 16
    %v1963 = vpop.permute.xlu0 %1962
    %1964 = vrot.lane.b32.xlu0 %v1352, 16
    %v1965 = vpop.permute.xlu0 %1964
    %1966 = vrot.lane.b32.xlu0 %v1353, 16
    %v1967 = vpop.permute.xlu0 %1966
    %1968 = vrot.lane.b32.xlu0 %v1354, 16
    %v1969 = vpop.permute.xlu0 %1968
    %1970 = vrot.lane.b32.xlu0 %v1355, 16
    %v1971 = vpop.permute.xlu0 %1970
    %1972 = vrot.lane.b32.xlu0 %v1356, 16
    %v1973 = vpop.permute.xlu0 %1972
    %1974 = vrot.lane.b32.xlu0 %v1357, 16
    %v1975 = vpop.permute.xlu0 %1974
    %1976 = vrot.lane.b32.xlu0 %v1358, 16
    %v1977 = vpop.permute.xlu0 %1976
    %1978 = vrot.lane.b32.xlu0 %v1359, 16
    %v1979 = vpop.permute.xlu0 %1978
    %1980 = vrot.lane.b32.xlu0 %v1360, 16
    %v1981 = vpop.permute.xlu0 %1980
    %1982 = vrot.lane.b32.xlu0 %v1361, 16
    %v1983 = vpop.permute.xlu0 %1982
    %1984 = vrot.lane.b32.xlu0 %v1362, 16
    %v1985 = vpop.permute.xlu0 %1984
    %1986 = vrot.lane.b32.xlu0 %v1363, 16
    %v1987 = vpop.permute.xlu0 %1986
    %1988 = vrot.lane.b32.xlu0 %v1364, 16
    %v1989 = vpop.permute.xlu0 %1988
    %1990 = vrot.lane.b32.xlu0 %v1365, 16
    %v1991 = vpop.permute.xlu0 %1990
    %1992 = vrot.lane.b32.xlu0 %v1366, 16
    %v1993 = vpop.permute.xlu0 %1992
    %1994 = vrot.lane.b32.xlu0 %v1367, 16
    %v1995 = vpop.permute.xlu0 %1994
    %1996 = vrot.lane.b32.xlu0 %v1368, 16
    %v1997 = vpop.permute.xlu0 %1996
    %1998 = vrot.lane.b32.xlu0 %v1369, 16
    %v1999 = vpop.permute.xlu0 %1998
    %2000 = vrot.lane.b32.xlu0 %v1370, 16
    %v2001 = vpop.permute.xlu0 %2000
    %2002 = vrot.lane.b32.xlu0 %v1371, 16
    %v2003 = vpop.permute.xlu0 %2002
    %2004 = vrot.lane.b32.xlu0 %v1372, 16
    %v2005 = vpop.permute.xlu0 %2004
    %2006 = vrot.lane.b32.xlu0 %v1373, 16
    %v2007 = vpop.permute.xlu0 %2006
    %2008 = vrot.lane.b32.xlu0 %v1374, 16
    %v2009 = vpop.permute.xlu0 %2008
    %2010 = vrot.lane.b32.xlu0 %v1375, 16
    %v2011 = vpop.permute.xlu0 %2010
    %2012 = vrot.lane.b32.xlu0 %v1376, 16
    %v2013 = vpop.permute.xlu0 %2012
    %2014 = vrot.lane.b32.xlu0 %v1377, 16
    %v2015 = vpop.permute.xlu0 %2014
    %2016 = vrot.lane.b32.xlu0 %v1378, 16
    %v2017 = vpop.permute.xlu0 %2016
    %2018 = vrot.lane.b32.xlu0 %v1379, 16
    %v2019 = vpop.permute.xlu0 %2018
    %2020 = vrot.lane.b32.xlu0 %v1380, 16
    %v2021 = vpop.permute.xlu0 %2020
    %2150 = vrot.lane.b32.xlu0 %v1381, 32
    %v2151 = vpop.permute.xlu0 %2150
    %2152 = vrot.lane.b32.xlu0 %v1382, 32
    %v2153 = vpop.permute.xlu0 %2152
    %2154 = vrot.lane.b32.xlu0 %v1383, 32
    %v2155 = vpop.permute.xlu0 %2154
    %2156 = vrot.lane.b32.xlu0 %v1384, 32
    %v2157 = vpop.permute.xlu0 %2156
    %2158 = vrot.lane.b32.xlu0 %v1385, 32
    %v2159 = vpop.permute.xlu0 %2158
    %2160 = vrot.lane.b32.xlu0 %v1386, 32
    %v2161 = vpop.permute.xlu0 %2160
    %2162 = vrot.lane.b32.xlu0 %v1387, 32
    %v2163 = vpop.permute.xlu0 %2162
    %2164 = vrot.lane.b32.xlu0 %v1388, 32
    %v2165 = vpop.permute.xlu0 %2164
    %2166 = vrot.lane.b32.xlu0 %v1389, 32
    %v2167 = vpop.permute.xlu0 %2166
    %2168 = vrot.lane.b32.xlu0 %v1390, 32
    %v2169 = vpop.permute.xlu0 %2168
    %2170 = vrot.lane.b32.xlu0 %v1391, 32
    %v2171 = vpop.permute.xlu0 %2170
    %2172 = vrot.lane.b32.xlu0 %v1392, 32
    %v2173 = vpop.permute.xlu0 %2172
    %2174 = vrot.lane.b32.xlu0 %v1393, 32
    %v2175 = vpop.permute.xlu0 %2174
    %2176 = vrot.lane.b32.xlu0 %v1394, 32
    %v2177 = vpop.permute.xlu0 %2176
    %2178 = vrot.lane.b32.xlu0 %v1395, 32
    %v2179 = vpop.permute.xlu0 %2178
    %2180 = vrot.lane.b32.xlu0 %v1396, 32
    %v2181 = vpop.permute.xlu0 %2180
    %2182 = vrot.lane.b32.xlu0 %v1397, 32
    %v2183 = vpop.permute.xlu0 %2182
    %2184 = vrot.lane.b32.xlu0 %v1398, 32
    %v2185 = vpop.permute.xlu0 %2184
    %2186 = vrot.lane.b32.xlu0 %v1399, 32
    %v2187 = vpop.permute.xlu0 %2186
    %2188 = vrot.lane.b32.xlu0 %v1400, 32
    %v2189 = vpop.permute.xlu0 %2188
    %2190 = vrot.lane.b32.xlu0 %v1401, 32
    %v2191 = vpop.permute.xlu0 %2190
    %2192 = vrot.lane.b32.xlu0 %v1402, 32
    %v2193 = vpop.permute.xlu0 %2192
    %2194 = vrot.lane.b32.xlu0 %v1403, 32
    %v2195 = vpop.permute.xlu0 %2194
    %2196 = vrot.lane.b32.xlu0 %v1404, 32
    %v2197 = vpop.permute.xlu0 %2196
    %2198 = vrot.lane.b32.xlu0 %v1405, 32
    %v2199 = vpop.permute.xlu0 %2198
    %2200 = vrot.lane.b32.xlu0 %v1406, 32
    %v2201 = vpop.permute.xlu0 %2200
    %2202 = vrot.lane.b32.xlu0 %v1407, 32
    %v2203 = vpop.permute.xlu0 %2202
    %2204 = vrot.lane.b32.xlu0 %v1408, 32
    %v2205 = vpop.permute.xlu0 %2204
    %2206 = vrot.lane.b32.xlu0 %v1409, 32
    %v2207 = vpop.permute.xlu0 %2206
    %2208 = vrot.lane.b32.xlu0 %v1410, 32
    %v2209 = vpop.permute.xlu0 %2208
    %2210 = vrot.lane.b32.xlu0 %v1411, 32
    %v2211 = vpop.permute.xlu0 %2210
    %2212 = vrot.lane.b32.xlu0 %v1412, 32
    %v2213 = vpop.permute.xlu0 %2212
    %2214 = vrot.lane.b32.xlu0 %v1413, 32
    %v2215 = vpop.permute.xlu0 %2214
    %2216 = vrot.lane.b32.xlu0 %v1414, 32
    %v2217 = vpop.permute.xlu0 %2216
    %2218 = vrot.lane.b32.xlu0 %v1415, 32
    %v2219 = vpop.permute.xlu0 %2218
    %2220 = vrot.lane.b32.xlu0 %v1416, 32
    %v2221 = vpop.permute.xlu0 %2220
    %2222 = vrot.lane.b32.xlu0 %v1417, 32
    %v2223 = vpop.permute.xlu0 %2222
    %2224 = vrot.lane.b32.xlu0 %v1418, 32
    %v2225 = vpop.permute.xlu0 %2224
    %2226 = vrot.lane.b32.xlu0 %v1419, 32
    %v2227 = vpop.permute.xlu0 %2226
    %2228 = vrot.lane.b32.xlu0 %v1420, 32
    %v2229 = vpop.permute.xlu0 %2228
    %2230 = vrot.lane.b32.xlu0 %v1421, 32
    %v2231 = vpop.permute.xlu0 %2230
    %2232 = vrot.lane.b32.xlu0 %v1422, 32
    %v2233 = vpop.permute.xlu0 %2232
    %2234 = vrot.lane.b32.xlu0 %v1423, 32
    %v2235 = vpop.permute.xlu0 %2234
    %2236 = vrot.lane.b32.xlu0 %v1424, 32
    %v2237 = vpop.permute.xlu0 %2236
    %2238 = vrot.lane.b32.xlu0 %v1425, 32
    %v2239 = vpop.permute.xlu0 %2238
    %2240 = vrot.lane.b32.xlu0 %v1426, 32
    %v2241 = vpop.permute.xlu0 %2240
    %2242 = vrot.lane.b32.xlu0 %v1427, 32
    %v2243 = vpop.permute.xlu0 %2242
    %2244 = vrot.lane.b32.xlu0 %v1428, 32
    %v2245 = vpop.permute.xlu0 %2244
    %2246 = vrot.lane.b32.xlu0 %v1429, 32
    %v2247 = vpop.permute.xlu0 %2246
    %2248 = vrot.lane.b32.xlu0 %v1430, 32
    %v2249 = vpop.permute.xlu0 %2248
    %2250 = vrot.lane.b32.xlu0 %v1431, 32
    %v2251 = vpop.permute.xlu0 %2250
    %2252 = vrot.lane.b32.xlu0 %v1432, 32
    %v2253 = vpop.permute.xlu0 %2252
    %2254 = vrot.lane.b32.xlu0 %v1433, 32
    %v2255 = vpop.permute.xlu0 %2254
    %2256 = vrot.lane.b32.xlu0 %v1434, 32
    %v2257 = vpop.permute.xlu0 %2256
    %2258 = vrot.lane.b32.xlu0 %v1435, 32
    %v2259 = vpop.permute.xlu0 %2258
    %2260 = vrot.lane.b32.xlu0 %v1436, 32
    %v2261 = vpop.permute.xlu0 %2260
    %2262 = vrot.lane.b32.xlu0 %v1437, 32
    %v2263 = vpop.permute.xlu0 %2262
    %2264 = vrot.lane.b32.xlu0 %v1438, 32
    %v2265 = vpop.permute.xlu0 %2264
    %2266 = vrot.lane.b32.xlu0 %v1439, 32
    %v2267 = vpop.permute.xlu0 %2266
    %2268 = vrot.lane.b32.xlu0 %v1440, 32
    %v2269 = vpop.permute.xlu0 %2268
    %2270 = vrot.lane.b32.xlu0 %v1441, 32
    %v2271 = vpop.permute.xlu0 %2270
    %2272 = vrot.lane.b32.xlu0 %v1442, 32
    %v2273 = vpop.permute.xlu0 %2272
    %2274 = vrot.lane.b32.xlu0 %v1443, 32
    %v2275 = vpop.permute.xlu0 %2274
    %2276 = vrot.lane.b32.xlu0 %v1444, 32
    %v2277 = vpop.permute.xlu0 %2276
    %2406 = vrot.lane.b32.xlu0 %v1445, 48
    %v2407 = vpop.permute.xlu0 %2406
    %2408 = vrot.lane.b32.xlu0 %v1446, 48
    %v2409 = vpop.permute.xlu0 %2408
    %2410 = vrot.lane.b32.xlu0 %v1447, 48
    %v2411 = vpop.permute.xlu0 %2410
    %2412 = vrot.lane.b32.xlu0 %v1448, 48
    %v2413 = vpop.permute.xlu0 %2412
    %2414 = vrot.lane.b32.xlu0 %v1449, 48
    %v2415 = vpop.permute.xlu0 %2414
    %2416 = vrot.lane.b32.xlu0 %v1450, 48
    %v2417 = vpop.permute.xlu0 %2416
    %2418 = vrot.lane.b32.xlu0 %v1451, 48
    %v2419 = vpop.permute.xlu0 %2418
    %2420 = vrot.lane.b32.xlu0 %v1452, 48
    %v2421 = vpop.permute.xlu0 %2420
    %2422 = vrot.lane.b32.xlu0 %v1453, 48
    %v2423 = vpop.permute.xlu0 %2422
    %2424 = vrot.lane.b32.xlu0 %v1454, 48
    %v2425 = vpop.permute.xlu0 %2424
    %2426 = vrot.lane.b32.xlu0 %v1455, 48
    %v2427 = vpop.permute.xlu0 %2426
    %2428 = vrot.lane.b32.xlu0 %v1456, 48
    %v2429 = vpop.permute.xlu0 %2428
    %2430 = vrot.lane.b32.xlu0 %v1457, 48
    %v2431 = vpop.permute.xlu0 %2430
    %2432 = vrot.lane.b32.xlu0 %v1458, 48
    %v2433 = vpop.permute.xlu0 %2432
    %2434 = vrot.lane.b32.xlu0 %v1459, 48
    %v2435 = vpop.permute.xlu0 %2434
    %2436 = vrot.lane.b32.xlu0 %v1460, 48
    %v2437 = vpop.permute.xlu0 %2436
    %2438 = vrot.lane.b32.xlu0 %v1461, 48
    %v2439 = vpop.permute.xlu0 %2438
    %2440 = vrot.lane.b32.xlu0 %v1462, 48
    %v2441 = vpop.permute.xlu0 %2440
    %2442 = vrot.lane.b32.xlu0 %v1463, 48
    %v2443 = vpop.permute.xlu0 %2442
    %2444 = vrot.lane.b32.xlu0 %v1464, 48
    %v2445 = vpop.permute.xlu0 %2444
    %2446 = vrot.lane.b32.xlu0 %v1465, 48
    %v2447 = vpop.permute.xlu0 %2446
    %2448 = vrot.lane.b32.xlu0 %v1466, 48
    %v2449 = vpop.permute.xlu0 %2448
    %2450 = vrot.lane.b32.xlu0 %v1467, 48
    %v2451 = vpop.permute.xlu0 %2450
    %2452 = vrot.lane.b32.xlu0 %v1468, 48
    %v2453 = vpop.permute.xlu0 %2452
    %2454 = vrot.lane.b32.xlu0 %v1469, 48
    %v2455 = vpop.permute.xlu0 %2454
    %2456 = vrot.lane.b32.xlu0 %v1470, 48
    %v2457 = vpop.permute.xlu0 %2456
    %2458 = vrot.lane.b32.xlu0 %v1471, 48
    %v2459 = vpop.permute.xlu0 %2458
    %2460 = vrot.lane.b32.xlu0 %v1472, 48
    %v2461 = vpop.permute.xlu0 %2460
    %2462 = vrot.lane.b32.xlu0 %v1473, 48
    %v2463 = vpop.permute.xlu0 %2462
    %2464 = vrot.lane.b32.xlu0 %v1474, 48
    %v2465 = vpop.permute.xlu0 %2464
    %2466 = vrot.lane.b32.xlu0 %v1475, 48
    %v2467 = vpop.permute.xlu0 %2466
    %2468 = vrot.lane.b32.xlu0 %v1476, 48
    %v2469 = vpop.permute.xlu0 %2468
    %2470 = vrot.lane.b32.xlu0 %v1477, 48
    %v2471 = vpop.permute.xlu0 %2470
    %2472 = vrot.lane.b32.xlu0 %v1478, 48
    %v2473 = vpop.permute.xlu0 %2472
    %2474 = vrot.lane.b32.xlu0 %v1479, 48
    %v2475 = vpop.permute.xlu0 %2474
    %2476 = vrot.lane.b32.xlu0 %v1480, 48
    %v2477 = vpop.permute.xlu0 %2476
    %2478 = vrot.lane.b32.xlu0 %v1481, 48
    %v2479 = vpop.permute.xlu0 %2478
    %2480 = vrot.lane.b32.xlu0 %v1482, 48
    %v2481 = vpop.permute.xlu0 %2480
    %2482 = vrot.lane.b32.xlu0 %v1483, 48
    %v2483 = vpop.permute.xlu0 %2482
    %2484 = vrot.lane.b32.xlu0 %v1484, 48
    %v2485 = vpop.permute.xlu0 %2484
    %2486 = vrot.lane.b32.xlu0 %v1485, 48
    %v2487 = vpop.permute.xlu0 %2486
    %2488 = vrot.lane.b32.xlu0 %v1486, 48
    %v2489 = vpop.permute.xlu0 %2488
    %2490 = vrot.lane.b32.xlu0 %v1487, 48
    %v2491 = vpop.permute.xlu0 %2490
    %2492 = vrot.lane.b32.xlu0 %v1488, 48
    %v2493 = vpop.permute.xlu0 %2492
    %2494 = vrot.lane.b32.xlu0 %v1489, 48
    %v2495 = vpop.permute.xlu0 %2494
    %2496 = vrot.lane.b32.xlu0 %v1490, 48
    %v2497 = vpop.permute.xlu0 %2496
    %2498 = vrot.lane.b32.xlu0 %v1491, 48
    %v2499 = vpop.permute.xlu0 %2498
    %2500 = vrot.lane.b32.xlu0 %v1492, 48
    %v2501 = vpop.permute.xlu0 %2500
    %2502 = vrot.lane.b32.xlu0 %v1493, 48
    %v2503 = vpop.permute.xlu0 %2502
    %2504 = vrot.lane.b32.xlu0 %v1494, 48
    %v2505 = vpop.permute.xlu0 %2504
    %2506 = vrot.lane.b32.xlu0 %v1495, 48
    %v2507 = vpop.permute.xlu0 %2506
    %2508 = vrot.lane.b32.xlu0 %v1496, 48
    %v2509 = vpop.permute.xlu0 %2508
    %2510 = vrot.lane.b32.xlu0 %v1497, 48
    %v2511 = vpop.permute.xlu0 %2510
    %2512 = vrot.lane.b32.xlu0 %v1498, 48
    %v2513 = vpop.permute.xlu0 %2512
    %2514 = vrot.lane.b32.xlu0 %v1499, 48
    %v2515 = vpop.permute.xlu0 %2514
    %2516 = vrot.lane.b32.xlu0 %v1500, 48
    %v2517 = vpop.permute.xlu0 %2516
    %2518 = vrot.lane.b32.xlu0 %v1501, 48
    %v2519 = vpop.permute.xlu0 %2518
    %2520 = vrot.lane.b32.xlu0 %v1502, 48
    %v2521 = vpop.permute.xlu0 %2520
    %2522 = vrot.lane.b32.xlu0 %v1503, 48
    %v2523 = vpop.permute.xlu0 %2522
    %2524 = vrot.lane.b32.xlu0 %v1504, 48
    %v2525 = vpop.permute.xlu0 %2524
    %2526 = vrot.lane.b32.xlu0 %v1505, 48
    %v2527 = vpop.permute.xlu0 %2526
    %2528 = vrot.lane.b32.xlu0 %v1506, 48
    %v2529 = vpop.permute.xlu0 %2528
    %2530 = vrot.lane.b32.xlu0 %v1507, 48
    %v2531 = vpop.permute.xlu0 %2530
    %2532 = vrot.lane.b32.xlu0 %v1508, 48
    %v2533 = vpop.permute.xlu0 %2532
    %2662 = vrot.lane.b32.xlu0 %v1509, 64
    %v2663 = vpop.permute.xlu0 %2662
    %2664 = vrot.lane.b32.xlu0 %v1510, 64
    %v2665 = vpop.permute.xlu0 %2664
    %2666 = vrot.lane.b32.xlu0 %v1511, 64
    %v2667 = vpop.permute.xlu0 %2666
    %2668 = vrot.lane.b32.xlu0 %v1512, 64
    %v2669 = vpop.permute.xlu0 %2668
    %2670 = vrot.lane.b32.xlu0 %v1513, 64
    %v2671 = vpop.permute.xlu0 %2670
    %2672 = vrot.lane.b32.xlu0 %v1514, 64
    %v2673 = vpop.permute.xlu0 %2672
    %2674 = vrot.lane.b32.xlu0 %v1515, 64
    %v2675 = vpop.permute.xlu0 %2674
    %2676 = vrot.lane.b32.xlu0 %v1516, 64
    %v2677 = vpop.permute.xlu0 %2676
    %2678 = vrot.lane.b32.xlu0 %v1517, 64
    %v2679 = vpop.permute.xlu0 %2678
    %2680 = vrot.lane.b32.xlu0 %v1518, 64
    %v2681 = vpop.permute.xlu0 %2680
    %2682 = vrot.lane.b32.xlu0 %v1519, 64
    %v2683 = vpop.permute.xlu0 %2682
    %2684 = vrot.lane.b32.xlu0 %v1520, 64
    %v2685 = vpop.permute.xlu0 %2684
    %2686 = vrot.lane.b32.xlu0 %v1521, 64
    %v2687 = vpop.permute.xlu0 %2686
    %2688 = vrot.lane.b32.xlu0 %v1522, 64
    %v2689 = vpop.permute.xlu0 %2688
    %2690 = vrot.lane.b32.xlu0 %v1523, 64
    %v2691 = vpop.permute.xlu0 %2690
    %2692 = vrot.lane.b32.xlu0 %v1524, 64
    %v2693 = vpop.permute.xlu0 %2692
    %2694 = vrot.lane.b32.xlu0 %v1525, 64
    %v2695 = vpop.permute.xlu0 %2694
    %2696 = vrot.lane.b32.xlu0 %v1526, 64
    %v2697 = vpop.permute.xlu0 %2696
    %2698 = vrot.lane.b32.xlu0 %v1527, 64
    %v2699 = vpop.permute.xlu0 %2698
    %2700 = vrot.lane.b32.xlu0 %v1528, 64
    %v2701 = vpop.permute.xlu0 %2700
    %2702 = vrot.lane.b32.xlu0 %v1529, 64
    %v2703 = vpop.permute.xlu0 %2702
    %2704 = vrot.lane.b32.xlu0 %v1530, 64
    %v2705 = vpop.permute.xlu0 %2704
    %2706 = vrot.lane.b32.xlu0 %v1531, 64
    %v2707 = vpop.permute.xlu0 %2706
    %2708 = vrot.lane.b32.xlu0 %v1532, 64
    %v2709 = vpop.permute.xlu0 %2708
    %2710 = vrot.lane.b32.xlu0 %v1533, 64
    %v2711 = vpop.permute.xlu0 %2710
    %2712 = vrot.lane.b32.xlu0 %v1534, 64
    %v2713 = vpop.permute.xlu0 %2712
    %2714 = vrot.lane.b32.xlu0 %v1535, 64
    %v2715 = vpop.permute.xlu0 %2714
    %2716 = vrot.lane.b32.xlu0 %v1536, 64
    %v2717 = vpop.permute.xlu0 %2716
    %2718 = vrot.lane.b32.xlu0 %v1537, 64
    %v2719 = vpop.permute.xlu0 %2718
    %2720 = vrot.lane.b32.xlu0 %v1538, 64
    %v2721 = vpop.permute.xlu0 %2720
    %2722 = vrot.lane.b32.xlu0 %v1539, 64
    %v2723 = vpop.permute.xlu0 %2722
    %2724 = vrot.lane.b32.xlu0 %v1540, 64
    %v2725 = vpop.permute.xlu0 %2724
    %2726 = vrot.lane.b32.xlu0 %v1541, 64
    %v2727 = vpop.permute.xlu0 %2726
    %2728 = vrot.lane.b32.xlu0 %v1542, 64
    %v2729 = vpop.permute.xlu0 %2728
    %2730 = vrot.lane.b32.xlu0 %v1543, 64
    %v2731 = vpop.permute.xlu0 %2730
    %2732 = vrot.lane.b32.xlu0 %v1544, 64
    %v2733 = vpop.permute.xlu0 %2732
    %2734 = vrot.lane.b32.xlu0 %v1545, 64
    %v2735 = vpop.permute.xlu0 %2734
    %2736 = vrot.lane.b32.xlu0 %v1546, 64
    %v2737 = vpop.permute.xlu0 %2736
    %2738 = vrot.lane.b32.xlu0 %v1547, 64
    %v2739 = vpop.permute.xlu0 %2738
    %2740 = vrot.lane.b32.xlu0 %v1548, 64
    %v2741 = vpop.permute.xlu0 %2740
    %2742 = vrot.lane.b32.xlu0 %v1549, 64
    %v2743 = vpop.permute.xlu0 %2742
    %2744 = vrot.lane.b32.xlu0 %v1550, 64
    %v2745 = vpop.permute.xlu0 %2744
    %2746 = vrot.lane.b32.xlu0 %v1551, 64
    %v2747 = vpop.permute.xlu0 %2746
    %2748 = vrot.lane.b32.xlu0 %v1552, 64
    %v2749 = vpop.permute.xlu0 %2748
    %2750 = vrot.lane.b32.xlu0 %v1553, 64
    %v2751 = vpop.permute.xlu0 %2750
    %2752 = vrot.lane.b32.xlu0 %v1554, 64
    %v2753 = vpop.permute.xlu0 %2752
    %2754 = vrot.lane.b32.xlu0 %v1555, 64
    %v2755 = vpop.permute.xlu0 %2754
    %2756 = vrot.lane.b32.xlu0 %v1556, 64
    %v2757 = vpop.permute.xlu0 %2756
    %2758 = vrot.lane.b32.xlu0 %v1557, 64
    %v2759 = vpop.permute.xlu0 %2758
    %2760 = vrot.lane.b32.xlu0 %v1558, 64
    %v2761 = vpop.permute.xlu0 %2760
    %2762 = vrot.lane.b32.xlu0 %v1559, 64
    %v2763 = vpop.permute.xlu0 %2762
    %2764 = vrot.lane.b32.xlu0 %v1560, 64
    %v2765 = vpop.permute.xlu0 %2764
    %2766 = vrot.lane.b32.xlu0 %v1561, 64
    %v2767 = vpop.permute.xlu0 %2766
    %2768 = vrot.lane.b32.xlu0 %v1562, 64
    %v2769 = vpop.permute.xlu0 %2768
    %2770 = vrot.lane.b32.xlu0 %v1563, 64
    %v2771 = vpop.permute.xlu0 %2770
    %2772 = vrot.lane.b32.xlu0 %v1564, 64
    %v2773 = vpop.permute.xlu0 %2772
    %2774 = vrot.lane.b32.xlu0 %v1565, 64
    %v2775 = vpop.permute.xlu0 %2774
    %2776 = vrot.lane.b32.xlu0 %v1566, 64
    %v2777 = vpop.permute.xlu0 %2776
    %2778 = vrot.lane.b32.xlu0 %v1567, 64
    %v2779 = vpop.permute.xlu0 %2778
    %2780 = vrot.lane.b32.xlu0 %v1568, 64
    %v2781 = vpop.permute.xlu0 %2780
    %2782 = vrot.lane.b32.xlu0 %v1569, 64
    %v2783 = vpop.permute.xlu0 %2782
    %2784 = vrot.lane.b32.xlu0 %v1570, 64
    %v2785 = vpop.permute.xlu0 %2784
    %2786 = vrot.lane.b32.xlu0 %v1571, 64
    %v2787 = vpop.permute.xlu0 %2786
    %2788 = vrot.lane.b32.xlu0 %v1572, 64
    %v2789 = vpop.permute.xlu0 %2788
    %2918 = vrot.lane.b32.xlu0 %v1573, 80
    %v2919 = vpop.permute.xlu0 %2918
    %2920 = vrot.lane.b32.xlu0 %v1574, 80
    %v2921 = vpop.permute.xlu0 %2920
    %2922 = vrot.lane.b32.xlu0 %v1575, 80
    %v2923 = vpop.permute.xlu0 %2922
    %2924 = vrot.lane.b32.xlu0 %v1576, 80
    %v2925 = vpop.permute.xlu0 %2924
    %2926 = vrot.lane.b32.xlu0 %v1577, 80
    %v2927 = vpop.permute.xlu0 %2926
    %2928 = vrot.lane.b32.xlu0 %v1578, 80
    %v2929 = vpop.permute.xlu0 %2928
    %2930 = vrot.lane.b32.xlu0 %v1579, 80
    %v2931 = vpop.permute.xlu0 %2930
    %2932 = vrot.lane.b32.xlu0 %v1580, 80
    %v2933 = vpop.permute.xlu0 %2932
    %2934 = vrot.lane.b32.xlu0 %v1581, 80
    %v2935 = vpop.permute.xlu0 %2934
    %2936 = vrot.lane.b32.xlu0 %v1582, 80
    %v2937 = vpop.permute.xlu0 %2936
    %2938 = vrot.lane.b32.xlu0 %v1583, 80
    %v2939 = vpop.permute.xlu0 %2938
    %2940 = vrot.lane.b32.xlu0 %v1584, 80
    %v2941 = vpop.permute.xlu0 %2940
    %2942 = vrot.lane.b32.xlu0 %v1585, 80
    %v2943 = vpop.permute.xlu0 %2942
    %2944 = vrot.lane.b32.xlu0 %v1586, 80
    %v2945 = vpop.permute.xlu0 %2944
    %2946 = vrot.lane.b32.xlu0 %v1587, 80
    %v2947 = vpop.permute.xlu0 %2946
    %2948 = vrot.lane.b32.xlu0 %v1588, 80
    %v2949 = vpop.permute.xlu0 %2948
    %2950 = vrot.lane.b32.xlu0 %v1589, 80
    %v2951 = vpop.permute.xlu0 %2950
    %2952 = vrot.lane.b32.xlu0 %v1590, 80
    %v2953 = vpop.permute.xlu0 %2952
    %2954 = vrot.lane.b32.xlu0 %v1591, 80
    %v2955 = vpop.permute.xlu0 %2954
    %2956 = vrot.lane.b32.xlu0 %v1592, 80
    %v2957 = vpop.permute.xlu0 %2956
    %2958 = vrot.lane.b32.xlu0 %v1593, 80
    %v2959 = vpop.permute.xlu0 %2958
    %2960 = vrot.lane.b32.xlu0 %v1594, 80
    %v2961 = vpop.permute.xlu0 %2960
    %2962 = vrot.lane.b32.xlu0 %v1595, 80
    %v2963 = vpop.permute.xlu0 %2962
    %2964 = vrot.lane.b32.xlu0 %v1596, 80
    %v2965 = vpop.permute.xlu0 %2964
    %2966 = vrot.lane.b32.xlu0 %v1597, 80
    %v2967 = vpop.permute.xlu0 %2966
    %2968 = vrot.lane.b32.xlu0 %v1598, 80
    %v2969 = vpop.permute.xlu0 %2968
    %2970 = vrot.lane.b32.xlu0 %v1599, 80
    %v2971 = vpop.permute.xlu0 %2970
    %2972 = vrot.lane.b32.xlu0 %v1600, 80
    %v2973 = vpop.permute.xlu0 %2972
    %2974 = vrot.lane.b32.xlu0 %v1601, 80
    %v2975 = vpop.permute.xlu0 %2974
    %2976 = vrot.lane.b32.xlu0 %v1602, 80
    %v2977 = vpop.permute.xlu0 %2976
    %2978 = vrot.lane.b32.xlu0 %v1603, 80
    %v2979 = vpop.permute.xlu0 %2978
    %2980 = vrot.lane.b32.xlu0 %v1604, 80
    %v2981 = vpop.permute.xlu0 %2980
    %2982 = vrot.lane.b32.xlu0 %v1605, 80
    %v2983 = vpop.permute.xlu0 %2982
    %2984 = vrot.lane.b32.xlu0 %v1606, 80
    %v2985 = vpop.permute.xlu0 %2984
    %2986 = vrot.lane.b32.xlu0 %v1607, 80
    %v2987 = vpop.permute.xlu0 %2986
    %2988 = vrot.lane.b32.xlu0 %v1608, 80
    %v2989 = vpop.permute.xlu0 %2988
    %2990 = vrot.lane.b32.xlu0 %v1609, 80
    %v2991 = vpop.permute.xlu0 %2990
    %2992 = vrot.lane.b32.xlu0 %v1610, 80
    %v2993 = vpop.permute.xlu0 %2992
    %2994 = vrot.lane.b32.xlu0 %v1611, 80
    %v2995 = vpop.permute.xlu0 %2994
    %2996 = vrot.lane.b32.xlu0 %v1612, 80
    %v2997 = vpop.permute.xlu0 %2996
    %2998 = vrot.lane.b32.xlu0 %v1613, 80
    %v2999 = vpop.permute.xlu0 %2998
    %3000 = vrot.lane.b32.xlu0 %v1614, 80
    %v3001 = vpop.permute.xlu0 %3000
    %3002 = vrot.lane.b32.xlu0 %v1615, 80
    %v3003 = vpop.permute.xlu0 %3002
    %3004 = vrot.lane.b32.xlu0 %v1616, 80
    %v3005 = vpop.permute.xlu0 %3004
    %3006 = vrot.lane.b32.xlu0 %v1617, 80
    %v3007 = vpop.permute.xlu0 %3006
    %3008 = vrot.lane.b32.xlu0 %v1618, 80
    %v3009 = vpop.permute.xlu0 %3008
    %3010 = vrot.lane.b32.xlu0 %v1619, 80
    %v3011 = vpop.permute.xlu0 %3010
    %3012 = vrot.lane.b32.xlu0 %v1620, 80
    %v3013 = vpop.permute.xlu0 %3012
    %3014 = vrot.lane.b32.xlu0 %v1621, 80
    %v3015 = vpop.permute.xlu0 %3014
    %3016 = vrot.lane.b32.xlu0 %v1622, 80
    %v3017 = vpop.permute.xlu0 %3016
    %3018 = vrot.lane.b32.xlu0 %v1623, 80
    %v3019 = vpop.permute.xlu0 %3018
    %3020 = vrot.lane.b32.xlu0 %v1624, 80
    %v3021 = vpop.permute.xlu0 %3020
    %3022 = vrot.lane.b32.xlu0 %v1625, 80
    %v3023 = vpop.permute.xlu0 %3022
    %3024 = vrot.lane.b32.xlu0 %v1626, 80
    %v3025 = vpop.permute.xlu0 %3024
    %3026 = vrot.lane.b32.xlu0 %v1627, 80
    %v3027 = vpop.permute.xlu0 %3026
    %3028 = vrot.lane.b32.xlu0 %v1628, 80
    %v3029 = vpop.permute.xlu0 %3028
    %3030 = vrot.lane.b32.xlu0 %v1629, 80
    %v3031 = vpop.permute.xlu0 %3030
    %3032 = vrot.lane.b32.xlu0 %v1630, 80
    %v3033 = vpop.permute.xlu0 %3032
    %3034 = vrot.lane.b32.xlu0 %v1631, 80
    %v3035 = vpop.permute.xlu0 %3034
    %3036 = vrot.lane.b32.xlu0 %v1632, 80
    %v3037 = vpop.permute.xlu0 %3036
    %3038 = vrot.lane.b32.xlu0 %v1633, 80
    %v3039 = vpop.permute.xlu0 %3038
    %3040 = vrot.lane.b32.xlu0 %v1634, 80
    %v3041 = vpop.permute.xlu0 %3040
    %3042 = vrot.lane.b32.xlu0 %v1635, 80
    %v3043 = vpop.permute.xlu0 %3042
    %3044 = vrot.lane.b32.xlu0 %v1636, 80
    %v3045 = vpop.permute.xlu0 %3044
    %3174 = vrot.lane.b32.xlu0 %v1638, 96
    %v3175 = vpop.permute.xlu0 %3174
    %3176 = vrot.lane.b32.xlu0 %v1639, 96
    %v3177 = vpop.permute.xlu0 %3176
    %3178 = vrot.lane.b32.xlu0 %v1640, 96
    %v3179 = vpop.permute.xlu0 %3178
    %3180 = vrot.lane.b32.xlu0 %v1641, 96
    %v3181 = vpop.permute.xlu0 %3180
    %3182 = vrot.lane.b32.xlu0 %v1642, 96
    %v3183 = vpop.permute.xlu0 %3182
    %3184 = vrot.lane.b32.xlu0 %v1643, 96
    %v3185 = vpop.permute.xlu0 %3184
    %3186 = vrot.lane.b32.xlu0 %v1644, 96
    %v3187 = vpop.permute.xlu0 %3186
    %3188 = vrot.lane.b32.xlu0 %v1645, 96
    %v3189 = vpop.permute.xlu0 %3188
    %3190 = vrot.lane.b32.xlu0 %v1646, 96
    %v3191 = vpop.permute.xlu0 %3190
    %3192 = vrot.lane.b32.xlu0 %v1647, 96
    %v3193 = vpop.permute.xlu0 %3192
    %3194 = vrot.lane.b32.xlu0 %v1648, 96
    %v3195 = vpop.permute.xlu0 %3194
    %3196 = vrot.lane.b32.xlu0 %v1649, 96
    %v3197 = vpop.permute.xlu0 %3196
    %3198 = vrot.lane.b32.xlu0 %v1650, 96
    %v3199 = vpop.permute.xlu0 %3198
    %3200 = vrot.lane.b32.xlu0 %v1651, 96
    %v3201 = vpop.permute.xlu0 %3200
    %3202 = vrot.lane.b32.xlu0 %v1652, 96
    %v3203 = vpop.permute.xlu0 %3202
    %3204 = vrot.lane.b32.xlu0 %v1653, 96
    %v3205 = vpop.permute.xlu0 %3204
    %3206 = vrot.lane.b32.xlu0 %v1654, 96
    %v3207 = vpop.permute.xlu0 %3206
    %3208 = vrot.lane.b32.xlu0 %v1655, 96
    %v3209 = vpop.permute.xlu0 %3208
    %3210 = vrot.lane.b32.xlu0 %v1656, 96
    %v3211 = vpop.permute.xlu0 %3210
    %3212 = vrot.lane.b32.xlu0 %v1657, 96
    %v3213 = vpop.permute.xlu0 %3212
    %3214 = vrot.lane.b32.xlu0 %v1658, 96
    %v3215 = vpop.permute.xlu0 %3214
    %3216 = vrot.lane.b32.xlu0 %v1659, 96
    %v3217 = vpop.permute.xlu0 %3216
    %3218 = vrot.lane.b32.xlu0 %v1660, 96
    %v3219 = vpop.permute.xlu0 %3218
    %3220 = vrot.lane.b32.xlu0 %v1661, 96
    %v3221 = vpop.permute.xlu0 %3220
    %3222 = vrot.lane.b32.xlu0 %v1662, 96
    %v3223 = vpop.permute.xlu0 %3222
    %3224 = vrot.lane.b32.xlu0 %v1663, 96
    %v3225 = vpop.permute.xlu0 %3224
    %3226 = vrot.lane.b32.xlu0 %v1664, 96
    %v3227 = vpop.permute.xlu0 %3226
    %3228 = vrot.lane.b32.xlu0 %v1665, 96
    %v3229 = vpop.permute.xlu0 %3228
    %3230 = vrot.lane.b32.xlu0 %v1666, 96
    %v3231 = vpop.permute.xlu0 %3230
    %3232 = vrot.lane.b32.xlu0 %v1667, 96
    %v3233 = vpop.permute.xlu0 %3232
    %3234 = vrot.lane.b32.xlu0 %v1668, 96
    %v3235 = vpop.permute.xlu0 %3234
    %3236 = vrot.lane.b32.xlu0 %v1669, 96
    %v3237 = vpop.permute.xlu0 %3236
    %3238 = vrot.lane.b32.xlu0 %v1670, 96
    %v3239 = vpop.permute.xlu0 %3238
    %3240 = vrot.lane.b32.xlu0 %v1671, 96
    %v3241 = vpop.permute.xlu0 %3240
    %3242 = vrot.lane.b32.xlu0 %v1672, 96
    %v3243 = vpop.permute.xlu0 %3242
    %3244 = vrot.lane.b32.xlu0 %v1673, 96
    %v3245 = vpop.permute.xlu0 %3244
    %3246 = vrot.lane.b32.xlu0 %v1674, 96
    %v3247 = vpop.permute.xlu0 %3246
    %3248 = vrot.lane.b32.xlu0 %v1675, 96
    %v3249 = vpop.permute.xlu0 %3248
    %3250 = vrot.lane.b32.xlu0 %v1676, 96
    %v3251 = vpop.permute.xlu0 %3250
    %3252 = vrot.lane.b32.xlu0 %v1677, 96
    %v3253 = vpop.permute.xlu0 %3252
    %3254 = vrot.lane.b32.xlu0 %v1678, 96
    %v3255 = vpop.permute.xlu0 %3254
    %3256 = vrot.lane.b32.xlu0 %v1679, 96
    %v3257 = vpop.permute.xlu0 %3256
    %3258 = vrot.lane.b32.xlu0 %v1680, 96
    %v3259 = vpop.permute.xlu0 %3258
    %3260 = vrot.lane.b32.xlu0 %v1681, 96
    %v3261 = vpop.permute.xlu0 %3260
    %3262 = vrot.lane.b32.xlu0 %v1682, 96
    %v3263 = vpop.permute.xlu0 %3262
    %3264 = vrot.lane.b32.xlu0 %v1683, 96
    %v3265 = vpop.permute.xlu0 %3264
    %3266 = vrot.lane.b32.xlu0 %v1684, 96
    %v3267 = vpop.permute.xlu0 %3266
    %3268 = vrot.lane.b32.xlu0 %v1685, 96
    %v3269 = vpop.permute.xlu0 %3268
    %3270 = vrot.lane.b32.xlu0 %v1686, 96
    %v3271 = vpop.permute.xlu0 %3270
    %3272 = vrot.lane.b32.xlu0 %v1687, 96
    %v3273 = vpop.permute.xlu0 %3272
    %3274 = vrot.lane.b32.xlu0 %v1688, 96
    %v3275 = vpop.permute.xlu0 %3274
    %3276 = vrot.lane.b32.xlu0 %v1689, 96
    %v3277 = vpop.permute.xlu0 %3276
    %3278 = vrot.lane.b32.xlu0 %v1690, 96
    %v3279 = vpop.permute.xlu0 %3278
    %3280 = vrot.lane.b32.xlu0 %v1691, 96
    %v3281 = vpop.permute.xlu0 %3280
    %3282 = vrot.lane.b32.xlu0 %v1692, 96
    %v3283 = vpop.permute.xlu0 %3282
    %3284 = vrot.lane.b32.xlu0 %v1693, 96
    %v3285 = vpop.permute.xlu0 %3284
    %3286 = vrot.lane.b32.xlu0 %v1694, 96
    %v3287 = vpop.permute.xlu0 %3286
    %3288 = vrot.lane.b32.xlu0 %v1695, 96
    %v3289 = vpop.permute.xlu0 %3288
    %3290 = vrot.lane.b32.xlu0 %v1696, 96
    %v3291 = vpop.permute.xlu0 %3290
    %3292 = vrot.lane.b32.xlu0 %v1697, 96
    %v3293 = vpop.permute.xlu0 %3292
    %3294 = vrot.lane.b32.xlu0 %v1698, 96
    %v3295 = vpop.permute.xlu0 %3294
    %3296 = vrot.lane.b32.xlu0 %v1699, 96
    %v3297 = vpop.permute.xlu0 %3296
    %3298 = vrot.lane.b32.xlu0 %v1700, 96
    %v3299 = vpop.permute.xlu0 %3298
    %3300 = vrot.lane.b32.xlu0 %v1701, 96
    %v3301 = vpop.permute.xlu0 %3300
    %3430 = vrot.lane.b32.xlu0 %v1702, 112
    %v3431 = vpop.permute.xlu0 %3430
    %3432 = vrot.lane.b32.xlu0 %v1703, 112
    %v3433 = vpop.permute.xlu0 %3432
    %3434 = vrot.lane.b32.xlu0 %v1704, 112
    %v3435 = vpop.permute.xlu0 %3434
    %3436 = vrot.lane.b32.xlu0 %v1705, 112
    %v3437 = vpop.permute.xlu0 %3436
    %3438 = vrot.lane.b32.xlu0 %v1706, 112
    %v3439 = vpop.permute.xlu0 %3438
    %3440 = vrot.lane.b32.xlu0 %v1707, 112
    %v3441 = vpop.permute.xlu0 %3440
    %3442 = vrot.lane.b32.xlu0 %v1708, 112
    %v3443 = vpop.permute.xlu0 %3442
    %3444 = vrot.lane.b32.xlu0 %v1709, 112
    %v3445 = vpop.permute.xlu0 %3444
    %3446 = vrot.lane.b32.xlu0 %v1710, 112
    %v3447 = vpop.permute.xlu0 %3446
    %3448 = vrot.lane.b32.xlu0 %v1711, 112
    %v3449 = vpop.permute.xlu0 %3448
    %3450 = vrot.lane.b32.xlu0 %v1712, 112
    %v3451 = vpop.permute.xlu0 %3450
    %3452 = vrot.lane.b32.xlu0 %v1713, 112
    %v3453 = vpop.permute.xlu0 %3452
    %3454 = vrot.lane.b32.xlu0 %v1714, 112
    %v3455 = vpop.permute.xlu0 %3454
    %3456 = vrot.lane.b32.xlu0 %v1715, 112
    %v3457 = vpop.permute.xlu0 %3456
    %3458 = vrot.lane.b32.xlu0 %v1716, 112
    %v3459 = vpop.permute.xlu0 %3458
    %3460 = vrot.lane.b32.xlu0 %v1717, 112
    %v3461 = vpop.permute.xlu0 %3460
    %3462 = vrot.lane.b32.xlu0 %v1718, 112
    %v3463 = vpop.permute.xlu0 %3462
    %3464 = vrot.lane.b32.xlu0 %v1719, 112
    %v3465 = vpop.permute.xlu0 %3464
    %3466 = vrot.lane.b32.xlu0 %v1720, 112
    %v3467 = vpop.permute.xlu0 %3466
    %3468 = vrot.lane.b32.xlu0 %v1721, 112
    %v3469 = vpop.permute.xlu0 %3468
    %3470 = vrot.lane.b32.xlu0 %v1722, 112
    %v3471 = vpop.permute.xlu0 %3470
    %3472 = vrot.lane.b32.xlu0 %v1723, 112
    %v3473 = vpop.permute.xlu0 %3472
    %3474 = vrot.lane.b32.xlu0 %v1724, 112
    %v3475 = vpop.permute.xlu0 %3474
    %3476 = vrot.lane.b32.xlu0 %v1725, 112
    %v3477 = vpop.permute.xlu0 %3476
    %3478 = vrot.lane.b32.xlu0 %v1726, 112
    %v3479 = vpop.permute.xlu0 %3478
    %3480 = vrot.lane.b32.xlu0 %v1727, 112
    %v3481 = vpop.permute.xlu0 %3480
    %3482 = vrot.lane.b32.xlu0 %v1728, 112
    %v3483 = vpop.permute.xlu0 %3482
    %3484 = vrot.lane.b32.xlu0 %v1729, 112
    %v3485 = vpop.permute.xlu0 %3484
    %3486 = vrot.lane.b32.xlu0 %v1730, 112
    %v3487 = vpop.permute.xlu0 %3486
    %3488 = vrot.lane.b32.xlu0 %v1731, 112
    %v3489 = vpop.permute.xlu0 %3488
    %3490 = vrot.lane.b32.xlu0 %v1732, 112
    %v3491 = vpop.permute.xlu0 %3490
    %3492 = vrot.lane.b32.xlu0 %v1733, 112
    %v3493 = vpop.permute.xlu0 %3492
    %3494 = vrot.lane.b32.xlu0 %v1734, 112
    %v3495 = vpop.permute.xlu0 %3494
    %3496 = vrot.lane.b32.xlu0 %v1735, 112
    %v3497 = vpop.permute.xlu0 %3496
    %3498 = vrot.lane.b32.xlu0 %v1736, 112
    %v3499 = vpop.permute.xlu0 %3498
    %3500 = vrot.lane.b32.xlu0 %v1737, 112
    %v3501 = vpop.permute.xlu0 %3500
    %3502 = vrot.lane.b32.xlu0 %v1738, 112
    %v3503 = vpop.permute.xlu0 %3502
    %3504 = vrot.lane.b32.xlu0 %v1739, 112
    %v3505 = vpop.permute.xlu0 %3504
    %3506 = vrot.lane.b32.xlu0 %v1740, 112
    %v3507 = vpop.permute.xlu0 %3506
    %3508 = vrot.lane.b32.xlu0 %v1741, 112
    %v3509 = vpop.permute.xlu0 %3508
    %3510 = vrot.lane.b32.xlu0 %v1742, 112
    %v3511 = vpop.permute.xlu0 %3510
    %3512 = vrot.lane.b32.xlu0 %v1743, 112
    %v3513 = vpop.permute.xlu0 %3512
    %3514 = vrot.lane.b32.xlu0 %v1744, 112
    %v3515 = vpop.permute.xlu0 %3514
    %3516 = vrot.lane.b32.xlu0 %v1745, 112
    %v3517 = vpop.permute.xlu0 %3516
    %3518 = vrot.lane.b32.xlu0 %v1746, 112
    %v3519 = vpop.permute.xlu0 %3518
    %3520 = vrot.lane.b32.xlu0 %v1747, 112
    %v3521 = vpop.permute.xlu0 %3520
    %3522 = vrot.lane.b32.xlu0 %v1748, 112
    %v3523 = vpop.permute.xlu0 %3522
    %3524 = vrot.lane.b32.xlu0 %v1749, 112
    %v3525 = vpop.permute.xlu0 %3524
    %3526 = vrot.lane.b32.xlu0 %v1750, 112
    %v3527 = vpop.permute.xlu0 %3526
    %3528 = vrot.lane.b32.xlu0 %v1751, 112
    %v3529 = vpop.permute.xlu0 %3528
    %3530 = vrot.lane.b32.xlu0 %v1752, 112
    %v3531 = vpop.permute.xlu0 %3530
    %3532 = vrot.lane.b32.xlu0 %v1753, 112
    %v3533 = vpop.permute.xlu0 %3532
    %3534 = vrot.lane.b32.xlu0 %v1754, 112
    %v3535 = vpop.permute.xlu0 %3534
    %3536 = vrot.lane.b32.xlu0 %v1755, 112
    %v3537 = vpop.permute.xlu0 %3536
    %3538 = vrot.lane.b32.xlu0 %v1756, 112
    %v3539 = vpop.permute.xlu0 %3538
    %3540 = vrot.lane.b32.xlu0 %v1757, 112
    %v3541 = vpop.permute.xlu0 %3540
    %3542 = vrot.lane.b32.xlu0 %v1758, 112
    %v3543 = vpop.permute.xlu0 %3542
    %3544 = vrot.lane.b32.xlu0 %v1759, 112
    %v3545 = vpop.permute.xlu0 %3544
    %3546 = vrot.lane.b32.xlu0 %v1760, 112
    %v3547 = vpop.permute.xlu0 %3546
    %3548 = vrot.lane.b32.xlu0 %v1761, 112
    %v3549 = vpop.permute.xlu0 %3548
    %3550 = vrot.lane.b32.xlu0 %v1762, 112
    %v3551 = vpop.permute.xlu0 %3550
    %3552 = vrot.lane.b32.xlu0 %v1763, 112
    %v3553 = vpop.permute.xlu0 %3552
    %3554 = vrot.lane.b32.xlu0 %v1764, 112
    %v3555 = vpop.permute.xlu0 %3554
    %3556 = vrot.lane.b32.xlu0 %v1765, 112
    %v3557 = vpop.permute.xlu0 %3556
    %v3622 = vsel %vm43, %v1253, %v1895
    %v3623 = vsel %vm43, %v1254, %v1897
    %v3624 = vsel %vm43, %v1255, %v1899
    %v3625 = vsel %vm43, %v1256, %v1901
    %v3626 = vsel %vm43, %v1257, %v1903
    %v3627 = vsel %vm43, %v1258, %v1905
    %v3628 = vsel %vm43, %v1259, %v1907
    %v3629 = vsel %vm43, %v1260, %v1909
    %v3630 = vsel %vm43, %v1261, %v1911
    %v3631 = vsel %vm43, %v1262, %v1913
    %v3632 = vsel %vm43, %v1263, %v1915
    %v3633 = vsel %vm43, %v1264, %v1917
    %v3634 = vsel %vm43, %v1265, %v1919
    %v3635 = vsel %vm43, %v1266, %v1921
    %v3636 = vsel %vm43, %v1267, %v1923
    %v3637 = vsel %vm43, %v1268, %v1925
    %v3638 = vsel %vm43, %v1269, %v1927
    %v3639 = vsel %vm43, %v1270, %v1929
    %v3640 = vsel %vm43, %v1271, %v1931
    %v3641 = vsel %vm43, %v1272, %v1933
    %v3642 = vsel %vm43, %v1273, %v1935
    %v3643 = vsel %vm43, %v1274, %v1937
    %v3644 = vsel %vm43, %v1275, %v1939
    %v3645 = vsel %vm43, %v1276, %v1941
    %v3646 = vsel %vm43, %v1277, %v1943
    %v3647 = vsel %vm43, %v1278, %v1945
    %v3648 = vsel %vm43, %v1279, %v1947
    %v3649 = vsel %vm43, %v1280, %v1949
    %v3650 = vsel %vm43, %v1281, %v1951
    %v3651 = vsel %vm43, %v1282, %v1953
    %v3652 = vsel %vm43, %v1283, %v1955
    %v3653 = vsel %vm43, %v1284, %v1957
    %v3654 = vsel %vm43, %v1285, %v1959
    %v3655 = vsel %vm43, %v1286, %v1961
    %v3656 = vsel %vm43, %v1287, %v1963
    %v3657 = vsel %vm43, %v1288, %v1965
    %v3658 = vsel %vm43, %v1289, %v1967
    %v3659 = vsel %vm43, %v1290, %v1969
    %v3660 = vsel %vm43, %v1291, %v1971
    %v3661 = vsel %vm43, %v1292, %v1973
    %v3662 = vsel %vm43, %v1293, %v1975
    %v3663 = vsel %vm43, %v1294, %v1977
    %v3664 = vsel %vm43, %v1295, %v1979
    %v3665 = vsel %vm43, %v1296, %v1981
    %v3666 = vsel %vm43, %v1297, %v1983
    %v3667 = vsel %vm43, %v1298, %v1985
    %v3668 = vsel %vm43, %v1299, %v1987
    %v3669 = vsel %vm43, %v1300, %v1989
    %v3670 = vsel %vm43, %v1301, %v1991
    %v3671 = vsel %vm43, %v1302, %v1993
    %v3672 = vsel %vm43, %v1303, %v1995
    %v3673 = vsel %vm43, %v1304, %v1997
    %v3674 = vsel %vm43, %v1305, %v1999
    %v3675 = vsel %vm43, %v1306, %v2001
    %v3676 = vsel %vm43, %v1307, %v2003
    %v3677 = vsel %vm43, %v1308, %v2005
    %v3678 = vsel %vm43, %v1309, %v2007
    %v3679 = vsel %vm43, %v1310, %v2009
    %v3680 = vsel %vm43, %v1311, %v2011
    %v3681 = vsel %vm43, %v1312, %v2013
    %v3682 = vsel %vm43, %v1313, %v2015
    %v3683 = vsel %vm43, %v1314, %v2017
    %v3684 = vsel %vm43, %v1315, %v2019
    %v3685 = vsel %vm43, %v1316, %v2021
    %v3686 = vsel %vm773, %v3622, %v2151
    %v3687 = vsel %vm773, %v3623, %v2153
    %v3688 = vsel %vm773, %v3624, %v2155
    %v3689 = vsel %vm773, %v3625, %v2157
    %v3690 = vsel %vm773, %v3626, %v2159
    %v3691 = vsel %vm773, %v3627, %v2161
    %v3692 = vsel %vm773, %v3628, %v2163
    %v3693 = vsel %vm773, %v3629, %v2165
    %v3694 = vsel %vm773, %v3630, %v2167
    %v3695 = vsel %vm773, %v3631, %v2169
    %v3696 = vsel %vm773, %v3632, %v2171
    %v3697 = vsel %vm773, %v3633, %v2173
    %v3698 = vsel %vm773, %v3634, %v2175
    %v3699 = vsel %vm773, %v3635, %v2177
    %v3700 = vsel %vm773, %v3636, %v2179
    %v3701 = vsel %vm773, %v3637, %v2181
    %v3702 = vsel %vm773, %v3638, %v2183
    %v3703 = vsel %vm773, %v3639, %v2185
    %v3704 = vsel %vm773, %v3640, %v2187
    %v3705 = vsel %vm773, %v3641, %v2189
    %v3706 = vsel %vm773, %v3642, %v2191
    %v3707 = vsel %vm773, %v3643, %v2193
    %v3708 = vsel %vm773, %v3644, %v2195
    %v3709 = vsel %vm773, %v3645, %v2197
    %v3710 = vsel %vm773, %v3646, %v2199
    %v3711 = vsel %vm773, %v3647, %v2201
    %v3712 = vsel %vm773, %v3648, %v2203
    %v3713 = vsel %vm773, %v3649, %v2205
    %v3714 = vsel %vm773, %v3650, %v2207
    %v3715 = vsel %vm773, %v3651, %v2209
    %v3716 = vsel %vm773, %v3652, %v2211
    %v3717 = vsel %vm773, %v3653, %v2213
    %v3718 = vsel %vm773, %v3654, %v2215
    %v3719 = vsel %vm773, %v3655, %v2217
    %v3720 = vsel %vm773, %v3656, %v2219
    %v3721 = vsel %vm773, %v3657, %v2221
    %v3722 = vsel %vm773, %v3658, %v2223
    %v3723 = vsel %vm773, %v3659, %v2225
    %v3724 = vsel %vm773, %v3660, %v2227
    %v3725 = vsel %vm773, %v3661, %v2229
    %v3726 = vsel %vm773, %v3662, %v2231
    %v3727 = vsel %vm773, %v3663, %v2233
    %v3728 = vsel %vm773, %v3664, %v2235
    %v3729 = vsel %vm773, %v3665, %v2237
    %v3730 = vsel %vm773, %v3666, %v2239
    %v3731 = vsel %vm773, %v3667, %v2241
    %v3732 = vsel %vm773, %v3668, %v2243
    %v3733 = vsel %vm773, %v3669, %v2245
    %v3734 = vsel %vm773, %v3670, %v2247
    %v3735 = vsel %vm773, %v3671, %v2249
    %v3736 = vsel %vm773, %v3672, %v2251
    %v3737 = vsel %vm773, %v3673, %v2253
    %v3738 = vsel %vm773, %v3674, %v2255
    %v3739 = vsel %vm773, %v3675, %v2257
    %v3740 = vsel %vm773, %v3676, %v2259
    %v3741 = vsel %vm773, %v3677, %v2261
    %v3742 = vsel %vm773, %v3678, %v2263
    %v3743 = vsel %vm773, %v3679, %v2265
    %v3744 = vsel %vm773, %v3680, %v2267
    %v3745 = vsel %vm773, %v3681, %v2269
    %v3746 = vsel %vm773, %v3682, %v2271
    %v3747 = vsel %vm773, %v3683, %v2273
    %v3748 = vsel %vm773, %v3684, %v2275
    %v3749 = vsel %vm773, %v3685, %v2277
    %vm3750 = vcmask 392192
    %v3751 = vsel %vm3750, %v3686, %v2407
    %v3752 = vsel %vm3750, %v3687, %v2409
    %v3753 = vsel %vm3750, %v3688, %v2411
    %v3754 = vsel %vm3750, %v3689, %v2413
    %v3755 = vsel %vm3750, %v3690, %v2415
    %v3756 = vsel %vm3750, %v3691, %v2417
    %v3757 = vsel %vm3750, %v3692, %v2419
    %v3758 = vsel %vm3750, %v3693, %v2421
    %v3759 = vsel %vm3750, %v3694, %v2423
    %v3760 = vsel %vm3750, %v3695, %v2425
    %v3761 = vsel %vm3750, %v3696, %v2427
    %v3762 = vsel %vm3750, %v3697, %v2429
    %v3763 = vsel %vm3750, %v3698, %v2431
    %v3764 = vsel %vm3750, %v3699, %v2433
    %v3765 = vsel %vm3750, %v3700, %v2435
    %v3766 = vsel %vm3750, %v3701, %v2437
    %v3767 = vsel %vm3750, %v3702, %v2439
    %v3768 = vsel %vm3750, %v3703, %v2441
    %v3769 = vsel %vm3750, %v3704, %v2443
    %v3770 = vsel %vm3750, %v3705, %v2445
    %v3771 = vsel %vm3750, %v3706, %v2447
    %v3772 = vsel %vm3750, %v3707, %v2449
    %v3773 = vsel %vm3750, %v3708, %v2451
    %v3774 = vsel %vm3750, %v3709, %v2453
    %v3775 = vsel %vm3750, %v3710, %v2455
    %v3776 = vsel %vm3750, %v3711, %v2457
    %v3777 = vsel %vm3750, %v3712, %v2459
    %v3778 = vsel %vm3750, %v3713, %v2461
    %v3779 = vsel %vm3750, %v3714, %v2463
    %v3780 = vsel %vm3750, %v3715, %v2465
    %v3781 = vsel %vm3750, %v3716, %v2467
    %v3782 = vsel %vm3750, %v3717, %v2469
    %v3783 = vsel %vm3750, %v3718, %v2471
    %v3784 = vsel %vm3750, %v3719, %v2473
    %v3785 = vsel %vm3750, %v3720, %v2475
    %v3786 = vsel %vm3750, %v3721, %v2477
    %v3787 = vsel %vm3750, %v3722, %v2479
    %v3788 = vsel %vm3750, %v3723, %v2481
    %v3789 = vsel %vm3750, %v3724, %v2483
    %v3790 = vsel %vm3750, %v3725, %v2485
    %v3791 = vsel %vm3750, %v3726, %v2487
    %v3792 = vsel %vm3750, %v3727, %v2489
    %v3793 = vsel %vm3750, %v3728, %v2491
    %v3794 = vsel %vm3750, %v3729, %v2493
    %v3795 = vsel %vm3750, %v3730, %v2495
    %v3796 = vsel %vm3750, %v3731, %v2497
    %v3797 = vsel %vm3750, %v3732, %v2499
    %v3798 = vsel %vm3750, %v3733, %v2501
    %v3799 = vsel %vm3750, %v3734, %v2503
    %v3800 = vsel %vm3750, %v3735, %v2505
    %v3801 = vsel %vm3750, %v3736, %v2507
    %v3802 = vsel %vm3750, %v3737, %v2509
    %v3803 = vsel %vm3750, %v3738, %v2511
    %v3804 = vsel %vm3750, %v3739, %v2513
    %v3805 = vsel %vm3750, %v3740, %v2515
    %v3806 = vsel %vm3750, %v3741, %v2517
    %v3807 = vsel %vm3750, %v3742, %v2519
    %v3808 = vsel %vm3750, %v3743, %v2521
    %v3809 = vsel %vm3750, %v3744, %v2523
    %v3810 = vsel %vm3750, %v3745, %v2525
    %v3811 = vsel %vm3750, %v3746, %v2527
    %v3812 = vsel %vm3750, %v3747, %v2529
    %v3813 = vsel %vm3750, %v3748, %v2531
    %v3814 = vsel %vm3750, %v3749, %v2533
    %vm3815 = vcmask 523264
    %v3816 = vsel %vm3815, %v3751, %v2663
    %v3817 = vsel %vm3815, %v3752, %v2665
    %v3818 = vsel %vm3815, %v3753, %v2667
    %v3819 = vsel %vm3815, %v3754, %v2669
    %v3820 = vsel %vm3815, %v3755, %v2671
    %v3821 = vsel %vm3815, %v3756, %v2673
    %v3822 = vsel %vm3815, %v3757, %v2675
    %v3823 = vsel %vm3815, %v3758, %v2677
    %v3824 = vsel %vm3815, %v3759, %v2679
    %v3825 = vsel %vm3815, %v3760, %v2681
    %v3826 = vsel %vm3815, %v3761, %v2683
    %v3827 = vsel %vm3815, %v3762, %v2685
    %v3828 = vsel %vm3815, %v3763, %v2687
    %v3829 = vsel %vm3815, %v3764, %v2689
    %v3830 = vsel %vm3815, %v3765, %v2691
    %v3831 = vsel %vm3815, %v3766, %v2693
    %v3832 = vsel %vm3815, %v3767, %v2695
    %v3833 = vsel %vm3815, %v3768, %v2697
    %v3834 = vsel %vm3815, %v3769, %v2699
    %v3835 = vsel %vm3815, %v3770, %v2701
    %v3836 = vsel %vm3815, %v3771, %v2703
    %v3837 = vsel %vm3815, %v3772, %v2705
    %v3838 = vsel %vm3815, %v3773, %v2707
    %v3839 = vsel %vm3815, %v3774, %v2709
    %v3840 = vsel %vm3815, %v3775, %v2711
    %v3841 = vsel %vm3815, %v3776, %v2713
    %v3842 = vsel %vm3815, %v3777, %v2715
    %v3843 = vsel %vm3815, %v3778, %v2717
    %v3844 = vsel %vm3815, %v3779, %v2719
    %v3845 = vsel %vm3815, %v3780, %v2721
    %v3846 = vsel %vm3815, %v3781, %v2723
    %v3847 = vsel %vm3815, %v3782, %v2725
    %v3848 = vsel %vm3815, %v3783, %v2727
    %v3849 = vsel %vm3815, %v3784, %v2729
    %v3850 = vsel %vm3815, %v3785, %v2731
    %v3851 = vsel %vm3815, %v3786, %v2733
    %v3852 = vsel %vm3815, %v3787, %v2735
    %v3853 = vsel %vm3815, %v3788, %v2737
    %v3854 = vsel %vm3815, %v3789, %v2739
    %v3855 = vsel %vm3815, %v3790, %v2741
    %v3856 = vsel %vm3815, %v3791, %v2743
    %v3857 = vsel %vm3815, %v3792, %v2745
    %v3858 = vsel %vm3815, %v3793, %v2747
    %v3859 = vsel %vm3815, %v3794, %v2749
    %v3860 = vsel %vm3815, %v3795, %v2751
    %v3861 = vsel %vm3815, %v3796, %v2753
    %v3862 = vsel %vm3815, %v3797, %v2755
    %v3863 = vsel %vm3815, %v3798, %v2757
    %v3864 = vsel %vm3815, %v3799, %v2759
    %v3865 = vsel %vm3815, %v3800, %v2761
    %v3866 = vsel %vm3815, %v3801, %v2763
    %v3867 = vsel %vm3815, %v3802, %v2765
    %v3868 = vsel %vm3815, %v3803, %v2767
    %v3869 = vsel %vm3815, %v3804, %v2769
    %v3870 = vsel %vm3815, %v3805, %v2771
    %v3871 = vsel %vm3815, %v3806, %v2773
    %v3872 = vsel %vm3815, %v3807, %v2775
    %v3873 = vsel %vm3815, %v3808, %v2777
    %v3874 = vsel %vm3815, %v3809, %v2779
    %v3875 = vsel %vm3815, %v3810, %v2781
    %v3876 = vsel %vm3815, %v3811, %v2783
    %v3877 = vsel %vm3815, %v3812, %v2785
    %v3878 = vsel %vm3815, %v3813, %v2787
    %v3879 = vsel %vm3815, %v3814, %v2789
    %vm3880 = vcmask 654336
    %v3881 = vsel %vm3880, %v3816, %v2919
    %v3882 = vsel %vm3880, %v3817, %v2921
    %v3883 = vsel %vm3880, %v3818, %v2923
    %v3884 = vsel %vm3880, %v3819, %v2925
    %v3885 = vsel %vm3880, %v3820, %v2927
    %v3886 = vsel %vm3880, %v3821, %v2929
    %v3887 = vsel %vm3880, %v3822, %v2931
    %v3888 = vsel %vm3880, %v3823, %v2933
    %v3889 = vsel %vm3880, %v3824, %v2935
    %v3890 = vsel %vm3880, %v3825, %v2937
    %v3891 = vsel %vm3880, %v3826, %v2939
    %v3892 = vsel %vm3880, %v3827, %v2941
    %v3893 = vsel %vm3880, %v3828, %v2943
    %v3894 = vsel %vm3880, %v3829, %v2945
    %v3895 = vsel %vm3880, %v3830, %v2947
    %v3896 = vsel %vm3880, %v3831, %v2949
    %v3897 = vsel %vm3880, %v3832, %v2951
    %v3898 = vsel %vm3880, %v3833, %v2953
    %v3899 = vsel %vm3880, %v3834, %v2955
    %v3900 = vsel %vm3880, %v3835, %v2957
    %v3901 = vsel %vm3880, %v3836, %v2959
    %v3902 = vsel %vm3880, %v3837, %v2961
    %v3903 = vsel %vm3880, %v3838, %v2963
    %v3904 = vsel %vm3880, %v3839, %v2965
    %v3905 = vsel %vm3880, %v3840, %v2967
    %v3906 = vsel %vm3880, %v3841, %v2969
    %v3907 = vsel %vm3880, %v3842, %v2971
    %v3908 = vsel %vm3880, %v3843, %v2973
    %v3909 = vsel %vm3880, %v3844, %v2975
    %v3910 = vsel %vm3880, %v3845, %v2977
    %v3911 = vsel %vm3880, %v3846, %v2979
    %v3912 = vsel %vm3880, %v3847, %v2981
    %v3913 = vsel %vm3880, %v3848, %v2983
    %v3914 = vsel %vm3880, %v3849, %v2985
    %v3915 = vsel %vm3880, %v3850, %v2987
    %v3916 = vsel %vm3880, %v3851, %v2989
    %v3917 = vsel %vm3880, %v3852, %v2991
    %v3918 = vsel %vm3880, %v3853, %v2993
    %v3919 = vsel %vm3880, %v3854, %v2995
    %v3920 = vsel %vm3880, %v3855, %v2997
    %v3921 = vsel %vm3880, %v3856, %v2999
    %v3922 = vsel %vm3880, %v3857, %v3001
    %v3923 = vsel %vm3880, %v3858, %v3003
    %v3924 = vsel %vm3880, %v3859, %v3005
    %v3925 = vsel %vm3880, %v3860, %v3007
    %v3926 = vsel %vm3880, %v3861, %v3009
    %v3927 = vsel %vm3880, %v3862, %v3011
    %v3928 = vsel %vm3880, %v3863, %v3013
    %v3929 = vsel %vm3880, %v3864, %v3015
    %v3930 = vsel %vm3880, %v3865, %v3017
    %v3931 = vsel %vm3880, %v3866, %v3019
    %v3932 = vsel %vm3880, %v3867, %v3021
    %v3933 = vsel %vm3880, %v3868, %v3023
    %v3934 = vsel %vm3880, %v3869, %v3025
    %v3935 = vsel %vm3880, %v3870, %v3027
    %v3936 = vsel %vm3880, %v3871, %v3029
    %v3937 = vsel %vm3880, %v3872, %v3031
    %v3938 = vsel %vm3880, %v3873, %v3033
    %v3939 = vsel %vm3880, %v3874, %v3035
    %v3940 = vsel %vm3880, %v3875, %v3037
    %v3941 = vsel %vm3880, %v3876, %v3039
    %v3942 = vsel %vm3880, %v3877, %v3041
    %v3943 = vsel %vm3880, %v3878, %v3043
    %v3944 = vsel %vm3880, %v3879, %v3045
    %vm3945 = vcmask 785408
    %v3946 = vsel %vm3945, %v3881, %v3175
    %v3947 = vsel %vm3945, %v3882, %v3177
    %v3948 = vsel %vm3945, %v3883, %v3179
    %v3949 = vsel %vm3945, %v3884, %v3181
    %v3950 = vsel %vm3945, %v3885, %v3183
    %v3951 = vsel %vm3945, %v3886, %v3185
    %v3952 = vsel %vm3945, %v3887, %v3187
    %v3953 = vsel %vm3945, %v3888, %v3189
    %v3954 = vsel %vm3945, %v3889, %v3191
    %v3955 = vsel %vm3945, %v3890, %v3193
    %v3956 = vsel %vm3945, %v3891, %v3195
    %v3957 = vsel %vm3945, %v3892, %v3197
    %v3958 = vsel %vm3945, %v3893, %v3199
    %v3959 = vsel %vm3945, %v3894, %v3201
    %v3960 = vsel %vm3945, %v3895, %v3203
    %v3961 = vsel %vm3945, %v3896, %v3205
    %v3962 = vsel %vm3945, %v3897, %v3207
    %v3963 = vsel %vm3945, %v3898, %v3209
    %v3964 = vsel %vm3945, %v3899, %v3211
    %v3965 = vsel %vm3945, %v3900, %v3213
    %v3966 = vsel %vm3945, %v3901, %v3215
    %v3967 = vsel %vm3945, %v3902, %v3217
    %v3968 = vsel %vm3945, %v3903, %v3219
    %v3969 = vsel %vm3945, %v3904, %v3221
    %v3970 = vsel %vm3945, %v3905, %v3223
    %v3971 = vsel %vm3945, %v3906, %v3225
    %v3972 = vsel %vm3945, %v3907, %v3227
    %v3973 = vsel %vm3945, %v3908, %v3229
    %v3974 = vsel %vm3945, %v3909, %v3231
    %v3975 = vsel %vm3945, %v3910, %v3233
    %v3976 = vsel %vm3945, %v3911, %v3235
    %v3977 = vsel %vm3945, %v3912, %v3237
    %v3978 = vsel %vm3945, %v3913, %v3239
    %v3979 = vsel %vm3945, %v3914, %v3241
    %v3980 = vsel %vm3945, %v3915, %v3243
    %v3981 = vsel %vm3945, %v3916, %v3245
    %v3982 = vsel %vm3945, %v3917, %v3247
    %v3983 = vsel %vm3945, %v3918, %v3249
    %v3984 = vsel %vm3945, %v3919, %v3251
    %v3985 = vsel %vm3945, %v3920, %v3253
    %v3986 = vsel %vm3945, %v3921, %v3255
    %v3987 = vsel %vm3945, %v3922, %v3257
    %v3988 = vsel %vm3945, %v3923, %v3259
    %v3989 = vsel %vm3945, %v3924, %v3261
    %v3990 = vsel %vm3945, %v3925, %v3263
    %v3991 = vsel %vm3945, %v3926, %v3265
    %v3992 = vsel %vm3945, %v3927, %v3267
    %v3993 = vsel %vm3945, %v3928, %v3269
    %v3994 = vsel %vm3945, %v3929, %v3271
    %v3995 = vsel %vm3945, %v3930, %v3273
    %v3996 = vsel %vm3945, %v3931, %v3275
    %v3997 = vsel %vm3945, %v3932, %v3277
    %v3998 = vsel %vm3945, %v3933, %v3279
    %v3999 = vsel %vm3945, %v3934, %v3281
    %v4000 = vsel %vm3945, %v3935, %v3283
    %v4001 = vsel %vm3945, %v3936, %v3285
    %v4002 = vsel %vm3945, %v3937, %v3287
    %v4003 = vsel %vm3945, %v3938, %v3289
    %v4004 = vsel %vm3945, %v3939, %v3291
    %v4005 = vsel %vm3945, %v3940, %v3293
    %v4006 = vsel %vm3945, %v3941, %v3295
    %v4007 = vsel %vm3945, %v3942, %v3297
    %v4008 = vsel %vm3945, %v3943, %v3299
    %v4009 = vsel %vm3945, %v3944, %v3301
    %vm4010 = vcmask 916480
    %v4011 = vsel %vm4010, %v3946, %v3431
    %v4012 = vsel %vm4010, %v3947, %v3433
    %v4013 = vsel %vm4010, %v3948, %v3435
    %v4014 = vsel %vm4010, %v3949, %v3437
    %v4015 = vsel %vm4010, %v3950, %v3439
    %v4016 = vsel %vm4010, %v3951, %v3441
    %v4017 = vsel %vm4010, %v3952, %v3443
    %v4018 = vsel %vm4010, %v3953, %v3445
    %v4019 = vsel %vm4010, %v3954, %v3447
    %v4020 = vsel %vm4010, %v3955, %v3449
    %v4021 = vsel %vm4010, %v3956, %v3451
    %v4022 = vsel %vm4010, %v3957, %v3453
    %v4023 = vsel %vm4010, %v3958, %v3455
    %v4024 = vsel %vm4010, %v3959, %v3457
    %v4025 = vsel %vm4010, %v3960, %v3459
    %v4026 = vsel %vm4010, %v3961, %v3461
    %v4027 = vsel %vm4010, %v3962, %v3463
    %v4028 = vsel %vm4010, %v3963, %v3465
    %v4029 = vsel %vm4010, %v3964, %v3467
    %v4030 = vsel %vm4010, %v3965, %v3469
    %v4031 = vsel %vm4010, %v3966, %v3471
    %v4032 = vsel %vm4010, %v3967, %v3473
    %v4033 = vsel %vm4010, %v3968, %v3475
    %v4034 = vsel %vm4010, %v3969, %v3477
    %v4035 = vsel %vm4010, %v3970, %v3479
    %v4036 = vsel %vm4010, %v3971, %v3481
    %v4037 = vsel %vm4010, %v3972, %v3483
    %v4038 = vsel %vm4010, %v3973, %v3485
    %v4039 = vsel %vm4010, %v3974, %v3487
    %v4040 = vsel %vm4010, %v3975, %v3489
    %v4041 = vsel %vm4010, %v3976, %v3491
    %v4042 = vsel %vm4010, %v3977, %v3493
    %v4043 = vsel %vm4010, %v3978, %v3495
    %v4044 = vsel %vm4010, %v3979, %v3497
    %v4045 = vsel %vm4010, %v3980, %v3499
    %v4046 = vsel %vm4010, %v3981, %v3501
    %v4047 = vsel %vm4010, %v3982, %v3503
    %v4048 = vsel %vm4010, %v3983, %v3505
    %v4049 = vsel %vm4010, %v3984, %v3507
    %v4050 = vsel %vm4010, %v3985, %v3509
    %v4051 = vsel %vm4010, %v3986, %v3511
    %v4052 = vsel %vm4010, %v3987, %v3513
    %v4053 = vsel %vm4010, %v3988, %v3515
    %v4054 = vsel %vm4010, %v3989, %v3517
    %v4055 = vsel %vm4010, %v3990, %v3519
    %v4056 = vsel %vm4010, %v3991, %v3521
    %v4057 = vsel %vm4010, %v3992, %v3523
    %v4058 = vsel %vm4010, %v3993, %v3525
    %v4059 = vsel %vm4010, %v3994, %v3527
    %v4060 = vsel %vm4010, %v3995, %v3529
    %v4061 = vsel %vm4010, %v3996, %v3531
    %v4062 = vsel %vm4010, %v3997, %v3533
    %v4063 = vsel %vm4010, %v3998, %v3535
    %v4064 = vsel %vm4010, %v3999, %v3537
    %v4065 = vsel %vm4010, %v4000, %v3539
    %v4066 = vsel %vm4010, %v4001, %v3541
    %v4067 = vsel %vm4010, %v4002, %v3543
    %v4068 = vsel %vm4010, %v4003, %v3545
    %v4069 = vsel %vm4010, %v4004, %v3547
    %v4070 = vsel %vm4010, %v4005, %v3549
    %v4071 = vsel %vm4010, %v4006, %v3551
    %v4072 = vsel %vm4010, %v4007, %v3553
    %v4073 = vsel %vm4010, %v4008, %v3555
    %v4074 = vsel %vm4010, %v4009, %v3557
    %v4075 = vpack.c.bf16 %v4012, %v4011
    %v4076 = vpack.c.bf16 %v1767, %v1766
    %v4077 = vpack.c.bf16 %v4014, %v4013
    %v4078 = vpack.c.bf16 %v1769, %v1768
    %v4079 = vpack.c.bf16 %v4016, %v4015
    %v4080 = vpack.c.bf16 %v1771, %v1770
    %v4081 = vpack.c.bf16 %v4018, %v4017
    %v4082 = vpack.c.bf16 %v1773, %v1772
    %v4083 = vpack.c.bf16 %v4020, %v4019
    %v4084 = vpack.c.bf16 %v1775, %v1774
    %v4085 = vpack.c.bf16 %v4022, %v4021
    %v4086 = vpack.c.bf16 %v1777, %v1776
    %v4087 = vpack.c.bf16 %v4024, %v4023
    %v4088 = vpack.c.bf16 %v1779, %v1778
    %v4089 = vpack.c.bf16 %v4026, %v4025
    %v4090 = vpack.c.bf16 %v1781, %v1780
    %v4091 = vpack.c.bf16 %v4028, %v4027
    %v4092 = vpack.c.bf16 %v1783, %v1782
    %v4093 = vpack.c.bf16 %v4030, %v4029
    %v4094 = vpack.c.bf16 %v1785, %v1784
    %v4095 = vpack.c.bf16 %v4032, %v4031
    %v4096 = vpack.c.bf16 %v1787, %v1786
    %v4097 = vpack.c.bf16 %v4034, %v4033
    %v4098 = vpack.c.bf16 %v1789, %v1788
    %v4099 = vpack.c.bf16 %v4036, %v4035
    %v4100 = vpack.c.bf16 %v1791, %v1790
    %v4101 = vpack.c.bf16 %v4038, %v4037
    %v4102 = vpack.c.bf16 %v1793, %v1792
    %v4103 = vpack.c.bf16 %v4040, %v4039
    %v4104 = vpack.c.bf16 %v1795, %v1794
    %v4105 = vpack.c.bf16 %v4042, %v4041
    %v4106 = vpack.c.bf16 %v1797, %v1796
    %v4107 = vpack.c.bf16 %v4044, %v4043
    %v4108 = vpack.c.bf16 %v1799, %v1798
    %v4109 = vpack.c.bf16 %v4046, %v4045
    %v4110 = vpack.c.bf16 %v1801, %v1800
    %v4111 = vpack.c.bf16 %v4048, %v4047
    %v4112 = vpack.c.bf16 %v1803, %v1802
    %v4113 = vpack.c.bf16 %v4050, %v4049
    %v4114 = vpack.c.bf16 %v1805, %v1804
    %v4115 = vpack.c.bf16 %v4052, %v4051
    %v4116 = vpack.c.bf16 %v1807, %v1806
    %v4117 = vpack.c.bf16 %v4054, %v4053
    %v4118 = vpack.c.bf16 %v1809, %v1808
    %v4119 = vpack.c.bf16 %v4056, %v4055
    %v4120 = vpack.c.bf16 %v1811, %v1810
    %v4121 = vpack.c.bf16 %v4058, %v4057
    %v4122 = vpack.c.bf16 %v1813, %v1812
    %v4123 = vpack.c.bf16 %v4060, %v4059
    %v4124 = vpack.c.bf16 %v1815, %v1814
    %v4125 = vpack.c.bf16 %v4062, %v4061
    %v4126 = vpack.c.bf16 %v1817, %v1816
    %v4127 = vpack.c.bf16 %v4064, %v4063
    %v4128 = vpack.c.bf16 %v1819, %v1818
    %v4129 = vpack.c.bf16 %v4066, %v4065
    %v4130 = vpack.c.bf16 %v1821, %v1820
    %v4131 = vpack.c.bf16 %v4068, %v4067
    %v4132 = vpack.c.bf16 %v1823, %v1822
    %v4133 = vpack.c.bf16 %v4070, %v4069
    %v4134 = vpack.c.bf16 %v1825, %v1824
    %v4135 = vpack.c.bf16 %v4072, %v4071
    %v4136 = vpack.c.bf16 %v1827, %v1826
    %v4137 = vpack.c.bf16 %v4074, %v4073
    %v4138 = vpack.c.bf16 %v1829, %v1828
    %v4139 = vld [vmem:[%s1] sm:$0xf]
    %v4140 = vld [vmem:[%s1 + $0x4] sm:$0xf]
    %v4141 = vld [vmem:[%s1 + $0x8] sm:$0xf]
    %v4142 = vld [vmem:[%s1 + $0xc] sm:$0xf]
    %v4143 = vld [vmem:[%s1 + $0x10] sm:$0xf]
    %v4144 = vld [vmem:[%s1 + $0x14] sm:$0xf]
    %v4145 = vld [vmem:[%s1 + $0x18] sm:$0xf]
    %v4146 = vld [vmem:[%s1 + $0x1c] sm:$0xf]
    %v4147 = vld [vmem:[%s1 + $0x20] sm:$0xf]
    %v4148 = vld [vmem:[%s1 + $0x24] sm:$0xf]
    %v4149 = vld [vmem:[%s1 + $0x28] sm:$0xf]
    %v4150 = vld [vmem:[%s1 + $0x2c] sm:$0xf]
    %v4151 = vld [vmem:[%s1 + $0x30] sm:$0xf]
    %v4152 = vld [vmem:[%s1 + $0x34] sm:$0xf]
    %v4153 = vld [vmem:[%s1 + $0x38] sm:$0xf]
    %v4154 = vld [vmem:[%s1 + $0x3c] sm:$0xf]
    %v4155 = vld [vmem:[%s1 + $0x40] sm:$0xf]
    %v4156 = vld [vmem:[%s1 + $0x44] sm:$0xf]
    %v4175 = vunpack.c.l.b16 %v4139
    %v4176 = vunpack.c.l.b16 %v4140
    %v4177 = vunpack.c.l.b16 %v4141
    %v4178 = vunpack.c.l.b16 %v4142
    %v4179 = vunpack.c.l.b16 %v4143
    %v4180 = vunpack.c.l.b16 %v4144
    %v4181 = vunpack.c.l.b16 %v4145
    %v4182 = vunpack.c.l.b16 %v4146
    %v4183 = vunpack.c.l.b16 %v4147
    %v4184 = vunpack.c.l.b16 %v4148
    %v4185 = vunpack.c.l.b16 %v4149
    %v4186 = vunpack.c.l.b16 %v4150
    %v4187 = vunpack.c.l.b16 %v4151
    %v4188 = vunpack.c.l.b16 %v4152
    %v4189 = vunpack.c.l.b16 %v4153
    %v4190 = vunpack.c.l.b16 %v4154
    %v4191 = vunpack.c.l.b16 %v4155
    %v4192 = vunpack.c.l.b16 %v4156
    %v4193 = vpack.c.b16 %v4176, %v4175
    %v4194 = vpack.c.b16 %v4178, %v4177
    %v4195 = vpack.c.b16 %v4180, %v4179
    %v4196 = vpack.c.b16 %v4182, %v4181
    %v4197 = vpack.c.b16 %v4184, %v4183
    %v4198 = vpack.c.b16 %v4186, %v4185
    %v4199 = vpack.c.b16 %v4188, %v4187
    %v4200 = vpack.c.b16 %v4190, %v4189
    %v4201 = vpack.c.b16 %v4192, %v4191
    %v4212 = vsel %vm43, %v4076, 0
    %v4215 = vsel %vm43, %v4078, 0
    %v4218 = vsel %vm43, %v4080, 0
    %v4221 = vsel %vm43, %v4082, 0
    %v4224 = vsel %vm43, %v4084, 0
    %v4227 = vsel %vm43, %v4086, 0
    %v4230 = vsel %vm43, %v4088, 0
    %v4233 = vsel %vm43, %v4090, 0
    %v4236 = vsel %vm43, %v4092, 0
    %v4239 = vsel %vm43, %v4094, 0
    %v4242 = vsel %vm43, %v4096, 0
    %v4245 = vsel %vm43, %v4098, 0
    %v4248 = vsel %vm43, %v4100, 0
    %v4251 = vsel %vm43, %v4102, 0
    %v4254 = vsel %vm43, %v4104, 0
    %v4257 = vsel %vm43, %v4106, 0
    %v4260 = vsel %vm43, %v4108, 0
    %v4263 = vsel %vm43, %v4110, 0
    %v4266 = vsel %vm43, %v4112, 0
    %v4269 = vsel %vm43, %v4114, 0
    %v4272 = vsel %vm43, %v4116, 0
    %v4275 = vsel %vm43, %v4118, 0
    %v4278 = vsel %vm43, %v4120, 0
    %v4281 = vsel %vm43, %v4122, 0
    %v4284 = vsel %vm43, %v4124, 0
    %v4287 = vsel %vm43, %v4126, 0
    %v4290 = vsel %vm43, %v4128, 0
    %v4293 = vsel %vm43, %v4130, 0
    %v4296 = vsel %vm43, %v4132, 0
    %v4299 = vsel %vm43, %v4134, 0
    %v4302 = vsel %vm43, %v4136, 0
    %v4305 = vsel %vm43, %v4138, 0
    %4307 = vmatprep.subr.bf16.mxu0 0
    %4308 = vmatpush1.bf16.msra.mxu0 %v4193
    %4309 = vmatprep.subr.bf16.mxu0 0
    %4310 = vmatpush1.bf16.msra.mxu0 %v4194
    %4311 = vmatprep.subr.bf16.mxu0 0
    %4312 = vmatpush1.bf16.msra.mxu0 %v4195
    %4313 = vmatprep.subr.bf16.mxu0 0
    %4314 = vmatpush1.bf16.msra.mxu0 %v4196
    %4315 = vmatprep.subr.bf16.mxu0 0
    %4316 = vmatpush1.bf16.msra.mxu0 %v4197
    %4317 = vmatprep.subr.bf16.mxu0 0
    %4318 = vmatpush1.bf16.msra.mxu0 %v4198
    %4319 = vmatprep.subr.bf16.mxu0 0
    %4320 = vmatpush1.bf16.msra.mxu0 %v4199
    %4321 = vmatprep.subr.bf16.mxu0 0
    %4322 = vmatpush1.bf16.msra.mxu0 %v4200
    %4323 = vmatprep.subr.bf16.mxu0 0
    %4324 = vmatpush1.bf16.msra.mxu0 %v4201
    %4325 = vmatprep.subr.bf16.mxu0 0
    %4326 = vmatpush1.bf16.msra.mxu0 0
    %4327 = vmatprep.subr.bf16.mxu0 0
    %4328 = vmatpush1.bf16.msra.mxu0 0
    %4329 = vmatprep.subr.bf16.mxu0 0
    %4330 = vmatpush1.bf16.msra.mxu0 0
    %4331 = vmatprep.subr.bf16.mxu0 0
    %4332 = vmatpush1.bf16.msra.mxu0 0
    %4333 = vmatprep.subr.bf16.mxu0 0
    %4334 = vmatpush1.bf16.msra.mxu0 0
    %4335 = vmatprep.subr.bf16.mxu0 0
    %4336 = vmatpush1.bf16.msra.mxu0 0
    %4337 = vmatprep.subr.bf16.mxu0 0
    %4338 = vmatpush1.bf16.msra.mxu0 0
    %4339 = vmatprep.mubr.bf16.mxu0 %v4212
    %4340 = vmatmul.mubr.bf16.gmra.mrb[0].mxu0 %v4075
    %v4341 = vpop.f32.mrb[0].mxu0
    %v4342 = vadd.f32 0.0, %v4341
    %v4343 = vpop.f32.mrb[0].mxu0
    %v4344 = vpop.f32.mrb[0].mxu0
    %v4345 = vadd.f32 0.0, %v4344
    %v4346 = vpop.f32.mrb[0].mxu0
    %4347 = vmatprep.mubr.bf16.mxu0 %v4215
    %4348 = vmatmul.mubr.bf16.gmra.mrb[0].mxu0 %v4077
    %v4349 = vpop.f32.mrb[0].mxu0
    %v4350 = vadd.f32 0.0, %v4349
    %v4351 = vpop.f32.mrb[0].mxu0
    %v4352 = vpop.f32.mrb[0].mxu0
    %v4353 = vadd.f32 0.0, %v4352
    %v4354 = vpop.f32.mrb[0].mxu0
    %4355 = vmatprep.mubr.bf16.mxu0 %v4218
    %4356 = vmatmul.mubr.bf16.gmra.mrb[0].mxu0 %v4079
    %v4357 = vpop.f32.mrb[0].mxu0
    %v4358 = vadd.f32 0.0, %v4357
    %v4359 = vpop.f32.mrb[0].mxu0
    %v4360 = vpop.f32.mrb[0].mxu0
    %v4361 = vadd.f32 0.0, %v4360
    %v4362 = vpop.f32.mrb[0].mxu0
    %4363 = vmatprep.mubr.bf16.mxu0 %v4221
    %4364 = vmatmul.mubr.bf16.gmra.mrb[0].mxu0 %v4081
    %v4365 = vpop.f32.mrb[0].mxu0
    %v4366 = vadd.f32 0.0, %v4365
    %v4367 = vpop.f32.mrb[0].mxu0
    %v4368 = vpop.f32.mrb[0].mxu0
    %v4369 = vadd.f32 0.0, %v4368
    %v4370 = vpop.f32.mrb[0].mxu0
    %4371 = vmatprep.mubr.bf16.mxu0 %v4224
    %4372 = vmatmul.mubr.bf16.gmra.mrb[0].mxu0 %v4083
    %v4373 = vpop.f32.mrb[0].mxu0
    %v4374 = vadd.f32 0.0, %v4373
    %v4375 = vpop.f32.mrb[0].mxu0
    %v4376 = vpop.f32.mrb[0].mxu0
    %v4377 = vadd.f32 0.0, %v4376
    %v4378 = vpop.f32.mrb[0].mxu0
    %4379 = vmatprep.mubr.bf16.mxu0 %v4227
    %4380 = vmatmul.mubr.bf16.gmra.mrb[0].mxu0 %v4085
    %v4381 = vpop.f32.mrb[0].mxu0
    %v4382 = vadd.f32 0.0, %v4381
    %v4383 = vpop.f32.mrb[0].mxu0
    %v4384 = vpop.f32.mrb[0].mxu0
    %v4385 = vadd.f32 0.0, %v4384
    %v4386 = vpop.f32.mrb[0].mxu0
    %4387 = vmatprep.mubr.bf16.mxu0 %v4230
    %4388 = vmatmul.mubr.bf16.gmra.mrb[0].mxu0 %v4087
    %v4389 = vpop.f32.mrb[0].mxu0
    %v4390 = vadd.f32 0.0, %v4389
    %v4391 = vpop.f32.mrb[0].mxu0
    %v4392 = vpop.f32.mrb[0].mxu0
    %v4393 = vadd.f32 0.0, %v4392
    %v4394 = vpop.f32.mrb[0].mxu0
    %4395 = vmatprep.mubr.bf16.mxu0 %v4233
    %4396 = vmatmul.mubr.bf16.gmra.mrb[0].mxu0 %v4089
    %v4397 = vpop.f32.mrb[0].mxu0
    %v4398 = vadd.f32 0.0, %v4397
    %v4399 = vpop.f32.mrb[0].mxu0
    %v4400 = vpop.f32.mrb[0].mxu0
    %v4401 = vadd.f32 0.0, %v4400
    %v4402 = vpop.f32.mrb[0].mxu0
    %4403 = vmatprep.mubr.bf16.mxu0 %v4236
    %4404 = vmatmul.mubr.bf16.gmra.mrb[0].mxu0 %v4091
    %v4405 = vpop.f32.mrb[0].mxu0
    %v4406 = vadd.f32 0.0, %v4405
    %v4407 = vpop.f32.mrb[0].mxu0
    %v4408 = vpop.f32.mrb[0].mxu0
    %v4409 = vadd.f32 0.0, %v4408
    %v4410 = vpop.f32.mrb[0].mxu0
    %4411 = vmatprep.mubr.bf16.mxu0 %v4239
    %4412 = vmatmul.mubr.bf16.gmra.mrb[0].mxu0 %v4093
    %v4413 = vpop.f32.mrb[0].mxu0
    %v4414 = vadd.f32 0.0, %v4413
    %v4415 = vpop.f32.mrb[0].mxu0
    %v4416 = vpop.f32.mrb[0].mxu0
    %v4417 = vadd.f32 0.0, %v4416
    %v4418 = vpop.f32.mrb[0].mxu0
    %4419 = vmatprep.mubr.bf16.mxu0 %v4242
    %4420 = vmatmul.mubr.bf16.gmra.mrb[0].mxu0 %v4095
    %v4421 = vpop.f32.mrb[0].mxu0
    %v4422 = vadd.f32 0.0, %v4421
    %v4423 = vpop.f32.mrb[0].mxu0
    %v4424 = vpop.f32.mrb[0].mxu0
    %v4425 = vadd.f32 0.0, %v4424
    %v4426 = vpop.f32.mrb[0].mxu0
    %4427 = vmatprep.mubr.bf16.mxu0 %v4245
    %4428 = vmatmul.mubr.bf16.gmra.mrb[0].mxu0 %v4097
    %v4429 = vpop.f32.mrb[0].mxu0
    %v4430 = vadd.f32 0.0, %v4429
    %v4431 = vpop.f32.mrb[0].mxu0
    %v4432 = vpop.f32.mrb[0].mxu0
    %v4433 = vadd.f32 0.0, %v4432
    %v4434 = vpop.f32.mrb[0].mxu0
    %4435 = vmatprep.mubr.bf16.mxu0 %v4248
    %4436 = vmatmul.mubr.bf16.gmra.mrb[0].mxu0 %v4099
    %v4437 = vpop.f32.mrb[0].mxu0
    %v4438 = vadd.f32 0.0, %v4437
    %v4439 = vpop.f32.mrb[0].mxu0
    %v4440 = vpop.f32.mrb[0].mxu0
    %v4441 = vadd.f32 0.0, %v4440
    %v4442 = vpop.f32.mrb[0].mxu0
    %4443 = vmatprep.mubr.bf16.mxu0 %v4251
    %4444 = vmatmul.mubr.bf16.gmra.mrb[0].mxu0 %v4101
    %v4445 = vpop.f32.mrb[0].mxu0
    %v4446 = vadd.f32 0.0, %v4445
    %v4447 = vpop.f32.mrb[0].mxu0
    %v4448 = vpop.f32.mrb[0].mxu0
    %v4449 = vadd.f32 0.0, %v4448
    %v4450 = vpop.f32.mrb[0].mxu0
    %4451 = vmatprep.mubr.bf16.mxu0 %v4254
    %4452 = vmatmul.mubr.bf16.gmra.mrb[0].mxu0 %v4103
    %v4453 = vpop.f32.mrb[0].mxu0
    %v4454 = vadd.f32 0.0, %v4453
    %v4455 = vpop.f32.mrb[0].mxu0
    %v4456 = vpop.f32.mrb[0].mxu0
    %v4457 = vadd.f32 0.0, %v4456
    %v4458 = vpop.f32.mrb[0].mxu0
    %4459 = vmatprep.mubr.bf16.mxu0 %v4257
    %4460 = vmatmul.mubr.bf16.gmra.mrb[0].mxu0 %v4105
    %v4461 = vpop.f32.mrb[0].mxu0
    %v4462 = vadd.f32 0.0, %v4461
    %v4463 = vpop.f32.mrb[0].mxu0
    %v4464 = vpop.f32.mrb[0].mxu0
    %v4465 = vadd.f32 0.0, %v4464
    %v4466 = vpop.f32.mrb[0].mxu0
    %4467 = vmatprep.mubr.bf16.mxu0 %v4260
    %4468 = vmatmul.mubr.bf16.gmra.mrb[0].mxu0 %v4107
    %v4469 = vpop.f32.mrb[0].mxu0
    %v4470 = vadd.f32 0.0, %v4469
    %v4471 = vpop.f32.mrb[0].mxu0
    %v4472 = vpop.f32.mrb[0].mxu0
    %v4473 = vadd.f32 0.0, %v4472
    %v4474 = vpop.f32.mrb[0].mxu0
    %4475 = vmatprep.mubr.bf16.mxu0 %v4263
    %4476 = vmatmul.mubr.bf16.gmra.mrb[0].mxu0 %v4109
    %v4477 = vpop.f32.mrb[0].mxu0
    %v4478 = vadd.f32 0.0, %v4477
    %v4479 = vpop.f32.mrb[0].mxu0
    %v4480 = vpop.f32.mrb[0].mxu0
    %v4481 = vadd.f32 0.0, %v4480
    %v4482 = vpop.f32.mrb[0].mxu0
    %4483 = vmatprep.mubr.bf16.mxu0 %v4266
    %4484 = vmatmul.mubr.bf16.gmra.mrb[0].mxu0 %v4111
    %v4485 = vpop.f32.mrb[0].mxu0
    %v4486 = vadd.f32 0.0, %v4485
    %v4487 = vpop.f32.mrb[0].mxu0
    %v4488 = vpop.f32.mrb[0].mxu0
    %v4489 = vadd.f32 0.0, %v4488
    %v4490 = vpop.f32.mrb[0].mxu0
    %4491 = vmatprep.mubr.bf16.mxu0 %v4269
    %4492 = vmatmul.mubr.bf16.gmra.mrb[0].mxu0 %v4113
    %v4493 = vpop.f32.mrb[0].mxu0
    %v4494 = vadd.f32 0.0, %v4493
    %v4495 = vpop.f32.mrb[0].mxu0
    %v4496 = vpop.f32.mrb[0].mxu0
    %v4497 = vadd.f32 0.0, %v4496
    %v4498 = vpop.f32.mrb[0].mxu0
    %4499 = vmatprep.mubr.bf16.mxu0 %v4272
    %4500 = vmatmul.mubr.bf16.gmra.mrb[0].mxu0 %v4115
    %v4501 = vpop.f32.mrb[0].mxu0
    %v4502 = vadd.f32 0.0, %v4501
    %v4503 = vpop.f32.mrb[0].mxu0
    %v4504 = vpop.f32.mrb[0].mxu0
    %v4505 = vadd.f32 0.0, %v4504
    %v4506 = vpop.f32.mrb[0].mxu0
    %4507 = vmatprep.mubr.bf16.mxu0 %v4275
    %4508 = vmatmul.mubr.bf16.gmra.mrb[0].mxu0 %v4117
    %v4509 = vpop.f32.mrb[0].mxu0
    %v4510 = vadd.f32 0.0, %v4509
    %v4511 = vpop.f32.mrb[0].mxu0
    %v4512 = vpop.f32.mrb[0].mxu0
    %v4513 = vadd.f32 0.0, %v4512
    %v4514 = vpop.f32.mrb[0].mxu0
    %4515 = vmatprep.mubr.bf16.mxu0 %v4278
    %4516 = vmatmul.mubr.bf16.gmra.mrb[0].mxu0 %v4119
    %v4517 = vpop.f32.mrb[0].mxu0
    %v4518 = vadd.f32 0.0, %v4517
    %v4519 = vpop.f32.mrb[0].mxu0
    %v4520 = vpop.f32.mrb[0].mxu0
    %v4521 = vadd.f32 0.0, %v4520
    %v4522 = vpop.f32.mrb[0].mxu0
    %4523 = vmatprep.mubr.bf16.mxu0 %v4281
    %4524 = vmatmul.mubr.bf16.gmra.mrb[0].mxu0 %v4121
    %v4525 = vpop.f32.mrb[0].mxu0
    %v4526 = vadd.f32 0.0, %v4525
    %v4527 = vpop.f32.mrb[0].mxu0
    %v4528 = vpop.f32.mrb[0].mxu0
    %v4529 = vadd.f32 0.0, %v4528
    %v4530 = vpop.f32.mrb[0].mxu0
    %4531 = vmatprep.mubr.bf16.mxu0 %v4284
    %4532 = vmatmul.mubr.bf16.gmra.mrb[0].mxu0 %v4123
    %v4533 = vpop.f32.mrb[0].mxu0
    %v4534 = vadd.f32 0.0, %v4533
    %v4535 = vpop.f32.mrb[0].mxu0
    %v4536 = vpop.f32.mrb[0].mxu0
    %v4537 = vadd.f32 0.0, %v4536
    %v4538 = vpop.f32.mrb[0].mxu0
    %4539 = vmatprep.mubr.bf16.mxu0 %v4287
    %4540 = vmatmul.mubr.bf16.gmra.mrb[0].mxu0 %v4125
    %v4541 = vpop.f32.mrb[0].mxu0
    %v4542 = vadd.f32 0.0, %v4541
    %v4543 = vpop.f32.mrb[0].mxu0
    %v4544 = vpop.f32.mrb[0].mxu0
    %v4545 = vadd.f32 0.0, %v4544
    %v4546 = vpop.f32.mrb[0].mxu0
    %4547 = vmatprep.mubr.bf16.mxu0 %v4290
    %4548 = vmatmul.mubr.bf16.gmra.mrb[0].mxu0 %v4127
    %v4549 = vpop.f32.mrb[0].mxu0
    %v4550 = vadd.f32 0.0, %v4549
    %v4551 = vpop.f32.mrb[0].mxu0
    %v4552 = vpop.f32.mrb[0].mxu0
    %v4553 = vadd.f32 0.0, %v4552
    %v4554 = vpop.f32.mrb[0].mxu0
    %4555 = vmatprep.mubr.bf16.mxu0 %v4293
    %4556 = vmatmul.mubr.bf16.gmra.mrb[0].mxu0 %v4129
    %v4557 = vpop.f32.mrb[0].mxu0
    %v4558 = vadd.f32 0.0, %v4557
    %v4559 = vpop.f32.mrb[0].mxu0
    %v4560 = vpop.f32.mrb[0].mxu0
    %v4561 = vadd.f32 0.0, %v4560
    %v4562 = vpop.f32.mrb[0].mxu0
    %4563 = vmatprep.mubr.bf16.mxu0 %v4296
    %4564 = vmatmul.mubr.bf16.gmra.mrb[0].mxu0 %v4131
    %v4565 = vpop.f32.mrb[0].mxu0
    %v4566 = vadd.f32 0.0, %v4565
    %v4567 = vpop.f32.mrb[0].mxu0
    %v4568 = vpop.f32.mrb[0].mxu0
    %v4569 = vadd.f32 0.0, %v4568
    %v4570 = vpop.f32.mrb[0].mxu0
    %4571 = vmatprep.mubr.bf16.mxu0 %v4299
    %4572 = vmatmul.mubr.bf16.gmra.mrb[0].mxu0 %v4133
    %v4573 = vpop.f32.mrb[0].mxu0
    %v4574 = vadd.f32 0.0, %v4573
    %v4575 = vpop.f32.mrb[0].mxu0
    %v4576 = vpop.f32.mrb[0].mxu0
    %v4577 = vadd.f32 0.0, %v4576
    %v4578 = vpop.f32.mrb[0].mxu0
    %4579 = vmatprep.mubr.bf16.mxu0 %v4302
    %4580 = vmatmul.mubr.bf16.gmra.mrb[0].mxu0 %v4135
    %v4581 = vpop.f32.mrb[0].mxu0
    %v4582 = vadd.f32 0.0, %v4581
    %v4583 = vpop.f32.mrb[0].mxu0
    %v4584 = vpop.f32.mrb[0].mxu0
    %v4585 = vadd.f32 0.0, %v4584
    %v4586 = vpop.f32.mrb[0].mxu0
    %4587 = vmatprep.mubr.bf16.mxu0 %v4305
    %4588 = vmatmul.mubr.bf16.gmra.mrb[0].mxu0 %v4137
    %v4589 = vpop.f32.mrb[0].mxu0
    %v4590 = vadd.f32 0.0, %v4589
    %v4591 = vpop.f32.mrb[0].mxu0
    %v4592 = vpop.f32.mrb[0].mxu0
    %v4593 = vadd.f32 0.0, %v4592
    %v4594 = vpop.f32.mrb[0].mxu0
    %4595 = vdwg.mxu0
    %v4596 = vld [vmem:[%s4] sm:$0x1]
    %v4597 = vld [vmem:[%s5] sm:$0x1]
    %v4598 = vsel %vm773, %v4342, 0.0
    %v4599 = vsel %vm773, %v4345, 0.0
    %v4600 = vadd.f32 %v4598, %v4599
    %v4601 = vsel %vm773, %v4350, 0.0
    %v4602 = vadd.f32 %v4600, %v4601
    %v4603 = vsel %vm773, %v4353, 0.0
    %v4604 = vadd.f32 %v4602, %v4603
    %v4605 = vsel %vm773, %v4358, 0.0
    %v4606 = vadd.f32 %v4604, %v4605
    %v4607 = vsel %vm773, %v4361, 0.0
    %v4608 = vadd.f32 %v4606, %v4607
    %v4609 = vsel %vm773, %v4366, 0.0
    %v4610 = vadd.f32 %v4608, %v4609
    %v4611 = vsel %vm773, %v4369, 0.0
    %v4612 = vadd.f32 %v4610, %v4611
    %v4613 = vsel %vm773, %v4374, 0.0
    %v4614 = vadd.f32 %v4612, %v4613
    %v4615 = vsel %vm773, %v4377, 0.0
    %v4616 = vadd.f32 %v4614, %v4615
    %v4617 = vsel %vm773, %v4382, 0.0
    %v4618 = vadd.f32 %v4616, %v4617
    %v4619 = vsel %vm773, %v4385, 0.0
    %v4620 = vadd.f32 %v4618, %v4619
    %v4621 = vsel %vm773, %v4390, 0.0
    %v4622 = vadd.f32 %v4620, %v4621
    %v4623 = vsel %vm773, %v4393, 0.0
    %v4624 = vadd.f32 %v4622, %v4623
    %v4625 = vsel %vm773, %v4398, 0.0
    %v4626 = vadd.f32 %v4624, %v4625
    %v4627 = vsel %vm773, %v4401, 0.0
    %v4628 = vadd.f32 %v4626, %v4627
    %v4629 = vsel %vm773, %v4406, 0.0
    %v4630 = vadd.f32 %v4628, %v4629
    %v4631 = vsel %vm773, %v4409, 0.0
    %v4632 = vadd.f32 %v4630, %v4631
    %v4633 = vsel %vm773, %v4414, 0.0
    %v4634 = vadd.f32 %v4632, %v4633
    %v4635 = vsel %vm773, %v4417, 0.0
    %v4636 = vadd.f32 %v4634, %v4635
    %v4637 = vsel %vm773, %v4422, 0.0
    %v4638 = vadd.f32 %v4636, %v4637
    %v4639 = vsel %vm773, %v4425, 0.0
    %v4640 = vadd.f32 %v4638, %v4639
    %v4641 = vsel %vm773, %v4430, 0.0
    %v4642 = vadd.f32 %v4640, %v4641
    %v4643 = vsel %vm773, %v4433, 0.0
    %v4644 = vadd.f32 %v4642, %v4643
    %v4645 = vsel %vm773, %v4438, 0.0
    %v4646 = vadd.f32 %v4644, %v4645
    %v4647 = vsel %vm773, %v4441, 0.0
    %v4648 = vadd.f32 %v4646, %v4647
    %v4649 = vsel %vm773, %v4446, 0.0
    %v4650 = vadd.f32 %v4648, %v4649
    %v4651 = vsel %vm773, %v4449, 0.0
    %v4652 = vadd.f32 %v4650, %v4651
    %v4653 = vsel %vm773, %v4454, 0.0
    %v4654 = vadd.f32 %v4652, %v4653
    %v4655 = vsel %vm773, %v4457, 0.0
    %v4656 = vadd.f32 %v4654, %v4655
    %v4657 = vsel %vm773, %v4462, 0.0
    %v4658 = vadd.f32 %v4656, %v4657
    %v4659 = vsel %vm773, %v4465, 0.0
    %v4660 = vadd.f32 %v4658, %v4659
    %v4661 = vsel %vm773, %v4470, 0.0
    %v4662 = vadd.f32 %v4660, %v4661
    %v4663 = vsel %vm773, %v4473, 0.0
    %v4664 = vadd.f32 %v4662, %v4663
    %v4665 = vsel %vm773, %v4478, 0.0
    %v4666 = vadd.f32 %v4664, %v4665
    %v4667 = vsel %vm773, %v4481, 0.0
    %v4668 = vadd.f32 %v4666, %v4667
    %v4669 = vsel %vm773, %v4486, 0.0
    %v4670 = vadd.f32 %v4668, %v4669
    %v4671 = vsel %vm773, %v4489, 0.0
    %v4672 = vadd.f32 %v4670, %v4671
    %v4673 = vsel %vm773, %v4494, 0.0
    %v4674 = vadd.f32 %v4672, %v4673
    %v4675 = vsel %vm773, %v4497, 0.0
    %v4676 = vadd.f32 %v4674, %v4675
    %v4677 = vsel %vm773, %v4502, 0.0
    %v4678 = vadd.f32 %v4676, %v4677
    %v4679 = vsel %vm773, %v4505, 0.0
    %v4680 = vadd.f32 %v4678, %v4679
    %v4681 = vsel %vm773, %v4510, 0.0
    %v4682 = vadd.f32 %v4680, %v4681
    %v4683 = vsel %vm773, %v4513, 0.0
    %v4684 = vadd.f32 %v4682, %v4683
    %v4685 = vsel %vm773, %v4518, 0.0
    %v4686 = vadd.f32 %v4684, %v4685
    %v4687 = vsel %vm773, %v4521, 0.0
    %v4688 = vadd.f32 %v4686, %v4687
    %v4689 = vsel %vm773, %v4526, 0.0
    %v4690 = vadd.f32 %v4688, %v4689
    %v4691 = vsel %vm773, %v4529, 0.0
    %v4692 = vadd.f32 %v4690, %v4691
    %v4693 = vsel %vm773, %v4534, 0.0
    %v4694 = vadd.f32 %v4692, %v4693
    %v4695 = vsel %vm773, %v4537, 0.0
    %v4696 = vadd.f32 %v4694, %v4695
    %v4697 = vsel %vm773, %v4542, 0.0
    %v4698 = vadd.f32 %v4696, %v4697
    %v4699 = vsel %vm773, %v4545, 0.0
    %v4700 = vadd.f32 %v4698, %v4699
    %v4701 = vsel %vm773, %v4550, 0.0
    %v4702 = vadd.f32 %v4700, %v4701
    %v4703 = vsel %vm773, %v4553, 0.0
    %v4704 = vadd.f32 %v4702, %v4703
    %v4705 = vsel %vm773, %v4558, 0.0
    %v4706 = vadd.f32 %v4704, %v4705
    %v4707 = vsel %vm773, %v4561, 0.0
    %v4708 = vadd.f32 %v4706, %v4707
    %v4709 = vsel %vm773, %v4566, 0.0
    %v4710 = vadd.f32 %v4708, %v4709
    %v4711 = vsel %vm773, %v4569, 0.0
    %v4712 = vadd.f32 %v4710, %v4711
    %v4713 = vsel %vm773, %v4574, 0.0
    %v4714 = vadd.f32 %v4712, %v4713
    %v4715 = vsel %vm773, %v4577, 0.0
    %v4716 = vadd.f32 %v4714, %v4715
    %v4717 = vsel %vm773, %v4582, 0.0
    %v4718 = vadd.f32 %v4716, %v4717
    %v4719 = vsel %vm773, %v4585, 0.0
    %v4720 = vadd.f32 %v4718, %v4719
    %v4721 = vsel %vm773, %v4590, 0.0
    %v4722 = vadd.f32 %v4720, %v4721
    %v4723 = vsel %vm773, %v4593, 0.0
    %v4724 = vadd.f32 %v4722, %v4723
    %v4725 = vrot.slane %v4724, 4
    %v4726 = vadd.f32 %v4724, %v4725
    %v4727 = vrot.slane %v4726, 2
    %v4728 = vadd.f32 %v4726, %v4727
    %v4729 = vrot.slane %v4728, 1
    %v4730 = vadd.f32 %v4728, %v4729
    %v4731 = vmul.f32 %v4730, 0.001953125
    %v4732 = vmul.f32 %v4342, %v4342
    %v4733 = vmul.f32 %v4345, %v4345
    %v4734 = vmul.f32 %v4350, %v4350
    %v4735 = vmul.f32 %v4353, %v4353
    %v4736 = vmul.f32 %v4358, %v4358
    %v4737 = vmul.f32 %v4361, %v4361
    %v4738 = vmul.f32 %v4366, %v4366
    %v4739 = vmul.f32 %v4369, %v4369
    %v4740 = vmul.f32 %v4374, %v4374
    %v4741 = vmul.f32 %v4377, %v4377
    %v4742 = vmul.f32 %v4382, %v4382
    %v4743 = vmul.f32 %v4385, %v4385
    %v4744 = vmul.f32 %v4390, %v4390
    %v4745 = vmul.f32 %v4393, %v4393
    %v4746 = vmul.f32 %v4398, %v4398
    %v4747 = vmul.f32 %v4401, %v4401
    %v4748 = vmul.f32 %v4406, %v4406
    %v4749 = vmul.f32 %v4409, %v4409
    %v4750 = vmul.f32 %v4414, %v4414
    %v4751 = vmul.f32 %v4417, %v4417
    %v4752 = vmul.f32 %v4422, %v4422
    %v4753 = vmul.f32 %v4425, %v4425
    %v4754 = vmul.f32 %v4430, %v4430
    %v4755 = vmul.f32 %v4433, %v4433
    %v4756 = vmul.f32 %v4438, %v4438
    %v4757 = vmul.f32 %v4441, %v4441
    %v4758 = vmul.f32 %v4446, %v4446
    %v4759 = vmul.f32 %v4449, %v4449
    %v4760 = vmul.f32 %v4454, %v4454
    %v4761 = vmul.f32 %v4457, %v4457
    %v4762 = vmul.f32 %v4462, %v4462
    %v4763 = vmul.f32 %v4465, %v4465
    %v4764 = vmul.f32 %v4470, %v4470
    %v4765 = vmul.f32 %v4473, %v4473
    %v4766 = vmul.f32 %v4478, %v4478
    %v4767 = vmul.f32 %v4481, %v4481
    %v4768 = vmul.f32 %v4486, %v4486
    %v4769 = vmul.f32 %v4489, %v4489
    %v4770 = vmul.f32 %v4494, %v4494
    %v4771 = vmul.f32 %v4497, %v4497
    %v4772 = vmul.f32 %v4502, %v4502
    %v4773 = vmul.f32 %v4505, %v4505
    %v4774 = vmul.f32 %v4510, %v4510
    %v4775 = vmul.f32 %v4513, %v4513
    %v4776 = vmul.f32 %v4518, %v4518
    %v4777 = vmul.f32 %v4521, %v4521
    %v4778 = vmul.f32 %v4526, %v4526
    %v4779 = vmul.f32 %v4529, %v4529
    %v4780 = vmul.f32 %v4534, %v4534
    %v4781 = vmul.f32 %v4537, %v4537
    %v4782 = vmul.f32 %v4542, %v4542
    %v4783 = vmul.f32 %v4545, %v4545
    %v4784 = vmul.f32 %v4550, %v4550
    %v4785 = vmul.f32 %v4553, %v4553
    %v4786 = vmul.f32 %v4558, %v4558
    %v4787 = vmul.f32 %v4561, %v4561
    %v4788 = vmul.f32 %v4566, %v4566
    %v4789 = vmul.f32 %v4569, %v4569
    %v4790 = vmul.f32 %v4574, %v4574
    %v4791 = vmul.f32 %v4577, %v4577
    %v4792 = vmul.f32 %v4582, %v4582
    %v4793 = vmul.f32 %v4585, %v4585
    %v4794 = vmul.f32 %v4590, %v4590
    %v4795 = vmul.f32 %v4593, %v4593
    %v4796 = vsel %vm773, %v4732, 0.0
    %v4797 = vsel %vm773, %v4733, 0.0
    %v4798 = vadd.f32 %v4796, %v4797
    %v4799 = vsel %vm773, %v4734, 0.0
    %v4800 = vadd.f32 %v4798, %v4799
    %v4801 = vsel %vm773, %v4735, 0.0
    %v4802 = vadd.f32 %v4800, %v4801
    %v4803 = vsel %vm773, %v4736, 0.0
    %v4804 = vadd.f32 %v4802, %v4803
    %v4805 = vsel %vm773, %v4737, 0.0
    %v4806 = vadd.f32 %v4804, %v4805
    %v4807 = vsel %vm773, %v4738, 0.0
    %v4808 = vadd.f32 %v4806, %v4807
    %v4809 = vsel %vm773, %v4739, 0.0
    %v4810 = vadd.f32 %v4808, %v4809
    %v4811 = vsel %vm773, %v4740, 0.0
    %v4812 = vadd.f32 %v4810, %v4811
    %v4813 = vsel %vm773, %v4741, 0.0
    %v4814 = vadd.f32 %v4812, %v4813
    %v4815 = vsel %vm773, %v4742, 0.0
    %v4816 = vadd.f32 %v4814, %v4815
    %v4817 = vsel %vm773, %v4743, 0.0
    %v4818 = vadd.f32 %v4816, %v4817
    %v4819 = vsel %vm773, %v4744, 0.0
    %v4820 = vadd.f32 %v4818, %v4819
    %v4821 = vsel %vm773, %v4745, 0.0
    %v4822 = vadd.f32 %v4820, %v4821
    %v4823 = vsel %vm773, %v4746, 0.0
    %v4824 = vadd.f32 %v4822, %v4823
    %v4825 = vsel %vm773, %v4747, 0.0
    %v4826 = vadd.f32 %v4824, %v4825
    %v4827 = vsel %vm773, %v4748, 0.0
    %v4828 = vadd.f32 %v4826, %v4827
    %v4829 = vsel %vm773, %v4749, 0.0
    %v4830 = vadd.f32 %v4828, %v4829
    %v4831 = vsel %vm773, %v4750, 0.0
    %v4832 = vadd.f32 %v4830, %v4831
    %v4833 = vsel %vm773, %v4751, 0.0
    %v4834 = vadd.f32 %v4832, %v4833
    %v4835 = vsel %vm773, %v4752, 0.0
    %v4836 = vadd.f32 %v4834, %v4835
    %v4837 = vsel %vm773, %v4753, 0.0
    %v4838 = vadd.f32 %v4836, %v4837
    %v4839 = vsel %vm773, %v4754, 0.0
    %v4840 = vadd.f32 %v4838, %v4839
    %v4841 = vsel %vm773, %v4755, 0.0
    %v4842 = vadd.f32 %v4840, %v4841
    %v4843 = vsel %vm773, %v4756, 0.0
    %v4844 = vadd.f32 %v4842, %v4843
    %v4845 = vsel %vm773, %v4757, 0.0
    %v4846 = vadd.f32 %v4844, %v4845
    %v4847 = vsel %vm773, %v4758, 0.0
    %v4848 = vadd.f32 %v4846, %v4847
    %v4849 = vsel %vm773, %v4759, 0.0
    %v4850 = vadd.f32 %v4848, %v4849
    %v4851 = vsel %vm773, %v4760, 0.0
    %v4852 = vadd.f32 %v4850, %v4851
    %v4853 = vsel %vm773, %v4761, 0.0
    %v4854 = vadd.f32 %v4852, %v4853
    %v4855 = vsel %vm773, %v4762, 0.0
    %v4856 = vadd.f32 %v4854, %v4855
    %v4857 = vsel %vm773, %v4763, 0.0
    %v4858 = vadd.f32 %v4856, %v4857
    %v4859 = vsel %vm773, %v4764, 0.0
    %v4860 = vadd.f32 %v4858, %v4859
    %v4861 = vsel %vm773, %v4765, 0.0
    %v4862 = vadd.f32 %v4860, %v4861
    %v4863 = vsel %vm773, %v4766, 0.0
    %v4864 = vadd.f32 %v4862, %v4863
    %v4865 = vsel %vm773, %v4767, 0.0
    %v4866 = vadd.f32 %v4864, %v4865
    %v4867 = vsel %vm773, %v4768, 0.0
    %v4868 = vadd.f32 %v4866, %v4867
    %v4869 = vsel %vm773, %v4769, 0.0
    %v4870 = vadd.f32 %v4868, %v4869
    %v4871 = vsel %vm773, %v4770, 0.0
    %v4872 = vadd.f32 %v4870, %v4871
    %v4873 = vsel %vm773, %v4771, 0.0
    %v4874 = vadd.f32 %v4872, %v4873
    %v4875 = vsel %vm773, %v4772, 0.0
    %v4876 = vadd.f32 %v4874, %v4875
    %v4877 = vsel %vm773, %v4773, 0.0
    %v4878 = vadd.f32 %v4876, %v4877
    %v4879 = vsel %vm773, %v4774, 0.0
    %v4880 = vadd.f32 %v4878, %v4879
    %v4881 = vsel %vm773, %v4775, 0.0
    %v4882 = vadd.f32 %v4880, %v4881
    %v4883 = vsel %vm773, %v4776, 0.0
    %v4884 = vadd.f32 %v4882, %v4883
    %v4885 = vsel %vm773, %v4777, 0.0
    %v4886 = vadd.f32 %v4884, %v4885
    %v4887 = vsel %vm773, %v4778, 0.0
    %v4888 = vadd.f32 %v4886, %v4887
    %v4889 = vsel %vm773, %v4779, 0.0
    %v4890 = vadd.f32 %v4888, %v4889
    %v4891 = vsel %vm773, %v4780, 0.0
    %v4892 = vadd.f32 %v4890, %v4891
    %v4893 = vsel %vm773, %v4781, 0.0
    %v4894 = vadd.f32 %v4892, %v4893
    %v4895 = vsel %vm773, %v4782, 0.0
    %v4896 = vadd.f32 %v4894, %v4895
    %v4897 = vsel %vm773, %v4783, 0.0
    %v4898 = vadd.f32 %v4896, %v4897
    %v4899 = vsel %vm773, %v4784, 0.0
    %v4900 = vadd.f32 %v4898, %v4899
    %v4901 = vsel %vm773, %v4785, 0.0
    %v4902 = vadd.f32 %v4900, %v4901
    %v4903 = vsel %vm773, %v4786, 0.0
    %v4904 = vadd.f32 %v4902, %v4903
    %v4905 = vsel %vm773, %v4787, 0.0
    %v4906 = vadd.f32 %v4904, %v4905
    %v4907 = vsel %vm773, %v4788, 0.0
    %v4908 = vadd.f32 %v4906, %v4907
    %v4909 = vsel %vm773, %v4789, 0.0
    %v4910 = vadd.f32 %v4908, %v4909
    %v4911 = vsel %vm773, %v4790, 0.0
    %v4912 = vadd.f32 %v4910, %v4911
    %v4913 = vsel %vm773, %v4791, 0.0
    %v4914 = vadd.f32 %v4912, %v4913
    %v4915 = vsel %vm773, %v4792, 0.0
    %v4916 = vadd.f32 %v4914, %v4915
    %v4917 = vsel %vm773, %v4793, 0.0
    %v4918 = vadd.f32 %v4916, %v4917
    %v4919 = vsel %vm773, %v4794, 0.0
    %v4920 = vadd.f32 %v4918, %v4919
    %v4921 = vsel %vm773, %v4795, 0.0
    %v4922 = vadd.f32 %v4920, %v4921
    %v4923 = vrot.slane %v4922, 4
    %v4924 = vadd.f32 %v4922, %v4923
    %v4925 = vrot.slane %v4924, 2
    %v4926 = vadd.f32 %v4924, %v4925
    %v4927 = vrot.slane %v4926, 1
    %v4928 = vadd.f32 %v4926, %v4927
    %v4929 = vmul.f32 %v4928, 0.001953125
    %v4930 = vmul.f32 %v4731, %v4731
    %v4931 = vsub.f32 %v4929, %v4930
    %v4932 = vadd.f32 %v4931, 1e-05
    %v4933 = vrsqrt.pop %v4932
    %v4934 = vmul.f32 %v4596, %v4933
    %v4935 = vmul.f32 %v4731, %v4934
    %v4936 = vsub.f32 %v4597, %v4935
    %v4938 = vlaneseq
    %v4939 = vshrl.u32 %v4938, 7
    %v4940 = vsub.s32 0, %v4939
    %v4941 = vrot.slane %v4934, %v4940
    %v4943 = vmul.f32 %v4342, %v4941
    %v4944 = vmul.f32 %v4345, %v4941
    %v4945 = vmul.f32 %v4350, %v4941
    %v4946 = vmul.f32 %v4353, %v4941
    %v4947 = vmul.f32 %v4358, %v4941
    %v4948 = vmul.f32 %v4361, %v4941
    %v4949 = vmul.f32 %v4366, %v4941
    %v4950 = vmul.f32 %v4369, %v4941
    %v4951 = vmul.f32 %v4374, %v4941
    %v4952 = vmul.f32 %v4377, %v4941
    %v4953 = vmul.f32 %v4382, %v4941
    %v4954 = vmul.f32 %v4385, %v4941
    %v4955 = vmul.f32 %v4390, %v4941
    %v4956 = vmul.f32 %v4393, %v4941
    %v4957 = vmul.f32 %v4398, %v4941
    %v4958 = vmul.f32 %v4401, %v4941
    %v4959 = vmul.f32 %v4406, %v4941
    %v4960 = vmul.f32 %v4409, %v4941
    %v4961 = vmul.f32 %v4414, %v4941
    %v4962 = vmul.f32 %v4417, %v4941
    %v4963 = vmul.f32 %v4422, %v4941
    %v4964 = vmul.f32 %v4425, %v4941
    %v4965 = vmul.f32 %v4430, %v4941
    %v4966 = vmul.f32 %v4433, %v4941
    %v4967 = vmul.f32 %v4438, %v4941
    %v4968 = vmul.f32 %v4441, %v4941
    %v4969 = vmul.f32 %v4446, %v4941
    %v4970 = vmul.f32 %v4449, %v4941
    %v4971 = vmul.f32 %v4454, %v4941
    %v4972 = vmul.f32 %v4457, %v4941
    %v4973 = vmul.f32 %v4462, %v4941
    %v4974 = vmul.f32 %v4465, %v4941
    %v4975 = vmul.f32 %v4470, %v4941
    %v4976 = vmul.f32 %v4473, %v4941
    %v4977 = vmul.f32 %v4478, %v4941
    %v4978 = vmul.f32 %v4481, %v4941
    %v4979 = vmul.f32 %v4486, %v4941
    %v4980 = vmul.f32 %v4489, %v4941
    %v4981 = vmul.f32 %v4494, %v4941
    %v4982 = vmul.f32 %v4497, %v4941
    %v4983 = vmul.f32 %v4502, %v4941
    %v4984 = vmul.f32 %v4505, %v4941
    %v4985 = vmul.f32 %v4510, %v4941
    %v4986 = vmul.f32 %v4513, %v4941
    %v4987 = vmul.f32 %v4518, %v4941
    %v4988 = vmul.f32 %v4521, %v4941
    %v4989 = vmul.f32 %v4526, %v4941
    %v4990 = vmul.f32 %v4529, %v4941
    %v4991 = vmul.f32 %v4534, %v4941
    %v4992 = vmul.f32 %v4537, %v4941
    %v4993 = vmul.f32 %v4542, %v4941
    %v4994 = vmul.f32 %v4545, %v4941
    %v4995 = vmul.f32 %v4550, %v4941
    %v4996 = vmul.f32 %v4553, %v4941
    %v4997 = vmul.f32 %v4558, %v4941
    %v4998 = vmul.f32 %v4561, %v4941
    %v4999 = vmul.f32 %v4566, %v4941
    %v5000 = vmul.f32 %v4569, %v4941
    %v5001 = vmul.f32 %v4574, %v4941
    %v5002 = vmul.f32 %v4577, %v4941
    %v5003 = vmul.f32 %v4582, %v4941
    %v5004 = vmul.f32 %v4585, %v4941
    %v5005 = vmul.f32 %v4590, %v4941
    %v5006 = vmul.f32 %v4593, %v4941
    %v5008 = vlaneseq
    %v5009 = vshrl.u32 %v5008, 7
    %v5010 = vsub.s32 0, %v5009
    %v5011 = vrot.slane %v4936, %v5010
    %v5013 = vadd.f32 %v4943, %v5011
    %v5014 = vadd.f32 %v4944, %v5011
    %v5015 = vadd.f32 %v4945, %v5011
    %v5016 = vadd.f32 %v4946, %v5011
    %v5017 = vadd.f32 %v4947, %v5011
    %v5018 = vadd.f32 %v4948, %v5011
    %v5019 = vadd.f32 %v4949, %v5011
    %v5020 = vadd.f32 %v4950, %v5011
    %v5021 = vadd.f32 %v4951, %v5011
    %v5022 = vadd.f32 %v4952, %v5011
    %v5023 = vadd.f32 %v4953, %v5011
    %v5024 = vadd.f32 %v4954, %v5011
    %v5025 = vadd.f32 %v4955, %v5011
    %v5026 = vadd.f32 %v4956, %v5011
    %v5027 = vadd.f32 %v4957, %v5011
    %v5028 = vadd.f32 %v4958, %v5011
    %v5029 = vadd.f32 %v4959, %v5011
    %v5030 = vadd.f32 %v4960, %v5011
    %v5031 = vadd.f32 %v4961, %v5011
    %v5032 = vadd.f32 %v4962, %v5011
    %v5033 = vadd.f32 %v4963, %v5011
    %v5034 = vadd.f32 %v4964, %v5011
    %v5035 = vadd.f32 %v4965, %v5011
    %v5036 = vadd.f32 %v4966, %v5011
    %v5037 = vadd.f32 %v4967, %v5011
    %v5038 = vadd.f32 %v4968, %v5011
    %v5039 = vadd.f32 %v4969, %v5011
    %v5040 = vadd.f32 %v4970, %v5011
    %v5041 = vadd.f32 %v4971, %v5011
    %v5042 = vadd.f32 %v4972, %v5011
    %v5043 = vadd.f32 %v4973, %v5011
    %v5044 = vadd.f32 %v4974, %v5011
    %v5045 = vadd.f32 %v4975, %v5011
    %v5046 = vadd.f32 %v4976, %v5011
    %v5047 = vadd.f32 %v4977, %v5011
    %v5048 = vadd.f32 %v4978, %v5011
    %v5049 = vadd.f32 %v4979, %v5011
    %v5050 = vadd.f32 %v4980, %v5011
    %v5051 = vadd.f32 %v4981, %v5011
    %v5052 = vadd.f32 %v4982, %v5011
    %v5053 = vadd.f32 %v4983, %v5011
    %v5054 = vadd.f32 %v4984, %v5011
    %v5055 = vadd.f32 %v4985, %v5011
    %v5056 = vadd.f32 %v4986, %v5011
    %v5057 = vadd.f32 %v4987, %v5011
    %v5058 = vadd.f32 %v4988, %v5011
    %v5059 = vadd.f32 %v4989, %v5011
    %v5060 = vadd.f32 %v4990, %v5011
    %v5061 = vadd.f32 %v4991, %v5011
    %v5062 = vadd.f32 %v4992, %v5011
    %v5063 = vadd.f32 %v4993, %v5011
    %v5064 = vadd.f32 %v4994, %v5011
    %v5065 = vadd.f32 %v4995, %v5011
    %v5066 = vadd.f32 %v4996, %v5011
    %v5067 = vadd.f32 %v4997, %v5011
    %v5068 = vadd.f32 %v4998, %v5011
    %v5069 = vadd.f32 %v4999, %v5011
    %v5070 = vadd.f32 %v5000, %v5011
    %v5071 = vadd.f32 %v5001, %v5011
    %v5072 = vadd.f32 %v5002, %v5011
    %v5073 = vadd.f32 %v5003, %v5011
    %v5074 = vadd.f32 %v5004, %v5011
    %v5075 = vadd.f32 %v5005, %v5011
    %v5076 = vadd.f32 %v5006, %v5011
    %v5077 = vmax.f32 %v5013, 0.0
    %v5078 = vmax.f32 %v5014, 0.0
    %v5079 = vmax.f32 %v5015, 0.0
    %v5080 = vmax.f32 %v5016, 0.0
    %v5081 = vmax.f32 %v5017, 0.0
    %v5082 = vmax.f32 %v5018, 0.0
    %v5083 = vmax.f32 %v5019, 0.0
    %v5084 = vmax.f32 %v5020, 0.0
    %v5085 = vmax.f32 %v5021, 0.0
    %v5086 = vmax.f32 %v5022, 0.0
    %v5087 = vmax.f32 %v5023, 0.0
    %v5088 = vmax.f32 %v5024, 0.0
    %v5089 = vmax.f32 %v5025, 0.0
    %v5090 = vmax.f32 %v5026, 0.0
    %v5091 = vmax.f32 %v5027, 0.0
    %v5092 = vmax.f32 %v5028, 0.0
    %v5093 = vmax.f32 %v5029, 0.0
    %v5094 = vmax.f32 %v5030, 0.0
    %v5095 = vmax.f32 %v5031, 0.0
    %v5096 = vmax.f32 %v5032, 0.0
    %v5097 = vmax.f32 %v5033, 0.0
    %v5098 = vmax.f32 %v5034, 0.0
    %v5099 = vmax.f32 %v5035, 0.0
    %v5100 = vmax.f32 %v5036, 0.0
    %v5101 = vmax.f32 %v5037, 0.0
    %v5102 = vmax.f32 %v5038, 0.0
    %v5103 = vmax.f32 %v5039, 0.0
    %v5104 = vmax.f32 %v5040, 0.0
    %v5105 = vmax.f32 %v5041, 0.0
    %v5106 = vmax.f32 %v5042, 0.0
    %v5107 = vmax.f32 %v5043, 0.0
    %v5108 = vmax.f32 %v5044, 0.0
    %v5109 = vmax.f32 %v5045, 0.0
    %v5110 = vmax.f32 %v5046, 0.0
    %v5111 = vmax.f32 %v5047, 0.0
    %v5112 = vmax.f32 %v5048, 0.0
    %v5113 = vmax.f32 %v5049, 0.0
    %v5114 = vmax.f32 %v5050, 0.0
    %v5115 = vmax.f32 %v5051, 0.0
    %v5116 = vmax.f32 %v5052, 0.0
    %v5117 = vmax.f32 %v5053, 0.0
    %v5118 = vmax.f32 %v5054, 0.0
    %v5119 = vmax.f32 %v5055, 0.0
    %v5120 = vmax.f32 %v5056, 0.0
    %v5121 = vmax.f32 %v5057, 0.0
    %v5122 = vmax.f32 %v5058, 0.0
    %v5123 = vmax.f32 %v5059, 0.0
    %v5124 = vmax.f32 %v5060, 0.0
    %v5125 = vmax.f32 %v5061, 0.0
    %v5126 = vmax.f32 %v5062, 0.0
    %v5127 = vmax.f32 %v5063, 0.0
    %v5128 = vmax.f32 %v5064, 0.0
    %v5129 = vmax.f32 %v5065, 0.0
    %v5130 = vmax.f32 %v5066, 0.0
    %v5131 = vmax.f32 %v5067, 0.0
    %v5132 = vmax.f32 %v5068, 0.0
    %v5133 = vmax.f32 %v5069, 0.0
    %v5134 = vmax.f32 %v5070, 0.0
    %v5135 = vmax.f32 %v5071, 0.0
    %v5136 = vmax.f32 %v5072, 0.0
    %v5137 = vmax.f32 %v5073, 0.0
    %v5138 = vmax.f32 %v5074, 0.0
    %v5139 = vmax.f32 %v5075, 0.0
    %v5140 = vmax.f32 %v5076, 0.0
    %5141 = vst.msk [vmem:[#allocation3] sm:$0xff] %vm773, 0.0
    %5142 = vst.msk [vmem:[#allocation3 + $0x8] sm:$0xff] %vm773, 0.0
    %vm5143 = vcmask 254976
    %5144 = vst.msk [vmem:[#allocation3 + $0x10] sm:$0x3] %vm5143, 0.0
    %5145 = vst.msk [vmem:[#allocation3 + $0x18] sm:$0xff] %vm773, 0.0
    %5146 = vst.msk [vmem:[#allocation3 + $0x20] sm:$0xff] %vm773, 0.0
    %5147 = vst.msk [vmem:[#allocation3 + $0x28] sm:$0x3] %vm5143, 0.0
    %5148 = vst.msk [vmem:[#allocation3 + $0x30] sm:$0xff] %vm773, 0.0
    %5149 = vst.msk [vmem:[#allocation3 + $0x38] sm:$0xff] %vm773, 0.0
    %5150 = vst.msk [vmem:[#allocation3 + $0x40] sm:$0x3] %vm5143, 0.0
    %5151 = vst.msk [vmem:[#allocation3 + $0x48] sm:$0xff] %vm773, 0.0
    %5152 = vst.msk [vmem:[#allocation3 + $0x50] sm:$0xff] %vm773, 0.0
    %5153 = vst.msk [vmem:[#allocation3 + $0x58] sm:$0x3] %vm5143, 0.0
    %5154 = vst.msk [vmem:[#allocation3 + $0x60] sm:$0xff] %vm773, 0.0
    %5155 = vst.msk [vmem:[#allocation3 + $0x68] sm:$0xff] %vm773, 0.0
    %5156 = vst.msk [vmem:[#allocation3 + $0x70] sm:$0x3] %vm5143, 0.0
    %5157 = vst.msk [vmem:[#allocation3 + $0x78] sm:$0xff] %vm773, 0.0
    %5158 = vst.msk [vmem:[#allocation3 + $0x80] sm:$0xff] %vm773, 0.0
    %5159 = vst.msk [vmem:[#allocation3 + $0x88] sm:$0x3] %vm5143, 0.0
    %5160 = vst.msk [vmem:[#allocation3 + $0x90] sm:$0xff] %vm773, 0.0
    %5161 = vst.msk [vmem:[#allocation3 + $0x98] sm:$0xff] %vm773, 0.0
    %5162 = vst.msk [vmem:[#allocation3 + $0xa0] sm:$0x3] %vm5143, 0.0
    %5163 = vst.msk [vmem:[#allocation3 + $0xa8] sm:$0xff] %vm773, 0.0
    %5164 = vst.msk [vmem:[#allocation3 + $0xb0] sm:$0xff] %vm773, 0.0
    %5165 = vst.msk [vmem:[#allocation3 + $0xb8] sm:$0x3] %vm5143, 0.0
    %5166 = vst.msk [vmem:[#allocation3 + $0xc0] sm:$0xff] %vm773, 0.0
    %5167 = vst.msk [vmem:[#allocation3 + $0xc8] sm:$0xff] %vm773, 0.0
    %5168 = vst.msk [vmem:[#allocation3 + $0xd0] sm:$0x3] %vm5143, 0.0
    %5169 = vst.msk [vmem:[#allocation3 + $0xd8] sm:$0xff] %vm773, 0.0
    %5170 = vst.msk [vmem:[#allocation3 + $0xe0] sm:$0xff] %vm773, 0.0
    %5171 = vst.msk [vmem:[#allocation3 + $0xe8] sm:$0x3] %vm5143, 0.0
    %5172 = vst.msk [vmem:[#allocation3 + $0xf0] sm:$0xff] %vm773, 0.0
    %5173 = vst.msk [vmem:[#allocation3 + $0xf8] sm:$0xff] %vm773, 0.0
    %5174 = vst.msk [vmem:[#allocation3 + $0x100] sm:$0x3] %vm5143, 0.0
    %5175 = vst.msk [vmem:[#allocation3 + $0x108] sm:$0xff] %vm773, 0.0
    %5176 = vst.msk [vmem:[#allocation3 + $0x110] sm:$0xff] %vm773, 0.0
    %5177 = vst.msk [vmem:[#allocation3 + $0x118] sm:$0x3] %vm5143, 0.0
    %5178 = vst.msk [vmem:[#allocation3 + $0x120] sm:$0xff] %vm773, 0.0
    %5179 = vst.msk [vmem:[#allocation3 + $0x128] sm:$0xff] %vm773, 0.0
    %5180 = vst.msk [vmem:[#allocation3 + $0x130] sm:$0x3] %vm5143, 0.0
    %5181 = vst.msk [vmem:[#allocation3 + $0x138] sm:$0xff] %vm773, 0.0
    %5182 = vst.msk [vmem:[#allocation3 + $0x140] sm:$0xff] %vm773, 0.0
    %5183 = vst.msk [vmem:[#allocation3 + $0x148] sm:$0x3] %vm5143, 0.0
    %5184 = vst.msk [vmem:[#allocation3 + $0x150] sm:$0xff] %vm773, 0.0
    %5185 = vst.msk [vmem:[#allocation3 + $0x158] sm:$0xff] %vm773, 0.0
    %5186 = vst.msk [vmem:[#allocation3 + $0x160] sm:$0x3] %vm5143, 0.0
    %5187 = vst.msk [vmem:[#allocation3 + $0x168] sm:$0xff] %vm773, 0.0
    %5188 = vst.msk [vmem:[#allocation3 + $0x170] sm:$0xff] %vm773, 0.0
    %5189 = vst.msk [vmem:[#allocation3 + $0x178] sm:$0x3] %vm5143, 0.0
    %5190 = vst.msk [vmem:[#allocation3 + $0x180] sm:$0xff] %vm773, 0.0
    %5191 = vst.msk [vmem:[#allocation3 + $0x188] sm:$0xff] %vm773, 0.0
    %5192 = vst.msk [vmem:[#allocation3 + $0x190] sm:$0x3] %vm5143, 0.0
    %5193 = vst.msk [vmem:[#allocation3 + $0x198] sm:$0xff] %vm773, 0.0
    %5194 = vst.msk [vmem:[#allocation3 + $0x1a0] sm:$0xff] %vm773, 0.0
    %5195 = vst.msk [vmem:[#allocation3 + $0x1a8] sm:$0x3] %vm5143, 0.0
    %5196 = vst.msk [vmem:[#allocation3 + $0x1b0] sm:$0xff] %vm773, 0.0
    %5197 = vst.msk [vmem:[#allocation3 + $0x1b8] sm:$0xff] %vm773, 0.0
    %5198 = vst.msk [vmem:[#allocation3 + $0x1c0] sm:$0x3] %vm5143, 0.0
    %5199 = vst.msk [vmem:[#allocation3 + $0x1c8] sm:$0xff] %vm773, 0.0
    %5200 = vst.msk [vmem:[#allocation3 + $0x1d0] sm:$0xff] %vm773, 0.0
    %5201 = vst.msk [vmem:[#allocation3 + $0x1d8] sm:$0x3] %vm5143, 0.0
    %5202 = vst.msk [vmem:[#allocation3 + $0x1e0] sm:$0xff] %vm773, 0.0
    %5203 = vst.msk [vmem:[#allocation3 + $0x1e8] sm:$0xff] %vm773, 0.0
    %5204 = vst.msk [vmem:[#allocation3 + $0x1f0] sm:$0x3] %vm5143, 0.0
    %5205 = vst.msk [vmem:[#allocation3 + $0x1f8] sm:$0xff] %vm773, 0.0
    %5206 = vst.msk [vmem:[#allocation3 + $0x200] sm:$0xff] %vm773, 0.0
    %5207 = vst.msk [vmem:[#allocation3 + $0x208] sm:$0x3] %vm5143, 0.0
    %5208 = vst.msk [vmem:[#allocation3 + $0x210] sm:$0xff] %vm773, 0.0
    %5209 = vst.msk [vmem:[#allocation3 + $0x218] sm:$0xff] %vm773, 0.0
    %5210 = vst.msk [vmem:[#allocation3 + $0x220] sm:$0x3] %vm5143, 0.0
    %5211 = vst.msk [vmem:[#allocation3 + $0x228] sm:$0xff] %vm773, 0.0
    %5212 = vst.msk [vmem:[#allocation3 + $0x230] sm:$0xff] %vm773, 0.0
    %5213 = vst.msk [vmem:[#allocation3 + $0x238] sm:$0x3] %vm5143, 0.0
    %5214 = vst.msk [vmem:[#allocation3 + $0x240] sm:$0xff] %vm773, 0.0
    %5215 = vst.msk [vmem:[#allocation3 + $0x248] sm:$0xff] %vm773, 0.0
    %5216 = vst.msk [vmem:[#allocation3 + $0x250] sm:$0x3] %vm5143, 0.0
    %5217 = vst.msk [vmem:[#allocation3 + $0x258] sm:$0xff] %vm773, 0.0
    %5218 = vst.msk [vmem:[#allocation3 + $0x260] sm:$0xff] %vm773, 0.0
    %5219 = vst.msk [vmem:[#allocation3 + $0x268] sm:$0x3] %vm5143, 0.0
    %5220 = vst.msk [vmem:[#allocation3 + $0x270] sm:$0xff] %vm773, 0.0
    %5221 = vst.msk [vmem:[#allocation3 + $0x278] sm:$0xff] %vm773, 0.0
    %5222 = vst.msk [vmem:[#allocation3 + $0x280] sm:$0x3] %vm5143, 0.0
    %5223 = vst.msk [vmem:[#allocation3 + $0x288] sm:$0xff] %vm773, 0.0
    %5224 = vst.msk [vmem:[#allocation3 + $0x290] sm:$0xff] %vm773, 0.0
    %5225 = vst.msk [vmem:[#allocation3 + $0x298] sm:$0x3] %vm5143, 0.0
    %5226 = vst.msk [vmem:[#allocation3 + $0x2a0] sm:$0xff] %vm773, 0.0
    %5227 = vst.msk [vmem:[#allocation3 + $0x2a8] sm:$0xff] %vm773, 0.0
    %5228 = vst.msk [vmem:[#allocation3 + $0x2b0] sm:$0x3] %vm5143, 0.0
    %5229 = vst.msk [vmem:[#allocation3 + $0x2b8] sm:$0xff] %vm773, 0.0
    %5230 = vst.msk [vmem:[#allocation3 + $0x2c0] sm:$0xff] %vm773, 0.0
    %5231 = vst.msk [vmem:[#allocation3 + $0x2c8] sm:$0x3] %vm5143, 0.0
    %5232 = vst.msk [vmem:[#allocation3 + $0x2d0] sm:$0xff] %vm773, 0.0
    %5233 = vst.msk [vmem:[#allocation3 + $0x2d8] sm:$0xff] %vm773, 0.0
    %5234 = vst.msk [vmem:[#allocation3 + $0x2e0] sm:$0x3] %vm5143, 0.0
    %5235 = vst.msk [vmem:[#allocation3 + $0x2e8] sm:$0xff] %vm773, 0.0
    %5236 = vst.msk [vmem:[#allocation3 + $0x2f0] sm:$0xff] %vm773, 0.0
    %5237 = vst.msk [vmem:[#allocation3 + $0x2f8] sm:$0x3] %vm5143, 0.0
    %5238 = vst.msk [vmem:[#allocation3 + $0x300] sm:$0xff] %vm773, 0.0
    %5239 = vst.msk [vmem:[#allocation3 + $0x308] sm:$0xff] %vm773, 0.0
    %5240 = vst.msk [vmem:[#allocation3 + $0x310] sm:$0x3] %vm5143, 0.0
    %5241 = vst.msk [vmem:[#allocation3 + $0x318] sm:$0xff] %vm773, 0.0
    %5242 = vst.msk [vmem:[#allocation3 + $0x320] sm:$0xff] %vm773, 0.0
    %5243 = vst.msk [vmem:[#allocation3 + $0x328] sm:$0x3] %vm5143, 0.0
    %5244 = vst.msk [vmem:[#allocation3 + $0x330] sm:$0xff] %vm773, 0.0
    %5245 = vst.msk [vmem:[#allocation3 + $0x338] sm:$0xff] %vm773, 0.0
    %5246 = vst.msk [vmem:[#allocation3 + $0x340] sm:$0x3] %vm5143, 0.0
    %5247 = vst.msk [vmem:[#allocation3 + $0x348] sm:$0xff] %vm773, 0.0
    %5248 = vst.msk [vmem:[#allocation3 + $0x350] sm:$0xff] %vm773, 0.0
    %5249 = vst.msk [vmem:[#allocation3 + $0x358] sm:$0x3] %vm5143, 0.0
    %s5250 = scalar_lea.vmem [#allocation3], 24
    %5251 = vst.msk [vmem:[%s5250 + $0x1] sm:$0xff] %vm773, %v5077
    %5252 = vst.msk [vmem:[%s5250 + $0x9] sm:$0xff] %vm773, %v5078
    %5253 = vst.msk [vmem:[%s5250 + $0x19] sm:$0xff] %vm773, %v5079
    %5254 = vst.msk [vmem:[%s5250 + $0x21] sm:$0xff] %vm773, %v5080
    %5255 = vst.msk [vmem:[%s5250 + $0x31] sm:$0xff] %vm773, %v5081
    %5256 = vst.msk [vmem:[%s5250 + $0x39] sm:$0xff] %vm773, %v5082
    %5257 = vst.msk [vmem:[%s5250 + $0x49] sm:$0xff] %vm773, %v5083
    %5258 = vst.msk [vmem:[%s5250 + $0x51] sm:$0xff] %vm773, %v5084
    %5259 = vst.msk [vmem:[%s5250 + $0x61] sm:$0xff] %vm773, %v5085
    %5260 = vst.msk [vmem:[%s5250 + $0x69] sm:$0xff] %vm773, %v5086
    %5261 = vst.msk [vmem:[%s5250 + $0x79] sm:$0xff] %vm773, %v5087
    %5262 = vst.msk [vmem:[%s5250 + $0x81] sm:$0xff] %vm773, %v5088
    %5263 = vst.msk [vmem:[%s5250 + $0x91] sm:$0xff] %vm773, %v5089
    %5264 = vst.msk [vmem:[%s5250 + $0x99] sm:$0xff] %vm773, %v5090
    %5265 = vst.msk [vmem:[%s5250 + $0xa9] sm:$0xff] %vm773, %v5091
    %5266 = vst.msk [vmem:[%s5250 + $0xb1] sm:$0xff] %vm773, %v5092
    %5267 = vst.msk [vmem:[%s5250 + $0xc1] sm:$0xff] %vm773, %v5093
    %5268 = vst.msk [vmem:[%s5250 + $0xc9] sm:$0xff] %vm773, %v5094
    %5269 = vst.msk [vmem:[%s5250 + $0xd9] sm:$0xff] %vm773, %v5095
    %5270 = vst.msk [vmem:[%s5250 + $0xe1] sm:$0xff] %vm773, %v5096
    %5271 = vst.msk [vmem:[%s5250 + $0xf1] sm:$0xff] %vm773, %v5097
    %5272 = vst.msk [vmem:[%s5250 + $0xf9] sm:$0xff] %vm773, %v5098
    %5273 = vst.msk [vmem:[%s5250 + $0x109] sm:$0xff] %vm773, %v5099
    %5274 = vst.msk [vmem:[%s5250 + $0x111] sm:$0xff] %vm773, %v5100
    %5275 = vst.msk [vmem:[%s5250 + $0x121] sm:$0xff] %vm773, %v5101
    %5276 = vst.msk [vmem:[%s5250 + $0x129] sm:$0xff] %vm773, %v5102
    %5277 = vst.msk [vmem:[%s5250 + $0x139] sm:$0xff] %vm773, %v5103
    %5278 = vst.msk [vmem:[%s5250 + $0x141] sm:$0xff] %vm773, %v5104
    %5279 = vst.msk [vmem:[%s5250 + $0x151] sm:$0xff] %vm773, %v5105
    %5280 = vst.msk [vmem:[%s5250 + $0x159] sm:$0xff] %vm773, %v5106
    %5281 = vst.msk [vmem:[%s5250 + $0x169] sm:$0xff] %vm773, %v5107
    %5282 = vst.msk [vmem:[%s5250 + $0x171] sm:$0xff] %vm773, %v5108
    %5283 = vst.msk [vmem:[%s5250 + $0x1b1] sm:$0xff] %vm773, %v5109
    %5284 = vst.msk [vmem:[%s5250 + $0x1b9] sm:$0xff] %vm773, %v5110
    %5285 = vst.msk [vmem:[%s5250 + $0x1c9] sm:$0xff] %vm773, %v5111
    %5286 = vst.msk [vmem:[%s5250 + $0x1d1] sm:$0xff] %vm773, %v5112
    %5287 = vst.msk [vmem:[%s5250 + $0x1e1] sm:$0xff] %vm773, %v5113
    %5288 = vst.msk [vmem:[%s5250 + $0x1e9] sm:$0xff] %vm773, %v5114
    %5289 = vst.msk [vmem:[%s5250 + $0x1f9] sm:$0xff] %vm773, %v5115
    %5290 = vst.msk [vmem:[%s5250 + $0x201] sm:$0xff] %vm773, %v5116
    %5291 = vst.msk [vmem:[%s5250 + $0x211] sm:$0xff] %vm773, %v5117
    %5292 = vst.msk [vmem:[%s5250 + $0x219] sm:$0xff] %vm773, %v5118
    %5293 = vst.msk [vmem:[%s5250 + $0x229] sm:$0xff] %vm773, %v5119
    %5294 = vst.msk [vmem:[%s5250 + $0x231] sm:$0xff] %vm773, %v5120
    %5295 = vst.msk [vmem:[%s5250 + $0x241] sm:$0xff] %vm773, %v5121
    %5296 = vst.msk [vmem:[%s5250 + $0x249] sm:$0xff] %vm773, %v5122
    %5297 = vst.msk [vmem:[%s5250 + $0x259] sm:$0xff] %vm773, %v5123
    %5298 = vst.msk [vmem:[%s5250 + $0x261] sm:$0xff] %vm773, %v5124
    %5299 = vst.msk [vmem:[%s5250 + $0x271] sm:$0xff] %vm773, %v5125
    %5300 = vst.msk [vmem:[%s5250 + $0x279] sm:$0xff] %vm773, %v5126
    %5301 = vst.msk [vmem:[%s5250 + $0x289] sm:$0xff] %vm773, %v5127
    %5302 = vst.msk [vmem:[%s5250 + $0x291] sm:$0xff] %vm773, %v5128
    %5303 = vst.msk [vmem:[%s5250 + $0x2a1] sm:$0xff] %vm773, %v5129
    %5304 = vst.msk [vmem:[%s5250 + $0x2a9] sm:$0xff] %vm773, %v5130
    %5305 = vst.msk [vmem:[%s5250 + $0x2b9] sm:$0xff] %vm773, %v5131
    %5306 = vst.msk [vmem:[%s5250 + $0x2c1] sm:$0xff] %vm773, %v5132
    %5307 = vst.msk [vmem:[%s5250 + $0x2d1] sm:$0xff] %vm773, %v5133
    %5308 = vst.msk [vmem:[%s5250 + $0x2d9] sm:$0xff] %vm773, %v5134
    %5309 = vst.msk [vmem:[%s5250 + $0x2e9] sm:$0xff] %vm773, %v5135
    %5310 = vst.msk [vmem:[%s5250 + $0x2f1] sm:$0xff] %vm773, %v5136
    %5311 = vst.msk [vmem:[%s5250 + $0x301] sm:$0xff] %vm773, %v5137
    %5312 = vst.msk [vmem:[%s5250 + $0x309] sm:$0xff] %vm773, %v5138
    %5313 = vst.msk [vmem:[%s5250 + $0x319] sm:$0xff] %vm773, %v5139
    %5314 = vst.msk [vmem:[%s5250 + $0x321] sm:$0xff] %vm773, %v5140
    %v5315 = vld [vmem:[#allocation3] sm:$0xff]
    %v5316 = vld [vmem:[#allocation3 + $0x8] sm:$0xff]
    %v5317 = vld [vmem:[#allocation3 + $0x18] sm:$0xff]
    %v5318 = vld [vmem:[#allocation3 + $0x20] sm:$0xff]
    %v5319 = vld [vmem:[#allocation3 + $0x30] sm:$0xff]
    %v5320 = vld [vmem:[#allocation3 + $0x38] sm:$0xff]
    %v5321 = vld [vmem:[#allocation3 + $0x48] sm:$0xff]
    %v5322 = vld [vmem:[#allocation3 + $0x50] sm:$0xff]
    %v5323 = vld [vmem:[#allocation3 + $0x60] sm:$0xff]
    %v5324 = vld [vmem:[#allocation3 + $0x68] sm:$0xff]
    %v5325 = vld [vmem:[#allocation3 + $0x78] sm:$0xff]
    %v5326 = vld [vmem:[#allocation3 + $0x80] sm:$0xff]
    %v5327 = vld [vmem:[#allocation3 + $0x90] sm:$0xff]
    %v5328 = vld [vmem:[#allocation3 + $0x98] sm:$0xff]
    %v5329 = vld [vmem:[#allocation3 + $0xa8] sm:$0xff]
    %v5330 = vld [vmem:[#allocation3 + $0xb0] sm:$0xff]
    %v5331 = vld [vmem:[#allocation3 + $0xc0] sm:$0xff]
    %v5332 = vld [vmem:[#allocation3 + $0xc8] sm:$0xff]
    %v5333 = vld [vmem:[#allocation3 + $0xd8] sm:$0xff]
    %v5334 = vld [vmem:[#allocation3 + $0xe0] sm:$0xff]
    %v5335 = vld [vmem:[#allocation3 + $0xf0] sm:$0xff]
    %v5336 = vld [vmem:[#allocation3 + $0xf8] sm:$0xff]
    %v5337 = vld [vmem:[#allocation3 + $0x108] sm:$0xff]
    %v5338 = vld [vmem:[#allocation3 + $0x110] sm:$0xff]
    %v5339 = vld [vmem:[#allocation3 + $0x120] sm:$0xff]
    %v5340 = vld [vmem:[#allocation3 + $0x128] sm:$0xff]
    %v5341 = vld [vmem:[#allocation3 + $0x138] sm:$0xff]
    %v5342 = vld [vmem:[#allocation3 + $0x140] sm:$0xff]
    %v5343 = vld [vmem:[#allocation3 + $0x150] sm:$0xff]
    %v5344 = vld [vmem:[#allocation3 + $0x158] sm:$0xff]
    %v5345 = vld [vmem:[#allocation3 + $0x168] sm:$0xff]
    %v5346 = vld [vmem:[#allocation3 + $0x170] sm:$0xff]
    %v5347 = vld [vmem:[#allocation3 + $0x1b0] sm:$0xff]
    %v5348 = vld [vmem:[#allocation3 + $0x1b8] sm:$0xff]
    %v5349 = vld [vmem:[#allocation3 + $0x1c8] sm:$0xff]
    %v5350 = vld [vmem:[#allocation3 + $0x1d0] sm:$0xff]
    %v5351 = vld [vmem:[#allocation3 + $0x1e0] sm:$0xff]
    %v5352 = vld [vmem:[#allocation3 + $0x1e8] sm:$0xff]
    %v5353 = vld [vmem:[#allocation3 + $0x1f8] sm:$0xff]
    %v5354 = vld [vmem:[#allocation3 + $0x200] sm:$0xff]
    %v5355 = vld [vmem:[#allocation3 + $0x210] sm:$0xff]
    %v5356 = vld [vmem:[#allocation3 + $0x218] sm:$0xff]
    %v5357 = vld [vmem:[#allocation3 + $0x228] sm:$0xff]
    %v5358 = vld [vmem:[#allocation3 + $0x230] sm:$0xff]
    %v5359 = vld [vmem:[#allocation3 + $0x240] sm:$0xff]
    %v5360 = vld [vmem:[#allocation3 + $0x248] sm:$0xff]
    %v5361 = vld [vmem:[#allocation3 + $0x258] sm:$0xff]
    %v5362 = vld [vmem:[#allocation3 + $0x260] sm:$0xff]
    %v5363 = vld [vmem:[#allocation3 + $0x270] sm:$0xff]
    %v5364 = vld [vmem:[#allocation3 + $0x278] sm:$0xff]
    %v5365 = vld [vmem:[#allocation3 + $0x288] sm:$0xff]
    %v5366 = vld [vmem:[#allocation3 + $0x290] sm:$0xff]
    %v5367 = vld [vmem:[#allocation3 + $0x2a0] sm:$0xff]
    %v5368 = vld [vmem:[#allocation3 + $0x2a8] sm:$0xff]
    %v5369 = vld [vmem:[#allocation3 + $0x2b8] sm:$0xff]
    %v5370 = vld [vmem:[#allocation3 + $0x2c0] sm:$0xff]
    %v5371 = vld [vmem:[#allocation3 + $0x2d0] sm:$0xff]
    %v5372 = vld [vmem:[#allocation3 + $0x2d8] sm:$0xff]
    %v5373 = vld [vmem:[#allocation3 + $0x2e8] sm:$0xff]
    %v5374 = vld [vmem:[#allocation3 + $0x2f0] sm:$0xff]
    %v5375 = vld [vmem:[#allocation3 + $0x300] sm:$0xff]
    %v5376 = vld [vmem:[#allocation3 + $0x308] sm:$0xff]
    %v5377 = vld [vmem:[#allocation3 + $0x318] sm:$0xff]
    %v5378 = vld [vmem:[#allocation3 + $0x320] sm:$0xff]
    %v5379 = vld [vmem:[#allocation3 + $0x1] sm:$0xff]
    %v5380 = vld [vmem:[#allocation3 + $0x9] sm:$0xff]
    %v5381 = vld [vmem:[#allocation3 + $0x19] sm:$0xff]
    %v5382 = vld [vmem:[#allocation3 + $0x21] sm:$0xff]
    %v5383 = vld [vmem:[#allocation3 + $0x31] sm:$0xff]
    %v5384 = vld [vmem:[#allocation3 + $0x39] sm:$0xff]
    %v5385 = vld [vmem:[#allocation3 + $0x49] sm:$0xff]
    %v5386 = vld [vmem:[#allocation3 + $0x51] sm:$0xff]
    %v5387 = vld [vmem:[#allocation3 + $0x61] sm:$0xff]
    %v5388 = vld [vmem:[#allocation3 + $0x69] sm:$0xff]
    %v5389 = vld [vmem:[#allocation3 + $0x79] sm:$0xff]
    %v5390 = vld [vmem:[#allocation3 + $0x81] sm:$0xff]
    %v5391 = vld [vmem:[#allocation3 + $0x91] sm:$0xff]
    %v5392 = vld [vmem:[#allocation3 + $0x99] sm:$0xff]
    %v5393 = vld [vmem:[#allocation3 + $0xa9] sm:$0xff]
    %v5394 = vld [vmem:[#allocation3 + $0xb1] sm:$0xff]
    %v5395 = vld [vmem:[#allocation3 + $0xc1] sm:$0xff]
    %v5396 = vld [vmem:[#allocation3 + $0xc9] sm:$0xff]
    %v5397 = vld [vmem:[#allocation3 + $0xd9] sm:$0xff]
    %v5398 = vld [vmem:[#allocation3 + $0xe1] sm:$0xff]
    %v5399 = vld [vmem:[#allocation3 + $0xf1] sm:$0xff]
    %v5400 = vld [vmem:[#allocation3 + $0xf9] sm:$0xff]
    %v5401 = vld [vmem:[#allocation3 + $0x109] sm:$0xff]
    %v5402 = vld [vmem:[#allocation3 + $0x111] sm:$0xff]
    %v5403 = vld [vmem:[#allocation3 + $0x121] sm:$0xff]
    %v5404 = vld [vmem:[#allocation3 + $0x129] sm:$0xff]
    %v5405 = vld [vmem:[#allocation3 + $0x139] sm:$0xff]
    %v5406 = vld [vmem:[#allocation3 + $0x141] sm:$0xff]
    %v5407 = vld [vmem:[#allocation3 + $0x151] sm:$0xff]
    %v5408 = vld [vmem:[#allocation3 + $0x159] sm:$0xff]
    %v5409 = vld [vmem:[#allocation3 + $0x169] sm:$0xff]
    %v5410 = vld [vmem:[#allocation3 + $0x171] sm:$0xff]
    %v5411 = vld [vmem:[#allocation3 + $0x1b1] sm:$0xff]
    %v5412 = vld [vmem:[#allocation3 + $0x1b9] sm:$0xff]
    %v5413 = vld [vmem:[#allocation3 + $0x1c9] sm:$0xff]
    %v5414 = vld [vmem:[#allocation3 + $0x1d1] sm:$0xff]
    %v5415 = vld [vmem:[#allocation3 + $0x1e1] sm:$0xff]
    %v5416 = vld [vmem:[#allocation3 + $0x1e9] sm:$0xff]
    %v5417 = vld [vmem:[#allocation3 + $0x1f9] sm:$0xff]
    %v5418 = vld [vmem:[#allocation3 + $0x201] sm:$0xff]
    %v5419 = vld [vmem:[#allocation3 + $0x211] sm:$0xff]
    %v5420 = vld [vmem:[#allocation3 + $0x219] sm:$0xff]
    %v5421 = vld [vmem:[#allocation3 + $0x229] sm:$0xff]
    %v5422 = vld [vmem:[#allocation3 + $0x231] sm:$0xff]
    %v5423 = vld [vmem:[#allocation3 + $0x241] sm:$0xff]
    %v5424 = vld [vmem:[#allocation3 + $0x249] sm:$0xff]
    %v5425 = vld [vmem:[#allocation3 + $0x259] sm:$0xff]
    %v5426 = vld [vmem:[#allocation3 + $0x261] sm:$0xff]
    %v5427 = vld [vmem:[#allocation3 + $0x271] sm:$0xff]
    %v5428 = vld [vmem:[#allocation3 + $0x279] sm:$0xff]
    %v5429 = vld [vmem:[#allocation3 + $0x289] sm:$0xff]
    %v5430 = vld [vmem:[#allocation3 + $0x291] sm:$0xff]
    %v5431 = vld [vmem:[#allocation3 + $0x2a1] sm:$0xff]
    %v5432 = vld [vmem:[#allocation3 + $0x2a9] sm:$0xff]
    %v5433 = vld [vmem:[#allocation3 + $0x2b9] sm:$0xff]
    %v5434 = vld [vmem:[#allocation3 + $0x2c1] sm:$0xff]
    %v5435 = vld [vmem:[#allocation3 + $0x2d1] sm:$0xff]
    %v5436 = vld [vmem:[#allocation3 + $0x2d9] sm:$0xff]
    %v5437 = vld [vmem:[#allocation3 + $0x2e9] sm:$0xff]
    %v5438 = vld [vmem:[#allocation3 + $0x2f1] sm:$0xff]
    %v5439 = vld [vmem:[#allocation3 + $0x301] sm:$0xff]
    %v5440 = vld [vmem:[#allocation3 + $0x309] sm:$0xff]
    %v5441 = vld [vmem:[#allocation3 + $0x319] sm:$0xff]
    %v5442 = vld [vmem:[#allocation3 + $0x321] sm:$0xff]
    %v5443 = vld [vmem:[#allocation3 + $0x2] sm:$0xff]
    %v5444 = vld [vmem:[#allocation3 + $0xa] sm:$0xff]
    %v5445 = vld [vmem:[#allocation3 + $0x1a] sm:$0xff]
    %v5446 = vld [vmem:[#allocation3 + $0x22] sm:$0xff]
    %v5447 = vld [vmem:[#allocation3 + $0x32] sm:$0xff]
    %v5448 = vld [vmem:[#allocation3 + $0x3a] sm:$0xff]
    %v5449 = vld [vmem:[#allocation3 + $0x4a] sm:$0xff]
    %v5450 = vld [vmem:[#allocation3 + $0x52] sm:$0xff]
    %v5451 = vld [vmem:[#allocation3 + $0x62] sm:$0xff]
    %v5452 = vld [vmem:[#allocation3 + $0x6a] sm:$0xff]
    %v5453 = vld [vmem:[#allocation3 + $0x7a] sm:$0xff]
    %v5454 = vld [vmem:[#allocation3 + $0x82] sm:$0xff]
    %v5455 = vld [vmem:[#allocation3 + $0x92] sm:$0xff]
    %v5456 = vld [vmem:[#allocation3 + $0x9a] sm:$0xff]
    %v5457 = vld [vmem:[#allocation3 + $0xaa] sm:$0xff]
    %v5458 = vld [vmem:[#allocation3 + $0xb2] sm:$0xff]
    %v5459 = vld [vmem:[#allocation3 + $0xc2] sm:$0xff]
    %v5460 = vld [vmem:[#allocation3 + $0xca] sm:$0xff]
    %v5461 = vld [vmem:[#allocation3 + $0xda] sm:$0xff]
    %v5462 = vld [vmem:[#allocation3 + $0xe2] sm:$0xff]
    %v5463 = vld [vmem:[#allocation3 + $0xf2] sm:$0xff]
    %v5464 = vld [vmem:[#allocation3 + $0xfa] sm:$0xff]
    %v5465 = vld [vmem:[#allocation3 + $0x10a] sm:$0xff]
    %v5466 = vld [vmem:[#allocation3 + $0x112] sm:$0xff]
    %v5467 = vld [vmem:[#allocation3 + $0x122] sm:$0xff]
    %v5468 = vld [vmem:[#allocation3 + $0x12a] sm:$0xff]
    %v5469 = vld [vmem:[#allocation3 + $0x13a] sm:$0xff]
    %v5470 = vld [vmem:[#allocation3 + $0x142] sm:$0xff]
    %v5471 = vld [vmem:[#allocation3 + $0x152] sm:$0xff]
    %v5472 = vld [vmem:[#allocation3 + $0x15a] sm:$0xff]
    %v5473 = vld [vmem:[#allocation3 + $0x16a] sm:$0xff]
    %v5474 = vld [vmem:[#allocation3 + $0x172] sm:$0xff]
    %v5475 = vld [vmem:[#allocation3 + $0x1b2] sm:$0xff]
    %v5476 = vld [vmem:[#allocation3 + $0x1ba] sm:$0xff]
    %v5477 = vld [vmem:[#allocation3 + $0x1ca] sm:$0xff]
    %v5478 = vld [vmem:[#allocation3 + $0x1d2] sm:$0xff]
    %v5479 = vld [vmem:[#allocation3 + $0x1e2] sm:$0xff]
    %v5480 = vld [vmem:[#allocation3 + $0x1ea] sm:$0xff]
    %v5481 = vld [vmem:[#allocation3 + $0x1fa] sm:$0xff]
    %v5482 = vld [vmem:[#allocation3 + $0x202] sm:$0xff]
    %v5483 = vld [vmem:[#allocation3 + $0x212] sm:$0xff]
    %v5484 = vld [vmem:[#allocation3 + $0x21a] sm:$0xff]
    %v5485 = vld [vmem:[#allocation3 + $0x22a] sm:$0xff]
    %v5486 = vld [vmem:[#allocation3 + $0x232] sm:$0xff]
    %v5487 = vld [vmem:[#allocation3 + $0x242] sm:$0xff]
    %v5488 = vld [vmem:[#allocation3 + $0x24a] sm:$0xff]
    %v5489 = vld [vmem:[#allocation3 + $0x25a] sm:$0xff]
    %v5490 = vld [vmem:[#allocation3 + $0x262] sm:$0xff]
    %v5491 = vld [vmem:[#allocation3 + $0x272] sm:$0xff]
    %v5492 = vld [vmem:[#allocation3 + $0x27a] sm:$0xff]
    %v5493 = vld [vmem:[#allocation3 + $0x28a] sm:$0xff]
    %v5494 = vld [vmem:[#allocation3 + $0x292] sm:$0xff]
    %v5495 = vld [vmem:[#allocation3 + $0x2a2] sm:$0xff]
    %v5496 = vld [vmem:[#allocation3 + $0x2aa] sm:$0xff]
    %v5497 = vld [vmem:[#allocation3 + $0x2ba] sm:$0xff]
    %v5498 = vld [vmem:[#allocation3 + $0x2c2] sm:$0xff]
    %v5499 = vld [vmem:[#allocation3 + $0x2d2] sm:$0xff]
    %v5500 = vld [vmem:[#allocation3 + $0x2da] sm:$0xff]
    %v5501 = vld [vmem:[#allocation3 + $0x2ea] sm:$0xff]
    %v5502 = vld [vmem:[#allocation3 + $0x2f2] sm:$0xff]
    %v5503 = vld [vmem:[#allocation3 + $0x302] sm:$0xff]
    %v5504 = vld [vmem:[#allocation3 + $0x30a] sm:$0xff]
    %v5505 = vld [vmem:[#allocation3 + $0x31a] sm:$0xff]
    %v5506 = vld [vmem:[#allocation3 + $0x322] sm:$0xff]
    %v5507 = vld [vmem:[%s5250] sm:$0xff]
    %v5508 = vld [vmem:[%s5250 + $0x8] sm:$0xff]
    %v5509 = vld [vmem:[%s5250 + $0x18] sm:$0xff]
    %v5510 = vld [vmem:[%s5250 + $0x20] sm:$0xff]
    %v5511 = vld [vmem:[%s5250 + $0x30] sm:$0xff]
    %v5512 = vld [vmem:[%s5250 + $0x38] sm:$0xff]
    %v5513 = vld [vmem:[%s5250 + $0x48] sm:$0xff]
    %v5514 = vld [vmem:[%s5250 + $0x50] sm:$0xff]
    %v5515 = vld [vmem:[%s5250 + $0x60] sm:$0xff]
    %v5516 = vld [vmem:[%s5250 + $0x68] sm:$0xff]
    %v5517 = vld [vmem:[%s5250 + $0x78] sm:$0xff]
    %v5518 = vld [vmem:[%s5250 + $0x80] sm:$0xff]
    %v5519 = vld [vmem:[%s5250 + $0x90] sm:$0xff]
    %v5520 = vld [vmem:[%s5250 + $0x98] sm:$0xff]
    %v5521 = vld [vmem:[%s5250 + $0xa8] sm:$0xff]
    %v5522 = vld [vmem:[%s5250 + $0xb0] sm:$0xff]
    %v5523 = vld [vmem:[%s5250 + $0xc0] sm:$0xff]
    %v5524 = vld [vmem:[%s5250 + $0xc8] sm:$0xff]
    %v5525 = vld [vmem:[%s5250 + $0xd8] sm:$0xff]
    %v5526 = vld [vmem:[%s5250 + $0xe0] sm:$0xff]
    %v5527 = vld [vmem:[%s5250 + $0xf0] sm:$0xff]
    %v5528 = vld [vmem:[%s5250 + $0xf8] sm:$0xff]
    %v5529 = vld [vmem:[%s5250 + $0x108] sm:$0xff]
    %v5530 = vld [vmem:[%s5250 + $0x110] sm:$0xff]
    %v5531 = vld [vmem:[%s5250 + $0x120] sm:$0xff]
    %v5532 = vld [vmem:[%s5250 + $0x128] sm:$0xff]
    %v5533 = vld [vmem:[%s5250 + $0x138] sm:$0xff]
    %v5534 = vld [vmem:[%s5250 + $0x140] sm:$0xff]
    %v5535 = vld [vmem:[%s5250 + $0x150] sm:$0xff]
    %v5536 = vld [vmem:[%s5250 + $0x158] sm:$0xff]
    %v5537 = vld [vmem:[%s5250 + $0x168] sm:$0xff]
    %v5538 = vld [vmem:[%s5250 + $0x170] sm:$0xff]
    %v5539 = vld [vmem:[%s5250 + $0x1b0] sm:$0xff]
    %v5540 = vld [vmem:[%s5250 + $0x1b8] sm:$0xff]
    %v5541 = vld [vmem:[%s5250 + $0x1c8] sm:$0xff]
    %v5542 = vld [vmem:[%s5250 + $0x1d0] sm:$0xff]
    %v5543 = vld [vmem:[%s5250 + $0x1e0] sm:$0xff]
    %v5544 = vld [vmem:[%s5250 + $0x1e8] sm:$0xff]
    %v5545 = vld [vmem:[%s5250 + $0x1f8] sm:$0xff]
    %v5546 = vld [vmem:[%s5250 + $0x200] sm:$0xff]
    %v5547 = vld [vmem:[%s5250 + $0x210] sm:$0xff]
    %v5548 = vld [vmem:[%s5250 + $0x218] sm:$0xff]
    %v5549 = vld [vmem:[%s5250 + $0x228] sm:$0xff]
    %v5550 = vld [vmem:[%s5250 + $0x230] sm:$0xff]
    %v5551 = vld [vmem:[%s5250 + $0x240] sm:$0xff]
    %v5552 = vld [vmem:[%s5250 + $0x248] sm:$0xff]
    %v5553 = vld [vmem:[%s5250 + $0x258] sm:$0xff]
    %v5554 = vld [vmem:[%s5250 + $0x260] sm:$0xff]
    %v5555 = vld [vmem:[%s5250 + $0x270] sm:$0xff]
    %v5556 = vld [vmem:[%s5250 + $0x278] sm:$0xff]
    %v5557 = vld [vmem:[%s5250 + $0x288] sm:$0xff]
    %v5558 = vld [vmem:[%s5250 + $0x290] sm:$0xff]
    %v5559 = vld [vmem:[%s5250 + $0x2a0] sm:$0xff]
    %v5560 = vld [vmem:[%s5250 + $0x2a8] sm:$0xff]
    %v5561 = vld [vmem:[%s5250 + $0x2b8] sm:$0xff]
    %v5562 = vld [vmem:[%s5250 + $0x2c0] sm:$0xff]
    %v5563 = vld [vmem:[%s5250 + $0x2d0] sm:$0xff]
    %v5564 = vld [vmem:[%s5250 + $0x2d8] sm:$0xff]
    %v5565 = vld [vmem:[%s5250 + $0x2e8] sm:$0xff]
    %v5566 = vld [vmem:[%s5250 + $0x2f0] sm:$0xff]
    %v5567 = vld [vmem:[%s5250 + $0x300] sm:$0xff]
    %v5568 = vld [vmem:[%s5250 + $0x308] sm:$0xff]
    %v5569 = vld [vmem:[%s5250 + $0x318] sm:$0xff]
    %v5570 = vld [vmem:[%s5250 + $0x320] sm:$0xff]
    %v5571 = vld [vmem:[%s5250 + $0x1] sm:$0xff]
    %v5572 = vld [vmem:[%s5250 + $0x9] sm:$0xff]
    %v5573 = vld [vmem:[%s5250 + $0x19] sm:$0xff]
    %v5574 = vld [vmem:[%s5250 + $0x21] sm:$0xff]
    %v5575 = vld [vmem:[%s5250 + $0x31] sm:$0xff]
    %v5576 = vld [vmem:[%s5250 + $0x39] sm:$0xff]
    %v5577 = vld [vmem:[%s5250 + $0x49] sm:$0xff]
    %v5578 = vld [vmem:[%s5250 + $0x51] sm:$0xff]
    %v5579 = vld [vmem:[%s5250 + $0x61] sm:$0xff]
    %v5580 = vld [vmem:[%s5250 + $0x69] sm:$0xff]
    %v5581 = vld [vmem:[%s5250 + $0x79] sm:$0xff]
    %v5582 = vld [vmem:[%s5250 + $0x81] sm:$0xff]
    %v5583 = vld [vmem:[%s5250 + $0x91] sm:$0xff]
    %v5584 = vld [vmem:[%s5250 + $0x99] sm:$0xff]
    %v5585 = vld [vmem:[%s5250 + $0xa9] sm:$0xff]
    %v5586 = vld [vmem:[%s5250 + $0xb1] sm:$0xff]
    %v5587 = vld [vmem:[%s5250 + $0xc1] sm:$0xff]
    %v5588 = vld [vmem:[%s5250 + $0xc9] sm:$0xff]
    %v5589 = vld [vmem:[%s5250 + $0xd9] sm:$0xff]
    %v5590 = vld [vmem:[%s5250 + $0xe1] sm:$0xff]
    %v5591 = vld [vmem:[%s5250 + $0xf1] sm:$0xff]
    %v5592 = vld [vmem:[%s5250 + $0xf9] sm:$0xff]
    %v5593 = vld [vmem:[%s5250 + $0x109] sm:$0xff]
    %v5594 = vld [vmem:[%s5250 + $0x111] sm:$0xff]
    %v5595 = vld [vmem:[%s5250 + $0x121] sm:$0xff]
    %v5596 = vld [vmem:[%s5250 + $0x129] sm:$0xff]
    %v5597 = vld [vmem:[%s5250 + $0x139] sm:$0xff]
    %v5598 = vld [vmem:[%s5250 + $0x141] sm:$0xff]
    %v5599 = vld [vmem:[%s5250 + $0x151] sm:$0xff]
    %v5600 = vld [vmem:[%s5250 + $0x159] sm:$0xff]
    %v5601 = vld [vmem:[%s5250 + $0x169] sm:$0xff]
    %v5602 = vld [vmem:[%s5250 + $0x171] sm:$0xff]
    %v5603 = vld [vmem:[%s5250 + $0x1b1] sm:$0xff]
    %v5604 = vld [vmem:[%s5250 + $0x1b9] sm:$0xff]
    %v5605 = vld [vmem:[%s5250 + $0x1c9] sm:$0xff]
    %v5606 = vld [vmem:[%s5250 + $0x1d1] sm:$0xff]
    %v5607 = vld [vmem:[%s5250 + $0x1e1] sm:$0xff]
    %v5608 = vld [vmem:[%s5250 + $0x1e9] sm:$0xff]
    %v5609 = vld [vmem:[%s5250 + $0x1f9] sm:$0xff]
    %v5610 = vld [vmem:[%s5250 + $0x201] sm:$0xff]
    %v5611 = vld [vmem:[%s5250 + $0x211] sm:$0xff]
    %v5612 = vld [vmem:[%s5250 + $0x219] sm:$0xff]
    %v5613 = vld [vmem:[%s5250 + $0x229] sm:$0xff]
    %v5614 = vld [vmem:[%s5250 + $0x231] sm:$0xff]
    %v5615 = vld [vmem:[%s5250 + $0x241] sm:$0xff]
    %v5616 = vld [vmem:[%s5250 + $0x249] sm:$0xff]
    %v5617 = vld [vmem:[%s5250 + $0x259] sm:$0xff]
    %v5618 = vld [vmem:[%s5250 + $0x261] sm:$0xff]
    %v5619 = vld [vmem:[%s5250 + $0x271] sm:$0xff]
    %v5620 = vld [vmem:[%s5250 + $0x279] sm:$0xff]
    %v5621 = vld [vmem:[%s5250 + $0x289] sm:$0xff]
    %v5622 = vld [vmem:[%s5250 + $0x291] sm:$0xff]
    %v5623 = vld [vmem:[%s5250 + $0x2a1] sm:$0xff]
    %v5624 = vld [vmem:[%s5250 + $0x2a9] sm:$0xff]
    %v5625 = vld [vmem:[%s5250 + $0x2b9] sm:$0xff]
    %v5626 = vld [vmem:[%s5250 + $0x2c1] sm:$0xff]
    %v5627 = vld [vmem:[%s5250 + $0x2d1] sm:$0xff]
    %v5628 = vld [vmem:[%s5250 + $0x2d9] sm:$0xff]
    %v5629 = vld [vmem:[%s5250 + $0x2e9] sm:$0xff]
    %v5630 = vld [vmem:[%s5250 + $0x2f1] sm:$0xff]
    %v5631 = vld [vmem:[%s5250 + $0x301] sm:$0xff]
    %v5632 = vld [vmem:[%s5250 + $0x309] sm:$0xff]
    %v5633 = vld [vmem:[%s5250 + $0x319] sm:$0xff]
    %v5634 = vld [vmem:[%s5250 + $0x321] sm:$0xff]
    %v5635 = vld [vmem:[%s5250 + $0x2] sm:$0xff]
    %v5636 = vld [vmem:[%s5250 + $0xa] sm:$0xff]
    %v5637 = vld [vmem:[%s5250 + $0x1a] sm:$0xff]
    %v5638 = vld [vmem:[%s5250 + $0x22] sm:$0xff]
    %v5639 = vld [vmem:[%s5250 + $0x32] sm:$0xff]
    %v5640 = vld [vmem:[%s5250 + $0x3a] sm:$0xff]
    %v5641 = vld [vmem:[%s5250 + $0x4a] sm:$0xff]
    %v5642 = vld [vmem:[%s5250 + $0x52] sm:$0xff]
    %v5643 = vld [vmem:[%s5250 + $0x62] sm:$0xff]
    %v5644 = vld [vmem:[%s5250 + $0x6a] sm:$0xff]
    %v5645 = vld [vmem:[%s5250 + $0x7a] sm:$0xff]
    %v5646 = vld [vmem:[%s5250 + $0x82] sm:$0xff]
    %v5647 = vld [vmem:[%s5250 + $0x92] sm:$0xff]
    %v5648 = vld [vmem:[%s5250 + $0x9a] sm:$0xff]
    %v5649 = vld [vmem:[%s5250 + $0xaa] sm:$0xff]
    %v5650 = vld [vmem:[%s5250 + $0xb2] sm:$0xff]
    %v5651 = vld [vmem:[%s5250 + $0xc2] sm:$0xff]
    %v5652 = vld [vmem:[%s5250 + $0xca] sm:$0xff]
    %v5653 = vld [vmem:[%s5250 + $0xda] sm:$0xff]
    %v5654 = vld [vmem:[%s5250 + $0xe2] sm:$0xff]
    %v5655 = vld [vmem:[%s5250 + $0xf2] sm:$0xff]
    %v5656 = vld [vmem:[%s5250 + $0xfa] sm:$0xff]
    %v5657 = vld [vmem:[%s5250 + $0x10a] sm:$0xff]
    %v5658 = vld [vmem:[%s5250 + $0x112] sm:$0xff]
    %v5659 = vld [vmem:[%s5250 + $0x122] sm:$0xff]
    %v5660 = vld [vmem:[%s5250 + $0x12a] sm:$0xff]
    %v5661 = vld [vmem:[%s5250 + $0x13a] sm:$0xff]
    %v5662 = vld [vmem:[%s5250 + $0x142] sm:$0xff]
    %v5663 = vld [vmem:[%s5250 + $0x152] sm:$0xff]
    %v5664 = vld [vmem:[%s5250 + $0x15a] sm:$0xff]
    %v5665 = vld [vmem:[%s5250 + $0x16a] sm:$0xff]
    %v5666 = vld [vmem:[%s5250 + $0x172] sm:$0xff]
    %v5667 = vld [vmem:[%s5250 + $0x1b2] sm:$0xff]
    %v5668 = vld [vmem:[%s5250 + $0x1ba] sm:$0xff]
    %v5669 = vld [vmem:[%s5250 + $0x1ca] sm:$0xff]
    %v5670 = vld [vmem:[%s5250 + $0x1d2] sm:$0xff]
    %v5671 = vld [vmem:[%s5250 + $0x1e2] sm:$0xff]
    %v5672 = vld [vmem:[%s5250 + $0x1ea] sm:$0xff]
    %v5673 = vld [vmem:[%s5250 + $0x1fa] sm:$0xff]
    %v5674 = vld [vmem:[%s5250 + $0x202] sm:$0xff]
    %v5675 = vld [vmem:[%s5250 + $0x212] sm:$0xff]
    %v5676 = vld [vmem:[%s5250 + $0x21a] sm:$0xff]
    %v5677 = vld [vmem:[%s5250 + $0x22a] sm:$0xff]
    %v5678 = vld [vmem:[%s5250 + $0x232] sm:$0xff]
    %v5679 = vld [vmem:[%s5250 + $0x242] sm:$0xff]
    %v5680 = vld [vmem:[%s5250 + $0x24a] sm:$0xff]
    %v5681 = vld [vmem:[%s5250 + $0x25a] sm:$0xff]
    %v5682 = vld [vmem:[%s5250 + $0x262] sm:$0xff]
    %v5683 = vld [vmem:[%s5250 + $0x272] sm:$0xff]
    %v5684 = vld [vmem:[%s5250 + $0x27a] sm:$0xff]
    %v5685 = vld [vmem:[%s5250 + $0x28a] sm:$0xff]
    %v5686 = vld [vmem:[%s5250 + $0x292] sm:$0xff]
    %v5687 = vld [vmem:[%s5250 + $0x2a2] sm:$0xff]
    %v5688 = vld [vmem:[%s5250 + $0x2aa] sm:$0xff]
    %v5689 = vld [vmem:[%s5250 + $0x2ba] sm:$0xff]
    %v5690 = vld [vmem:[%s5250 + $0x2c2] sm:$0xff]
    %v5691 = vld [vmem:[%s5250 + $0x2d2] sm:$0xff]
    %v5692 = vld [vmem:[%s5250 + $0x2da] sm:$0xff]
    %v5693 = vld [vmem:[%s5250 + $0x2ea] sm:$0xff]
    %v5694 = vld [vmem:[%s5250 + $0x2f2] sm:$0xff]
    %v5695 = vld [vmem:[%s5250 + $0x302] sm:$0xff]
    %v5696 = vld [vmem:[%s5250 + $0x30a] sm:$0xff]
    %v5697 = vld [vmem:[%s5250 + $0x31a] sm:$0xff]
    %v5698 = vld [vmem:[%s5250 + $0x322] sm:$0xff]
    %s5699 = scalar_lea.vmem [#allocation3], 48
    %v5700 = vld [vmem:[%s5699] sm:$0xff]
    %v5701 = vld [vmem:[%s5699 + $0x8] sm:$0xff]
    %v5702 = vld [vmem:[%s5699 + $0x18] sm:$0xff]
    %v5703 = vld [vmem:[%s5699 + $0x20] sm:$0xff]
    %v5704 = vld [vmem:[%s5699 + $0x30] sm:$0xff]
    %v5705 = vld [vmem:[%s5699 + $0x38] sm:$0xff]
    %v5706 = vld [vmem:[%s5699 + $0x48] sm:$0xff]
    %v5707 = vld [vmem:[%s5699 + $0x50] sm:$0xff]
    %v5708 = vld [vmem:[%s5699 + $0x60] sm:$0xff]
    %v5709 = vld [vmem:[%s5699 + $0x68] sm:$0xff]
    %v5710 = vld [vmem:[%s5699 + $0x78] sm:$0xff]
    %v5711 = vld [vmem:[%s5699 + $0x80] sm:$0xff]
    %v5712 = vld [vmem:[%s5699 + $0x90] sm:$0xff]
    %v5713 = vld [vmem:[%s5699 + $0x98] sm:$0xff]
    %v5714 = vld [vmem:[%s5699 + $0xa8] sm:$0xff]
    %v5715 = vld [vmem:[%s5699 + $0xb0] sm:$0xff]
    %v5716 = vld [vmem:[%s5699 + $0xc0] sm:$0xff]
    %v5717 = vld [vmem:[%s5699 + $0xc8] sm:$0xff]
    %v5718 = vld [vmem:[%s5699 + $0xd8] sm:$0xff]
    %v5719 = vld [vmem:[%s5699 + $0xe0] sm:$0xff]
    %v5720 = vld [vmem:[%s5699 + $0xf0] sm:$0xff]
    %v5721 = vld [vmem:[%s5699 + $0xf8] sm:$0xff]
    %v5722 = vld [vmem:[%s5699 + $0x108] sm:$0xff]
    %v5723 = vld [vmem:[%s5699 + $0x110] sm:$0xff]
    %v5724 = vld [vmem:[%s5699 + $0x120] sm:$0xff]
    %v5725 = vld [vmem:[%s5699 + $0x128] sm:$0xff]
    %v5726 = vld [vmem:[%s5699 + $0x138] sm:$0xff]
    %v5727 = vld [vmem:[%s5699 + $0x140] sm:$0xff]
    %v5728 = vld [vmem:[%s5699 + $0x150] sm:$0xff]
    %v5729 = vld [vmem:[%s5699 + $0x158] sm:$0xff]
    %v5730 = vld [vmem:[%s5699 + $0x168] sm:$0xff]
    %v5731 = vld [vmem:[%s5699 + $0x170] sm:$0xff]
    %v5732 = vld [vmem:[%s5699 + $0x1b0] sm:$0xff]
    %v5733 = vld [vmem:[%s5699 + $0x1b8] sm:$0xff]
    %v5734 = vld [vmem:[%s5699 + $0x1c8] sm:$0xff]
    %v5735 = vld [vmem:[%s5699 + $0x1d0] sm:$0xff]
    %v5736 = vld [vmem:[%s5699 + $0x1e0] sm:$0xff]
    %v5737 = vld [vmem:[%s5699 + $0x1e8] sm:$0xff]
    %v5738 = vld [vmem:[%s5699 + $0x1f8] sm:$0xff]
    %v5739 = vld [vmem:[%s5699 + $0x200] sm:$0xff]
    %v5740 = vld [vmem:[%s5699 + $0x210] sm:$0xff]
    %v5741 = vld [vmem:[%s5699 + $0x218] sm:$0xff]
    %v5742 = vld [vmem:[%s5699 + $0x228] sm:$0xff]
    %v5743 = vld [vmem:[%s5699 + $0x230] sm:$0xff]
    %v5744 = vld [vmem:[%s5699 + $0x240] sm:$0xff]
    %v5745 = vld [vmem:[%s5699 + $0x248] sm:$0xff]
    %v5746 = vld [vmem:[%s5699 + $0x258] sm:$0xff]
    %v5747 = vld [vmem:[%s5699 + $0x260] sm:$0xff]
    %v5748 = vld [vmem:[%s5699 + $0x270] sm:$0xff]
    %v5749 = vld [vmem:[%s5699 + $0x278] sm:$0xff]
    %v5750 = vld [vmem:[%s5699 + $0x288] sm:$0xff]
    %v5751 = vld [vmem:[%s5699 + $0x290] sm:$0xff]
    %v5752 = vld [vmem:[%s5699 + $0x2a0] sm:$0xff]
    %v5753 = vld [vmem:[%s5699 + $0x2a8] sm:$0xff]
    %v5754 = vld [vmem:[%s5699 + $0x2b8] sm:$0xff]
    %v5755 = vld [vmem:[%s5699 + $0x2c0] sm:$0xff]
    %v5756 = vld [vmem:[%s5699 + $0x2d0] sm:$0xff]
    %v5757 = vld [vmem:[%s5699 + $0x2d8] sm:$0xff]
    %v5758 = vld [vmem:[%s5699 + $0x2e8] sm:$0xff]
    %v5759 = vld [vmem:[%s5699 + $0x2f0] sm:$0xff]
    %v5760 = vld [vmem:[%s5699 + $0x300] sm:$0xff]
    %v5761 = vld [vmem:[%s5699 + $0x308] sm:$0xff]
    %v5762 = vld [vmem:[%s5699 + $0x318] sm:$0xff]
    %v5763 = vld [vmem:[%s5699 + $0x320] sm:$0xff]
    %v5764 = vld [vmem:[%s5699 + $0x1] sm:$0xff]
    %v5765 = vld [vmem:[%s5699 + $0x9] sm:$0xff]
    %v5766 = vld [vmem:[%s5699 + $0x19] sm:$0xff]
    %v5767 = vld [vmem:[%s5699 + $0x21] sm:$0xff]
    %v5768 = vld [vmem:[%s5699 + $0x31] sm:$0xff]
    %v5769 = vld [vmem:[%s5699 + $0x39] sm:$0xff]
    %v5770 = vld [vmem:[%s5699 + $0x49] sm:$0xff]
    %v5771 = vld [vmem:[%s5699 + $0x51] sm:$0xff]
    %v5772 = vld [vmem:[%s5699 + $0x61] sm:$0xff]
    %v5773 = vld [vmem:[%s5699 + $0x69] sm:$0xff]
    %v5774 = vld [vmem:[%s5699 + $0x79] sm:$0xff]
    %v5775 = vld [vmem:[%s5699 + $0x81] sm:$0xff]
    %v5776 = vld [vmem:[%s5699 + $0x91] sm:$0xff]
    %v5777 = vld [vmem:[%s5699 + $0x99] sm:$0xff]
    %v5778 = vld [vmem:[%s5699 + $0xa9] sm:$0xff]
    %v5779 = vld [vmem:[%s5699 + $0xb1] sm:$0xff]
    %v5780 = vld [vmem:[%s5699 + $0xc1] sm:$0xff]
    %v5781 = vld [vmem:[%s5699 + $0xc9] sm:$0xff]
    %v5782 = vld [vmem:[%s5699 + $0xd9] sm:$0xff]
    %v5783 = vld [vmem:[%s5699 + $0xe1] sm:$0xff]
    %v5784 = vld [vmem:[%s5699 + $0xf1] sm:$0xff]
    %v5785 = vld [vmem:[%s5699 + $0xf9] sm:$0xff]
    %v5786 = vld [vmem:[%s5699 + $0x109] sm:$0xff]
    %v5787 = vld [vmem:[%s5699 + $0x111] sm:$0xff]
    %v5788 = vld [vmem:[%s5699 + $0x121] sm:$0xff]
    %v5789 = vld [vmem:[%s5699 + $0x129] sm:$0xff]
    %v5790 = vld [vmem:[%s5699 + $0x139] sm:$0xff]
    %v5791 = vld [vmem:[%s5699 + $0x141] sm:$0xff]
    %v5792 = vld [vmem:[%s5699 + $0x151] sm:$0xff]
    %v5793 = vld [vmem:[%s5699 + $0x159] sm:$0xff]
    %v5794 = vld [vmem:[%s5699 + $0x169] sm:$0xff]
    %v5795 = vld [vmem:[%s5699 + $0x171] sm:$0xff]
    %v5796 = vld [vmem:[%s5699 + $0x1b1] sm:$0xff]
    %v5797 = vld [vmem:[%s5699 + $0x1b9] sm:$0xff]
    %v5798 = vld [vmem:[%s5699 + $0x1c9] sm:$0xff]
    %v5799 = vld [vmem:[%s5699 + $0x1d1] sm:$0xff]
    %v5800 = vld [vmem:[%s5699 + $0x1e1] sm:$0xff]
    %v5801 = vld [vmem:[%s5699 + $0x1e9] sm:$0xff]
    %v5802 = vld [vmem:[%s5699 + $0x1f9] sm:$0xff]
    %v5803 = vld [vmem:[%s5699 + $0x201] sm:$0xff]
    %v5804 = vld [vmem:[%s5699 + $0x211] sm:$0xff]
    %v5805 = vld [vmem:[%s5699 + $0x219] sm:$0xff]
    %v5806 = vld [vmem:[%s5699 + $0x229] sm:$0xff]
    %v5807 = vld [vmem:[%s5699 + $0x231] sm:$0xff]
    %v5808 = vld [vmem:[%s5699 + $0x241] sm:$0xff]
    %v5809 = vld [vmem:[%s5699 + $0x249] sm:$0xff]
    %v5810 = vld [vmem:[%s5699 + $0x259] sm:$0xff]
    %v5811 = vld [vmem:[%s5699 + $0x261] sm:$0xff]
    %v5812 = vld [vmem:[%s5699 + $0x271] sm:$0xff]
    %v5813 = vld [vmem:[%s5699 + $0x279] sm:$0xff]
    %v5814 = vld [vmem:[%s5699 + $0x289] sm:$0xff]
    %v5815 = vld [vmem:[%s5699 + $0x291] sm:$0xff]
    %v5816 = vld [vmem:[%s5699 + $0x2a1] sm:$0xff]
    %v5817 = vld [vmem:[%s5699 + $0x2a9] sm:$0xff]
    %v5818 = vld [vmem:[%s5699 + $0x2b9] sm:$0xff]
    %v5819 = vld [vmem:[%s5699 + $0x2c1] sm:$0xff]
    %v5820 = vld [vmem:[%s5699 + $0x2d1] sm:$0xff]
    %v5821 = vld [vmem:[%s5699 + $0x2d9] sm:$0xff]
    %v5822 = vld [vmem:[%s5699 + $0x2e9] sm:$0xff]
    %v5823 = vld [vmem:[%s5699 + $0x2f1] sm:$0xff]
    %v5824 = vld [vmem:[%s5699 + $0x301] sm:$0xff]
    %v5825 = vld [vmem:[%s5699 + $0x309] sm:$0xff]
    %v5826 = vld [vmem:[%s5699 + $0x319] sm:$0xff]
    %v5827 = vld [vmem:[%s5699 + $0x321] sm:$0xff]
    %v5828 = vld [vmem:[%s5699 + $0x2] sm:$0xff]
    %v5829 = vld [vmem:[%s5699 + $0xa] sm:$0xff]
    %v5830 = vld [vmem:[%s5699 + $0x1a] sm:$0xff]
    %v5831 = vld [vmem:[%s5699 + $0x22] sm:$0xff]
    %v5832 = vld [vmem:[%s5699 + $0x32] sm:$0xff]
    %v5833 = vld [vmem:[%s5699 + $0x3a] sm:$0xff]
    %v5834 = vld [vmem:[%s5699 + $0x4a] sm:$0xff]
    %v5835 = vld [vmem:[%s5699 + $0x52] sm:$0xff]
    %v5836 = vld [vmem:[%s5699 + $0x62] sm:$0xff]
    %v5837 = vld [vmem:[%s5699 + $0x6a] sm:$0xff]
    %v5838 = vld [vmem:[%s5699 + $0x7a] sm:$0xff]
    %v5839 = vld [vmem:[%s5699 + $0x82] sm:$0xff]
    %v5840 = vld [vmem:[%s5699 + $0x92] sm:$0xff]
    %v5841 = vld [vmem:[%s5699 + $0x9a] sm:$0xff]
    %v5842 = vld [vmem:[%s5699 + $0xaa] sm:$0xff]
    %v5843 = vld [vmem:[%s5699 + $0xb2] sm:$0xff]
    %v5844 = vld [vmem:[%s5699 + $0xc2] sm:$0xff]
    %v5845 = vld [vmem:[%s5699 + $0xca] sm:$0xff]
    %v5846 = vld [vmem:[%s5699 + $0xda] sm:$0xff]
    %v5847 = vld [vmem:[%s5699 + $0xe2] sm:$0xff]
    %v5848 = vld [vmem:[%s5699 + $0xf2] sm:$0xff]
    %v5849 = vld [vmem:[%s5699 + $0xfa] sm:$0xff]
    %v5850 = vld [vmem:[%s5699 + $0x10a] sm:$0xff]
    %v5851 = vld [vmem:[%s5699 + $0x112] sm:$0xff]
    %v5852 = vld [vmem:[%s5699 + $0x122] sm:$0xff]
    %v5853 = vld [vmem:[%s5699 + $0x12a] sm:$0xff]
    %v5854 = vld [vmem:[%s5699 + $0x13a] sm:$0xff]
    %v5855 = vld [vmem:[%s5699 + $0x142] sm:$0xff]
    %v5856 = vld [vmem:[%s5699 + $0x152] sm:$0xff]
    %v5857 = vld [vmem:[%s5699 + $0x15a] sm:$0xff]
    %v5858 = vld [vmem:[%s5699 + $0x16a] sm:$0xff]
    %v5859 = vld [vmem:[%s5699 + $0x172] sm:$0xff]
    %v5860 = vld [vmem:[%s5699 + $0x1b2] sm:$0xff]
    %v5861 = vld [vmem:[%s5699 + $0x1ba] sm:$0xff]
    %v5862 = vld [vmem:[%s5699 + $0x1ca] sm:$0xff]
    %v5863 = vld [vmem:[%s5699 + $0x1d2] sm:$0xff]
    %v5864 = vld [vmem:[%s5699 + $0x1e2] sm:$0xff]
    %v5865 = vld [vmem:[%s5699 + $0x1ea] sm:$0xff]
    %v5866 = vld [vmem:[%s5699 + $0x1fa] sm:$0xff]
    %v5867 = vld [vmem:[%s5699 + $0x202] sm:$0xff]
    %v5868 = vld [vmem:[%s5699 + $0x212] sm:$0xff]
    %v5869 = vld [vmem:[%s5699 + $0x21a] sm:$0xff]
    %v5870 = vld [vmem:[%s5699 + $0x22a] sm:$0xff]
    %v5871 = vld [vmem:[%s5699 + $0x232] sm:$0xff]
    %v5872 = vld [vmem:[%s5699 + $0x242] sm:$0xff]
    %v5873 = vld [vmem:[%s5699 + $0x24a] sm:$0xff]
    %v5874 = vld [vmem:[%s5699 + $0x25a] sm:$0xff]
    %v5875 = vld [vmem:[%s5699 + $0x262] sm:$0xff]
    %v5876 = vld [vmem:[%s5699 + $0x272] sm:$0xff]
    %v5877 = vld [vmem:[%s5699 + $0x27a] sm:$0xff]
    %v5878 = vld [vmem:[%s5699 + $0x28a] sm:$0xff]
    %v5879 = vld [vmem:[%s5699 + $0x292] sm:$0xff]
    %v5880 = vld [vmem:[%s5699 + $0x2a2] sm:$0xff]
    %v5881 = vld [vmem:[%s5699 + $0x2aa] sm:$0xff]
    %v5882 = vld [vmem:[%s5699 + $0x2ba] sm:$0xff]
    %v5883 = vld [vmem:[%s5699 + $0x2c2] sm:$0xff]
    %v5884 = vld [vmem:[%s5699 + $0x2d2] sm:$0xff]
    %v5885 = vld [vmem:[%s5699 + $0x2da] sm:$0xff]
    %v5886 = vld [vmem:[%s5699 + $0x2ea] sm:$0xff]
    %v5887 = vld [vmem:[%s5699 + $0x2f2] sm:$0xff]
    %v5888 = vld [vmem:[%s5699 + $0x302] sm:$0xff]
    %v5889 = vld [vmem:[%s5699 + $0x30a] sm:$0xff]
    %v5890 = vld [vmem:[%s5699 + $0x31a] sm:$0xff]
    %v5891 = vld [vmem:[%s5699 + $0x322] sm:$0xff]
    %5956 = vrot.lane.b32.xlu0 %v5379, 32
    %v5957 = vpop.permute.xlu0 %5956
    %5958 = vrot.lane.b32.xlu0 %v5380, 32
    %v5959 = vpop.permute.xlu0 %5958
    %5960 = vrot.lane.b32.xlu0 %v5381, 32
    %v5961 = vpop.permute.xlu0 %5960
    %5962 = vrot.lane.b32.xlu0 %v5382, 32
    %v5963 = vpop.permute.xlu0 %5962
    %5964 = vrot.lane.b32.xlu0 %v5383, 32
    %v5965 = vpop.permute.xlu0 %5964
    %5966 = vrot.lane.b32.xlu0 %v5384, 32
    %v5967 = vpop.permute.xlu0 %5966
    %5968 = vrot.lane.b32.xlu0 %v5385, 32
    %v5969 = vpop.permute.xlu0 %5968
    %5970 = vrot.lane.b32.xlu0 %v5386, 32
    %v5971 = vpop.permute.xlu0 %5970
    %5972 = vrot.lane.b32.xlu0 %v5387, 32
    %v5973 = vpop.permute.xlu0 %5972
    %5974 = vrot.lane.b32.xlu0 %v5388, 32
    %v5975 = vpop.permute.xlu0 %5974
    %5976 = vrot.lane.b32.xlu0 %v5389, 32
    %v5977 = vpop.permute.xlu0 %5976
    %5978 = vrot.lane.b32.xlu0 %v5390, 32
    %v5979 = vpop.permute.xlu0 %5978
    %5980 = vrot.lane.b32.xlu0 %v5391, 32
    %v5981 = vpop.permute.xlu0 %5980
    %5982 = vrot.lane.b32.xlu0 %v5392, 32
    %v5983 = vpop.permute.xlu0 %5982
    %5984 = vrot.lane.b32.xlu0 %v5393, 32
    %v5985 = vpop.permute.xlu0 %5984
    %5986 = vrot.lane.b32.xlu0 %v5394, 32
    %v5987 = vpop.permute.xlu0 %5986
    %5988 = vrot.lane.b32.xlu0 %v5395, 32
    %v5989 = vpop.permute.xlu0 %5988
    %5990 = vrot.lane.b32.xlu0 %v5396, 32
    %v5991 = vpop.permute.xlu0 %5990
    %5992 = vrot.lane.b32.xlu0 %v5397, 32
    %v5993 = vpop.permute.xlu0 %5992
    %5994 = vrot.lane.b32.xlu0 %v5398, 32
    %v5995 = vpop.permute.xlu0 %5994
    %5996 = vrot.lane.b32.xlu0 %v5399, 32
    %v5997 = vpop.permute.xlu0 %5996
    %5998 = vrot.lane.b32.xlu0 %v5400, 32
    %v5999 = vpop.permute.xlu0 %5998
    %6000 = vrot.lane.b32.xlu0 %v5401, 32
    %v6001 = vpop.permute.xlu0 %6000
    %6002 = vrot.lane.b32.xlu0 %v5402, 32
    %v6003 = vpop.permute.xlu0 %6002
    %6004 = vrot.lane.b32.xlu0 %v5403, 32
    %v6005 = vpop.permute.xlu0 %6004
    %6006 = vrot.lane.b32.xlu0 %v5404, 32
    %v6007 = vpop.permute.xlu0 %6006
    %6008 = vrot.lane.b32.xlu0 %v5405, 32
    %v6009 = vpop.permute.xlu0 %6008
    %6010 = vrot.lane.b32.xlu0 %v5406, 32
    %v6011 = vpop.permute.xlu0 %6010
    %6012 = vrot.lane.b32.xlu0 %v5407, 32
    %v6013 = vpop.permute.xlu0 %6012
    %6014 = vrot.lane.b32.xlu0 %v5408, 32
    %v6015 = vpop.permute.xlu0 %6014
    %6016 = vrot.lane.b32.xlu0 %v5409, 32
    %v6017 = vpop.permute.xlu0 %6016
    %6018 = vrot.lane.b32.xlu0 %v5410, 32
    %v6019 = vpop.permute.xlu0 %6018
    %6020 = vrot.lane.b32.xlu0 %v5411, 32
    %v6021 = vpop.permute.xlu0 %6020
    %6022 = vrot.lane.b32.xlu0 %v5412, 32
    %v6023 = vpop.permute.xlu0 %6022
    %6024 = vrot.lane.b32.xlu0 %v5413, 32
    %v6025 = vpop.permute.xlu0 %6024
    %6026 = vrot.lane.b32.xlu0 %v5414, 32
    %v6027 = vpop.permute.xlu0 %6026
    %6028 = vrot.lane.b32.xlu0 %v5415, 32
    %v6029 = vpop.permute.xlu0 %6028
    %6030 = vrot.lane.b32.xlu0 %v5416, 32
    %v6031 = vpop.permute.xlu0 %6030
    %6032 = vrot.lane.b32.xlu0 %v5417, 32
    %v6033 = vpop.permute.xlu0 %6032
    %6034 = vrot.lane.b32.xlu0 %v5418, 32
    %v6035 = vpop.permute.xlu0 %6034
    %6036 = vrot.lane.b32.xlu0 %v5419, 32
    %v6037 = vpop.permute.xlu0 %6036
    %6038 = vrot.lane.b32.xlu0 %v5420, 32
    %v6039 = vpop.permute.xlu0 %6038
    %6040 = vrot.lane.b32.xlu0 %v5421, 32
    %v6041 = vpop.permute.xlu0 %6040
    %6042 = vrot.lane.b32.xlu0 %v5422, 32
    %v6043 = vpop.permute.xlu0 %6042
    %6044 = vrot.lane.b32.xlu0 %v5423, 32
    %v6045 = vpop.permute.xlu0 %6044
    %6046 = vrot.lane.b32.xlu0 %v5424, 32
    %v6047 = vpop.permute.xlu0 %6046
    %6048 = vrot.lane.b32.xlu0 %v5425, 32
    %v6049 = vpop.permute.xlu0 %6048
    %6050 = vrot.lane.b32.xlu0 %v5426, 32
    %v6051 = vpop.permute.xlu0 %6050
    %6052 = vrot.lane.b32.xlu0 %v5427, 32
    %v6053 = vpop.permute.xlu0 %6052
    %6054 = vrot.lane.b32.xlu0 %v5428, 32
    %v6055 = vpop.permute.xlu0 %6054
    %6056 = vrot.lane.b32.xlu0 %v5429, 32
    %v6057 = vpop.permute.xlu0 %6056
    %6058 = vrot.lane.b32.xlu0 %v5430, 32
    %v6059 = vpop.permute.xlu0 %6058
    %6060 = vrot.lane.b32.xlu0 %v5431, 32
    %v6061 = vpop.permute.xlu0 %6060
    %6062 = vrot.lane.b32.xlu0 %v5432, 32
    %v6063 = vpop.permute.xlu0 %6062
    %6064 = vrot.lane.b32.xlu0 %v5433, 32
    %v6065 = vpop.permute.xlu0 %6064
    %6066 = vrot.lane.b32.xlu0 %v5434, 32
    %v6067 = vpop.permute.xlu0 %6066
    %6068 = vrot.lane.b32.xlu0 %v5435, 32
    %v6069 = vpop.permute.xlu0 %6068
    %6070 = vrot.lane.b32.xlu0 %v5436, 32
    %v6071 = vpop.permute.xlu0 %6070
    %6072 = vrot.lane.b32.xlu0 %v5437, 32
    %v6073 = vpop.permute.xlu0 %6072
    %6074 = vrot.lane.b32.xlu0 %v5438, 32
    %v6075 = vpop.permute.xlu0 %6074
    %6076 = vrot.lane.b32.xlu0 %v5439, 32
    %v6077 = vpop.permute.xlu0 %6076
    %6078 = vrot.lane.b32.xlu0 %v5440, 32
    %v6079 = vpop.permute.xlu0 %6078
    %6080 = vrot.lane.b32.xlu0 %v5441, 32
    %v6081 = vpop.permute.xlu0 %6080
    %6082 = vrot.lane.b32.xlu0 %v5442, 32
    %v6083 = vpop.permute.xlu0 %6082
    %6212 = vrot.lane.b32.xlu0 %v5443, 64
    %v6213 = vpop.permute.xlu0 %6212
    %6214 = vrot.lane.b32.xlu0 %v5444, 64
    %v6215 = vpop.permute.xlu0 %6214
    %6216 = vrot.lane.b32.xlu0 %v5445, 64
    %v6217 = vpop.permute.xlu0 %6216
    %6218 = vrot.lane.b32.xlu0 %v5446, 64
    %v6219 = vpop.permute.xlu0 %6218
    %6220 = vrot.lane.b32.xlu0 %v5447, 64
    %v6221 = vpop.permute.xlu0 %6220
    %6222 = vrot.lane.b32.xlu0 %v5448, 64
    %v6223 = vpop.permute.xlu0 %6222
    %6224 = vrot.lane.b32.xlu0 %v5449, 64
    %v6225 = vpop.permute.xlu0 %6224
    %6226 = vrot.lane.b32.xlu0 %v5450, 64
    %v6227 = vpop.permute.xlu0 %6226
    %6228 = vrot.lane.b32.xlu0 %v5451, 64
    %v6229 = vpop.permute.xlu0 %6228
    %6230 = vrot.lane.b32.xlu0 %v5452, 64
    %v6231 = vpop.permute.xlu0 %6230
    %6232 = vrot.lane.b32.xlu0 %v5453, 64
    %v6233 = vpop.permute.xlu0 %6232
    %6234 = vrot.lane.b32.xlu0 %v5454, 64
    %v6235 = vpop.permute.xlu0 %6234
    %6236 = vrot.lane.b32.xlu0 %v5455, 64
    %v6237 = vpop.permute.xlu0 %6236
    %6238 = vrot.lane.b32.xlu0 %v5456, 64
    %v6239 = vpop.permute.xlu0 %6238
    %6240 = vrot.lane.b32.xlu0 %v5457, 64
    %v6241 = vpop.permute.xlu0 %6240
    %6242 = vrot.lane.b32.xlu0 %v5458, 64
    %v6243 = vpop.permute.xlu0 %6242
    %6244 = vrot.lane.b32.xlu0 %v5459, 64
    %v6245 = vpop.permute.xlu0 %6244
    %6246 = vrot.lane.b32.xlu0 %v5460, 64
    %v6247 = vpop.permute.xlu0 %6246
    %6248 = vrot.lane.b32.xlu0 %v5461, 64
    %v6249 = vpop.permute.xlu0 %6248
    %6250 = vrot.lane.b32.xlu0 %v5462, 64
    %v6251 = vpop.permute.xlu0 %6250
    %6252 = vrot.lane.b32.xlu0 %v5463, 64
    %v6253 = vpop.permute.xlu0 %6252
    %6254 = vrot.lane.b32.xlu0 %v5464, 64
    %v6255 = vpop.permute.xlu0 %6254
    %6256 = vrot.lane.b32.xlu0 %v5465, 64
    %v6257 = vpop.permute.xlu0 %6256
    %6258 = vrot.lane.b32.xlu0 %v5466, 64
    %v6259 = vpop.permute.xlu0 %6258
    %6260 = vrot.lane.b32.xlu0 %v5467, 64
    %v6261 = vpop.permute.xlu0 %6260
    %6262 = vrot.lane.b32.xlu0 %v5468, 64
    %v6263 = vpop.permute.xlu0 %6262
    %6264 = vrot.lane.b32.xlu0 %v5469, 64
    %v6265 = vpop.permute.xlu0 %6264
    %6266 = vrot.lane.b32.xlu0 %v5470, 64
    %v6267 = vpop.permute.xlu0 %6266
    %6268 = vrot.lane.b32.xlu0 %v5471, 64
    %v6269 = vpop.permute.xlu0 %6268
    %6270 = vrot.lane.b32.xlu0 %v5472, 64
    %v6271 = vpop.permute.xlu0 %6270
    %6272 = vrot.lane.b32.xlu0 %v5473, 64
    %v6273 = vpop.permute.xlu0 %6272
    %6274 = vrot.lane.b32.xlu0 %v5474, 64
    %v6275 = vpop.permute.xlu0 %6274
    %6276 = vrot.lane.b32.xlu0 %v5475, 64
    %v6277 = vpop.permute.xlu0 %6276
    %6278 = vrot.lane.b32.xlu0 %v5476, 64
    %v6279 = vpop.permute.xlu0 %6278
    %6280 = vrot.lane.b32.xlu0 %v5477, 64
    %v6281 = vpop.permute.xlu0 %6280
    %6282 = vrot.lane.b32.xlu0 %v5478, 64
    %v6283 = vpop.permute.xlu0 %6282
    %6284 = vrot.lane.b32.xlu0 %v5479, 64
    %v6285 = vpop.permute.xlu0 %6284
    %6286 = vrot.lane.b32.xlu0 %v5480, 64
    %v6287 = vpop.permute.xlu0 %6286
    %6288 = vrot.lane.b32.xlu0 %v5481, 64
    %v6289 = vpop.permute.xlu0 %6288
    %6290 = vrot.lane.b32.xlu0 %v5482, 64
    %v6291 = vpop.permute.xlu0 %6290
    %6292 = vrot.lane.b32.xlu0 %v5483, 64
    %v6293 = vpop.permute.xlu0 %6292
    %6294 = vrot.lane.b32.xlu0 %v5484, 64
    %v6295 = vpop.permute.xlu0 %6294
    %6296 = vrot.lane.b32.xlu0 %v5485, 64
    %v6297 = vpop.permute.xlu0 %6296
    %6298 = vrot.lane.b32.xlu0 %v5486, 64
    %v6299 = vpop.permute.xlu0 %6298
    %6300 = vrot.lane.b32.xlu0 %v5487, 64
    %v6301 = vpop.permute.xlu0 %6300
    %6302 = vrot.lane.b32.xlu0 %v5488, 64
    %v6303 = vpop.permute.xlu0 %6302
    %6304 = vrot.lane.b32.xlu0 %v5489, 64
    %v6305 = vpop.permute.xlu0 %6304
    %6306 = vrot.lane.b32.xlu0 %v5490, 64
    %v6307 = vpop.permute.xlu0 %6306
    %6308 = vrot.lane.b32.xlu0 %v5491, 64
    %v6309 = vpop.permute.xlu0 %6308
    %6310 = vrot.lane.b32.xlu0 %v5492, 64
    %v6311 = vpop.permute.xlu0 %6310
    %6312 = vrot.lane.b32.xlu0 %v5493, 64
    %v6313 = vpop.permute.xlu0 %6312
    %6314 = vrot.lane.b32.xlu0 %v5494, 64
    %v6315 = vpop.permute.xlu0 %6314
    %6316 = vrot.lane.b32.xlu0 %v5495, 64
    %v6317 = vpop.permute.xlu0 %6316
    %6318 = vrot.lane.b32.xlu0 %v5496, 64
    %v6319 = vpop.permute.xlu0 %6318
    %6320 = vrot.lane.b32.xlu0 %v5497, 64
    %v6321 = vpop.permute.xlu0 %6320
    %6322 = vrot.lane.b32.xlu0 %v5498, 64
    %v6323 = vpop.permute.xlu0 %6322
    %6324 = vrot.lane.b32.xlu0 %v5499, 64
    %v6325 = vpop.permute.xlu0 %6324
    %6326 = vrot.lane.b32.xlu0 %v5500, 64
    %v6327 = vpop.permute.xlu0 %6326
    %6328 = vrot.lane.b32.xlu0 %v5501, 64
    %v6329 = vpop.permute.xlu0 %6328
    %6330 = vrot.lane.b32.xlu0 %v5502, 64
    %v6331 = vpop.permute.xlu0 %6330
    %6332 = vrot.lane.b32.xlu0 %v5503, 64
    %v6333 = vpop.permute.xlu0 %6332
    %6334 = vrot.lane.b32.xlu0 %v5504, 64
    %v6335 = vpop.permute.xlu0 %6334
    %6336 = vrot.lane.b32.xlu0 %v5505, 64
    %v6337 = vpop.permute.xlu0 %6336
    %6338 = vrot.lane.b32.xlu0 %v5506, 64
    %v6339 = vpop.permute.xlu0 %6338
    %6468 = vrot.lane.b32.xlu0 %v5507, 96
    %v6469 = vpop.permute.xlu0 %6468
    %6470 = vrot.lane.b32.xlu0 %v5508, 96
    %v6471 = vpop.permute.xlu0 %6470
    %6472 = vrot.lane.b32.xlu0 %v5509, 96
    %v6473 = vpop.permute.xlu0 %6472
    %6474 = vrot.lane.b32.xlu0 %v5510, 96
    %v6475 = vpop.permute.xlu0 %6474
    %6476 = vrot.lane.b32.xlu0 %v5511, 96
    %v6477 = vpop.permute.xlu0 %6476
    %6478 = vrot.lane.b32.xlu0 %v5512, 96
    %v6479 = vpop.permute.xlu0 %6478
    %6480 = vrot.lane.b32.xlu0 %v5513, 96
    %v6481 = vpop.permute.xlu0 %6480
    %6482 = vrot.lane.b32.xlu0 %v5514, 96
    %v6483 = vpop.permute.xlu0 %6482
    %6484 = vrot.lane.b32.xlu0 %v5515, 96
    %v6485 = vpop.permute.xlu0 %6484
    %6486 = vrot.lane.b32.xlu0 %v5516, 96
    %v6487 = vpop.permute.xlu0 %6486
    %6488 = vrot.lane.b32.xlu0 %v5517, 96
    %v6489 = vpop.permute.xlu0 %6488
    %6490 = vrot.lane.b32.xlu0 %v5518, 96
    %v6491 = vpop.permute.xlu0 %6490
    %6492 = vrot.lane.b32.xlu0 %v5519, 96
    %v6493 = vpop.permute.xlu0 %6492
    %6494 = vrot.lane.b32.xlu0 %v5520, 96
    %v6495 = vpop.permute.xlu0 %6494
    %6496 = vrot.lane.b32.xlu0 %v5521, 96
    %v6497 = vpop.permute.xlu0 %6496
    %6498 = vrot.lane.b32.xlu0 %v5522, 96
    %v6499 = vpop.permute.xlu0 %6498
    %6500 = vrot.lane.b32.xlu0 %v5523, 96
    %v6501 = vpop.permute.xlu0 %6500
    %6502 = vrot.lane.b32.xlu0 %v5524, 96
    %v6503 = vpop.permute.xlu0 %6502
    %6504 = vrot.lane.b32.xlu0 %v5525, 96
    %v6505 = vpop.permute.xlu0 %6504
    %6506 = vrot.lane.b32.xlu0 %v5526, 96
    %v6507 = vpop.permute.xlu0 %6506
    %6508 = vrot.lane.b32.xlu0 %v5527, 96
    %v6509 = vpop.permute.xlu0 %6508
    %6510 = vrot.lane.b32.xlu0 %v5528, 96
    %v6511 = vpop.permute.xlu0 %6510
    %6512 = vrot.lane.b32.xlu0 %v5529, 96
    %v6513 = vpop.permute.xlu0 %6512
    %6514 = vrot.lane.b32.xlu0 %v5530, 96
    %v6515 = vpop.permute.xlu0 %6514
    %6516 = vrot.lane.b32.xlu0 %v5531, 96
    %v6517 = vpop.permute.xlu0 %6516
    %6518 = vrot.lane.b32.xlu0 %v5532, 96
    %v6519 = vpop.permute.xlu0 %6518
    %6520 = vrot.lane.b32.xlu0 %v5533, 96
    %v6521 = vpop.permute.xlu0 %6520
    %6522 = vrot.lane.b32.xlu0 %v5534, 96
    %v6523 = vpop.permute.xlu0 %6522
    %6524 = vrot.lane.b32.xlu0 %v5535, 96
    %v6525 = vpop.permute.xlu0 %6524
    %6526 = vrot.lane.b32.xlu0 %v5536, 96
    %v6527 = vpop.permute.xlu0 %6526
    %6528 = vrot.lane.b32.xlu0 %v5537, 96
    %v6529 = vpop.permute.xlu0 %6528
    %6530 = vrot.lane.b32.xlu0 %v5538, 96
    %v6531 = vpop.permute.xlu0 %6530
    %6532 = vrot.lane.b32.xlu0 %v5539, 96
    %v6533 = vpop.permute.xlu0 %6532
    %6534 = vrot.lane.b32.xlu0 %v5540, 96
    %v6535 = vpop.permute.xlu0 %6534
    %6536 = vrot.lane.b32.xlu0 %v5541, 96
    %v6537 = vpop.permute.xlu0 %6536
    %6538 = vrot.lane.b32.xlu0 %v5542, 96
    %v6539 = vpop.permute.xlu0 %6538
    %6540 = vrot.lane.b32.xlu0 %v5543, 96
    %v6541 = vpop.permute.xlu0 %6540
    %6542 = vrot.lane.b32.xlu0 %v5544, 96
    %v6543 = vpop.permute.xlu0 %6542
    %6544 = vrot.lane.b32.xlu0 %v5545, 96
    %v6545 = vpop.permute.xlu0 %6544
    %6546 = vrot.lane.b32.xlu0 %v5546, 96
    %v6547 = vpop.permute.xlu0 %6546
    %6548 = vrot.lane.b32.xlu0 %v5547, 96
    %v6549 = vpop.permute.xlu0 %6548
    %6550 = vrot.lane.b32.xlu0 %v5548, 96
    %v6551 = vpop.permute.xlu0 %6550
    %6552 = vrot.lane.b32.xlu0 %v5549, 96
    %v6553 = vpop.permute.xlu0 %6552
    %6554 = vrot.lane.b32.xlu0 %v5550, 96
    %v6555 = vpop.permute.xlu0 %6554
    %6556 = vrot.lane.b32.xlu0 %v5551, 96
    %v6557 = vpop.permute.xlu0 %6556
    %6558 = vrot.lane.b32.xlu0 %v5552, 96
    %v6559 = vpop.permute.xlu0 %6558
    %6560 = vrot.lane.b32.xlu0 %v5553, 96
    %v6561 = vpop.permute.xlu0 %6560
    %6562 = vrot.lane.b32.xlu0 %v5554, 96
    %v6563 = vpop.permute.xlu0 %6562
    %6564 = vrot.lane.b32.xlu0 %v5555, 96
    %v6565 = vpop.permute.xlu0 %6564
    %6566 = vrot.lane.b32.xlu0 %v5556, 96
    %v6567 = vpop.permute.xlu0 %6566
    %6568 = vrot.lane.b32.xlu0 %v5557, 96
    %v6569 = vpop.permute.xlu0 %6568
    %6570 = vrot.lane.b32.xlu0 %v5558, 96
    %v6571 = vpop.permute.xlu0 %6570
    %6572 = vrot.lane.b32.xlu0 %v5559, 96
    %v6573 = vpop.permute.xlu0 %6572
    %6574 = vrot.lane.b32.xlu0 %v5560, 96
    %v6575 = vpop.permute.xlu0 %6574
    %6576 = vrot.lane.b32.xlu0 %v5561, 96
    %v6577 = vpop.permute.xlu0 %6576
    %6578 = vrot.lane.b32.xlu0 %v5562, 96
    %v6579 = vpop.permute.xlu0 %6578
    %6580 = vrot.lane.b32.xlu0 %v5563, 96
    %v6581 = vpop.permute.xlu0 %6580
    %6582 = vrot.lane.b32.xlu0 %v5564, 96
    %v6583 = vpop.permute.xlu0 %6582
    %6584 = vrot.lane.b32.xlu0 %v5565, 96
    %v6585 = vpop.permute.xlu0 %6584
    %6586 = vrot.lane.b32.xlu0 %v5566, 96
    %v6587 = vpop.permute.xlu0 %6586
    %6588 = vrot.lane.b32.xlu0 %v5567, 96
    %v6589 = vpop.permute.xlu0 %6588
    %6590 = vrot.lane.b32.xlu0 %v5568, 96
    %v6591 = vpop.permute.xlu0 %6590
    %6592 = vrot.lane.b32.xlu0 %v5569, 96
    %v6593 = vpop.permute.xlu0 %6592
    %6594 = vrot.lane.b32.xlu0 %v5570, 96
    %v6595 = vpop.permute.xlu0 %6594
    %6724 = vrot.lane.b32.xlu0 %v5635, 32
    %v6725 = vpop.permute.xlu0 %6724
    %6726 = vrot.lane.b32.xlu0 %v5636, 32
    %v6727 = vpop.permute.xlu0 %6726
    %6728 = vrot.lane.b32.xlu0 %v5637, 32
    %v6729 = vpop.permute.xlu0 %6728
    %6730 = vrot.lane.b32.xlu0 %v5638, 32
    %v6731 = vpop.permute.xlu0 %6730
    %6732 = vrot.lane.b32.xlu0 %v5639, 32
    %v6733 = vpop.permute.xlu0 %6732
    %6734 = vrot.lane.b32.xlu0 %v5640, 32
    %v6735 = vpop.permute.xlu0 %6734
    %6736 = vrot.lane.b32.xlu0 %v5641, 32
    %v6737 = vpop.permute.xlu0 %6736
    %6738 = vrot.lane.b32.xlu0 %v5642, 32
    %v6739 = vpop.permute.xlu0 %6738
    %6740 = vrot.lane.b32.xlu0 %v5643, 32
    %v6741 = vpop.permute.xlu0 %6740
    %6742 = vrot.lane.b32.xlu0 %v5644, 32
    %v6743 = vpop.permute.xlu0 %6742
    %6744 = vrot.lane.b32.xlu0 %v5645, 32
    %v6745 = vpop.permute.xlu0 %6744
    %6746 = vrot.lane.b32.xlu0 %v5646, 32
    %v6747 = vpop.permute.xlu0 %6746
    %6748 = vrot.lane.b32.xlu0 %v5647, 32
    %v6749 = vpop.permute.xlu0 %6748
    %6750 = vrot.lane.b32.xlu0 %v5648, 32
    %v6751 = vpop.permute.xlu0 %6750
    %6752 = vrot.lane.b32.xlu0 %v5649, 32
    %v6753 = vpop.permute.xlu0 %6752
    %6754 = vrot.lane.b32.xlu0 %v5650, 32
    %v6755 = vpop.permute.xlu0 %6754
    %6756 = vrot.lane.b32.xlu0 %v5651, 32
    %v6757 = vpop.permute.xlu0 %6756
    %6758 = vrot.lane.b32.xlu0 %v5652, 32
    %v6759 = vpop.permute.xlu0 %6758
    %6760 = vrot.lane.b32.xlu0 %v5653, 32
    %v6761 = vpop.permute.xlu0 %6760
    %6762 = vrot.lane.b32.xlu0 %v5654, 32
    %v6763 = vpop.permute.xlu0 %6762
    %6764 = vrot.lane.b32.xlu0 %v5655, 32
    %v6765 = vpop.permute.xlu0 %6764
    %6766 = vrot.lane.b32.xlu0 %v5656, 32
    %v6767 = vpop.permute.xlu0 %6766
    %6768 = vrot.lane.b32.xlu0 %v5657, 32
    %v6769 = vpop.permute.xlu0 %6768
    %6770 = vrot.lane.b32.xlu0 %v5658, 32
    %v6771 = vpop.permute.xlu0 %6770
    %6772 = vrot.lane.b32.xlu0 %v5659, 32
    %v6773 = vpop.permute.xlu0 %6772
    %6774 = vrot.lane.b32.xlu0 %v5660, 32
    %v6775 = vpop.permute.xlu0 %6774
    %6776 = vrot.lane.b32.xlu0 %v5661, 32
    %v6777 = vpop.permute.xlu0 %6776
    %6778 = vrot.lane.b32.xlu0 %v5662, 32
    %v6779 = vpop.permute.xlu0 %6778
    %6780 = vrot.lane.b32.xlu0 %v5663, 32
    %v6781 = vpop.permute.xlu0 %6780
    %6782 = vrot.lane.b32.xlu0 %v5664, 32
    %v6783 = vpop.permute.xlu0 %6782
    %6784 = vrot.lane.b32.xlu0 %v5665, 32
    %v6785 = vpop.permute.xlu0 %6784
    %6786 = vrot.lane.b32.xlu0 %v5666, 32
    %v6787 = vpop.permute.xlu0 %6786
    %6788 = vrot.lane.b32.xlu0 %v5667, 32
    %v6789 = vpop.permute.xlu0 %6788
    %6790 = vrot.lane.b32.xlu0 %v5668, 32
    %v6791 = vpop.permute.xlu0 %6790
    %6792 = vrot.lane.b32.xlu0 %v5669, 32
    %v6793 = vpop.permute.xlu0 %6792
    %6794 = vrot.lane.b32.xlu0 %v5670, 32
    %v6795 = vpop.permute.xlu0 %6794
    %6796 = vrot.lane.b32.xlu0 %v5671, 32
    %v6797 = vpop.permute.xlu0 %6796
    %6798 = vrot.lane.b32.xlu0 %v5672, 32
    %v6799 = vpop.permute.xlu0 %6798
    %6800 = vrot.lane.b32.xlu0 %v5673, 32
    %v6801 = vpop.permute.xlu0 %6800
    %6802 = vrot.lane.b32.xlu0 %v5674, 32
    %v6803 = vpop.permute.xlu0 %6802
    %6804 = vrot.lane.b32.xlu0 %v5675, 32
    %v6805 = vpop.permute.xlu0 %6804
    %6806 = vrot.lane.b32.xlu0 %v5676, 32
    %v6807 = vpop.permute.xlu0 %6806
    %6808 = vrot.lane.b32.xlu0 %v5677, 32
    %v6809 = vpop.permute.xlu0 %6808
    %6810 = vrot.lane.b32.xlu0 %v5678, 32
    %v6811 = vpop.permute.xlu0 %6810
    %6812 = vrot.lane.b32.xlu0 %v5679, 32
    %v6813 = vpop.permute.xlu0 %6812
    %6814 = vrot.lane.b32.xlu0 %v5680, 32
    %v6815 = vpop.permute.xlu0 %6814
    %6816 = vrot.lane.b32.xlu0 %v5681, 32
    %v6817 = vpop.permute.xlu0 %6816
    %6818 = vrot.lane.b32.xlu0 %v5682, 32
    %v6819 = vpop.permute.xlu0 %6818
    %6820 = vrot.lane.b32.xlu0 %v5683, 32
    %v6821 = vpop.permute.xlu0 %6820
    %6822 = vrot.lane.b32.xlu0 %v5684, 32
    %v6823 = vpop.permute.xlu0 %6822
    %6824 = vrot.lane.b32.xlu0 %v5685, 32
    %v6825 = vpop.permute.xlu0 %6824
    %6826 = vrot.lane.b32.xlu0 %v5686, 32
    %v6827 = vpop.permute.xlu0 %6826
    %6828 = vrot.lane.b32.xlu0 %v5687, 32
    %v6829 = vpop.permute.xlu0 %6828
    %6830 = vrot.lane.b32.xlu0 %v5688, 32
    %v6831 = vpop.permute.xlu0 %6830
    %6832 = vrot.lane.b32.xlu0 %v5689, 32
    %v6833 = vpop.permute.xlu0 %6832
    %6834 = vrot.lane.b32.xlu0 %v5690, 32
    %v6835 = vpop.permute.xlu0 %6834
    %6836 = vrot.lane.b32.xlu0 %v5691, 32
    %v6837 = vpop.permute.xlu0 %6836
    %6838 = vrot.lane.b32.xlu0 %v5692, 32
    %v6839 = vpop.permute.xlu0 %6838
    %6840 = vrot.lane.b32.xlu0 %v5693, 32
    %v6841 = vpop.permute.xlu0 %6840
    %6842 = vrot.lane.b32.xlu0 %v5694, 32
    %v6843 = vpop.permute.xlu0 %6842
    %6844 = vrot.lane.b32.xlu0 %v5695, 32
    %v6845 = vpop.permute.xlu0 %6844
    %6846 = vrot.lane.b32.xlu0 %v5696, 32
    %v6847 = vpop.permute.xlu0 %6846
    %6848 = vrot.lane.b32.xlu0 %v5697, 32
    %v6849 = vpop.permute.xlu0 %6848
    %6850 = vrot.lane.b32.xlu0 %v5698, 32
    %v6851 = vpop.permute.xlu0 %6850
    %6980 = vrot.lane.b32.xlu0 %v5700, 64
    %v6981 = vpop.permute.xlu0 %6980
    %6982 = vrot.lane.b32.xlu0 %v5701, 64
    %v6983 = vpop.permute.xlu0 %6982
    %6984 = vrot.lane.b32.xlu0 %v5702, 64
    %v6985 = vpop.permute.xlu0 %6984
    %6986 = vrot.lane.b32.xlu0 %v5703, 64
    %v6987 = vpop.permute.xlu0 %6986
    %6988 = vrot.lane.b32.xlu0 %v5704, 64
    %v6989 = vpop.permute.xlu0 %6988
    %6990 = vrot.lane.b32.xlu0 %v5705, 64
    %v6991 = vpop.permute.xlu0 %6990
    %6992 = vrot.lane.b32.xlu0 %v5706, 64
    %v6993 = vpop.permute.xlu0 %6992
    %6994 = vrot.lane.b32.xlu0 %v5707, 64
    %v6995 = vpop.permute.xlu0 %6994
    %6996 = vrot.lane.b32.xlu0 %v5708, 64
    %v6997 = vpop.permute.xlu0 %6996
    %6998 = vrot.lane.b32.xlu0 %v5709, 64
    %v6999 = vpop.permute.xlu0 %6998
    %7000 = vrot.lane.b32.xlu0 %v5710, 64
    %v7001 = vpop.permute.xlu0 %7000
    %7002 = vrot.lane.b32.xlu0 %v5711, 64
    %v7003 = vpop.permute.xlu0 %7002
    %7004 = vrot.lane.b32.xlu0 %v5712, 64
    %v7005 = vpop.permute.xlu0 %7004
    %7006 = vrot.lane.b32.xlu0 %v5713, 64
    %v7007 = vpop.permute.xlu0 %7006
    %7008 = vrot.lane.b32.xlu0 %v5714, 64
    %v7009 = vpop.permute.xlu0 %7008
    %7010 = vrot.lane.b32.xlu0 %v5715, 64
    %v7011 = vpop.permute.xlu0 %7010
    %7012 = vrot.lane.b32.xlu0 %v5716, 64
    %v7013 = vpop.permute.xlu0 %7012
    %7014 = vrot.lane.b32.xlu0 %v5717, 64
    %v7015 = vpop.permute.xlu0 %7014
    %7016 = vrot.lane.b32.xlu0 %v5718, 64
    %v7017 = vpop.permute.xlu0 %7016
    %7018 = vrot.lane.b32.xlu0 %v5719, 64
    %v7019 = vpop.permute.xlu0 %7018
    %7020 = vrot.lane.b32.xlu0 %v5720, 64
    %v7021 = vpop.permute.xlu0 %7020
    %7022 = vrot.lane.b32.xlu0 %v5721, 64
    %v7023 = vpop.permute.xlu0 %7022
    %7024 = vrot.lane.b32.xlu0 %v5722, 64
    %v7025 = vpop.permute.xlu0 %7024
    %7026 = vrot.lane.b32.xlu0 %v5723, 64
    %v7027 = vpop.permute.xlu0 %7026
    %7028 = vrot.lane.b32.xlu0 %v5724, 64
    %v7029 = vpop.permute.xlu0 %7028
    %7030 = vrot.lane.b32.xlu0 %v5725, 64
    %v7031 = vpop.permute.xlu0 %7030
    %7032 = vrot.lane.b32.xlu0 %v5726, 64
    %v7033 = vpop.permute.xlu0 %7032
    %7034 = vrot.lane.b32.xlu0 %v5727, 64
    %v7035 = vpop.permute.xlu0 %7034
    %7036 = vrot.lane.b32.xlu0 %v5728, 64
    %v7037 = vpop.permute.xlu0 %7036
    %7038 = vrot.lane.b32.xlu0 %v5729, 64
    %v7039 = vpop.permute.xlu0 %7038
    %7040 = vrot.lane.b32.xlu0 %v5730, 64
    %v7041 = vpop.permute.xlu0 %7040
    %7042 = vrot.lane.b32.xlu0 %v5731, 64
    %v7043 = vpop.permute.xlu0 %7042
    %7044 = vrot.lane.b32.xlu0 %v5732, 64
    %v7045 = vpop.permute.xlu0 %7044
    %7046 = vrot.lane.b32.xlu0 %v5733, 64
    %v7047 = vpop.permute.xlu0 %7046
    %7048 = vrot.lane.b32.xlu0 %v5734, 64
    %v7049 = vpop.permute.xlu0 %7048
    %7050 = vrot.lane.b32.xlu0 %v5735, 64
    %v7051 = vpop.permute.xlu0 %7050
    %7052 = vrot.lane.b32.xlu0 %v5736, 64
    %v7053 = vpop.permute.xlu0 %7052
    %7054 = vrot.lane.b32.xlu0 %v5737, 64
    %v7055 = vpop.permute.xlu0 %7054
    %7056 = vrot.lane.b32.xlu0 %v5738, 64
    %v7057 = vpop.permute.xlu0 %7056
    %7058 = vrot.lane.b32.xlu0 %v5739, 64
    %v7059 = vpop.permute.xlu0 %7058
    %7060 = vrot.lane.b32.xlu0 %v5740, 64
    %v7061 = vpop.permute.xlu0 %7060
    %7062 = vrot.lane.b32.xlu0 %v5741, 64
    %v7063 = vpop.permute.xlu0 %7062
    %7064 = vrot.lane.b32.xlu0 %v5742, 64
    %v7065 = vpop.permute.xlu0 %7064
    %7066 = vrot.lane.b32.xlu0 %v5743, 64
    %v7067 = vpop.permute.xlu0 %7066
    %7068 = vrot.lane.b32.xlu0 %v5744, 64
    %v7069 = vpop.permute.xlu0 %7068
    %7070 = vrot.lane.b32.xlu0 %v5745, 64
    %v7071 = vpop.permute.xlu0 %7070
    %7072 = vrot.lane.b32.xlu0 %v5746, 64
    %v7073 = vpop.permute.xlu0 %7072
    %7074 = vrot.lane.b32.xlu0 %v5747, 64
    %v7075 = vpop.permute.xlu0 %7074
    %7076 = vrot.lane.b32.xlu0 %v5748, 64
    %v7077 = vpop.permute.xlu0 %7076
    %7078 = vrot.lane.b32.xlu0 %v5749, 64
    %v7079 = vpop.permute.xlu0 %7078
    %7080 = vrot.lane.b32.xlu0 %v5750, 64
    %v7081 = vpop.permute.xlu0 %7080
    %7082 = vrot.lane.b32.xlu0 %v5751, 64
    %v7083 = vpop.permute.xlu0 %7082
    %7084 = vrot.lane.b32.xlu0 %v5752, 64
    %v7085 = vpop.permute.xlu0 %7084
    %7086 = vrot.lane.b32.xlu0 %v5753, 64
    %v7087 = vpop.permute.xlu0 %7086
    %7088 = vrot.lane.b32.xlu0 %v5754, 64
    %v7089 = vpop.permute.xlu0 %7088
    %7090 = vrot.lane.b32.xlu0 %v5755, 64
    %v7091 = vpop.permute.xlu0 %7090
    %7092 = vrot.lane.b32.xlu0 %v5756, 64
    %v7093 = vpop.permute.xlu0 %7092
    %7094 = vrot.lane.b32.xlu0 %v5757, 64
    %v7095 = vpop.permute.xlu0 %7094
    %7096 = vrot.lane.b32.xlu0 %v5758, 64
    %v7097 = vpop.permute.xlu0 %7096
    %7098 = vrot.lane.b32.xlu0 %v5759, 64
    %v7099 = vpop.permute.xlu0 %7098
    %7100 = vrot.lane.b32.xlu0 %v5760, 64
    %v7101 = vpop.permute.xlu0 %7100
    %7102 = vrot.lane.b32.xlu0 %v5761, 64
    %v7103 = vpop.permute.xlu0 %7102
    %7104 = vrot.lane.b32.xlu0 %v5762, 64
    %v7105 = vpop.permute.xlu0 %7104
    %7106 = vrot.lane.b32.xlu0 %v5763, 64
    %v7107 = vpop.permute.xlu0 %7106
    %7236 = vrot.lane.b32.xlu0 %v5764, 96
    %v7237 = vpop.permute.xlu0 %7236
    %7238 = vrot.lane.b32.xlu0 %v5765, 96
    %v7239 = vpop.permute.xlu0 %7238
    %7240 = vrot.lane.b32.xlu0 %v5766, 96
    %v7241 = vpop.permute.xlu0 %7240
    %7242 = vrot.lane.b32.xlu0 %v5767, 96
    %v7243 = vpop.permute.xlu0 %7242
    %7244 = vrot.lane.b32.xlu0 %v5768, 96
    %v7245 = vpop.permute.xlu0 %7244
    %7246 = vrot.lane.b32.xlu0 %v5769, 96
    %v7247 = vpop.permute.xlu0 %7246
    %7248 = vrot.lane.b32.xlu0 %v5770, 96
    %v7249 = vpop.permute.xlu0 %7248
    %7250 = vrot.lane.b32.xlu0 %v5771, 96
    %v7251 = vpop.permute.xlu0 %7250
    %7252 = vrot.lane.b32.xlu0 %v5772, 96
    %v7253 = vpop.permute.xlu0 %7252
    %7254 = vrot.lane.b32.xlu0 %v5773, 96
    %v7255 = vpop.permute.xlu0 %7254
    %7256 = vrot.lane.b32.xlu0 %v5774, 96
    %v7257 = vpop.permute.xlu0 %7256
    %7258 = vrot.lane.b32.xlu0 %v5775, 96
    %v7259 = vpop.permute.xlu0 %7258
    %7260 = vrot.lane.b32.xlu0 %v5776, 96
    %v7261 = vpop.permute.xlu0 %7260
    %7262 = vrot.lane.b32.xlu0 %v5777, 96
    %v7263 = vpop.permute.xlu0 %7262
    %7264 = vrot.lane.b32.xlu0 %v5778, 96
    %v7265 = vpop.permute.xlu0 %7264
    %7266 = vrot.lane.b32.xlu0 %v5779, 96
    %v7267 = vpop.permute.xlu0 %7266
    %7268 = vrot.lane.b32.xlu0 %v5780, 96
    %v7269 = vpop.permute.xlu0 %7268
    %7270 = vrot.lane.b32.xlu0 %v5781, 96
    %v7271 = vpop.permute.xlu0 %7270
    %7272 = vrot.lane.b32.xlu0 %v5782, 96
    %v7273 = vpop.permute.xlu0 %7272
    %7274 = vrot.lane.b32.xlu0 %v5783, 96
    %v7275 = vpop.permute.xlu0 %7274
    %7276 = vrot.lane.b32.xlu0 %v5784, 96
    %v7277 = vpop.permute.xlu0 %7276
    %7278 = vrot.lane.b32.xlu0 %v5785, 96
    %v7279 = vpop.permute.xlu0 %7278
    %7280 = vrot.lane.b32.xlu0 %v5786, 96
    %v7281 = vpop.permute.xlu0 %7280
    %7282 = vrot.lane.b32.xlu0 %v5787, 96
    %v7283 = vpop.permute.xlu0 %7282
    %7284 = vrot.lane.b32.xlu0 %v5788, 96
    %v7285 = vpop.permute.xlu0 %7284
    %7286 = vrot.lane.b32.xlu0 %v5789, 96
    %v7287 = vpop.permute.xlu0 %7286
    %7288 = vrot.lane.b32.xlu0 %v5790, 96
    %v7289 = vpop.permute.xlu0 %7288
    %7290 = vrot.lane.b32.xlu0 %v5791, 96
    %v7291 = vpop.permute.xlu0 %7290
    %7292 = vrot.lane.b32.xlu0 %v5792, 96
    %v7293 = vpop.permute.xlu0 %7292
    %7294 = vrot.lane.b32.xlu0 %v5793, 96
    %v7295 = vpop.permute.xlu0 %7294
    %7296 = vrot.lane.b32.xlu0 %v5794, 96
    %v7297 = vpop.permute.xlu0 %7296
    %7298 = vrot.lane.b32.xlu0 %v5795, 96
    %v7299 = vpop.permute.xlu0 %7298
    %7300 = vrot.lane.b32.xlu0 %v5796, 96
    %v7301 = vpop.permute.xlu0 %7300
    %7302 = vrot.lane.b32.xlu0 %v5797, 96
    %v7303 = vpop.permute.xlu0 %7302
    %7304 = vrot.lane.b32.xlu0 %v5798, 96
    %v7305 = vpop.permute.xlu0 %7304
    %7306 = vrot.lane.b32.xlu0 %v5799, 96
    %v7307 = vpop.permute.xlu0 %7306
    %7308 = vrot.lane.b32.xlu0 %v5800, 96
    %v7309 = vpop.permute.xlu0 %7308
    %7310 = vrot.lane.b32.xlu0 %v5801, 96
    %v7311 = vpop.permute.xlu0 %7310
    %7312 = vrot.lane.b32.xlu0 %v5802, 96
    %v7313 = vpop.permute.xlu0 %7312
    %7314 = vrot.lane.b32.xlu0 %v5803, 96
    %v7315 = vpop.permute.xlu0 %7314
    %7316 = vrot.lane.b32.xlu0 %v5804, 96
    %v7317 = vpop.permute.xlu0 %7316
    %7318 = vrot.lane.b32.xlu0 %v5805, 96
    %v7319 = vpop.permute.xlu0 %7318
    %7320 = vrot.lane.b32.xlu0 %v5806, 96
    %v7321 = vpop.permute.xlu0 %7320
    %7322 = vrot.lane.b32.xlu0 %v5807, 96
    %v7323 = vpop.permute.xlu0 %7322
    %7324 = vrot.lane.b32.xlu0 %v5808, 96
    %v7325 = vpop.permute.xlu0 %7324
    %7326 = vrot.lane.b32.xlu0 %v5809, 96
    %v7327 = vpop.permute.xlu0 %7326
    %7328 = vrot.lane.b32.xlu0 %v5810, 96
    %v7329 = vpop.permute.xlu0 %7328
    %7330 = vrot.lane.b32.xlu0 %v5811, 96
    %v7331 = vpop.permute.xlu0 %7330
    %7332 = vrot.lane.b32.xlu0 %v5812, 96
    %v7333 = vpop.permute.xlu0 %7332
    %7334 = vrot.lane.b32.xlu0 %v5813, 96
    %v7335 = vpop.permute.xlu0 %7334
    %7336 = vrot.lane.b32.xlu0 %v5814, 96
    %v7337 = vpop.permute.xlu0 %7336
    %7338 = vrot.lane.b32.xlu0 %v5815, 96
    %v7339 = vpop.permute.xlu0 %7338
    %7340 = vrot.lane.b32.xlu0 %v5816, 96
    %v7341 = vpop.permute.xlu0 %7340
    %7342 = vrot.lane.b32.xlu0 %v5817, 96
    %v7343 = vpop.permute.xlu0 %7342
    %7344 = vrot.lane.b32.xlu0 %v5818, 96
    %v7345 = vpop.permute.xlu0 %7344
    %7346 = vrot.lane.b32.xlu0 %v5819, 96
    %v7347 = vpop.permute.xlu0 %7346
    %7348 = vrot.lane.b32.xlu0 %v5820, 96
    %v7349 = vpop.permute.xlu0 %7348
    %7350 = vrot.lane.b32.xlu0 %v5821, 96
    %v7351 = vpop.permute.xlu0 %7350
    %7352 = vrot.lane.b32.xlu0 %v5822, 96
    %v7353 = vpop.permute.xlu0 %7352
    %7354 = vrot.lane.b32.xlu0 %v5823, 96
    %v7355 = vpop.permute.xlu0 %7354
    %7356 = vrot.lane.b32.xlu0 %v5824, 96
    %v7357 = vpop.permute.xlu0 %7356
    %7358 = vrot.lane.b32.xlu0 %v5825, 96
    %v7359 = vpop.permute.xlu0 %7358
    %7360 = vrot.lane.b32.xlu0 %v5826, 96
    %v7361 = vpop.permute.xlu0 %7360
    %7362 = vrot.lane.b32.xlu0 %v5827, 96
    %v7363 = vpop.permute.xlu0 %7362
    %v7428 = vsel %vm773, %v5315, %v5957
    %v7429 = vsel %vm773, %v5316, %v5959
    %v7430 = vsel %vm773, %v5317, %v5961
    %v7431 = vsel %vm773, %v5318, %v5963
    %v7432 = vsel %vm773, %v5319, %v5965
    %v7433 = vsel %vm773, %v5320, %v5967
    %v7434 = vsel %vm773, %v5321, %v5969
    %v7435 = vsel %vm773, %v5322, %v5971
    %v7436 = vsel %vm773, %v5323, %v5973
    %v7437 = vsel %vm773, %v5324, %v5975
    %v7438 = vsel %vm773, %v5325, %v5977
    %v7439 = vsel %vm773, %v5326, %v5979
    %v7440 = vsel %vm773, %v5327, %v5981
    %v7441 = vsel %vm773, %v5328, %v5983
    %v7442 = vsel %vm773, %v5329, %v5985
    %v7443 = vsel %vm773, %v5330, %v5987
    %v7444 = vsel %vm773, %v5331, %v5989
    %v7445 = vsel %vm773, %v5332, %v5991
    %v7446 = vsel %vm773, %v5333, %v5993
    %v7447 = vsel %vm773, %v5334, %v5995
    %v7448 = vsel %vm773, %v5335, %v5997
    %v7449 = vsel %vm773, %v5336, %v5999
    %v7450 = vsel %vm773, %v5337, %v6001
    %v7451 = vsel %vm773, %v5338, %v6003
    %v7452 = vsel %vm773, %v5339, %v6005
    %v7453 = vsel %vm773, %v5340, %v6007
    %v7454 = vsel %vm773, %v5341, %v6009
    %v7455 = vsel %vm773, %v5342, %v6011
    %v7456 = vsel %vm773, %v5343, %v6013
    %v7457 = vsel %vm773, %v5344, %v6015
    %v7458 = vsel %vm773, %v5345, %v6017
    %v7459 = vsel %vm773, %v5346, %v6019
    %v7460 = vsel %vm773, %v5347, %v6021
    %v7461 = vsel %vm773, %v5348, %v6023
    %v7462 = vsel %vm773, %v5349, %v6025
    %v7463 = vsel %vm773, %v5350, %v6027
    %v7464 = vsel %vm773, %v5351, %v6029
    %v7465 = vsel %vm773, %v5352, %v6031
    %v7466 = vsel %vm773, %v5353, %v6033
    %v7467 = vsel %vm773, %v5354, %v6035
    %v7468 = vsel %vm773, %v5355, %v6037
    %v7469 = vsel %vm773, %v5356, %v6039
    %v7470 = vsel %vm773, %v5357, %v6041
    %v7471 = vsel %vm773, %v5358, %v6043
    %v7472 = vsel %vm773, %v5359, %v6045
    %v7473 = vsel %vm773, %v5360, %v6047
    %v7474 = vsel %vm773, %v5361, %v6049
    %v7475 = vsel %vm773, %v5362, %v6051
    %v7476 = vsel %vm773, %v5363, %v6053
    %v7477 = vsel %vm773, %v5364, %v6055
    %v7478 = vsel %vm773, %v5365, %v6057
    %v7479 = vsel %vm773, %v5366, %v6059
    %v7480 = vsel %vm773, %v5367, %v6061
    %v7481 = vsel %vm773, %v5368, %v6063
    %v7482 = vsel %vm773, %v5369, %v6065
    %v7483 = vsel %vm773, %v5370, %v6067
    %v7484 = vsel %vm773, %v5371, %v6069
    %v7485 = vsel %vm773, %v5372, %v6071
    %v7486 = vsel %vm773, %v5373, %v6073
    %v7487 = vsel %vm773, %v5374, %v6075
    %v7488 = vsel %vm773, %v5375, %v6077
    %v7489 = vsel %vm773, %v5376, %v6079
    %v7490 = vsel %vm773, %v5377, %v6081
    %v7491 = vsel %vm773, %v5378, %v6083
    %v7492 = vsel %vm3815, %v7428, %v6213
    %v7493 = vsel %vm3815, %v7429, %v6215
    %v7494 = vsel %vm3815, %v7430, %v6217
    %v7495 = vsel %vm3815, %v7431, %v6219
    %v7496 = vsel %vm3815, %v7432, %v6221
    %v7497 = vsel %vm3815, %v7433, %v6223
    %v7498 = vsel %vm3815, %v7434, %v6225
    %v7499 = vsel %vm3815, %v7435, %v6227
    %v7500 = vsel %vm3815, %v7436, %v6229
    %v7501 = vsel %vm3815, %v7437, %v6231
    %v7502 = vsel %vm3815, %v7438, %v6233
    %v7503 = vsel %vm3815, %v7439, %v6235
    %v7504 = vsel %vm3815, %v7440, %v6237
    %v7505 = vsel %vm3815, %v7441, %v6239
    %v7506 = vsel %vm3815, %v7442, %v6241
    %v7507 = vsel %vm3815, %v7443, %v6243
    %v7508 = vsel %vm3815, %v7444, %v6245
    %v7509 = vsel %vm3815, %v7445, %v6247
    %v7510 = vsel %vm3815, %v7446, %v6249
    %v7511 = vsel %vm3815, %v7447, %v6251
    %v7512 = vsel %vm3815, %v7448, %v6253
    %v7513 = vsel %vm3815, %v7449, %v6255
    %v7514 = vsel %vm3815, %v7450, %v6257
    %v7515 = vsel %vm3815, %v7451, %v6259
    %v7516 = vsel %vm3815, %v7452, %v6261
    %v7517 = vsel %vm3815, %v7453, %v6263
    %v7518 = vsel %vm3815, %v7454, %v6265
    %v7519 = vsel %vm3815, %v7455, %v6267
    %v7520 = vsel %vm3815, %v7456, %v6269
    %v7521 = vsel %vm3815, %v7457, %v6271
    %v7522 = vsel %vm3815, %v7458, %v6273
    %v7523 = vsel %vm3815, %v7459, %v6275
    %v7524 = vsel %vm3815, %v7460, %v6277
    %v7525 = vsel %vm3815, %v7461, %v6279
    %v7526 = vsel %vm3815, %v7462, %v6281
    %v7527 = vsel %vm3815, %v7463, %v6283
    %v7528 = vsel %vm3815, %v7464, %v6285
    %v7529 = vsel %vm3815, %v7465, %v6287
    %v7530 = vsel %vm3815, %v7466, %v6289
    %v7531 = vsel %vm3815, %v7467, %v6291
    %v7532 = vsel %vm3815, %v7468, %v6293
    %v7533 = vsel %vm3815, %v7469, %v6295
    %v7534 = vsel %vm3815, %v7470, %v6297
    %v7535 = vsel %vm3815, %v7471, %v6299
    %v7536 = vsel %vm3815, %v7472, %v6301
    %v7537 = vsel %vm3815, %v7473, %v6303
    %v7538 = vsel %vm3815, %v7474, %v6305
    %v7539 = vsel %vm3815, %v7475, %v6307
    %v7540 = vsel %vm3815, %v7476, %v6309
    %v7541 = vsel %vm3815, %v7477, %v6311
    %v7542 = vsel %vm3815, %v7478, %v6313
    %v7543 = vsel %vm3815, %v7479, %v6315
    %v7544 = vsel %vm3815, %v7480, %v6317
    %v7545 = vsel %vm3815, %v7481, %v6319
    %v7546 = vsel %vm3815, %v7482, %v6321
    %v7547 = vsel %vm3815, %v7483, %v6323
    %v7548 = vsel %vm3815, %v7484, %v6325
    %v7549 = vsel %vm3815, %v7485, %v6327
    %v7550 = vsel %vm3815, %v7486, %v6329
    %v7551 = vsel %vm3815, %v7487, %v6331
    %v7552 = vsel %vm3815, %v7488, %v6333
    %v7553 = vsel %vm3815, %v7489, %v6335
    %v7554 = vsel %vm3815, %v7490, %v6337
    %v7555 = vsel %vm3815, %v7491, %v6339
    %v7556 = vsel %vm3945, %v7492, %v6469
    %v7557 = vsel %vm3945, %v7493, %v6471
    %v7558 = vsel %vm3945, %v7494, %v6473
    %v7559 = vsel %vm3945, %v7495, %v6475
    %v7560 = vsel %vm3945, %v7496, %v6477
    %v7561 = vsel %vm3945, %v7497, %v6479
    %v7562 = vsel %vm3945, %v7498, %v6481
    %v7563 = vsel %vm3945, %v7499, %v6483
    %v7564 = vsel %vm3945, %v7500, %v6485
    %v7565 = vsel %vm3945, %v7501, %v6487
    %v7566 = vsel %vm3945, %v7502, %v6489
    %v7567 = vsel %vm3945, %v7503, %v6491
    %v7568 = vsel %vm3945, %v7504, %v6493
    %v7569 = vsel %vm3945, %v7505, %v6495
    %v7570 = vsel %vm3945, %v7506, %v6497
    %v7571 = vsel %vm3945, %v7507, %v6499
    %v7572 = vsel %vm3945, %v7508, %v6501
    %v7573 = vsel %vm3945, %v7509, %v6503
    %v7574 = vsel %vm3945, %v7510, %v6505
    %v7575 = vsel %vm3945, %v7511, %v6507
    %v7576 = vsel %vm3945, %v7512, %v6509
    %v7577 = vsel %vm3945, %v7513, %v6511
    %v7578 = vsel %vm3945, %v7514, %v6513
    %v7579 = vsel %vm3945, %v7515, %v6515
    %v7580 = vsel %vm3945, %v7516, %v6517
    %v7581 = vsel %vm3945, %v7517, %v6519
    %v7582 = vsel %vm3945, %v7518, %v6521
    %v7583 = vsel %vm3945, %v7519, %v6523
    %v7584 = vsel %vm3945, %v7520, %v6525
    %v7585 = vsel %vm3945, %v7521, %v6527
    %v7586 = vsel %vm3945, %v7522, %v6529
    %v7587 = vsel %vm3945, %v7523, %v6531
    %v7588 = vsel %vm3945, %v7524, %v6533
    %v7589 = vsel %vm3945, %v7525, %v6535
    %v7590 = vsel %vm3945, %v7526, %v6537
    %v7591 = vsel %vm3945, %v7527, %v6539
    %v7592 = vsel %vm3945, %v7528, %v6541
    %v7593 = vsel %vm3945, %v7529, %v6543
    %v7594 = vsel %vm3945, %v7530, %v6545
    %v7595 = vsel %vm3945, %v7531, %v6547
    %v7596 = vsel %vm3945, %v7532, %v6549
    %v7597 = vsel %vm3945, %v7533, %v6551
    %v7598 = vsel %vm3945, %v7534, %v6553
    %v7599 = vsel %vm3945, %v7535, %v6555
    %v7600 = vsel %vm3945, %v7536, %v6557
    %v7601 = vsel %vm3945, %v7537, %v6559
    %v7602 = vsel %vm3945, %v7538, %v6561
    %v7603 = vsel %vm3945, %v7539, %v6563
    %v7604 = vsel %vm3945, %v7540, %v6565
    %v7605 = vsel %vm3945, %v7541, %v6567
    %v7606 = vsel %vm3945, %v7542, %v6569
    %v7607 = vsel %vm3945, %v7543, %v6571
    %v7608 = vsel %vm3945, %v7544, %v6573
    %v7609 = vsel %vm3945, %v7545, %v6575
    %v7610 = vsel %vm3945, %v7546, %v6577
    %v7611 = vsel %vm3945, %v7547, %v6579
    %v7612 = vsel %vm3945, %v7548, %v6581
    %v7613 = vsel %vm3945, %v7549, %v6583
    %v7614 = vsel %vm3945, %v7550, %v6585
    %v7615 = vsel %vm3945, %v7551, %v6587
    %v7616 = vsel %vm3945, %v7552, %v6589
    %v7617 = vsel %vm3945, %v7553, %v6591
    %v7618 = vsel %vm3945, %v7554, %v6593
    %v7619 = vsel %vm3945, %v7555, %v6595
    %v7620 = vsel %vm773, %v5571, %v6725
    %v7621 = vsel %vm773, %v5572, %v6727
    %v7622 = vsel %vm773, %v5573, %v6729
    %v7623 = vsel %vm773, %v5574, %v6731
    %v7624 = vsel %vm773, %v5575, %v6733
    %v7625 = vsel %vm773, %v5576, %v6735
    %v7626 = vsel %vm773, %v5577, %v6737
    %v7627 = vsel %vm773, %v5578, %v6739
    %v7628 = vsel %vm773, %v5579, %v6741
    %v7629 = vsel %vm773, %v5580, %v6743
    %v7630 = vsel %vm773, %v5581, %v6745
    %v7631 = vsel %vm773, %v5582, %v6747
    %v7632 = vsel %vm773, %v5583, %v6749
    %v7633 = vsel %vm773, %v5584, %v6751
    %v7634 = vsel %vm773, %v5585, %v6753
    %v7635 = vsel %vm773, %v5586, %v6755
    %v7636 = vsel %vm773, %v5587, %v6757
    %v7637 = vsel %vm773, %v5588, %v6759
    %v7638 = vsel %vm773, %v5589, %v6761
    %v7639 = vsel %vm773, %v5590, %v6763
    %v7640 = vsel %vm773, %v5591, %v6765
    %v7641 = vsel %vm773, %v5592, %v6767
    %v7642 = vsel %vm773, %v5593, %v6769
    %v7643 = vsel %vm773, %v5594, %v6771
    %v7644 = vsel %vm773, %v5595, %v6773
    %v7645 = vsel %vm773, %v5596, %v6775
    %v7646 = vsel %vm773, %v5597, %v6777
    %v7647 = vsel %vm773, %v5598, %v6779
    %v7648 = vsel %vm773, %v5599, %v6781
    %v7649 = vsel %vm773, %v5600, %v6783
    %v7650 = vsel %vm773, %v5601, %v6785
    %v7651 = vsel %vm773, %v5602, %v6787
    %v7652 = vsel %vm773, %v5603, %v6789
    %v7653 = vsel %vm773, %v5604, %v6791
    %v7654 = vsel %vm773, %v5605, %v6793
    %v7655 = vsel %vm773, %v5606, %v6795
    %v7656 = vsel %vm773, %v5607, %v6797
    %v7657 = vsel %vm773, %v5608, %v6799
    %v7658 = vsel %vm773, %v5609, %v6801
    %v7659 = vsel %vm773, %v5610, %v6803
    %v7660 = vsel %vm773, %v5611, %v6805
    %v7661 = vsel %vm773, %v5612, %v6807
    %v7662 = vsel %vm773, %v5613, %v6809
    %v7663 = vsel %vm773, %v5614, %v6811
    %v7664 = vsel %vm773, %v5615, %v6813
    %v7665 = vsel %vm773, %v5616, %v6815
    %v7666 = vsel %vm773, %v5617, %v6817
    %v7667 = vsel %vm773, %v5618, %v6819
    %v7668 = vsel %vm773, %v5619, %v6821
    %v7669 = vsel %vm773, %v5620, %v6823
    %v7670 = vsel %vm773, %v5621, %v6825
    %v7671 = vsel %vm773, %v5622, %v6827
    %v7672 = vsel %vm773, %v5623, %v6829
    %v7673 = vsel %vm773, %v5624, %v6831
    %v7674 = vsel %vm773, %v5625, %v6833
    %v7675 = vsel %vm773, %v5626, %v6835
    %v7676 = vsel %vm773, %v5627, %v6837
    %v7677 = vsel %vm773, %v5628, %v6839
    %v7678 = vsel %vm773, %v5629, %v6841
    %v7679 = vsel %vm773, %v5630, %v6843
    %v7680 = vsel %vm773, %v5631, %v6845
    %v7681 = vsel %vm773, %v5632, %v6847
    %v7682 = vsel %vm773, %v5633, %v6849
    %v7683 = vsel %vm773, %v5634, %v6851
    %v7684 = vsel %vm3815, %v7620, %v6981
    %v7685 = vsel %vm3815, %v7621, %v6983
    %v7686 = vsel %vm3815, %v7622, %v6985
    %v7687 = vsel %vm3815, %v7623, %v6987
    %v7688 = vsel %vm3815, %v7624, %v6989
    %v7689 = vsel %vm3815, %v7625, %v6991
    %v7690 = vsel %vm3815, %v7626, %v6993
    %v7691 = vsel %vm3815, %v7627, %v6995
    %v7692 = vsel %vm3815, %v7628, %v6997
    %v7693 = vsel %vm3815, %v7629, %v6999
    %v7694 = vsel %vm3815, %v7630, %v7001
    %v7695 = vsel %vm3815, %v7631, %v7003
    %v7696 = vsel %vm3815, %v7632, %v7005
    %v7697 = vsel %vm3815, %v7633, %v7007
    %v7698 = vsel %vm3815, %v7634, %v7009
    %v7699 = vsel %vm3815, %v7635, %v7011
    %v7700 = vsel %vm3815, %v7636, %v7013
    %v7701 = vsel %vm3815, %v7637, %v7015
    %v7702 = vsel %vm3815, %v7638, %v7017
    %v7703 = vsel %vm3815, %v7639, %v7019
    %v7704 = vsel %vm3815, %v7640, %v7021
    %v7705 = vsel %vm3815, %v7641, %v7023
    %v7706 = vsel %vm3815, %v7642, %v7025
    %v7707 = vsel %vm3815, %v7643, %v7027
    %v7708 = vsel %vm3815, %v7644, %v7029
    %v7709 = vsel %vm3815, %v7645, %v7031
    %v7710 = vsel %vm3815, %v7646, %v7033
    %v7711 = vsel %vm3815, %v7647, %v7035
    %v7712 = vsel %vm3815, %v7648, %v7037
    %v7713 = vsel %vm3815, %v7649, %v7039
    %v7714 = vsel %vm3815, %v7650, %v7041
    %v7715 = vsel %vm3815, %v7651, %v7043
    %v7716 = vsel %vm3815, %v7652, %v7045
    %v7717 = vsel %vm3815, %v7653, %v7047
    %v7718 = vsel %vm3815, %v7654, %v7049
    %v7719 = vsel %vm3815, %v7655, %v7051
    %v7720 = vsel %vm3815, %v7656, %v7053
    %v7721 = vsel %vm3815, %v7657, %v7055
    %v7722 = vsel %vm3815, %v7658, %v7057
    %v7723 = vsel %vm3815, %v7659, %v7059
    %v7724 = vsel %vm3815, %v7660, %v7061
    %v7725 = vsel %vm3815, %v7661, %v7063
    %v7726 = vsel %vm3815, %v7662, %v7065
    %v7727 = vsel %vm3815, %v7663, %v7067
    %v7728 = vsel %vm3815, %v7664, %v7069
    %v7729 = vsel %vm3815, %v7665, %v7071
    %v7730 = vsel %vm3815, %v7666, %v7073
    %v7731 = vsel %vm3815, %v7667, %v7075
    %v7732 = vsel %vm3815, %v7668, %v7077
    %v7733 = vsel %vm3815, %v7669, %v7079
    %v7734 = vsel %vm3815, %v7670, %v7081
    %v7735 = vsel %vm3815, %v7671, %v7083
    %v7736 = vsel %vm3815, %v7672, %v7085
    %v7737 = vsel %vm3815, %v7673, %v7087
    %v7738 = vsel %vm3815, %v7674, %v7089
    %v7739 = vsel %vm3815, %v7675, %v7091
    %v7740 = vsel %vm3815, %v7676, %v7093
    %v7741 = vsel %vm3815, %v7677, %v7095
    %v7742 = vsel %vm3815, %v7678, %v7097
    %v7743 = vsel %vm3815, %v7679, %v7099
    %v7744 = vsel %vm3815, %v7680, %v7101
    %v7745 = vsel %vm3815, %v7681, %v7103
    %v7746 = vsel %vm3815, %v7682, %v7105
    %v7747 = vsel %vm3815, %v7683, %v7107
    %v7748 = vsel %vm3945, %v7684, %v7237
    %v7749 = vsel %vm3945, %v7685, %v7239
    %v7750 = vsel %vm3945, %v7686, %v7241
    %v7751 = vsel %vm3945, %v7687, %v7243
    %v7752 = vsel %vm3945, %v7688, %v7245
    %v7753 = vsel %vm3945, %v7689, %v7247
    %v7754 = vsel %vm3945, %v7690, %v7249
    %v7755 = vsel %vm3945, %v7691, %v7251
    %v7756 = vsel %vm3945, %v7692, %v7253
    %v7757 = vsel %vm3945, %v7693, %v7255
    %v7758 = vsel %vm3945, %v7694, %v7257
    %v7759 = vsel %vm3945, %v7695, %v7259
    %v7760 = vsel %vm3945, %v7696, %v7261
    %v7761 = vsel %vm3945, %v7697, %v7263
    %v7762 = vsel %vm3945, %v7698, %v7265
    %v7763 = vsel %vm3945, %v7699, %v7267
    %v7764 = vsel %vm3945, %v7700, %v7269
    %v7765 = vsel %vm3945, %v7701, %v7271
    %v7766 = vsel %vm3945, %v7702, %v7273
    %v7767 = vsel %vm3945, %v7703, %v7275
    %v7768 = vsel %vm3945, %v7704, %v7277
    %v7769 = vsel %vm3945, %v7705, %v7279
    %v7770 = vsel %vm3945, %v7706, %v7281
    %v7771 = vsel %vm3945, %v7707, %v7283
    %v7772 = vsel %vm3945, %v7708, %v7285
    %v7773 = vsel %vm3945, %v7709, %v7287
    %v7774 = vsel %vm3945, %v7710, %v7289
    %v7775 = vsel %vm3945, %v7711, %v7291
    %v7776 = vsel %vm3945, %v7712, %v7293
    %v7777 = vsel %vm3945, %v7713, %v7295
    %v7778 = vsel %vm3945, %v7714, %v7297
    %v7779 = vsel %vm3945, %v7715, %v7299
    %v7780 = vsel %vm3945, %v7716, %v7301
    %v7781 = vsel %vm3945, %v7717, %v7303
    %v7782 = vsel %vm3945, %v7718, %v7305
    %v7783 = vsel %vm3945, %v7719, %v7307
    %v7784 = vsel %vm3945, %v7720, %v7309
    %v7785 = vsel %vm3945, %v7721, %v7311
    %v7786 = vsel %vm3945, %v7722, %v7313
    %v7787 = vsel %vm3945, %v7723, %v7315
    %v7788 = vsel %vm3945, %v7724, %v7317
    %v7789 = vsel %vm3945, %v7725, %v7319
    %v7790 = vsel %vm3945, %v7726, %v7321
    %v7791 = vsel %vm3945, %v7727, %v7323
    %v7792 = vsel %vm3945, %v7728, %v7325
    %v7793 = vsel %vm3945, %v7729, %v7327
    %v7794 = vsel %vm3945, %v7730, %v7329
    %v7795 = vsel %vm3945, %v7731, %v7331
    %v7796 = vsel %vm3945, %v7732, %v7333
    %v7797 = vsel %vm3945, %v7733, %v7335
    %v7798 = vsel %vm3945, %v7734, %v7337
    %v7799 = vsel %vm3945, %v7735, %v7339
    %v7800 = vsel %vm3945, %v7736, %v7341
    %v7801 = vsel %vm3945, %v7737, %v7343
    %v7802 = vsel %vm3945, %v7738, %v7345
    %v7803 = vsel %vm3945, %v7739, %v7347
    %v7804 = vsel %vm3945, %v7740, %v7349
    %v7805 = vsel %vm3945, %v7741, %v7351
    %v7806 = vsel %vm3945, %v7742, %v7353
    %v7807 = vsel %vm3945, %v7743, %v7355
    %v7808 = vsel %vm3945, %v7744, %v7357
    %v7809 = vsel %vm3945, %v7745, %v7359
    %v7810 = vsel %vm3945, %v7746, %v7361
    %v7811 = vsel %vm3945, %v7747, %v7363
    %v7812 = vpack.c.bf16 %v7557, %v7556
    %v7813 = vpack.c.bf16 %v7749, %v7748
    %v7814 = vpack.c.bf16 %v5829, %v5828
    %v7815 = vpack.c.bf16 %v7559, %v7558
    %v7816 = vpack.c.bf16 %v7751, %v7750
    %v7817 = vpack.c.bf16 %v5831, %v5830
    %v7818 = vpack.c.bf16 %v7561, %v7560
    %v7819 = vpack.c.bf16 %v7753, %v7752
    %v7820 = vpack.c.bf16 %v5833, %v5832
    %v7821 = vpack.c.bf16 %v7563, %v7562
    %v7822 = vpack.c.bf16 %v7755, %v7754
    %v7823 = vpack.c.bf16 %v5835, %v5834
    %v7824 = vpack.c.bf16 %v7565, %v7564
    %v7825 = vpack.c.bf16 %v7757, %v7756
    %v7826 = vpack.c.bf16 %v5837, %v5836
    %v7827 = vpack.c.bf16 %v7567, %v7566
    %v7828 = vpack.c.bf16 %v7759, %v7758
    %v7829 = vpack.c.bf16 %v5839, %v5838
    %v7830 = vpack.c.bf16 %v7569, %v7568
    %v7831 = vpack.c.bf16 %v7761, %v7760
    %v7832 = vpack.c.bf16 %v5841, %v5840
    %v7833 = vpack.c.bf16 %v7571, %v7570
    %v7834 = vpack.c.bf16 %v7763, %v7762
    %v7835 = vpack.c.bf16 %v5843, %v5842
    %v7836 = vpack.c.bf16 %v7573, %v7572
    %v7837 = vpack.c.bf16 %v7765, %v7764
    %v7838 = vpack.c.bf16 %v5845, %v5844
    %v7839 = vpack.c.bf16 %v7575, %v7574
    %v7840 = vpack.c.bf16 %v7767, %v7766
    %v7841 = vpack.c.bf16 %v5847, %v5846
    %v7842 = vpack.c.bf16 %v7577, %v7576
    %v7843 = vpack.c.bf16 %v7769, %v7768
    %v7844 = vpack.c.bf16 %v5849, %v5848
    %v7845 = vpack.c.bf16 %v7579, %v7578
    %v7846 = vpack.c.bf16 %v7771, %v7770
    %v7847 = vpack.c.bf16 %v5851, %v5850
    %v7848 = vpack.c.bf16 %v7581, %v7580
    %v7849 = vpack.c.bf16 %v7773, %v7772
    %v7850 = vpack.c.bf16 %v5853, %v5852
    %v7851 = vpack.c.bf16 %v7583, %v7582
    %v7852 = vpack.c.bf16 %v7775, %v7774
    %v7853 = vpack.c.bf16 %v5855, %v5854
    %v7854 = vpack.c.bf16 %v7585, %v7584
    %v7855 = vpack.c.bf16 %v7777, %v7776
    %v7856 = vpack.c.bf16 %v5857, %v5856
    %v7857 = vpack.c.bf16 %v7587, %v7586
    %v7858 = vpack.c.bf16 %v7779, %v7778
    %v7859 = vpack.c.bf16 %v5859, %v5858
    %v7860 = vpack.c.bf16 %v7589, %v7588
    %v7861 = vpack.c.bf16 %v7781, %v7780
    %v7862 = vpack.c.bf16 %v5861, %v5860
    %v7863 = vpack.c.bf16 %v7591, %v7590
    %v7864 = vpack.c.bf16 %v7783, %v7782
    %v7865 = vpack.c.bf16 %v5863, %v5862
    %v7866 = vpack.c.bf16 %v7593, %v7592
    %v7867 = vpack.c.bf16 %v7785, %v7784
    %v7868 = vpack.c.bf16 %v5865, %v5864
    %v7869 = vpack.c.bf16 %v7595, %v7594
    %v7870 = vpack.c.bf16 %v7787, %v7786
    %v7871 = vpack.c.bf16 %v5867, %v5866
    %v7872 = vpack.c.bf16 %v7597, %v7596
    %v7873 = vpack.c.bf16 %v7789, %v7788
    %v7874 = vpack.c.bf16 %v5869, %v5868
    %v7875 = vpack.c.bf16 %v7599, %v7598
    %v7876 = vpack.c.bf16 %v7791, %v7790
    %v7877 = vpack.c.bf16 %v5871, %v5870
    %v7878 = vpack.c.bf16 %v7601, %v7600
    %v7879 = vpack.c.bf16 %v7793, %v7792
    %v7880 = vpack.c.bf16 %v5873, %v5872
    %v7881 = vpack.c.bf16 %v7603, %v7602
    %v7882 = vpack.c.bf16 %v7795, %v7794
    %v7883 = vpack.c.bf16 %v5875, %v5874
    %v7884 = vpack.c.bf16 %v7605, %v7604
    %v7885 = vpack.c.bf16 %v7797, %v7796
    %v7886 = vpack.c.bf16 %v5877, %v5876
    %v7887 = vpack.c.bf16 %v7607, %v7606
    %v7888 = vpack.c.bf16 %v7799, %v7798
    %v7889 = vpack.c.bf16 %v5879, %v5878
    %v7890 = vpack.c.bf16 %v7609, %v7608
    %v7891 = vpack.c.bf16 %v7801, %v7800
    %v7892 = vpack.c.bf16 %v5881, %v5880
    %v7893 = vpack.c.bf16 %v7611, %v7610
    %v7894 = vpack.c.bf16 %v7803, %v7802
    %v7895 = vpack.c.bf16 %v5883, %v5882
    %v7896 = vpack.c.bf16 %v7613, %v7612
    %v7897 = vpack.c.bf16 %v7805, %v7804
    %v7898 = vpack.c.bf16 %v5885, %v5884
    %v7899 = vpack.c.bf16 %v7615, %v7614
    %v7900 = vpack.c.bf16 %v7807, %v7806
    %v7901 = vpack.c.bf16 %v5887, %v5886
    %v7902 = vpack.c.bf16 %v7617, %v7616
    %v7903 = vpack.c.bf16 %v7809, %v7808
    %v7904 = vpack.c.bf16 %v5889, %v5888
    %v7905 = vpack.c.bf16 %v7619, %v7618
    %v7906 = vpack.c.bf16 %v7811, %v7810
    %v7907 = vpack.c.bf16 %v5891, %v5890
    %v7908 = vld [vmem:[%s2] sm:$0xf]
    %v7909 = vld [vmem:[%s2 + $0x4] sm:$0xf]
    %v7910 = vld [vmem:[%s2 + $0x8] sm:$0xf]
    %v7911 = vld [vmem:[%s2 + $0xc] sm:$0xf]
    %v7912 = vld [vmem:[%s2 + $0x10] sm:$0xf]
    %v7913 = vld [vmem:[%s2 + $0x14] sm:$0xf]
    %v7914 = vld [vmem:[%s2 + $0x18] sm:$0xf]
    %v7915 = vld [vmem:[%s2 + $0x1c] sm:$0xf]
    %v7916 = vld [vmem:[%s2 + $0x20] sm:$0xf]
    %v7917 = vld [vmem:[%s2 + $0x24] sm:$0xf]
    %v7918 = vld [vmem:[%s2 + $0x28] sm:$0xf]
    %v7919 = vld [vmem:[%s2 + $0x2c] sm:$0xf]
    %v7920 = vld [vmem:[%s2 + $0x30] sm:$0xf]
    %v7921 = vld [vmem:[%s2 + $0x34] sm:$0xf]
    %v7922 = vld [vmem:[%s2 + $0x38] sm:$0xf]
    %v7923 = vld [vmem:[%s2 + $0x3c] sm:$0xf]
    %v7924 = vld [vmem:[%s2 + $0x40] sm:$0xf]
    %v7925 = vld [vmem:[%s2 + $0x44] sm:$0xf]
    %v7926 = vld [vmem:[%s2 + $0x48] sm:$0xf]
    %v7927 = vld [vmem:[%s2 + $0x4c] sm:$0xf]
    %v7928 = vld [vmem:[%s2 + $0x50] sm:$0xf]
    %v7929 = vld [vmem:[%s2 + $0x54] sm:$0xf]
    %v7930 = vld [vmem:[%s2 + $0x58] sm:$0xf]
    %v7931 = vld [vmem:[%s2 + $0x5c] sm:$0xf]
    %v7932 = vld [vmem:[%s2 + $0x60] sm:$0xf]
    %v7933 = vld [vmem:[%s2 + $0x64] sm:$0xf]
    %v7934 = vld [vmem:[%s2 + $0x68] sm:$0xf]
    %v7935 = vld [vmem:[%s2 + $0x6c] sm:$0xf]
    %v7936 = vld [vmem:[%s2 + $0x70] sm:$0xf]
    %v7937 = vld [vmem:[%s2 + $0x74] sm:$0xf]
    %v7938 = vld [vmem:[%s2 + $0x78] sm:$0xf]
    %v7939 = vld [vmem:[%s2 + $0x7c] sm:$0xf]
    %v7940 = vld [vmem:[%s2 + $0x80] sm:$0xf]
    %v7941 = vld [vmem:[%s2 + $0x84] sm:$0xf]
    %v7942 = vld [vmem:[%s2 + $0x88] sm:$0xf]
    %v7943 = vld [vmem:[%s2 + $0x8c] sm:$0xf]
    %v7980 = vunpack.c.l.b16 %v7908
    %v7981 = vunpack.c.l.b16 %v7909
    %v7982 = vunpack.c.l.b16 %v7910
    %v7983 = vunpack.c.l.b16 %v7911
    %v7984 = vunpack.c.l.b16 %v7912
    %v7985 = vunpack.c.l.b16 %v7913
    %v7986 = vunpack.c.l.b16 %v7914
    %v7987 = vunpack.c.l.b16 %v7915
    %v7988 = vunpack.c.l.b16 %v7916
    %v7989 = vunpack.c.l.b16 %v7917
    %v7990 = vunpack.c.l.b16 %v7918
    %v7991 = vunpack.c.l.b16 %v7919
    %v7992 = vunpack.c.l.b16 %v7920
    %v7993 = vunpack.c.l.b16 %v7921
    %v7994 = vunpack.c.l.b16 %v7922
    %v7995 = vunpack.c.l.b16 %v7923
    %v7996 = vunpack.c.l.b16 %v7924
    %v7997 = vunpack.c.l.b16 %v7925
    %v7998 = vunpack.c.l.b16 %v7926
    %v7999 = vunpack.c.l.b16 %v7927
    %v8000 = vunpack.c.l.b16 %v7928
    %v8001 = vunpack.c.l.b16 %v7929
    %v8002 = vunpack.c.l.b16 %v7930
    %v8003 = vunpack.c.l.b16 %v7931
    %v8004 = vunpack.c.l.b16 %v7932
    %v8005 = vunpack.c.l.b16 %v7933
    %v8006 = vunpack.c.l.b16 %v7934
    %v8007 = vunpack.c.l.b16 %v7935
    %v8008 = vunpack.c.l.b16 %v7936
    %v8009 = vunpack.c.l.b16 %v7937
    %v8010 = vunpack.c.l.b16 %v7938
    %v8011 = vunpack.c.l.b16 %v7939
    %v8012 = vunpack.c.l.b16 %v7940
    %v8013 = vunpack.c.l.b16 %v7941
    %v8014 = vunpack.c.l.b16 %v7942
    %v8015 = vunpack.c.l.b16 %v7943
    %v8016 = vpack.c.b16 %v7981, %v7980
    %v8017 = vpack.c.b16 %v7983, %v7982
    %v8018 = vpack.c.b16 %v7985, %v7984
    %v8019 = vpack.c.b16 %v7987, %v7986
    %v8020 = vpack.c.b16 %v7989, %v7988
    %v8021 = vpack.c.b16 %v7991, %v7990
    %v8022 = vpack.c.b16 %v7993, %v7992
    %v8023 = vpack.c.b16 %v7995, %v7994
    %v8024 = vpack.c.b16 %v7997, %v7996
    %v8025 = vpack.c.b16 %v7999, %v7998
    %v8026 = vpack.c.b16 %v8001, %v8000
    %v8027 = vpack.c.b16 %v8003, %v8002
    %v8028 = vpack.c.b16 %v8005, %v8004
    %v8029 = vpack.c.b16 %v8007, %v8006
    %v8030 = vpack.c.b16 %v8009, %v8008
    %v8031 = vpack.c.b16 %v8011, %v8010
    %v8032 = vpack.c.b16 %v8013, %v8012
    %v8033 = vpack.c.b16 %v8015, %v8014
    %v8053 = vsel %vm773, %v7814, 0
    %v8056 = vsel %vm773, %v7817, 0
    %v8059 = vsel %vm773, %v7820, 0
    %v8062 = vsel %vm773, %v7823, 0
    %v8065 = vsel %vm773, %v7826, 0
    %v8068 = vsel %vm773, %v7829, 0
    %v8071 = vsel %vm773, %v7832, 0
    %v8074 = vsel %vm773, %v7835, 0
    %v8077 = vsel %vm773, %v7838, 0
    %v8080 = vsel %vm773, %v7841, 0
    %v8083 = vsel %vm773, %v7844, 0
    %v8086 = vsel %vm773, %v7847, 0
    %v8089 = vsel %vm773, %v7850, 0
    %v8092 = vsel %vm773, %v7853, 0
    %v8095 = vsel %vm773, %v7856, 0
    %v8098 = vsel %vm773, %v7859, 0
    %v8101 = vsel %vm773, %v7862, 0
    %v8104 = vsel %vm773, %v7865, 0
    %v8107 = vsel %vm773, %v7868, 0
    %v8110 = vsel %vm773, %v7871, 0
    %v8113 = vsel %vm773, %v7874, 0
    %v8116 = vsel %vm773, %v7877, 0
    %v8119 = vsel %vm773, %v7880, 0
    %v8122 = vsel %vm773, %v7883, 0
    %v8125 = vsel %vm773, %v7886, 0
    %v8128 = vsel %vm773, %v7889, 0
    %v8131 = vsel %vm773, %v7892, 0
    %v8134 = vsel %vm773, %v7895, 0
    %v8137 = vsel %vm773, %v7898, 0
    %v8140 = vsel %vm773, %v7901, 0
    %v8143 = vsel %vm773, %v7904, 0
    %v8146 = vsel %vm773, %v7907, 0
    %8148 = vmatprep.subr.bf16.mxu0 0
    %8149 = vmatpush1.bf16.msra.mxu0 %v8016
    %8150 = vmatprep.subr.bf16.mxu0 0
    %8151 = vmatpush1.bf16.msra.mxu0 %v8017
    %8152 = vmatprep.subr.bf16.mxu0 0
    %8153 = vmatpush1.bf16.msra.mxu0 %v8018
    %8154 = vmatprep.subr.bf16.mxu0 0
    %8155 = vmatpush1.bf16.msra.mxu0 %v8019
    %8156 = vmatprep.subr.bf16.mxu0 0
    %8157 = vmatpush1.bf16.msra.mxu0 %v8020
    %8158 = vmatprep.subr.bf16.mxu0 0
    %8159 = vmatpush1.bf16.msra.mxu0 %v8021
    %8160 = vmatprep.subr.bf16.mxu0 0
    %8161 = vmatpush1.bf16.msra.mxu0 %v8022
    %8162 = vmatprep.subr.bf16.mxu0 0
    %8163 = vmatpush1.bf16.msra.mxu0 %v8023
    %8164 = vmatprep.subr.bf16.mxu0 0
    %8165 = vmatpush1.bf16.msra.mxu0 %v8024
    %8166 = vmatprep.subr.bf16.mxu0 0
    %8167 = vmatpush1.bf16.msra.mxu0 %v8025
    %8168 = vmatprep.subr.bf16.mxu0 0
    %8169 = vmatpush1.bf16.msra.mxu0 %v8026
    %8170 = vmatprep.subr.bf16.mxu0 0
    %8171 = vmatpush1.bf16.msra.mxu0 %v8027
    %8172 = vmatprep.subr.bf16.mxu0 0
    %8173 = vmatpush1.bf16.msra.mxu0 %v8028
    %8174 = vmatprep.subr.bf16.mxu0 0
    %8175 = vmatpush1.bf16.msra.mxu0 %v8029
    %8176 = vmatprep.subr.bf16.mxu0 0
    %8177 = vmatpush1.bf16.msra.mxu0 %v8030
    %8178 = vmatprep.subr.bf16.mxu0 0
    %8179 = vmatpush1.bf16.msra.mxu0 %v8031
    %8180 = vmatprep.mubr.bf16.mxu0 %v7813
    %8181 = vmatmul.mubr.bf16.gmra.mrb[0].mxu0 %v7812
    %v8182 = vpop.f32.mrb[0].mxu0
    %v8183 = vadd.f32 0.0, %v8182
    %v8184 = vpop.f32.mrb[0].mxu0
    %v8185 = vpop.f32.mrb[0].mxu0
    %v8186 = vadd.f32 0.0, %v8185
    %v8187 = vpop.f32.mrb[0].mxu0
    %8188 = vmatprep.mubr.bf16.mxu0 %v7816
    %8189 = vmatmul.mubr.bf16.gmra.mrb[0].mxu0 %v7815
    %v8190 = vpop.f32.mrb[0].mxu0
    %v8191 = vadd.f32 0.0, %v8190
    %v8192 = vpop.f32.mrb[0].mxu0
    %v8193 = vpop.f32.mrb[0].mxu0
    %v8194 = vadd.f32 0.0, %v8193
    %v8195 = vpop.f32.mrb[0].mxu0
    %8196 = vmatprep.mubr.bf16.mxu0 %v7819
    %8197 = vmatmul.mubr.bf16.gmra.mrb[0].mxu0 %v7818
    %v8198 = vpop.f32.mrb[0].mxu0
    %v8199 = vadd.f32 0.0, %v8198
    %v8200 = vpop.f32.mrb[0].mxu0
    %v8201 = vpop.f32.mrb[0].mxu0
    %v8202 = vadd.f32 0.0, %v8201
    %v8203 = vpop.f32.mrb[0].mxu0
    %8204 = vmatprep.mubr.bf16.mxu0 %v7822
    %8205 = vmatmul.mubr.bf16.gmra.mrb[0].mxu0 %v7821
    %v8206 = vpop.f32.mrb[0].mxu0
    %v8207 = vadd.f32 0.0, %v8206
    %v8208 = vpop.f32.mrb[0].mxu0
    %v8209 = vpop.f32.mrb[0].mxu0
    %v8210 = vadd.f32 0.0, %v8209
    %v8211 = vpop.f32.mrb[0].mxu0
    %8212 = vmatprep.mubr.bf16.mxu0 %v7825
    %8213 = vmatmul.mubr.bf16.gmra.mrb[0].mxu0 %v7824
    %v8214 = vpop.f32.mrb[0].mxu0
    %v8215 = vadd.f32 0.0, %v8214
    %v8216 = vpop.f32.mrb[0].mxu0
    %v8217 = vpop.f32.mrb[0].mxu0
    %v8218 = vadd.f32 0.0, %v8217
    %v8219 = vpop.f32.mrb[0].mxu0
    %8220 = vmatprep.mubr.bf16.mxu0 %v7828
    %8221 = vmatmul.mubr.bf16.gmra.mrb[0].mxu0 %v7827
    %v8222 = vpop.f32.mrb[0].mxu0
    %v8223 = vadd.f32 0.0, %v8222
    %v8224 = vpop.f32.mrb[0].mxu0
    %v8225 = vpop.f32.mrb[0].mxu0
    %v8226 = vadd.f32 0.0, %v8225
    %v8227 = vpop.f32.mrb[0].mxu0
    %8228 = vmatprep.mubr.bf16.mxu0 %v7831
    %8229 = vmatmul.mubr.bf16.gmra.mrb[0].mxu0 %v7830
    %v8230 = vpop.f32.mrb[0].mxu0
    %v8231 = vadd.f32 0.0, %v8230
    %v8232 = vpop.f32.mrb[0].mxu0
    %v8233 = vpop.f32.mrb[0].mxu0
    %v8234 = vadd.f32 0.0, %v8233
    %v8235 = vpop.f32.mrb[0].mxu0
    %8236 = vmatprep.mubr.bf16.mxu0 %v7834
    %8237 = vmatmul.mubr.bf16.gmra.mrb[0].mxu0 %v7833
    %v8238 = vpop.f32.mrb[0].mxu0
    %v8239 = vadd.f32 0.0, %v8238
    %v8240 = vpop.f32.mrb[0].mxu0
    %v8241 = vpop.f32.mrb[0].mxu0
    %v8242 = vadd.f32 0.0, %v8241
    %v8243 = vpop.f32.mrb[0].mxu0
    %8244 = vmatprep.mubr.bf16.mxu0 %v7837
    %8245 = vmatmul.mubr.bf16.gmra.mrb[0].mxu0 %v7836
    %v8246 = vpop.f32.mrb[0].mxu0
    %v8247 = vadd.f32 0.0, %v8246
    %v8248 = vpop.f32.mrb[0].mxu0
    %v8249 = vpop.f32.mrb[0].mxu0
    %v8250 = vadd.f32 0.0, %v8249
    %v8251 = vpop.f32.mrb[0].mxu0
    %8252 = vmatprep.mubr.bf16.mxu0 %v7840
    %8253 = vmatmul.mubr.bf16.gmra.mrb[0].mxu0 %v7839
    %v8254 = vpop.f32.mrb[0].mxu0
    %v8255 = vadd.f32 0.0, %v8254
    %v8256 = vpop.f32.mrb[0].mxu0
    %v8257 = vpop.f32.mrb[0].mxu0
    %v8258 = vadd.f32 0.0, %v8257
    %v8259 = vpop.f32.mrb[0].mxu0
    %8260 = vmatprep.mubr.bf16.mxu0 %v7843
    %8261 = vmatmul.mubr.bf16.gmra.mrb[0].mxu0 %v7842
    %v8262 = vpop.f32.mrb[0].mxu0
    %v8263 = vadd.f32 0.0, %v8262
    %v8264 = vpop.f32.mrb[0].mxu0
    %v8265 = vpop.f32.mrb[0].mxu0
    %v8266 = vadd.f32 0.0, %v8265
    %v8267 = vpop.f32.mrb[0].mxu0
    %8268 = vmatprep.mubr.bf16.mxu0 %v7846
    %8269 = vmatmul.mubr.bf16.gmra.mrb[0].mxu0 %v7845
    %v8270 = vpop.f32.mrb[0].mxu0
    %v8271 = vadd.f32 0.0, %v8270
    %v8272 = vpop.f32.mrb[0].mxu0
    %v8273 = vpop.f32.mrb[0].mxu0
    %v8274 = vadd.f32 0.0, %v8273
    %v8275 = vpop.f32.mrb[0].mxu0
    %8276 = vmatprep.mubr.bf16.mxu0 %v7849
    %8277 = vmatmul.mubr.bf16.gmra.mrb[0].mxu0 %v7848
    %v8278 = vpop.f32.mrb[0].mxu0
    %v8279 = vadd.f32 0.0, %v8278
    %v8280 = vpop.f32.mrb[0].mxu0
    %v8281 = vpop.f32.mrb[0].mxu0
    %v8282 = vadd.f32 0.0, %v8281
    %v8283 = vpop.f32.mrb[0].mxu0
    %8284 = vmatprep.mubr.bf16.mxu0 %v7852
    %8285 = vmatmul.mubr.bf16.gmra.mrb[0].mxu0 %v7851
    %v8286 = vpop.f32.mrb[0].mxu0
    %v8287 = vadd.f32 0.0, %v8286
    %v8288 = vpop.f32.mrb[0].mxu0
    %v8289 = vpop.f32.mrb[0].mxu0
    %v8290 = vadd.f32 0.0, %v8289
    %v8291 = vpop.f32.mrb[0].mxu0
    %8292 = vmatprep.mubr.bf16.mxu0 %v7855
    %8293 = vmatmul.mubr.bf16.gmra.mrb[0].mxu0 %v7854
    %v8294 = vpop.f32.mrb[0].mxu0
    %v8295 = vadd.f32 0.0, %v8294
    %v8296 = vpop.f32.mrb[0].mxu0
    %v8297 = vpop.f32.mrb[0].mxu0
    %v8298 = vadd.f32 0.0, %v8297
    %v8299 = vpop.f32.mrb[0].mxu0
    %8300 = vmatprep.mubr.bf16.mxu0 %v7858
    %8301 = vmatmul.mubr.bf16.gmra.mrb[0].mxu0 %v7857
    %v8302 = vpop.f32.mrb[0].mxu0
    %v8303 = vadd.f32 0.0, %v8302
    %v8304 = vpop.f32.mrb[0].mxu0
    %v8305 = vpop.f32.mrb[0].mxu0
    %v8306 = vadd.f32 0.0, %v8305
    %v8307 = vpop.f32.mrb[0].mxu0
    %8308 = vmatprep.mubr.bf16.mxu0 %v7861
    %8309 = vmatmul.mubr.bf16.gmra.mrb[0].mxu0 %v7860
    %v8310 = vpop.f32.mrb[0].mxu0
    %v8311 = vadd.f32 0.0, %v8310
    %v8312 = vpop.f32.mrb[0].mxu0
    %v8313 = vpop.f32.mrb[0].mxu0
    %v8314 = vadd.f32 0.0, %v8313
    %v8315 = vpop.f32.mrb[0].mxu0
    %8316 = vmatprep.mubr.bf16.mxu0 %v7864
    %8317 = vmatmul.mubr.bf16.gmra.mrb[0].mxu0 %v7863
    %v8318 = vpop.f32.mrb[0].mxu0
    %v8319 = vadd.f32 0.0, %v8318
    %v8320 = vpop.f32.mrb[0].mxu0
    %v8321 = vpop.f32.mrb[0].mxu0
    %v8322 = vadd.f32 0.0, %v8321
    %v8323 = vpop.f32.mrb[0].mxu0
    %8324 = vmatprep.mubr.bf16.mxu0 %v7867
    %8325 = vmatmul.mubr.bf16.gmra.mrb[0].mxu0 %v7866
    %v8326 = vpop.f32.mrb[0].mxu0
    %v8327 = vadd.f32 0.0, %v8326
    %v8328 = vpop.f32.mrb[0].mxu0
    %v8329 = vpop.f32.mrb[0].mxu0
    %v8330 = vadd.f32 0.0, %v8329
    %v8331 = vpop.f32.mrb[0].mxu0
    %8332 = vmatprep.mubr.bf16.mxu0 %v7870
    %8333 = vmatmul.mubr.bf16.gmra.mrb[0].mxu0 %v7869
    %v8334 = vpop.f32.mrb[0].mxu0
    %v8335 = vadd.f32 0.0, %v8334
    %v8336 = vpop.f32.mrb[0].mxu0
    %v8337 = vpop.f32.mrb[0].mxu0
    %v8338 = vadd.f32 0.0, %v8337
    %v8339 = vpop.f32.mrb[0].mxu0
    %8340 = vmatprep.mubr.bf16.mxu0 %v7873
    %8341 = vmatmul.mubr.bf16.gmra.mrb[0].mxu0 %v7872
    %v8342 = vpop.f32.mrb[0].mxu0
    %v8343 = vadd.f32 0.0, %v8342
    %v8344 = vpop.f32.mrb[0].mxu0
    %v8345 = vpop.f32.mrb[0].mxu0
    %v8346 = vadd.f32 0.0, %v8345
    %v8347 = vpop.f32.mrb[0].mxu0
    %8348 = vmatprep.mubr.bf16.mxu0 %v7876
    %8349 = vmatmul.mubr.bf16.gmra.mrb[0].mxu0 %v7875
    %v8350 = vpop.f32.mrb[0].mxu0
    %v8351 = vadd.f32 0.0, %v8350
    %v8352 = vpop.f32.mrb[0].mxu0
    %v8353 = vpop.f32.mrb[0].mxu0
    %v8354 = vadd.f32 0.0, %v8353
    %v8355 = vpop.f32.mrb[0].mxu0
    %8356 = vmatprep.mubr.bf16.mxu0 %v7879
    %8357 = vmatmul.mubr.bf16.gmra.mrb[0].mxu0 %v7878
    %v8358 = vpop.f32.mrb[0].mxu0
    %v8359 = vadd.f32 0.0, %v8358
    %v8360 = vpop.f32.mrb[0].mxu0
    %v8361 = vpop.f32.mrb[0].mxu0
    %v8362 = vadd.f32 0.0, %v8361
    %v8363 = vpop.f32.mrb[0].mxu0
    %8364 = vmatprep.mubr.bf16.mxu0 %v7882
    %8365 = vmatmul.mubr.bf16.gmra.mrb[0].mxu0 %v7881
    %v8366 = vpop.f32.mrb[0].mxu0
    %v8367 = vadd.f32 0.0, %v8366
    %v8368 = vpop.f32.mrb[0].mxu0
    %v8369 = vpop.f32.mrb[0].mxu0
    %v8370 = vadd.f32 0.0, %v8369
    %v8371 = vpop.f32.mrb[0].mxu0
    %8372 = vmatprep.mubr.bf16.mxu0 %v7885
    %8373 = vmatmul.mubr.bf16.gmra.mrb[0].mxu0 %v7884
    %v8374 = vpop.f32.mrb[0].mxu0
    %v8375 = vadd.f32 0.0, %v8374
    %v8376 = vpop.f32.mrb[0].mxu0
    %v8377 = vpop.f32.mrb[0].mxu0
    %v8378 = vadd.f32 0.0, %v8377
    %v8379 = vpop.f32.mrb[0].mxu0
    %8380 = vmatprep.mubr.bf16.mxu0 %v7888
    %8381 = vmatmul.mubr.bf16.gmra.mrb[0].mxu0 %v7887
    %v8382 = vpop.f32.mrb[0].mxu0
    %v8383 = vadd.f32 0.0, %v8382
    %v8384 = vpop.f32.mrb[0].mxu0
    %v8385 = vpop.f32.mrb[0].mxu0
    %v8386 = vadd.f32 0.0, %v8385
    %v8387 = vpop.f32.mrb[0].mxu0
    %8388 = vmatprep.mubr.bf16.mxu0 %v7891
    %8389 = vmatmul.mubr.bf16.gmra.mrb[0].mxu0 %v7890
    %v8390 = vpop.f32.mrb[0].mxu0
    %v8391 = vadd.f32 0.0, %v8390
    %v8392 = vpop.f32.mrb[0].mxu0
    %v8393 = vpop.f32.mrb[0].mxu0
    %v8394 = vadd.f32 0.0, %v8393
    %v8395 = vpop.f32.mrb[0].mxu0
    %8396 = vmatprep.mubr.bf16.mxu0 %v7894
    %8397 = vmatmul.mubr.bf16.gmra.mrb[0].mxu0 %v7893
    %v8398 = vpop.f32.mrb[0].mxu0
    %v8399 = vadd.f32 0.0, %v8398
    %v8400 = vpop.f32.mrb[0].mxu0
    %v8401 = vpop.f32.mrb[0].mxu0
    %v8402 = vadd.f32 0.0, %v8401
    %v8403 = vpop.f32.mrb[0].mxu0
    %8404 = vmatprep.mubr.bf16.mxu0 %v7897
    %8405 = vmatmul.mubr.bf16.gmra.mrb[0].mxu0 %v7896
    %v8406 = vpop.f32.mrb[0].mxu0
    %v8407 = vadd.f32 0.0, %v8406
    %v8408 = vpop.f32.mrb[0].mxu0
    %v8409 = vpop.f32.mrb[0].mxu0
    %v8410 = vadd.f32 0.0, %v8409
    %v8411 = vpop.f32.mrb[0].mxu0
    %8412 = vmatprep.mubr.bf16.mxu0 %v7900
    %8413 = vmatmul.mubr.bf16.gmra.mrb[0].mxu0 %v7899
    %v8414 = vpop.f32.mrb[0].mxu0
    %v8415 = vadd.f32 0.0, %v8414
    %v8416 = vpop.f32.mrb[0].mxu0
    %v8417 = vpop.f32.mrb[0].mxu0
    %v8418 = vadd.f32 0.0, %v8417
    %v8419 = vpop.f32.mrb[0].mxu0
    %8420 = vmatprep.mubr.bf16.mxu0 %v7903
    %8421 = vmatmul.mubr.bf16.gmra.mrb[0].mxu0 %v7902
    %v8422 = vpop.f32.mrb[0].mxu0
    %v8423 = vadd.f32 0.0, %v8422
    %v8424 = vpop.f32.mrb[0].mxu0
    %v8425 = vpop.f32.mrb[0].mxu0
    %v8426 = vadd.f32 0.0, %v8425
    %v8427 = vpop.f32.mrb[0].mxu0
    %8428 = vmatprep.mubr.bf16.mxu0 %v7906
    %8429 = vmatmul.mubr.bf16.gmra.mrb[0].mxu0 %v7905
    %v8430 = vpop.f32.mrb[0].mxu0
    %v8431 = vadd.f32 0.0, %v8430
    %v8432 = vpop.f32.mrb[0].mxu0
    %v8433 = vpop.f32.mrb[0].mxu0
    %v8434 = vadd.f32 0.0, %v8433
    %v8435 = vpop.f32.mrb[0].mxu0
    %8436 = vdwg.mxu0
    %8437 = vmatprep.subr.bf16.mxu0 0
    %8438 = vmatpush1.bf16.msra.mxu0 %v8032
    %8439 = vmatprep.subr.bf16.mxu0 0
    %8440 = vmatpush1.bf16.msra.mxu0 %v8033
    %8441 = vmatprep.subr.bf16.mxu0 0
    %8442 = vmatpush1.bf16.msra.mxu0 0
    %8443 = vmatprep.subr.bf16.mxu0 0
    %8444 = vmatpush1.bf16.msra.mxu0 0
    %8445 = vmatprep.subr.bf16.mxu0 0
    %8446 = vmatpush1.bf16.msra.mxu0 0
    %8447 = vmatprep.subr.bf16.mxu0 0
    %8448 = vmatpush1.bf16.msra.mxu0 0
    %8449 = vmatprep.subr.bf16.mxu0 0
    %8450 = vmatpush1.bf16.msra.mxu0 0
    %8451 = vmatprep.subr.bf16.mxu0 0
    %8452 = vmatpush1.bf16.msra.mxu0 0
    %8453 = vmatprep.subr.bf16.mxu0 0
    %8454 = vmatpush1.bf16.msra.mxu0 0
    %8455 = vmatprep.subr.bf16.mxu0 0
    %8456 = vmatpush1.bf16.msra.mxu0 0
    %8457 = vmatprep.subr.bf16.mxu0 0
    %8458 = vmatpush1.bf16.msra.mxu0 0
    %8459 = vmatprep.subr.bf16.mxu0 0
    %8460 = vmatpush1.bf16.msra.mxu0 0
    %8461 = vmatprep.subr.bf16.mxu0 0
    %8462 = vmatpush1.bf16.msra.mxu0 0
    %8463 = vmatprep.subr.bf16.mxu0 0
    %8464 = vmatpush1.bf16.msra.mxu0 0
    %8465 = vmatprep.subr.bf16.mxu0 0
    %8466 = vmatpush1.bf16.msra.mxu0 0
    %8467 = vmatprep.subr.bf16.mxu0 0
    %8468 = vmatpush1.bf16.msra.mxu0 0
    %8469 = vmatprep.mubr.bf16.mxu0 0
    %8470 = vmatmul.mubr.bf16.gmra.mrb[0].mxu0 %v8053
    %v8471 = vpop.f32.mrb[0].mxu0
    %v8472 = vadd.f32 %v8183, %v8471
    %v8473 = vpop.f32.mrb[0].mxu0
    %v8474 = vpop.f32.mrb[0].mxu0
    %v8475 = vadd.f32 %v8186, %v8474
    %v8476 = vpop.f32.mrb[0].mxu0
    %8477 = vmatprep.mubr.bf16.mxu0 0
    %8478 = vmatmul.mubr.bf16.gmra.mrb[0].mxu0 %v8056
    %v8479 = vpop.f32.mrb[0].mxu0
    %v8480 = vadd.f32 %v8191, %v8479
    %v8481 = vpop.f32.mrb[0].mxu0
    %v8482 = vpop.f32.mrb[0].mxu0
    %v8483 = vadd.f32 %v8194, %v8482
    %v8484 = vpop.f32.mrb[0].mxu0
    %8485 = vmatprep.mubr.bf16.mxu0 0
    %8486 = vmatmul.mubr.bf16.gmra.mrb[0].mxu0 %v8059
    %v8487 = vpop.f32.mrb[0].mxu0
    %v8488 = vadd.f32 %v8199, %v8487
    %v8489 = vpop.f32.mrb[0].mxu0
    %v8490 = vpop.f32.mrb[0].mxu0
    %v8491 = vadd.f32 %v8202, %v8490
    %v8492 = vpop.f32.mrb[0].mxu0
    %8493 = vmatprep.mubr.bf16.mxu0 0
    %8494 = vmatmul.mubr.bf16.gmra.mrb[0].mxu0 %v8062
    %v8495 = vpop.f32.mrb[0].mxu0
    %v8496 = vadd.f32 %v8207, %v8495
    %v8497 = vpop.f32.mrb[0].mxu0
    %v8498 = vpop.f32.mrb[0].mxu0
    %v8499 = vadd.f32 %v8210, %v8498
    %v8500 = vpop.f32.mrb[0].mxu0
    %8501 = vmatprep.mubr.bf16.mxu0 0
    %8502 = vmatmul.mubr.bf16.gmra.mrb[0].mxu0 %v8065
    %v8503 = vpop.f32.mrb[0].mxu0
    %v8504 = vadd.f32 %v8215, %v8503
    %v8505 = vpop.f32.mrb[0].mxu0
    %v8506 = vpop.f32.mrb[0].mxu0
    %v8507 = vadd.f32 %v8218, %v8506
    %v8508 = vpop.f32.mrb[0].mxu0
    %8509 = vmatprep.mubr.bf16.mxu0 0
    %8510 = vmatmul.mubr.bf16.gmra.mrb[0].mxu0 %v8068
    %v8511 = vpop.f32.mrb[0].mxu0
    %v8512 = vadd.f32 %v8223, %v8511
    %v8513 = vpop.f32.mrb[0].mxu0
    %v8514 = vpop.f32.mrb[0].mxu0
    %v8515 = vadd.f32 %v8226, %v8514
    %v8516 = vpop.f32.mrb[0].mxu0
    %8517 = vmatprep.mubr.bf16.mxu0 0
    %8518 = vmatmul.mubr.bf16.gmra.mrb[0].mxu0 %v8071
    %v8519 = vpop.f32.mrb[0].mxu0
    %v8520 = vadd.f32 %v8231, %v8519
    %v8521 = vpop.f32.mrb[0].mxu0
    %v8522 = vpop.f32.mrb[0].mxu0
    %v8523 = vadd.f32 %v8234, %v8522
    %v8524 = vpop.f32.mrb[0].mxu0
    %8525 = vmatprep.mubr.bf16.mxu0 0
    %8526 = vmatmul.mubr.bf16.gmra.mrb[0].mxu0 %v8074
    %v8527 = vpop.f32.mrb[0].mxu0
    %v8528 = vadd.f32 %v8239, %v8527
    %v8529 = vpop.f32.mrb[0].mxu0
    %v8530 = vpop.f32.mrb[0].mxu0
    %v8531 = vadd.f32 %v8242, %v8530
    %v8532 = vpop.f32.mrb[0].mxu0
    %8533 = vmatprep.mubr.bf16.mxu0 0
    %8534 = vmatmul.mubr.bf16.gmra.mrb[0].mxu0 %v8077
    %v8535 = vpop.f32.mrb[0].mxu0
    %v8536 = vadd.f32 %v8247, %v8535
    %v8537 = vpop.f32.mrb[0].mxu0
    %v8538 = vpop.f32.mrb[0].mxu0
    %v8539 = vadd.f32 %v8250, %v8538
    %v8540 = vpop.f32.mrb[0].mxu0
    %8541 = vmatprep.mubr.bf16.mxu0 0
    %8542 = vmatmul.mubr.bf16.gmra.mrb[0].mxu0 %v8080
    %v8543 = vpop.f32.mrb[0].mxu0
    %v8544 = vadd.f32 %v8255, %v8543
    %v8545 = vpop.f32.mrb[0].mxu0
    %v8546 = vpop.f32.mrb[0].mxu0
    %v8547 = vadd.f32 %v8258, %v8546
    %v8548 = vpop.f32.mrb[0].mxu0
    %8549 = vmatprep.mubr.bf16.mxu0 0
    %8550 = vmatmul.mubr.bf16.gmra.mrb[0].mxu0 %v8083
    %v8551 = vpop.f32.mrb[0].mxu0
    %v8552 = vadd.f32 %v8263, %v8551
    %v8553 = vpop.f32.mrb[0].mxu0
    %v8554 = vpop.f32.mrb[0].mxu0
    %v8555 = vadd.f32 %v8266, %v8554
    %v8556 = vpop.f32.mrb[0].mxu0
    %8557 = vmatprep.mubr.bf16.mxu0 0
    %8558 = vmatmul.mubr.bf16.gmra.mrb[0].mxu0 %v8086
    %v8559 = vpop.f32.mrb[0].mxu0
    %v8560 = vadd.f32 %v8271, %v8559
    %v8561 = vpop.f32.mrb[0].mxu0
    %v8562 = vpop.f32.mrb[0].mxu0
    %v8563 = vadd.f32 %v8274, %v8562
    %v8564 = vpop.f32.mrb[0].mxu0
    %8565 = vmatprep.mubr.bf16.mxu0 0
    %8566 = vmatmul.mubr.bf16.gmra.mrb[0].mxu0 %v8089
    %v8567 = vpop.f32.mrb[0].mxu0
    %v8568 = vadd.f32 %v8279, %v8567
    %v8569 = vpop.f32.mrb[0].mxu0
    %v8570 = vpop.f32.mrb[0].mxu0
    %v8571 = vadd.f32 %v8282, %v8570
    %v8572 = vpop.f32.mrb[0].mxu0
    %8573 = vmatprep.mubr.bf16.mxu0 0
    %8574 = vmatmul.mubr.bf16.gmra.mrb[0].mxu0 %v8092
    %v8575 = vpop.f32.mrb[0].mxu0
    %v8576 = vadd.f32 %v8287, %v8575
    %v8577 = vpop.f32.mrb[0].mxu0
    %v8578 = vpop.f32.mrb[0].mxu0
    %v8579 = vadd.f32 %v8290, %v8578
    %v8580 = vpop.f32.mrb[0].mxu0
    %8581 = vmatprep.mubr.bf16.mxu0 0
    %8582 = vmatmul.mubr.bf16.gmra.mrb[0].mxu0 %v8095
    %v8583 = vpop.f32.mrb[0].mxu0
    %v8584 = vadd.f32 %v8295, %v8583
    %v8585 = vpop.f32.mrb[0].mxu0
    %v8586 = vpop.f32.mrb[0].mxu0
    %v8587 = vadd.f32 %v8298, %v8586
    %v8588 = vpop.f32.mrb[0].mxu0
    %8589 = vmatprep.mubr.bf16.mxu0 0
    %8590 = vmatmul.mubr.bf16.gmra.mrb[0].mxu0 %v8098
    %v8591 = vpop.f32.mrb[0].mxu0
    %v8592 = vadd.f32 %v8303, %v8591
    %v8593 = vpop.f32.mrb[0].mxu0
    %v8594 = vpop.f32.mrb[0].mxu0
    %v8595 = vadd.f32 %v8306, %v8594
    %v8596 = vpop.f32.mrb[0].mxu0
    %8597 = vmatprep.mubr.bf16.mxu0 0
    %8598 = vmatmul.mubr.bf16.gmra.mrb[0].mxu0 %v8101
    %v8599 = vpop.f32.mrb[0].mxu0
    %v8600 = vadd.f32 %v8311, %v8599
    %v8601 = vpop.f32.mrb[0].mxu0
    %v8602 = vpop.f32.mrb[0].mxu0
    %v8603 = vadd.f32 %v8314, %v8602
    %v8604 = vpop.f32.mrb[0].mxu0
    %8605 = vmatprep.mubr.bf16.mxu0 0
    %8606 = vmatmul.mubr.bf16.gmra.mrb[0].mxu0 %v8104
    %v8607 = vpop.f32.mrb[0].mxu0
    %v8608 = vadd.f32 %v8319, %v8607
    %v8609 = vpop.f32.mrb[0].mxu0
    %v8610 = vpop.f32.mrb[0].mxu0
    %v8611 = vadd.f32 %v8322, %v8610
    %v8612 = vpop.f32.mrb[0].mxu0
    %8613 = vmatprep.mubr.bf16.mxu0 0
    %8614 = vmatmul.mubr.bf16.gmra.mrb[0].mxu0 %v8107
    %v8615 = vpop.f32.mrb[0].mxu0
    %v8616 = vadd.f32 %v8327, %v8615
    %v8617 = vpop.f32.mrb[0].mxu0
    %v8618 = vpop.f32.mrb[0].mxu0
    %v8619 = vadd.f32 %v8330, %v8618
    %v8620 = vpop.f32.mrb[0].mxu0
    %8621 = vmatprep.mubr.bf16.mxu0 0
    %8622 = vmatmul.mubr.bf16.gmra.mrb[0].mxu0 %v8110
    %v8623 = vpop.f32.mrb[0].mxu0
    %v8624 = vadd.f32 %v8335, %v8623
    %v8625 = vpop.f32.mrb[0].mxu0
    %v8626 = vpop.f32.mrb[0].mxu0
    %v8627 = vadd.f32 %v8338, %v8626
    %v8628 = vpop.f32.mrb[0].mxu0
    %8629 = vmatprep.mubr.bf16.mxu0 0
    %8630 = vmatmul.mubr.bf16.gmra.mrb[0].mxu0 %v8113
    %v8631 = vpop.f32.mrb[0].mxu0
    %v8632 = vadd.f32 %v8343, %v8631
    %v8633 = vpop.f32.mrb[0].mxu0
    %v8634 = vpop.f32.mrb[0].mxu0
    %v8635 = vadd.f32 %v8346, %v8634
    %v8636 = vpop.f32.mrb[0].mxu0
    %8637 = vmatprep.mubr.bf16.mxu0 0
    %8638 = vmatmul.mubr.bf16.gmra.mrb[0].mxu0 %v8116
    %v8639 = vpop.f32.mrb[0].mxu0
    %v8640 = vadd.f32 %v8351, %v8639
    %v8641 = vpop.f32.mrb[0].mxu0
    %v8642 = vpop.f32.mrb[0].mxu0
    %v8643 = vadd.f32 %v8354, %v8642
    %v8644 = vpop.f32.mrb[0].mxu0
    %8645 = vmatprep.mubr.bf16.mxu0 0
    %8646 = vmatmul.mubr.bf16.gmra.mrb[0].mxu0 %v8119
    %v8647 = vpop.f32.mrb[0].mxu0
    %v8648 = vadd.f32 %v8359, %v8647
    %v8649 = vpop.f32.mrb[0].mxu0
    %v8650 = vpop.f32.mrb[0].mxu0
    %v8651 = vadd.f32 %v8362, %v8650
    %v8652 = vpop.f32.mrb[0].mxu0
    %8653 = vmatprep.mubr.bf16.mxu0 0
    %8654 = vmatmul.mubr.bf16.gmra.mrb[0].mxu0 %v8122
    %v8655 = vpop.f32.mrb[0].mxu0
    %v8656 = vadd.f32 %v8367, %v8655
    %v8657 = vpop.f32.mrb[0].mxu0
    %v8658 = vpop.f32.mrb[0].mxu0
    %v8659 = vadd.f32 %v8370, %v8658
    %v8660 = vpop.f32.mrb[0].mxu0
    %8661 = vmatprep.mubr.bf16.mxu0 0
    %8662 = vmatmul.mubr.bf16.gmra.mrb[0].mxu0 %v8125
    %v8663 = vpop.f32.mrb[0].mxu0
    %v8664 = vadd.f32 %v8375, %v8663
    %v8665 = vpop.f32.mrb[0].mxu0
    %v8666 = vpop.f32.mrb[0].mxu0
    %v8667 = vadd.f32 %v8378, %v8666
    %v8668 = vpop.f32.mrb[0].mxu0
    %8669 = vmatprep.mubr.bf16.mxu0 0
    %8670 = vmatmul.mubr.bf16.gmra.mrb[0].mxu0 %v8128
    %v8671 = vpop.f32.mrb[0].mxu0
    %v8672 = vadd.f32 %v8383, %v8671
    %v8673 = vpop.f32.mrb[0].mxu0
    %v8674 = vpop.f32.mrb[0].mxu0
    %v8675 = vadd.f32 %v8386, %v8674
    %v8676 = vpop.f32.mrb[0].mxu0
    %8677 = vmatprep.mubr.bf16.mxu0 0
    %8678 = vmatmul.mubr.bf16.gmra.mrb[0].mxu0 %v8131
    %v8679 = vpop.f32.mrb[0].mxu0
    %v8680 = vadd.f32 %v8391, %v8679
    %v8681 = vpop.f32.mrb[0].mxu0
    %v8682 = vpop.f32.mrb[0].mxu0
    %v8683 = vadd.f32 %v8394, %v8682
    %v8684 = vpop.f32.mrb[0].mxu0
    %8685 = vmatprep.mubr.bf16.mxu0 0
    %8686 = vmatmul.mubr.bf16.gmra.mrb[0].mxu0 %v8134
    %v8687 = vpop.f32.mrb[0].mxu0
    %v8688 = vadd.f32 %v8399, %v8687
    %v8689 = vpop.f32.mrb[0].mxu0
    %v8690 = vpop.f32.mrb[0].mxu0
    %v8691 = vadd.f32 %v8402, %v8690
    %v8692 = vpop.f32.mrb[0].mxu0
    %8693 = vmatprep.mubr.bf16.mxu0 0
    %8694 = vmatmul.mubr.bf16.gmra.mrb[0].mxu0 %v8137
    %v8695 = vpop.f32.mrb[0].mxu0
    %v8696 = vadd.f32 %v8407, %v8695
    %v8697 = vpop.f32.mrb[0].mxu0
    %v8698 = vpop.f32.mrb[0].mxu0
    %v8699 = vadd.f32 %v8410, %v8698
    %v8700 = vpop.f32.mrb[0].mxu0
    %8701 = vmatprep.mubr.bf16.mxu0 0
    %8702 = vmatmul.mubr.bf16.gmra.mrb[0].mxu0 %v8140
    %v8703 = vpop.f32.mrb[0].mxu0
    %v8704 = vadd.f32 %v8415, %v8703
    %v8705 = vpop.f32.mrb[0].mxu0
    %v8706 = vpop.f32.mrb[0].mxu0
    %v8707 = vadd.f32 %v8418, %v8706
    %v8708 = vpop.f32.mrb[0].mxu0
    %8709 = vmatprep.mubr.bf16.mxu0 0
    %8710 = vmatmul.mubr.bf16.gmra.mrb[0].mxu0 %v8143
    %v8711 = vpop.f32.mrb[0].mxu0
    %v8712 = vadd.f32 %v8423, %v8711
    %v8713 = vpop.f32.mrb[0].mxu0
    %v8714 = vpop.f32.mrb[0].mxu0
    %v8715 = vadd.f32 %v8426, %v8714
    %v8716 = vpop.f32.mrb[0].mxu0
    %8717 = vmatprep.mubr.bf16.mxu0 0
    %8718 = vmatmul.mubr.bf16.gmra.mrb[0].mxu0 %v8146
    %v8719 = vpop.f32.mrb[0].mxu0
    %v8720 = vadd.f32 %v8431, %v8719
    %v8721 = vpop.f32.mrb[0].mxu0
    %v8722 = vpop.f32.mrb[0].mxu0
    %v8723 = vadd.f32 %v8434, %v8722
    %v8724 = vpop.f32.mrb[0].mxu0
    %8725 = vdwg.mxu0
    %v8726 = vld [vmem:[%s6] sm:$0x1]
    %v8727 = vld [vmem:[%s7] sm:$0x1]
    %v8728 = vsel %vm773, %v8472, 0.0
    %v8729 = vsel %vm773, %v8475, 0.0
    %v8730 = vadd.f32 %v8728, %v8729
    %v8731 = vsel %vm773, %v8480, 0.0
    %v8732 = vadd.f32 %v8730, %v8731
    %v8733 = vsel %vm773, %v8483, 0.0
    %v8734 = vadd.f32 %v8732, %v8733
    %v8735 = vsel %vm773, %v8488, 0.0
    %v8736 = vadd.f32 %v8734, %v8735
    %v8737 = vsel %vm773, %v8491, 0.0
    %v8738 = vadd.f32 %v8736, %v8737
    %v8739 = vsel %vm773, %v8496, 0.0
    %v8740 = vadd.f32 %v8738, %v8739
    %v8741 = vsel %vm773, %v8499, 0.0
    %v8742 = vadd.f32 %v8740, %v8741
    %v8743 = vsel %vm773, %v8504, 0.0
    %v8744 = vadd.f32 %v8742, %v8743
    %v8745 = vsel %vm773, %v8507, 0.0
    %v8746 = vadd.f32 %v8744, %v8745
    %v8747 = vsel %vm773, %v8512, 0.0
    %v8748 = vadd.f32 %v8746, %v8747
    %v8749 = vsel %vm773, %v8515, 0.0
    %v8750 = vadd.f32 %v8748, %v8749
    %v8751 = vsel %vm773, %v8520, 0.0
    %v8752 = vadd.f32 %v8750, %v8751
    %v8753 = vsel %vm773, %v8523, 0.0
    %v8754 = vadd.f32 %v8752, %v8753
    %v8755 = vsel %vm773, %v8528, 0.0
    %v8756 = vadd.f32 %v8754, %v8755
    %v8757 = vsel %vm773, %v8531, 0.0
    %v8758 = vadd.f32 %v8756, %v8757
    %v8759 = vsel %vm773, %v8536, 0.0
    %v8760 = vadd.f32 %v8758, %v8759
    %v8761 = vsel %vm773, %v8539, 0.0
    %v8762 = vadd.f32 %v8760, %v8761
    %v8763 = vsel %vm773, %v8544, 0.0
    %v8764 = vadd.f32 %v8762, %v8763
    %v8765 = vsel %vm773, %v8547, 0.0
    %v8766 = vadd.f32 %v8764, %v8765
    %v8767 = vsel %vm773, %v8552, 0.0
    %v8768 = vadd.f32 %v8766, %v8767
    %v8769 = vsel %vm773, %v8555, 0.0
    %v8770 = vadd.f32 %v8768, %v8769
    %v8771 = vsel %vm773, %v8560, 0.0
    %v8772 = vadd.f32 %v8770, %v8771
    %v8773 = vsel %vm773, %v8563, 0.0
    %v8774 = vadd.f32 %v8772, %v8773
    %v8775 = vsel %vm773, %v8568, 0.0
    %v8776 = vadd.f32 %v8774, %v8775
    %v8777 = vsel %vm773, %v8571, 0.0
    %v8778 = vadd.f32 %v8776, %v8777
    %v8779 = vsel %vm773, %v8576, 0.0
    %v8780 = vadd.f32 %v8778, %v8779
    %v8781 = vsel %vm773, %v8579, 0.0
    %v8782 = vadd.f32 %v8780, %v8781
    %v8783 = vsel %vm773, %v8584, 0.0
    %v8784 = vadd.f32 %v8782, %v8783
    %v8785 = vsel %vm773, %v8587, 0.0
    %v8786 = vadd.f32 %v8784, %v8785
    %v8787 = vsel %vm773, %v8592, 0.0
    %v8788 = vadd.f32 %v8786, %v8787
    %v8789 = vsel %vm773, %v8595, 0.0
    %v8790 = vadd.f32 %v8788, %v8789
    %v8791 = vsel %vm773, %v8600, 0.0
    %v8792 = vadd.f32 %v8790, %v8791
    %v8793 = vsel %vm773, %v8603, 0.0
    %v8794 = vadd.f32 %v8792, %v8793
    %v8795 = vsel %vm773, %v8608, 0.0
    %v8796 = vadd.f32 %v8794, %v8795
    %v8797 = vsel %vm773, %v8611, 0.0
    %v8798 = vadd.f32 %v8796, %v8797
    %v8799 = vsel %vm773, %v8616, 0.0
    %v8800 = vadd.f32 %v8798, %v8799
    %v8801 = vsel %vm773, %v8619, 0.0
    %v8802 = vadd.f32 %v8800, %v8801
    %v8803 = vsel %vm773, %v8624, 0.0
    %v8804 = vadd.f32 %v8802, %v8803
    %v8805 = vsel %vm773, %v8627, 0.0
    %v8806 = vadd.f32 %v8804, %v8805
    %v8807 = vsel %vm773, %v8632, 0.0
    %v8808 = vadd.f32 %v8806, %v8807
    %v8809 = vsel %vm773, %v8635, 0.0
    %v8810 = vadd.f32 %v8808, %v8809
    %v8811 = vsel %vm773, %v8640, 0.0
    %v8812 = vadd.f32 %v8810, %v8811
    %v8813 = vsel %vm773, %v8643, 0.0
    %v8814 = vadd.f32 %v8812, %v8813
    %v8815 = vsel %vm773, %v8648, 0.0
    %v8816 = vadd.f32 %v8814, %v8815
    %v8817 = vsel %vm773, %v8651, 0.0
    %v8818 = vadd.f32 %v8816, %v8817
    %v8819 = vsel %vm773, %v8656, 0.0
    %v8820 = vadd.f32 %v8818, %v8819
    %v8821 = vsel %vm773, %v8659, 0.0
    %v8822 = vadd.f32 %v8820, %v8821
    %v8823 = vsel %vm773, %v8664, 0.0
    %v8824 = vadd.f32 %v8822, %v8823
    %v8825 = vsel %vm773, %v8667, 0.0
    %v8826 = vadd.f32 %v8824, %v8825
    %v8827 = vsel %vm773, %v8672, 0.0
    %v8828 = vadd.f32 %v8826, %v8827
    %v8829 = vsel %vm773, %v8675, 0.0
    %v8830 = vadd.f32 %v8828, %v8829
    %v8831 = vsel %vm773, %v8680, 0.0
    %v8832 = vadd.f32 %v8830, %v8831
    %v8833 = vsel %vm773, %v8683, 0.0
    %v8834 = vadd.f32 %v8832, %v8833
    %v8835 = vsel %vm773, %v8688, 0.0
    %v8836 = vadd.f32 %v8834, %v8835
    %v8837 = vsel %vm773, %v8691, 0.0
    %v8838 = vadd.f32 %v8836, %v8837
    %v8839 = vsel %vm773, %v8696, 0.0
    %v8840 = vadd.f32 %v8838, %v8839
    %v8841 = vsel %vm773, %v8699, 0.0
    %v8842 = vadd.f32 %v8840, %v8841
    %v8843 = vsel %vm773, %v8704, 0.0
    %v8844 = vadd.f32 %v8842, %v8843
    %v8845 = vsel %vm773, %v8707, 0.0
    %v8846 = vadd.f32 %v8844, %v8845
    %v8847 = vsel %vm773, %v8712, 0.0
    %v8848 = vadd.f32 %v8846, %v8847
    %v8849 = vsel %vm773, %v8715, 0.0
    %v8850 = vadd.f32 %v8848, %v8849
    %v8851 = vsel %vm773, %v8720, 0.0
    %v8852 = vadd.f32 %v8850, %v8851
    %v8853 = vsel %vm773, %v8723, 0.0
    %v8854 = vadd.f32 %v8852, %v8853
    %v8855 = vrot.slane %v8854, 4
    %v8856 = vadd.f32 %v8854, %v8855
    %v8857 = vrot.slane %v8856, 2
    %v8858 = vadd.f32 %v8856, %v8857
    %v8859 = vrot.slane %v8858, 1
    %v8860 = vadd.f32 %v8858, %v8859
    %v8861 = vmul.f32 %v8860, 0.001953125
    %v8862 = vmul.f32 %v8472, %v8472
    %v8863 = vmul.f32 %v8475, %v8475
    %v8864 = vmul.f32 %v8480, %v8480
    %v8865 = vmul.f32 %v8483, %v8483
    %v8866 = vmul.f32 %v8488, %v8488
    %v8867 = vmul.f32 %v8491, %v8491
    %v8868 = vmul.f32 %v8496, %v8496
    %v8869 = vmul.f32 %v8499, %v8499
    %v8870 = vmul.f32 %v8504, %v8504
    %v8871 = vmul.f32 %v8507, %v8507
    %v8872 = vmul.f32 %v8512, %v8512
    %v8873 = vmul.f32 %v8515, %v8515
    %v8874 = vmul.f32 %v8520, %v8520
    %v8875 = vmul.f32 %v8523, %v8523
    %v8876 = vmul.f32 %v8528, %v8528
    %v8877 = vmul.f32 %v8531, %v8531
    %v8878 = vmul.f32 %v8536, %v8536
    %v8879 = vmul.f32 %v8539, %v8539
    %v8880 = vmul.f32 %v8544, %v8544
    %v8881 = vmul.f32 %v8547, %v8547
    %v8882 = vmul.f32 %v8552, %v8552
    %v8883 = vmul.f32 %v8555, %v8555
    %v8884 = vmul.f32 %v8560, %v8560
    %v8885 = vmul.f32 %v8563, %v8563
    %v8886 = vmul.f32 %v8568, %v8568
    %v8887 = vmul.f32 %v8571, %v8571
    %v8888 = vmul.f32 %v8576, %v8576
    %v8889 = vmul.f32 %v8579, %v8579
    %v8890 = vmul.f32 %v8584, %v8584
    %v8891 = vmul.f32 %v8587, %v8587
    %v8892 = vmul.f32 %v8592, %v8592
    %v8893 = vmul.f32 %v8595, %v8595
    %v8894 = vmul.f32 %v8600, %v8600
    %v8895 = vmul.f32 %v8603, %v8603
    %v8896 = vmul.f32 %v8608, %v8608
    %v8897 = vmul.f32 %v8611, %v8611
    %v8898 = vmul.f32 %v8616, %v8616
    %v8899 = vmul.f32 %v8619, %v8619
    %v8900 = vmul.f32 %v8624, %v8624
    %v8901 = vmul.f32 %v8627, %v8627
    %v8902 = vmul.f32 %v8632, %v8632
    %v8903 = vmul.f32 %v8635, %v8635
    %v8904 = vmul.f32 %v8640, %v8640
    %v8905 = vmul.f32 %v8643, %v8643
    %v8906 = vmul.f32 %v8648, %v8648
    %v8907 = vmul.f32 %v8651, %v8651
    %v8908 = vmul.f32 %v8656, %v8656
    %v8909 = vmul.f32 %v8659, %v8659
    %v8910 = vmul.f32 %v8664, %v8664
    %v8911 = vmul.f32 %v8667, %v8667
    %v8912 = vmul.f32 %v8672, %v8672
    %v8913 = vmul.f32 %v8675, %v8675
    %v8914 = vmul.f32 %v8680, %v8680
    %v8915 = vmul.f32 %v8683, %v8683
    %v8916 = vmul.f32 %v8688, %v8688
    %v8917 = vmul.f32 %v8691, %v8691
    %v8918 = vmul.f32 %v8696, %v8696
    %v8919 = vmul.f32 %v8699, %v8699
    %v8920 = vmul.f32 %v8704, %v8704
    %v8921 = vmul.f32 %v8707, %v8707
    %v8922 = vmul.f32 %v8712, %v8712
    %v8923 = vmul.f32 %v8715, %v8715
    %v8924 = vmul.f32 %v8720, %v8720
    %v8925 = vmul.f32 %v8723, %v8723
    %v8926 = vsel %vm773, %v8862, 0.0
    %v8927 = vsel %vm773, %v8863, 0.0
    %v8928 = vadd.f32 %v8926, %v8927
    %v8929 = vsel %vm773, %v8864, 0.0
    %v8930 = vadd.f32 %v8928, %v8929
    %v8931 = vsel %vm773, %v8865, 0.0
    %v8932 = vadd.f32 %v8930, %v8931
    %v8933 = vsel %vm773, %v8866, 0.0
    %v8934 = vadd.f32 %v8932, %v8933
    %v8935 = vsel %vm773, %v8867, 0.0
    %v8936 = vadd.f32 %v8934, %v8935
    %v8937 = vsel %vm773, %v8868, 0.0
    %v8938 = vadd.f32 %v8936, %v8937
    %v8939 = vsel %vm773, %v8869, 0.0
    %v8940 = vadd.f32 %v8938, %v8939
    %v8941 = vsel %vm773, %v8870, 0.0
    %v8942 = vadd.f32 %v8940, %v8941
    %v8943 = vsel %vm773, %v8871, 0.0
    %v8944 = vadd.f32 %v8942, %v8943
    %v8945 = vsel %vm773, %v8872, 0.0
    %v8946 = vadd.f32 %v8944, %v8945
    %v8947 = vsel %vm773, %v8873, 0.0
    %v8948 = vadd.f32 %v8946, %v8947
    %v8949 = vsel %vm773, %v8874, 0.0
    %v8950 = vadd.f32 %v8948, %v8949
    %v8951 = vsel %vm773, %v8875, 0.0
    %v8952 = vadd.f32 %v8950, %v8951
    %v8953 = vsel %vm773, %v8876, 0.0
    %v8954 = vadd.f32 %v8952, %v8953
    %v8955 = vsel %vm773, %v8877, 0.0
    %v8956 = vadd.f32 %v8954, %v8955
    %v8957 = vsel %vm773, %v8878, 0.0
    %v8958 = vadd.f32 %v8956, %v8957
    %v8959 = vsel %vm773, %v8879, 0.0
    %v8960 = vadd.f32 %v8958, %v8959
    %v8961 = vsel %vm773, %v8880, 0.0
    %v8962 = vadd.f32 %v8960, %v8961
    %v8963 = vsel %vm773, %v8881, 0.0
    %v8964 = vadd.f32 %v8962, %v8963
    %v8965 = vsel %vm773, %v8882, 0.0
    %v8966 = vadd.f32 %v8964, %v8965
    %v8967 = vsel %vm773, %v8883, 0.0
    %v8968 = vadd.f32 %v8966, %v8967
    %v8969 = vsel %vm773, %v8884, 0.0
    %v8970 = vadd.f32 %v8968, %v8969
    %v8971 = vsel %vm773, %v8885, 0.0
    %v8972 = vadd.f32 %v8970, %v8971
    %v8973 = vsel %vm773, %v8886, 0.0
    %v8974 = vadd.f32 %v8972, %v8973
    %v8975 = vsel %vm773, %v8887, 0.0
    %v8976 = vadd.f32 %v8974, %v8975
    %v8977 = vsel %vm773, %v8888, 0.0
    %v8978 = vadd.f32 %v8976, %v8977
    %v8979 = vsel %vm773, %v8889, 0.0
    %v8980 = vadd.f32 %v8978, %v8979
    %v8981 = vsel %vm773, %v8890, 0.0
    %v8982 = vadd.f32 %v8980, %v8981
    %v8983 = vsel %vm773, %v8891, 0.0
    %v8984 = vadd.f32 %v8982, %v8983
    %v8985 = vsel %vm773, %v8892, 0.0
    %v8986 = vadd.f32 %v8984, %v8985
    %v8987 = vsel %vm773, %v8893, 0.0
    %v8988 = vadd.f32 %v8986, %v8987
    %v8989 = vsel %vm773, %v8894, 0.0
    %v8990 = vadd.f32 %v8988, %v8989
    %v8991 = vsel %vm773, %v8895, 0.0
    %v8992 = vadd.f32 %v8990, %v8991
    %v8993 = vsel %vm773, %v8896, 0.0
    %v8994 = vadd.f32 %v8992, %v8993
    %v8995 = vsel %vm773, %v8897, 0.0
    %v8996 = vadd.f32 %v8994, %v8995
    %v8997 = vsel %vm773, %v8898, 0.0
    %v8998 = vadd.f32 %v8996, %v8997
    %v8999 = vsel %vm773, %v8899, 0.0
    %v9000 = vadd.f32 %v8998, %v8999
    %v9001 = vsel %vm773, %v8900, 0.0
    %v9002 = vadd.f32 %v9000, %v9001
    %v9003 = vsel %vm773, %v8901, 0.0
    %v9004 = vadd.f32 %v9002, %v9003
    %v9005 = vsel %vm773, %v8902, 0.0
    %v9006 = vadd.f32 %v9004, %v9005
    %v9007 = vsel %vm773, %v8903, 0.0
    %v9008 = vadd.f32 %v9006, %v9007
    %v9009 = vsel %vm773, %v8904, 0.0
    %v9010 = vadd.f32 %v9008, %v9009
    %v9011 = vsel %vm773, %v8905, 0.0
    %v9012 = vadd.f32 %v9010, %v9011
    %v9013 = vsel %vm773, %v8906, 0.0
    %v9014 = vadd.f32 %v9012, %v9013
    %v9015 = vsel %vm773, %v8907, 0.0
    %v9016 = vadd.f32 %v9014, %v9015
    %v9017 = vsel %vm773, %v8908, 0.0
    %v9018 = vadd.f32 %v9016, %v9017
    %v9019 = vsel %vm773, %v8909, 0.0
    %v9020 = vadd.f32 %v9018, %v9019
    %v9021 = vsel %vm773, %v8910, 0.0
    %v9022 = vadd.f32 %v9020, %v9021
    %v9023 = vsel %vm773, %v8911, 0.0
    %v9024 = vadd.f32 %v9022, %v9023
    %v9025 = vsel %vm773, %v8912, 0.0
    %v9026 = vadd.f32 %v9024, %v9025
    %v9027 = vsel %vm773, %v8913, 0.0
    %v9028 = vadd.f32 %v9026, %v9027
    %v9029 = vsel %vm773, %v8914, 0.0
    %v9030 = vadd.f32 %v9028, %v9029
    %v9031 = vsel %vm773, %v8915, 0.0
    %v9032 = vadd.f32 %v9030, %v9031
    %v9033 = vsel %vm773, %v8916, 0.0
    %v9034 = vadd.f32 %v9032, %v9033
    %v9035 = vsel %vm773, %v8917, 0.0
    %v9036 = vadd.f32 %v9034, %v9035
    %v9037 = vsel %vm773, %v8918, 0.0
    %v9038 = vadd.f32 %v9036, %v9037
    %v9039 = vsel %vm773, %v8919, 0.0
    %v9040 = vadd.f32 %v9038, %v9039
    %v9041 = vsel %vm773, %v8920, 0.0
    %v9042 = vadd.f32 %v9040, %v9041
    %v9043 = vsel %vm773, %v8921, 0.0
    %v9044 = vadd.f32 %v9042, %v9043
    %v9045 = vsel %vm773, %v8922, 0.0
    %v9046 = vadd.f32 %v9044, %v9045
    %v9047 = vsel %vm773, %v8923, 0.0
    %v9048 = vadd.f32 %v9046, %v9047
    %v9049 = vsel %vm773, %v8924, 0.0
    %v9050 = vadd.f32 %v9048, %v9049
    %v9051 = vsel %vm773, %v8925, 0.0
    %v9052 = vadd.f32 %v9050, %v9051
    %v9053 = vrot.slane %v9052, 4
    %v9054 = vadd.f32 %v9052, %v9053
    %v9055 = vrot.slane %v9054, 2
    %v9056 = vadd.f32 %v9054, %v9055
    %v9057 = vrot.slane %v9056, 1
    %v9058 = vadd.f32 %v9056, %v9057
    %v9059 = vmul.f32 %v9058, 0.001953125
    %v9060 = vmul.f32 %v8861, %v8861
    %v9061 = vsub.f32 %v9059, %v9060
    %v9062 = vadd.f32 %v9061, 1e-05
    %v9063 = vrsqrt.pop %v9062
    %v9064 = vmul.f32 %v8726, %v9063
    %v9065 = vmul.f32 %v8861, %v9064
    %v9066 = vsub.f32 %v8727, %v9065
    %v9068 = vlaneseq
    %v9069 = vshrl.u32 %v9068, 7
    %v9070 = vsub.s32 0, %v9069
    %v9071 = vrot.slane %v9064, %v9070
    %v9073 = vmul.f32 %v8472, %v9071
    %v9074 = vmul.f32 %v8475, %v9071
    %v9075 = vmul.f32 %v8480, %v9071
    %v9076 = vmul.f32 %v8483, %v9071
    %v9077 = vmul.f32 %v8488, %v9071
    %v9078 = vmul.f32 %v8491, %v9071
    %v9079 = vmul.f32 %v8496, %v9071
    %v9080 = vmul.f32 %v8499, %v9071
    %v9081 = vmul.f32 %v8504, %v9071
    %v9082 = vmul.f32 %v8507, %v9071
    %v9083 = vmul.f32 %v8512, %v9071
    %v9084 = vmul.f32 %v8515, %v9071
    %v9085 = vmul.f32 %v8520, %v9071
    %v9086 = vmul.f32 %v8523, %v9071
    %v9087 = vmul.f32 %v8528, %v9071
    %v9088 = vmul.f32 %v8531, %v9071
    %v9089 = vmul.f32 %v8536, %v9071
    %v9090 = vmul.f32 %v8539, %v9071
    %v9091 = vmul.f32 %v8544, %v9071
    %v9092 = vmul.f32 %v8547, %v9071
    %v9093 = vmul.f32 %v8552, %v9071
    %v9094 = vmul.f32 %v8555, %v9071
    %v9095 = vmul.f32 %v8560, %v9071
    %v9096 = vmul.f32 %v8563, %v9071
    %v9097 = vmul.f32 %v8568, %v9071
    %v9098 = vmul.f32 %v8571, %v9071
    %v9099 = vmul.f32 %v8576, %v9071
    %v9100 = vmul.f32 %v8579, %v9071
    %v9101 = vmul.f32 %v8584, %v9071
    %v9102 = vmul.f32 %v8587, %v9071
    %v9103 = vmul.f32 %v8592, %v9071
    %v9104 = vmul.f32 %v8595, %v9071
    %v9105 = vmul.f32 %v8600, %v9071
    %v9106 = vmul.f32 %v8603, %v9071
    %v9107 = vmul.f32 %v8608, %v9071
    %v9108 = vmul.f32 %v8611, %v9071
    %v9109 = vmul.f32 %v8616, %v9071
    %v9110 = vmul.f32 %v8619, %v9071
    %v9111 = vmul.f32 %v8624, %v9071
    %v9112 = vmul.f32 %v8627, %v9071
    %v9113 = vmul.f32 %v8632, %v9071
    %v9114 = vmul.f32 %v8635, %v9071
    %v9115 = vmul.f32 %v8640, %v9071
    %v9116 = vmul.f32 %v8643, %v9071
    %v9117 = vmul.f32 %v8648, %v9071
    %v9118 = vmul.f32 %v8651, %v9071
    %v9119 = vmul.f32 %v8656, %v9071
    %v9120 = vmul.f32 %v8659, %v9071
    %v9121 = vmul.f32 %v8664, %v9071
    %v9122 = vmul.f32 %v8667, %v9071
    %v9123 = vmul.f32 %v8672, %v9071
    %v9124 = vmul.f32 %v8675, %v9071
    %v9125 = vmul.f32 %v8680, %v9071
    %v9126 = vmul.f32 %v8683, %v9071
    %v9127 = vmul.f32 %v8688, %v9071
    %v9128 = vmul.f32 %v8691, %v9071
    %v9129 = vmul.f32 %v8696, %v9071
    %v9130 = vmul.f32 %v8699, %v9071
    %v9131 = vmul.f32 %v8704, %v9071
    %v9132 = vmul.f32 %v8707, %v9071
    %v9133 = vmul.f32 %v8712, %v9071
    %v9134 = vmul.f32 %v8715, %v9071
    %v9135 = vmul.f32 %v8720, %v9071
    %v9136 = vmul.f32 %v8723, %v9071
    %v9138 = vlaneseq
    %v9139 = vshrl.u32 %v9138, 7
    %v9140 = vsub.s32 0, %v9139
    %v9141 = vrot.slane %v9066, %v9140
    %v9143 = vadd.f32 %v9073, %v9141
    %v9144 = vadd.f32 %v9074, %v9141
    %v9145 = vadd.f32 %v9075, %v9141
    %v9146 = vadd.f32 %v9076, %v9141
    %v9147 = vadd.f32 %v9077, %v9141
    %v9148 = vadd.f32 %v9078, %v9141
    %v9149 = vadd.f32 %v9079, %v9141
    %v9150 = vadd.f32 %v9080, %v9141
    %v9151 = vadd.f32 %v9081, %v9141
    %v9152 = vadd.f32 %v9082, %v9141
    %v9153 = vadd.f32 %v9083, %v9141
    %v9154 = vadd.f32 %v9084, %v9141
    %v9155 = vadd.f32 %v9085, %v9141
    %v9156 = vadd.f32 %v9086, %v9141
    %v9157 = vadd.f32 %v9087, %v9141
    %v9158 = vadd.f32 %v9088, %v9141
    %v9159 = vadd.f32 %v9089, %v9141
    %v9160 = vadd.f32 %v9090, %v9141
    %v9161 = vadd.f32 %v9091, %v9141
    %v9162 = vadd.f32 %v9092, %v9141
    %v9163 = vadd.f32 %v9093, %v9141
    %v9164 = vadd.f32 %v9094, %v9141
    %v9165 = vadd.f32 %v9095, %v9141
    %v9166 = vadd.f32 %v9096, %v9141
    %v9167 = vadd.f32 %v9097, %v9141
    %v9168 = vadd.f32 %v9098, %v9141
    %v9169 = vadd.f32 %v9099, %v9141
    %v9170 = vadd.f32 %v9100, %v9141
    %v9171 = vadd.f32 %v9101, %v9141
    %v9172 = vadd.f32 %v9102, %v9141
    %v9173 = vadd.f32 %v9103, %v9141
    %v9174 = vadd.f32 %v9104, %v9141
    %v9175 = vadd.f32 %v9105, %v9141
    %v9176 = vadd.f32 %v9106, %v9141
    %v9177 = vadd.f32 %v9107, %v9141
    %v9178 = vadd.f32 %v9108, %v9141
    %v9179 = vadd.f32 %v9109, %v9141
    %v9180 = vadd.f32 %v9110, %v9141
    %v9181 = vadd.f32 %v9111, %v9141
    %v9182 = vadd.f32 %v9112, %v9141
    %v9183 = vadd.f32 %v9113, %v9141
    %v9184 = vadd.f32 %v9114, %v9141
    %v9185 = vadd.f32 %v9115, %v9141
    %v9186 = vadd.f32 %v9116, %v9141
    %v9187 = vadd.f32 %v9117, %v9141
    %v9188 = vadd.f32 %v9118, %v9141
    %v9189 = vadd.f32 %v9119, %v9141
    %v9190 = vadd.f32 %v9120, %v9141
    %v9191 = vadd.f32 %v9121, %v9141
    %v9192 = vadd.f32 %v9122, %v9141
    %v9193 = vadd.f32 %v9123, %v9141
    %v9194 = vadd.f32 %v9124, %v9141
    %v9195 = vadd.f32 %v9125, %v9141
    %v9196 = vadd.f32 %v9126, %v9141
    %v9197 = vadd.f32 %v9127, %v9141
    %v9198 = vadd.f32 %v9128, %v9141
    %v9199 = vadd.f32 %v9129, %v9141
    %v9200 = vadd.f32 %v9130, %v9141
    %v9201 = vadd.f32 %v9131, %v9141
    %v9202 = vadd.f32 %v9132, %v9141
    %v9203 = vadd.f32 %v9133, %v9141
    %v9204 = vadd.f32 %v9134, %v9141
    %v9205 = vadd.f32 %v9135, %v9141
    %v9206 = vadd.f32 %v9136, %v9141
    %v9207 = vsel %vm773, %v9143, 0.0
    %v9208 = vsel %vm773, %v9144, 0.0
    %v9209 = vadd.f32 %v9207, %v9208
    %v9210 = vsel %vm773, %v9145, 0.0
    %v9211 = vadd.f32 %v9209, %v9210
    %v9212 = vsel %vm773, %v9146, 0.0
    %v9213 = vadd.f32 %v9211, %v9212
    %v9214 = vsel %vm773, %v9147, 0.0
    %v9215 = vadd.f32 %v9213, %v9214
    %v9216 = vsel %vm773, %v9148, 0.0
    %v9217 = vadd.f32 %v9215, %v9216
    %v9218 = vsel %vm773, %v9149, 0.0
    %v9219 = vadd.f32 %v9217, %v9218
    %v9220 = vsel %vm773, %v9150, 0.0
    %v9221 = vadd.f32 %v9219, %v9220
    %v9222 = vsel %vm773, %v9151, 0.0
    %v9223 = vadd.f32 %v9221, %v9222
    %v9224 = vsel %vm773, %v9152, 0.0
    %v9225 = vadd.f32 %v9223, %v9224
    %v9226 = vsel %vm773, %v9153, 0.0
    %v9227 = vadd.f32 %v9225, %v9226
    %v9228 = vsel %vm773, %v9154, 0.0
    %v9229 = vadd.f32 %v9227, %v9228
    %v9230 = vsel %vm773, %v9155, 0.0
    %v9231 = vadd.f32 %v9229, %v9230
    %v9232 = vsel %vm773, %v9156, 0.0
    %v9233 = vadd.f32 %v9231, %v9232
    %v9234 = vsel %vm773, %v9157, 0.0
    %v9235 = vadd.f32 %v9233, %v9234
    %v9236 = vsel %vm773, %v9158, 0.0
    %v9237 = vadd.f32 %v9235, %v9236
    %v9238 = vsel %vm773, %v9159, 0.0
    %v9239 = vadd.f32 %v9237, %v9238
    %v9240 = vsel %vm773, %v9160, 0.0
    %v9241 = vadd.f32 %v9239, %v9240
    %v9242 = vsel %vm773, %v9161, 0.0
    %v9243 = vadd.f32 %v9241, %v9242
    %v9244 = vsel %vm773, %v9162, 0.0
    %v9245 = vadd.f32 %v9243, %v9244
    %v9246 = vsel %vm773, %v9163, 0.0
    %v9247 = vadd.f32 %v9245, %v9246
    %v9248 = vsel %vm773, %v9164, 0.0
    %v9249 = vadd.f32 %v9247, %v9248
    %v9250 = vsel %vm773, %v9165, 0.0
    %v9251 = vadd.f32 %v9249, %v9250
    %v9252 = vsel %vm773, %v9166, 0.0
    %v9253 = vadd.f32 %v9251, %v9252
    %v9254 = vsel %vm773, %v9167, 0.0
    %v9255 = vadd.f32 %v9253, %v9254
    %v9256 = vsel %vm773, %v9168, 0.0
    %v9257 = vadd.f32 %v9255, %v9256
    %v9258 = vsel %vm773, %v9169, 0.0
    %v9259 = vadd.f32 %v9257, %v9258
    %v9260 = vsel %vm773, %v9170, 0.0
    %v9261 = vadd.f32 %v9259, %v9260
    %v9262 = vsel %vm773, %v9171, 0.0
    %v9263 = vadd.f32 %v9261, %v9262
    %v9264 = vsel %vm773, %v9172, 0.0
    %v9265 = vadd.f32 %v9263, %v9264
    %v9266 = vsel %vm773, %v9173, 0.0
    %v9267 = vadd.f32 %v9265, %v9266
    %v9268 = vsel %vm773, %v9174, 0.0
    %v9269 = vadd.f32 %v9267, %v9268
    %v9270 = vrot.slane %v9269, 4
    %v9271 = vadd.f32 %v9269, %v9270
    %v9272 = vrot.slane %v9271, 2
    %v9273 = vadd.f32 %v9271, %v9272
    %v9274 = vrot.slane %v9273, 1
    %v9275 = vadd.f32 %v9273, %v9274
    %v9276 = vsel %vm773, %v9175, 0.0
    %v9277 = vsel %vm773, %v9176, 0.0
    %v9278 = vadd.f32 %v9276, %v9277
    %v9279 = vsel %vm773, %v9177, 0.0
    %v9280 = vadd.f32 %v9278, %v9279
    %v9281 = vsel %vm773, %v9178, 0.0
    %v9282 = vadd.f32 %v9280, %v9281
    %v9283 = vsel %vm773, %v9179, 0.0
    %v9284 = vadd.f32 %v9282, %v9283
    %v9285 = vsel %vm773, %v9180, 0.0
    %v9286 = vadd.f32 %v9284, %v9285
    %v9287 = vsel %vm773, %v9181, 0.0
    %v9288 = vadd.f32 %v9286, %v9287
    %v9289 = vsel %vm773, %v9182, 0.0
    %v9290 = vadd.f32 %v9288, %v9289
    %v9291 = vsel %vm773, %v9183, 0.0
    %v9292 = vadd.f32 %v9290, %v9291
    %v9293 = vsel %vm773, %v9184, 0.0
    %v9294 = vadd.f32 %v9292, %v9293
    %v9295 = vsel %vm773, %v9185, 0.0
    %v9296 = vadd.f32 %v9294, %v9295
    %v9297 = vsel %vm773, %v9186, 0.0
    %v9298 = vadd.f32 %v9296, %v9297
    %v9299 = vsel %vm773, %v9187, 0.0
    %v9300 = vadd.f32 %v9298, %v9299
    %v9301 = vsel %vm773, %v9188, 0.0
    %v9302 = vadd.f32 %v9300, %v9301
    %v9303 = vsel %vm773, %v9189, 0.0
    %v9304 = vadd.f32 %v9302, %v9303
    %v9305 = vsel %vm773, %v9190, 0.0
    %v9306 = vadd.f32 %v9304, %v9305
    %v9307 = vsel %vm773, %v9191, 0.0
    %v9308 = vadd.f32 %v9306, %v9307
    %v9309 = vsel %vm773, %v9192, 0.0
    %v9310 = vadd.f32 %v9308, %v9309
    %v9311 = vsel %vm773, %v9193, 0.0
    %v9312 = vadd.f32 %v9310, %v9311
    %v9313 = vsel %vm773, %v9194, 0.0
    %v9314 = vadd.f32 %v9312, %v9313
    %v9315 = vsel %vm773, %v9195, 0.0
    %v9316 = vadd.f32 %v9314, %v9315
    %v9317 = vsel %vm773, %v9196, 0.0
    %v9318 = vadd.f32 %v9316, %v9317
    %v9319 = vsel %vm773, %v9197, 0.0
    %v9320 = vadd.f32 %v9318, %v9319
    %v9321 = vsel %vm773, %v9198, 0.0
    %v9322 = vadd.f32 %v9320, %v9321
    %v9323 = vsel %vm773, %v9199, 0.0
    %v9324 = vadd.f32 %v9322, %v9323
    %v9325 = vsel %vm773, %v9200, 0.0
    %v9326 = vadd.f32 %v9324, %v9325
    %v9327 = vsel %vm773, %v9201, 0.0
    %v9328 = vadd.f32 %v9326, %v9327
    %v9329 = vsel %vm773, %v9202, 0.0
    %v9330 = vadd.f32 %v9328, %v9329
    %v9331 = vsel %vm773, %v9203, 0.0
    %v9332 = vadd.f32 %v9330, %v9331
    %v9333 = vsel %vm773, %v9204, 0.0
    %v9334 = vadd.f32 %v9332, %v9333
    %v9335 = vsel %vm773, %v9205, 0.0
    %v9336 = vadd.f32 %v9334, %v9335
    %v9337 = vsel %vm773, %v9206, 0.0
    %v9338 = vadd.f32 %v9336, %v9337
    %v9339 = vrot.slane %v9338, 4
    %v9340 = vadd.f32 %v9338, %v9339
    %v9341 = vrot.slane %v9340, 2
    %v9342 = vadd.f32 %v9340, %v9341
    %v9343 = vrot.slane %v9342, 1
    %v9344 = vadd.f32 %v9342, %v9343
    %v9345 = vrcp.pop 256.0
    %v9346 = vmul.f32 %v9275, %v9345
    %v9347 = vmul.f32 %v9344, %v9345
    %v9348 = vld [vmem:[%s10] sm:$0xff]
    %v9349 = vld [vmem:[%s10 + $0x8] sm:$0xff]
    %v9350 = vld [vmem:[%s10 + $0x10] sm:$0xff]
    %v9351 = vld [vmem:[%s10 + $0x18] sm:$0xff]
    %vm9354 = vcmask 1041409
    %v9355 = vsel %vm9354, %v9347, %v9346
    %v9356 = vsel %vm773, %v9355, 0
    %9358 = vmatprep.subr.mxu0 0.0
    %9359 = vmatpush1.msra.mxu0 %v9348
    %9360 = vmatprep.subr.mxu0 0.0
    %9361 = vmatpush1.msra.mxu0 %v9349
    %9362 = vmatprep.subr.mxu0 0.0
    %9363 = vmatpush1.msra.mxu0 %v9350
    %9364 = vmatprep.subr.mxu0 0.0
    %9365 = vmatpush1.msra.mxu0 %v9351
    %9366 = vmatprep.subr.mxu0 0.0
    %9367 = vmatpush1.msra.mxu0 0.0
    %9368 = vmatprep.subr.mxu0 0.0
    %9369 = vmatpush1.msra.mxu0 0.0
    %9370 = vmatprep.subr.mxu0 0.0
    %9371 = vmatpush1.msra.mxu0 0.0
    %9372 = vmatprep.subr.mxu0 0.0
    %9373 = vmatpush1.msra.mxu0 0.0
    %9374 = vmatprep.subr.mxu0 0.0
    %9375 = vmatpush1.msra.mxu0 0.0
    %9376 = vmatprep.subr.mxu0 0.0
    %9377 = vmatpush1.msra.mxu0 0.0
    %9378 = vmatprep.subr.mxu0 0.0
    %9379 = vmatpush1.msra.mxu0 0.0
    %9380 = vmatprep.subr.mxu0 0.0
    %9381 = vmatpush1.msra.mxu0 0.0
    %9382 = vmatprep.subr.mxu0 0.0
    %9383 = vmatpush1.msra.mxu0 0.0
    %9384 = vmatprep.subr.mxu0 0.0
    %9385 = vmatpush1.msra.mxu0 0.0
    %9386 = vmatprep.subr.mxu0 0.0
    %9387 = vmatpush1.msra.mxu0 0.0
    %9388 = vmatprep.subr.mxu0 0.0
    %9389 = vmatpush1.msra.mxu0 0.0
    %9390 = vmatprep.subr.mxu0 0.0
    %9391 = vmatpush1.msra.mxu0 0.0
    %9392 = vmatprep.subr.mxu0 0.0
    %9393 = vmatpush1.msra.mxu0 0.0
    %9394 = vmatprep.subr.mxu0 0.0
    %9395 = vmatpush1.msra.mxu0 0.0
    %9396 = vmatprep.subr.mxu0 0.0
    %9397 = vmatpush1.msra.mxu0 0.0
    %9398 = vmatprep.subr.mxu0 0.0
    %9399 = vmatpush1.msra.mxu0 0.0
    %9400 = vmatprep.subr.mxu0 0.0
    %9401 = vmatpush1.msra.mxu0 0.0
    %9402 = vmatprep.subr.mxu0 0.0
    %9403 = vmatpush1.msra.mxu0 0.0
    %9404 = vmatprep.subr.mxu0 0.0
    %9405 = vmatpush1.msra.mxu0 0.0
    %9406 = vmatprep.subr.mxu0 0.0
    %9407 = vmatpush1.msra.mxu0 0.0
    %9408 = vmatprep.subr.mxu0 0.0
    %9409 = vmatpush1.msra.mxu0 0.0
    %9410 = vmatprep.subr.mxu0 0.0
    %9411 = vmatpush1.msra.mxu0 0.0
    %9412 = vmatprep.subr.mxu0 0.0
    %9413 = vmatpush1.msra.mxu0 0.0
    %9414 = vmatprep.subr.mxu0 0.0
    %9415 = vmatpush1.msra.mxu0 0.0
    %9416 = vmatprep.subr.mxu0 0.0
    %9417 = vmatpush1.msra.mxu0 0.0
    %9418 = vmatprep.subr.mxu0 0.0
    %9419 = vmatpush1.msra.mxu0 0.0
    %9420 = vmatprep.subr.mxu0 0.0
    %9421 = vmatpush1.msra.mxu0 0.0
    %9422 = vmatprep.mubr.f32.mxu0 0.0
    %9423 = vmatmul.mubr.f32.gmra.mrb[0].mxu0 %v9356
    %v9424 = vpop.f32.mrb[0].mxu0
    %v9425 = vadd.f32 0.0, %v9424
    %v9426 = vpop.f32.mrb[0].mxu0
    %9427 = vdwg.mxu0
    %v9428 = vmax.f32 %v9425, 0.0
    %v9429 = vld [vmem:[%s11] sm:$0x3]
    %vm9430 = vcmask 15360
    %v9432 = vsel %vm9430, %v9428, 0
    %vm9434 = vcmask 1041408
    %v9436 = vsel %vm9434, %v9429, 0
    %9438 = vmatprep.subr.mxu0 0.0
    %9439 = vmatpush1.msra.mxu0 %v9436
    %9440 = vmatprep.subr.mxu0 0.0
    %9441 = vmatpush1.msra.mxu0 0.0
    %9442 = vmatprep.subr.mxu0 0.0
    %9443 = vmatpush1.msra.mxu0 0.0
    %9444 = vmatprep.subr.mxu0 0.0
    %9445 = vmatpush1.msra.mxu0 0.0
    %9446 = vmatprep.subr.mxu0 0.0
    %9447 = vmatpush1.msra.mxu0 0.0
    %9448 = vmatprep.subr.mxu0 0.0
    %9449 = vmatpush1.msra.mxu0 0.0
    %9450 = vmatprep.subr.mxu0 0.0
    %9451 = vmatpush1.msra.mxu0 0.0
    %9452 = vmatprep.subr.mxu0 0.0
    %9453 = vmatpush1.msra.mxu0 0.0
    %9454 = vmatprep.subr.mxu0 0.0
    %9455 = vmatpush1.msra.mxu0 0.0
    %9456 = vmatprep.subr.mxu0 0.0
    %9457 = vmatpush1.msra.mxu0 0.0
    %9458 = vmatprep.subr.mxu0 0.0
    %9459 = vmatpush1.msra.mxu0 0.0
    %9460 = vmatprep.subr.mxu0 0.0
    %9461 = vmatpush1.msra.mxu0 0.0
    %9462 = vmatprep.subr.mxu0 0.0
    %9463 = vmatpush1.msra.mxu0 0.0
    %9464 = vmatprep.subr.mxu0 0.0
    %9465 = vmatpush1.msra.mxu0 0.0
    %9466 = vmatprep.subr.mxu0 0.0
    %9467 = vmatpush1.msra.mxu0 0.0
    %9468 = vmatprep.subr.mxu0 0.0
    %9469 = vmatpush1.msra.mxu0 0.0
    %9470 = vmatprep.subr.mxu0 0.0
    %9471 = vmatpush1.msra.mxu0 0.0
    %9472 = vmatprep.subr.mxu0 0.0
    %9473 = vmatpush1.msra.mxu0 0.0
    %9474 = vmatprep.subr.mxu0 0.0
    %9475 = vmatpush1.msra.mxu0 0.0
    %9476 = vmatprep.subr.mxu0 0.0
    %9477 = vmatpush1.msra.mxu0 0.0
    %9478 = vmatprep.subr.mxu0 0.0
    %9479 = vmatpush1.msra.mxu0 0.0
    %9480 = vmatprep.subr.mxu0 0.0
    %9481 = vmatpush1.msra.mxu0 0.0
    %9482 = vmatprep.subr.mxu0 0.0
    %9483 = vmatpush1.msra.mxu0 0.0
    %9484 = vmatprep.subr.mxu0 0.0
    %9485 = vmatpush1.msra.mxu0 0.0
    %9486 = vmatprep.subr.mxu0 0.0
    %9487 = vmatpush1.msra.mxu0 0.0
    %9488 = vmatprep.subr.mxu0 0.0
    %9489 = vmatpush1.msra.mxu0 0.0
    %9490 = vmatprep.subr.mxu0 0.0
    %9491 = vmatpush1.msra.mxu0 0.0
    %9492 = vmatprep.subr.mxu0 0.0
    %9493 = vmatpush1.msra.mxu0 0.0
    %9494 = vmatprep.subr.mxu0 0.0
    %9495 = vmatpush1.msra.mxu0 0.0
    %9496 = vmatprep.subr.mxu0 0.0
    %9497 = vmatpush1.msra.mxu0 0.0
    %9498 = vmatprep.subr.mxu0 0.0
    %9499 = vmatpush1.msra.mxu0 0.0
    %9500 = vmatprep.subr.mxu0 0.0
    %9501 = vmatpush1.msra.mxu0 0.0
    %9502 = vmatprep.mubr.f32.mxu0 0.0
    %9503 = vmatmul.mubr.f32.gmra.mrb[0].mxu0 %v9432
    %v9504 = vpop.f32.mrb[0].mxu0
    %v9505 = vadd.f32 0.0, %v9504
    %v9506 = vpop.f32.mrb[0].mxu0
    %9507 = vdwg.mxu0
    %v9508 = vxor.u32 %v9505, 2147483648
    %v9509 = vmul.f32 %v9508, 1.442695
    %v9510 = vpow.pop %v9509
    %v9511 = vadd.f32 %v9510, 1.0
    %v9512 = vrcp.pop %v9511
    %v9513 = vmul.f32 1.0, %v9512
    %v9516 = vunpack.c.l.s4 1966171168
    %v9517 = vunpack.c.0.s8 %v9516
    %v9518 = vlaneseq
    %v9519 = vshrl.u32 %v9518, 7
    %v9520 = vsub.s32 %v9517, %v9519
    %v9521 = vrot.slane %v9513, %v9520
    %v9522 = vcombine.high %v9521, %v9521
    %v9524 = vunpack.c.l.s4 1966171168
    %v9525 = vunpack.c.0.s8 %v9524
    %v9526 = vlaneseq
    %v9527 = vshrl.u32 %v9526, 7
    %v9528 = vsub.s32 %v9525, %v9527
    %v9529 = vrot.slane %v9521, %v9528
    %v9531 = vunpack.c.l.s4 1966171168
    %v9532 = vunpack.c.0.s8 %v9531
    %v9533 = vlaneseq
    %v9534 = vshrl.u32 %v9533, 7
    %v9535 = vsub.s32 %v9532, %v9534
    %v9536 = vrot.slane %v9522, %v9535
    %v9537 = vlaneseq
    %v9538 = vshrl.u32 %v9537, 7
    %v9539 = vsub.s32 0, %v9538
    %v9540 = vrot.slane %v9529, %v9539
    %v9541 = vlaneseq
    %v9542 = vshrl.u32 %v9541, 7
    %v9543 = vsub.s32 0, %v9542
    %v9544 = vrot.slane %v9536, %v9543
    %v9547 = vmul.f32 %v9143, %v9540
    %v9548 = vmul.f32 %v9144, %v9540
    %v9549 = vmul.f32 %v9145, %v9540
    %v9550 = vmul.f32 %v9146, %v9540
    %v9551 = vmul.f32 %v9147, %v9540
    %v9552 = vmul.f32 %v9148, %v9540
    %v9553 = vmul.f32 %v9149, %v9540
    %v9554 = vmul.f32 %v9150, %v9540
    %v9555 = vmul.f32 %v9151, %v9540
    %v9556 = vmul.f32 %v9152, %v9540
    %v9557 = vmul.f32 %v9153, %v9540
    %v9558 = vmul.f32 %v9154, %v9540
    %v9559 = vmul.f32 %v9155, %v9540
    %v9560 = vmul.f32 %v9156, %v9540
    %v9561 = vmul.f32 %v9157, %v9540
    %v9562 = vmul.f32 %v9158, %v9540
    %v9563 = vmul.f32 %v9159, %v9540
    %v9564 = vmul.f32 %v9160, %v9540
    %v9565 = vmul.f32 %v9161, %v9540
    %v9566 = vmul.f32 %v9162, %v9540
    %v9567 = vmul.f32 %v9163, %v9540
    %v9568 = vmul.f32 %v9164, %v9540
    %v9569 = vmul.f32 %v9165, %v9540
    %v9570 = vmul.f32 %v9166, %v9540
    %v9571 = vmul.f32 %v9167, %v9540
    %v9572 = vmul.f32 %v9168, %v9540
    %v9573 = vmul.f32 %v9169, %v9540
    %v9574 = vmul.f32 %v9170, %v9540
    %v9575 = vmul.f32 %v9171, %v9540
    %v9576 = vmul.f32 %v9172, %v9540
    %v9577 = vmul.f32 %v9173, %v9540
    %v9578 = vmul.f32 %v9174, %v9540
    %v9579 = vmul.f32 %v9175, %v9544
    %v9580 = vmul.f32 %v9176, %v9544
    %v9581 = vmul.f32 %v9177, %v9544
    %v9582 = vmul.f32 %v9178, %v9544
    %v9583 = vmul.f32 %v9179, %v9544
    %v9584 = vmul.f32 %v9180, %v9544
    %v9585 = vmul.f32 %v9181, %v9544
    %v9586 = vmul.f32 %v9182, %v9544
    %v9587 = vmul.f32 %v9183, %v9544
    %v9588 = vmul.f32 %v9184, %v9544
    %v9589 = vmul.f32 %v9185, %v9544
    %v9590 = vmul.f32 %v9186, %v9544
    %v9591 = vmul.f32 %v9187, %v9544
    %v9592 = vmul.f32 %v9188, %v9544
    %v9593 = vmul.f32 %v9189, %v9544
    %v9594 = vmul.f32 %v9190, %v9544
    %v9595 = vmul.f32 %v9191, %v9544
    %v9596 = vmul.f32 %v9192, %v9544
    %v9597 = vmul.f32 %v9193, %v9544
    %v9598 = vmul.f32 %v9194, %v9544
    %v9599 = vmul.f32 %v9195, %v9544
    %v9600 = vmul.f32 %v9196, %v9544
    %v9601 = vmul.f32 %v9197, %v9544
    %v9602 = vmul.f32 %v9198, %v9544
    %v9603 = vmul.f32 %v9199, %v9544
    %v9604 = vmul.f32 %v9200, %v9544
    %v9605 = vmul.f32 %v9201, %v9544
    %v9606 = vmul.f32 %v9202, %v9544
    %v9607 = vmul.f32 %v9203, %v9544
    %v9608 = vmul.f32 %v9204, %v9544
    %v9609 = vmul.f32 %v9205, %v9544
    %v9610 = vmul.f32 %v9206, %v9544
    %v9611 = vadd.f32 %v9547, %v1189
    %v9612 = vadd.f32 %v9548, %v1190
    %v9613 = vadd.f32 %v9549, %v1191
    %v9614 = vadd.f32 %v9550, %v1192
    %v9615 = vadd.f32 %v9551, %v1193
    %v9616 = vadd.f32 %v9552, %v1194
    %v9617 = vadd.f32 %v9553, %v1195
    %v9618 = vadd.f32 %v9554, %v1196
    %v9619 = vadd.f32 %v9555, %v1197
    %v9620 = vadd.f32 %v9556, %v1198
    %v9621 = vadd.f32 %v9557, %v1199
    %v9622 = vadd.f32 %v9558, %v1200
    %v9623 = vadd.f32 %v9559, %v1201
    %v9624 = vadd.f32 %v9560, %v1202
    %v9625 = vadd.f32 %v9561, %v1203
    %v9626 = vadd.f32 %v9562, %v1204
    %v9627 = vadd.f32 %v9563, %v1205
    %v9628 = vadd.f32 %v9564, %v1206
    %v9629 = vadd.f32 %v9565, %v1207
    %v9630 = vadd.f32 %v9566, %v1208
    %v9631 = vadd.f32 %v9567, %v1209
    %v9632 = vadd.f32 %v9568, %v1210
    %v9633 = vadd.f32 %v9569, %v1211
    %v9634 = vadd.f32 %v9570, %v1212
    %v9635 = vadd.f32 %v9571, %v1213
    %v9636 = vadd.f32 %v9572, %v1214
    %v9637 = vadd.f32 %v9573, %v1215
    %v9638 = vadd.f32 %v9574, %v1216
    %v9639 = vadd.f32 %v9575, %v1217
    %v9640 = vadd.f32 %v9576, %v1218
    %v9641 = vadd.f32 %v9577, %v1219
    %v9642 = vadd.f32 %v9578, %v1220
    %v9643 = vadd.f32 %v9579, %v1221
    %v9644 = vadd.f32 %v9580, %v1222
    %v9645 = vadd.f32 %v9581, %v1223
    %v9646 = vadd.f32 %v9582, %v1224
    %v9647 = vadd.f32 %v9583, %v1225
    %v9648 = vadd.f32 %v9584, %v1226
    %v9649 = vadd.f32 %v9585, %v1227
    %v9650 = vadd.f32 %v9586, %v1228
    %v9651 = vadd.f32 %v9587, %v1229
    %v9652 = vadd.f32 %v9588, %v1230
    %v9653 = vadd.f32 %v9589, %v1231
    %v9654 = vadd.f32 %v9590, %v1232
    %v9655 = vadd.f32 %v9591, %v1233
    %v9656 = vadd.f32 %v9592, %v1234
    %v9657 = vadd.f32 %v9593, %v1235
    %v9658 = vadd.f32 %v9594, %v1236
    %v9659 = vadd.f32 %v9595, %v1237
    %v9660 = vadd.f32 %v9596, %v1238
    %v9661 = vadd.f32 %v9597, %v1239
    %v9662 = vadd.f32 %v9598, %v1240
    %v9663 = vadd.f32 %v9599, %v1241
    %v9664 = vadd.f32 %v9600, %v1242
    %v9665 = vadd.f32 %v9601, %v1243
    %v9666 = vadd.f32 %v9602, %v1244
    %v9667 = vadd.f32 %v9603, %v1245
    %v9668 = vadd.f32 %v9604, %v1246
    %v9669 = vadd.f32 %v9605, %v1247
    %v9670 = vadd.f32 %v9606, %v1248
    %v9671 = vadd.f32 %v9607, %v1249
    %v9672 = vadd.f32 %v9608, %v1250
    %v9673 = vadd.f32 %v9609, %v1251
    %v9674 = vadd.f32 %v9610, %v1252
    %v9675 = vmax.f32 %v9611, 0.0
    %v9676 = vmax.f32 %v9612, 0.0
    %v9677 = vmax.f32 %v9613, 0.0
    %v9678 = vmax.f32 %v9614, 0.0
    %v9679 = vmax.f32 %v9615, 0.0
    %v9680 = vmax.f32 %v9616, 0.0
    %v9681 = vmax.f32 %v9617, 0.0
    %v9682 = vmax.f32 %v9618, 0.0
    %v9683 = vmax.f32 %v9619, 0.0
    %v9684 = vmax.f32 %v9620, 0.0
    %v9685 = vmax.f32 %v9621, 0.0
    %v9686 = vmax.f32 %v9622, 0.0
    %v9687 = vmax.f32 %v9623, 0.0
    %v9688 = vmax.f32 %v9624, 0.0
    %v9689 = vmax.f32 %v9625, 0.0
    %v9690 = vmax.f32 %v9626, 0.0
    %v9691 = vmax.f32 %v9627, 0.0
    %v9692 = vmax.f32 %v9628, 0.0
    %v9693 = vmax.f32 %v9629, 0.0
    %v9694 = vmax.f32 %v9630, 0.0
    %v9695 = vmax.f32 %v9631, 0.0
    %v9696 = vmax.f32 %v9632, 0.0
    %v9697 = vmax.f32 %v9633, 0.0
    %v9698 = vmax.f32 %v9634, 0.0
    %v9699 = vmax.f32 %v9635, 0.0
    %v9700 = vmax.f32 %v9636, 0.0
    %v9701 = vmax.f32 %v9637, 0.0
    %v9702 = vmax.f32 %v9638, 0.0
    %v9703 = vmax.f32 %v9639, 0.0
    %v9704 = vmax.f32 %v9640, 0.0
    %v9705 = vmax.f32 %v9641, 0.0
    %v9706 = vmax.f32 %v9642, 0.0
    %v9707 = vmax.f32 %v9643, 0.0
    %v9708 = vmax.f32 %v9644, 0.0
    %v9709 = vmax.f32 %v9645, 0.0
    %v9710 = vmax.f32 %v9646, 0.0
    %v9711 = vmax.f32 %v9647, 0.0
    %v9712 = vmax.f32 %v9648, 0.0
    %v9713 = vmax.f32 %v9649, 0.0
    %v9714 = vmax.f32 %v9650, 0.0
    %v9715 = vmax.f32 %v9651, 0.0
    %v9716 = vmax.f32 %v9652, 0.0
    %v9717 = vmax.f32 %v9653, 0.0
    %v9718 = vmax.f32 %v9654, 0.0
    %v9719 = vmax.f32 %v9655, 0.0
    %v9720 = vmax.f32 %v9656, 0.0
    %v9721 = vmax.f32 %v9657, 0.0
    %v9722 = vmax.f32 %v9658, 0.0
    %v9723 = vmax.f32 %v9659, 0.0
    %v9724 = vmax.f32 %v9660, 0.0
    %v9725 = vmax.f32 %v9661, 0.0
    %v9726 = vmax.f32 %v9662, 0.0
    %v9727 = vmax.f32 %v9663, 0.0
    %v9728 = vmax.f32 %v9664, 0.0
    %v9729 = vmax.f32 %v9665, 0.0
    %v9730 = vmax.f32 %v9666, 0.0
    %v9731 = vmax.f32 %v9667, 0.0
    %v9732 = vmax.f32 %v9668, 0.0
    %v9733 = vmax.f32 %v9669, 0.0
    %v9734 = vmax.f32 %v9670, 0.0
    %v9735 = vmax.f32 %v9671, 0.0
    %v9736 = vmax.f32 %v9672, 0.0
    %v9737 = vmax.f32 %v9673, 0.0
    %v9738 = vmax.f32 %v9674, 0.0
    %9739 = vst.msk [vmem:[#allocation4] sm:$0xff] %vm773, %v9675
    %9740 = vst.msk [vmem:[#allocation4 + $0x8] sm:$0xff] %vm773, %v9676
    %9741 = vst.msk [vmem:[#allocation4 + $0x10] sm:$0xff] %vm773, %v9677
    %9742 = vst.msk [vmem:[#allocation4 + $0x18] sm:$0xff] %vm773, %v9678
    %9743 = vst.msk [vmem:[#allocation4 + $0x20] sm:$0xff] %vm773, %v9679
    %9744 = vst.msk [vmem:[#allocation4 + $0x28] sm:$0xff] %vm773, %v9680
    %9745 = vst.msk [vmem:[#allocation4 + $0x30] sm:$0xff] %vm773, %v9681
    %9746 = vst.msk [vmem:[#allocation4 + $0x38] sm:$0xff] %vm773, %v9682
    %9747 = vst.msk [vmem:[#allocation4 + $0x40] sm:$0xff] %vm773, %v9683
    %9748 = vst.msk [vmem:[#allocation4 + $0x48] sm:$0xff] %vm773, %v9684
    %9749 = vst.msk [vmem:[#allocation4 + $0x50] sm:$0xff] %vm773, %v9685
    %9750 = vst.msk [vmem:[#allocation4 + $0x58] sm:$0xff] %vm773, %v9686
    %9751 = vst.msk [vmem:[#allocation4 + $0x60] sm:$0xff] %vm773, %v9687
    %9752 = vst.msk [vmem:[#allocation4 + $0x68] sm:$0xff] %vm773, %v9688
    %9753 = vst.msk [vmem:[#allocation4 + $0x70] sm:$0xff] %vm773, %v9689
    %9754 = vst.msk [vmem:[#allocation4 + $0x78] sm:$0xff] %vm773, %v9690
    %9755 = vst.msk [vmem:[#allocation4 + $0x80] sm:$0xff] %vm773, %v9691
    %9756 = vst.msk [vmem:[#allocation4 + $0x88] sm:$0xff] %vm773, %v9692
    %9757 = vst.msk [vmem:[#allocation4 + $0x90] sm:$0xff] %vm773, %v9693
    %9758 = vst.msk [vmem:[#allocation4 + $0x98] sm:$0xff] %vm773, %v9694
    %9759 = vst.msk [vmem:[#allocation4 + $0xa0] sm:$0xff] %vm773, %v9695
    %9760 = vst.msk [vmem:[#allocation4 + $0xa8] sm:$0xff] %vm773, %v9696
    %9761 = vst.msk [vmem:[#allocation4 + $0xb0] sm:$0xff] %vm773, %v9697
    %9762 = vst.msk [vmem:[#allocation4 + $0xb8] sm:$0xff] %vm773, %v9698
    %9763 = vst.msk [vmem:[#allocation4 + $0xc0] sm:$0xff] %vm773, %v9699
    %9764 = vst.msk [vmem:[#allocation4 + $0xc8] sm:$0xff] %vm773, %v9700
    %9765 = vst.msk [vmem:[#allocation4 + $0xd0] sm:$0xff] %vm773, %v9701
    %9766 = vst.msk [vmem:[#allocation4 + $0xd8] sm:$0xff] %vm773, %v9702
    %9767 = vst.msk [vmem:[#allocation4 + $0xe0] sm:$0xff] %vm773, %v9703
    %9768 = vst.msk [vmem:[#allocation4 + $0xe8] sm:$0xff] %vm773, %v9704
    %9769 = vst.msk [vmem:[#allocation4 + $0xf0] sm:$0xff] %vm773, %v9705
    %9770 = vst.msk [vmem:[#allocation4 + $0xf8] sm:$0xff] %vm773, %v9706
    %9771 = vst.msk [vmem:[#allocation4 + $0x100] sm:$0xff] %vm773, %v9707
    %9772 = vst.msk [vmem:[#allocation4 + $0x108] sm:$0xff] %vm773, %v9708
    %9773 = vst.msk [vmem:[#allocation4 + $0x110] sm:$0xff] %vm773, %v9709
    %9774 = vst.msk [vmem:[#allocation4 + $0x118] sm:$0xff] %vm773, %v9710
    %9775 = vst.msk [vmem:[#allocation4 + $0x120] sm:$0xff] %vm773, %v9711
    %9776 = vst.msk [vmem:[#allocation4 + $0x128] sm:$0xff] %vm773, %v9712
    %9777 = vst.msk [vmem:[#allocation4 + $0x130] sm:$0xff] %vm773, %v9713
    %9778 = vst.msk [vmem:[#allocation4 + $0x138] sm:$0xff] %vm773, %v9714
    %9779 = vst.msk [vmem:[#allocation4 + $0x140] sm:$0xff] %vm773, %v9715
    %9780 = vst.msk [vmem:[#allocation4 + $0x148] sm:$0xff] %vm773, %v9716
    %9781 = vst.msk [vmem:[#allocation4 + $0x150] sm:$0xff] %vm773, %v9717
    %9782 = vst.msk [vmem:[#allocation4 + $0x158] sm:$0xff] %vm773, %v9718
    %9783 = vst.msk [vmem:[#allocation4 + $0x160] sm:$0xff] %vm773, %v9719
    %9784 = vst.msk [vmem:[#allocation4 + $0x168] sm:$0xff] %vm773, %v9720
    %9785 = vst.msk [vmem:[#allocation4 + $0x170] sm:$0xff] %vm773, %v9721
    %9786 = vst.msk [vmem:[#allocation4 + $0x178] sm:$0xff] %vm773, %v9722
    %9787 = vst.msk [vmem:[#allocation4 + $0x180] sm:$0xff] %vm773, %v9723
    %9788 = vst.msk [vmem:[#allocation4 + $0x188] sm:$0xff] %vm773, %v9724
    %9789 = vst.msk [vmem:[#allocation4 + $0x190] sm:$0xff] %vm773, %v9725
    %9790 = vst.msk [vmem:[#allocation4 + $0x198] sm:$0xff] %vm773, %v9726
    %9791 = vst.msk [vmem:[#allocation4 + $0x1a0] sm:$0xff] %vm773, %v9727
    %9792 = vst.msk [vmem:[#allocation4 + $0x1a8] sm:$0xff] %vm773, %v9728
    %9793 = vst.msk [vmem:[#allocation4 + $0x1b0] sm:$0xff] %vm773, %v9729
    %9794 = vst.msk [vmem:[#allocation4 + $0x1b8] sm:$0xff] %vm773, %v9730
    %9795 = vst.msk [vmem:[#allocation4 + $0x1c0] sm:$0xff] %vm773, %v9731
    %9796 = vst.msk [vmem:[#allocation4 + $0x1c8] sm:$0xff] %vm773, %v9732
    %9797 = vst.msk [vmem:[#allocation4 + $0x1d0] sm:$0xff] %vm773, %v9733
    %9798 = vst.msk [vmem:[#allocation4 + $0x1d8] sm:$0xff] %vm773, %v9734
    %9799 = vst.msk [vmem:[#allocation4 + $0x1e0] sm:$0xff] %vm773, %v9735
    %9800 = vst.msk [vmem:[#allocation4 + $0x1e8] sm:$0xff] %vm773, %v9736
    %9801 = vst.msk [vmem:[#allocation4 + $0x1f0] sm:$0xff] %vm773, %v9737
    %9802 = vst.msk [vmem:[#allocation4 + $0x1f8] sm:$0xff] %vm773, %v9738
    // Predicated region
    $region50: #{se_basic_block_forward.1} parent=1 // pred_check
      _
    $region51: #{se_basic_block_forward.1} parent=1 // pred_check_branch
      %9804 = sbr.rel (0) target = $region53
    $region52: #{se_basic_block_forward.1} parent=1 // pred_region
      %s9806 = ssub.s32 8192, 8192
      %9807 = vsyncadd [#allocation5], %s9806
      %s9808 = sshll.u32 [#allocation4], 4
      %s9809 = int_to_ptr.vmem [resolvable:$true] %s9808
      %9814 = dma.vmem_to_hbm [thread:$0]  %s9809, 8192, %s12, [#allocation5], 128, 128, 8
    $region53: #{se_basic_block_forward.1} parent=1 // pred_fallthru
      _
    // Predicated region
    $region54: #{se_basic_block_forward.1} parent=1 // pred_check
      _
    $region55: #{se_basic_block_forward.1} parent=1 // pred_check_branch
      %9816 = sbr.rel (0) target = $region57
    $region56: #{se_basic_block_forward.1} parent=1 // pred_region
      %9817 = dma.done [#allocation5], 8192
    $region57: #{se_basic_block_forward.1} parent=1 // pred_fallthru
      _
    %9818 = vsyncpa [#allocation5], 1

</llo_original>
